<compile_context>
chip_gen: v6e
topology: v6e:2x2x1
jax: 0.10.0
libtpu: 0.0.40
codegen_flags: <defaults>
</compile_context>

<pallas_src>
import functools

import jax
import jax.numpy as jnp
import numpy as np
from jax.experimental import pallas as pl
from jax.experimental.pallas import tpu as pltpu


# ----------------------------------------------------------------------------
# Fused kernel.  Per grid step (one batch tile of TB elements):
#   col_ref : (49*TB, 1024) bf16   rows (q_h, q_w, b), lanes (r_h, r_w, patch256)
#             where conv1 output (h1, w1) = (2*q_h + r_h, 2*q_w + r_w).
#   w1 (1024,128) block-diag | w2 (512,64) 4 parity groups | w3 (576,64)
#   wf (1024,512) | wh (512,128) fused+padded heads ; biases are f32 (1, N).
#   out_ref : (TB, 128) f32 = [policy logits | value_ext | value_int | 0 pad]
# ----------------------------------------------------------------------------
def _policy_kernel(col_ref, w1_ref, b1_ref, w2_ref, b2_ref, w3_ref, b3_ref,
                   wf_ref, bf_ref, wh_ref, bh_ref, out_ref, *, tb):
    f32 = jnp.float32
    bf16 = jnp.bfloat16

    # conv1: one K=1024 matmul.  Block-diagonal w1 means output lane group
    # (r_h, r_w) (32 channels each) is conv1 at (2*q_h + r_h, 2*q_w + r_w).
    z1 = jnp.dot(col_ref[...], w1_ref[...], preferred_element_type=f32)
    z1 = jnp.maximum(z1 + b1_ref[...], 0.0).astype(bf16)          # (49*tb, 128)

    # conv2 (4x4, stride 2): 4 parity groups, each one K=128 matmul over a
    # contiguous tb-aligned row window of z1.  Output rows land in the
    # 7-strided flat layout s2 = 7*oh2 + ow2 (rows with s2 % 7 == 6 are junk
    # and are never read by any valid conv3 position).
    acc2 = None
    for g, (a, c) in enumerate(((0, 0), (0, 1), (1, 0), (1, 1))):
        off = (7 * a + c) * tb
        part = jnp.dot(z1[off:off + 41 * tb, :],
                       w2_ref[128 * g:128 * (g + 1), :],
                       preferred_element_type=f32)
        acc2 = part if acc2 is None else acc2 + part
    z2 = jnp.maximum(acc2 + b2_ref[...], 0.0).astype(bf16)        # (41*tb, 64)

    # conv3 (3x3, stride 1): 9 taps, contiguous tb-aligned windows of z2.
    # Output rows: s3 = 7*oh3 + ow3 (16 of the 25 flat rows are valid).
    acc3 = None
    for di in range(3):
        for dj in range(3):
            off = (7 * di + dj) * tb
            t = 3 * di + dj
            part = jnp.dot(z2[off:off + 25 * tb, :],
                           w3_ref[64 * t:64 * (t + 1), :],
                           preferred_element_type=f32)
            acc3 = part if acc3 is None else acc3 + part
    z3 = jnp.maximum(acc3 + b3_ref[...], 0.0).astype(bf16)        # (25*tb, 64)

    # fc: accumulate over the 16 valid conv3 positions; wf rows were
    # pre-permuted from PyTorch's (c, h, w) flatten to (h, w, c).
    fc_acc = None
    for oh3 in range(4):
        for ow3 in range(4):
            s3 = 7 * oh3 + ow3
            r = 4 * oh3 + ow3
            part = jnp.dot(z3[s3 * tb:(s3 + 1) * tb, :],
                           wf_ref[64 * r:64 * (r + 1), :],
                           preferred_element_type=f32)
            fc_acc = part if fc_acc is None else fc_acc + part
    feat = jnp.maximum(fc_acc + bf_ref[...], 0.0).astype(bf16)    # (tb, 512)

    # fused heads, zero-padded to 128 lanes: [policy | v_ext | v_int | zeros].
    out_ref[...] = (jnp.dot(feat, wh_ref[...], preferred_element_type=f32)
                    + bh_ref[...])


# ----------------------------------------------------------------------------
# One-time (outside jit) weight repack: PyTorch layout -> matmul-ready bf16.
# ----------------------------------------------------------------------------
def prepare_params(raw):
    a_dim = raw["pol_w"].shape[0]
    f32, bf16 = jnp.float32, jnp.bfloat16

    # conv1: rows (di, dj, cin, r4, c4) -> 256, with x/255 folded into the
    # weight; then block-diagonal over the 4 output parities (r_h, r_w).
    w1 = raw["c1_w"].reshape(32, 4, 2, 4, 2, 4).transpose(2, 4, 1, 3, 5, 0)
    w1 = (w1.reshape(256, 32) * (1.0 / 255.0)).astype(f32)
    w1bd = jnp.zeros((1024, 128), f32)
    for p in range(4):
        w1bd = w1bd.at[p * 256:(p + 1) * 256, p * 32:(p + 1) * 32].set(w1)
    b1 = jnp.tile(raw["c1_b"], 4).reshape(1, 128)

    # conv2: 4 parity groups g = (a, c); rows within a group are (r_h, r_w, cin),
    # matching z1's lane order, for taps (kh, kw) = (2a + r_h, 2c + r_w).
    w2 = raw["c2_w"].reshape(64, 32, 2, 2, 2, 2).transpose(2, 4, 3, 5, 1, 0)
    w2 = w2.reshape(512, 64)

    # conv3: rows (kh, kw, cin).
    w3 = raw["c3_w"].transpose(2, 3, 1, 0).reshape(576, 64)

    # fc: PyTorch flattens (c, h, w); kernel accumulates per (h, w) position.
    wf = raw["fc_w"].reshape(512, 64, 4, 4).transpose(2, 3, 1, 0).reshape(1024, 512)

    # heads fused along N and zero-padded to 128 lanes.
    wh = jnp.zeros((512, 128), f32)
    wh = wh.at[:, :a_dim].set(raw["pol_w"].T)
    wh = wh.at[:, a_dim:a_dim + 1].set(raw["ve_w"].T)
    wh = wh.at[:, a_dim + 1:a_dim + 2].set(raw["vi_w"].T)
    bh = jnp.zeros((128,), f32)
    bh = bh.at[:a_dim].set(raw["pol_b"])
    bh = bh.at[a_dim].set(raw["ve_b"][0])
    bh = bh.at[a_dim + 1].set(raw["vi_b"][0])

    return {
        "w1": w1bd.astype(bf16), "b1": b1.astype(f32),
        "w2": w2.astype(bf16),   "b2": raw["c2_b"].reshape(1, 64).astype(f32),
        "w3": w3.astype(bf16),   "b3": raw["c3_b"].reshape(1, 64).astype(f32),
        "wf": wf.astype(bf16),   "bf": raw["fc_b"].reshape(1, 512).astype(f32),
        "wh": wh.astype(bf16),   "bh": bh.reshape(1, 128).astype(f32),
    }


# ----------------------------------------------------------------------------
# Forward: bf16 host-side im2col (static slices/reshapes only) + one fused,
# batch-tiled Pallas kernel.
# ----------------------------------------------------------------------------
@functools.partial(jax.jit, static_argnames=("action_dim", "block_b"))
def policy_forward(prep, x, *, action_dim, block_b=16):
    """x: (B, 4, 60, 60) NCHW uint8 frames -> (logits, value_ext, value_int)."""
    B, C, H, W = x.shape
    assert (C, H, W) == (4, 60, 60), "Linear(1024, 512) implies 4x60x60 inputs"
    assert block_b % 8 == 0
    tb = block_b
    nb = -(-B // tb)
    bp = nb * tb

    # ---- host-side (XLA) glue: bf16, no gathers ---------------------------
    xf = x.astype(jnp.bfloat16)                       # /255 folded into w1
    if bp != B:
        xf = jnp.pad(xf, ((0, bp - B), (0, 0), (0, 0), (0, 0)))
    # 4x4-block decomposition: feature = (cin, r4, c4).
    xb = xf.reshape(bp, 4, 15, 4, 15, 4).transpose(0, 2, 4, 1, 3, 5)
    xb = xb.reshape(bp, 15, 15, 64)
    # Undupped conv1 im2col from static slices + concat: feat (di, dj, cin, r4, c4).
    col = jnp.concatenate(
        [xb[:, 0:14, 0:14, :], xb[:, 0:14, 1:15, :],
         xb[:, 1:15, 0:14, :], xb[:, 1:15, 1:15, :]], axis=-1)    # (bp,14,14,256)
    # Parity-pack (h1, w1) = (2*q_h + r_h, 2*q_w + r_w): per batch tile the rows
    # are (q_h, q_w, b) [b innermost -> TB-aligned slices], lanes (r_h, r_w, 256).
    col = col.reshape(nb, tb, 7, 2, 7, 2, 256).transpose(0, 2, 4, 1, 3, 5, 6)
    col = col.reshape(nb * 49 * tb, 1024)

    args = (col, prep["w1"], prep["b1"], prep["w2"], prep["b2"],
            prep["w3"], prep["b3"], prep["wf"], prep["bf"],
            prep["wh"], prep["bh"])
    in_specs = [pl.BlockSpec((49 * tb, 1024), lambda i: (i, 0))]
    in_specs += [pl.BlockSpec(a.shape, lambda i: (0, 0)) for a in args[1:]]

    out = pl.pallas_call(
        functools.partial(_policy_kernel, tb=tb),
        out_shape=jax.ShapeDtypeStruct((bp, 128), jnp.float32),
        grid=(nb,),
        in_specs=in_specs,
        out_specs=pl.BlockSpec((tb, 128), lambda i: (i, 0)),
        compiler_params=pltpu.CompilerParams(
            dimension_semantics=("parallel",),          # megacore split on v7x
            vmem_limit_bytes=32 * 1024 * 1024),          # actual use ~8 MiB
    )(*args)

    logits = out[:B, :action_dim]
    value_ext = out[:B, action_dim:action_dim + 1]
    value_int = out[:B, action_dim + 1:action_dim + 2]
    return logits, value_ext, value_int


# ----------------------------------------------------------------------------
# Synthetic parameters in PyTorch nn.Module layout + plain-JAX reference.
# ----------------------------------------------------------------------------
def init_params(key, action_dim=4):
    def w(k, shape, fan_in):
        return jnp.sqrt(2.0 / fan_in) * jax.random.normal(k, shape, dtype=jnp.float32)

    def bias(k, shape):
        return 0.1 * jax.random.normal(k, shape, dtype=jnp.float32)

    ks = jax.random.split(key, 14)
    return {
        "c1_w": w(ks[0], (32, 4, 8, 8), 4 * 8 * 8),   "c1_b": bias(ks[1], (32,)),
        "c2_w": w(ks[2], (64, 32, 4, 4), 32 * 4 * 4), "c2_b": bias(ks[3], (64,)),
        "c3_w": w(ks[4], (64, 64, 3, 3), 64 * 3 * 3), "c3_b": bias(ks[5], (64,)),
        "fc_w": w(ks[6], (512, 1024), 1024),          "fc_b": bias(ks[7], (512,)),
        "pol_w": w(ks[8], (action_dim, 512), 512),    "pol_b": bias(ks[9], (action_dim,)),
        "ve_w": w(ks[10], (1, 512), 512),             "ve_b": bias(ks[11], (1,)),
        "vi_w": w(ks[12], (1, 512), 512),             "vi_b": bias(ks[13], (1,)),
    }


def _reference_forward(raw, x):
    """Plain-JAX (XLA conv, f32) reference with the exact PyTorch semantics."""
    dn = ("NCHW", "OIHW", "NCHW")
    y = x.astype(jnp.float32) / 255.0
    y = jax.lax.conv_general_dilated(y, raw["c1_w"], (4, 4), "VALID",
                                     dimension_numbers=dn)
    y = jnp.maximum(y + raw["c1_b"][None, :, None, None], 0.0)
    y = jax.lax.conv_general_dilated(y, raw["c2_w"], (2, 2), "VALID",
                                     dimension_numbers=dn)
    y = jnp.maximum(y + raw["c2_b"][None, :, None, None], 0.0)
    y = jax.lax.conv_general_dilated(y, raw["c3_w"], (1, 1), "VALID",
                                     dimension_numbers=dn)
    y = jnp.maximum(y + raw["c3_b"][None, :, None, None], 0.0)
    feat = y.reshape(y.shape[0], -1)                              # NCHW flatten
    feat = jnp.maximum(feat @ raw["fc_w"].T + raw["fc_b"], 0.0)
    logits = feat @ raw["pol_w"].T + raw["pol_b"]
    value_ext = feat @ raw["ve_w"].T + raw["ve_b"]
    value_int = feat @ raw["vi_w"].T + raw["vi_b"]
    return logits, value_ext, value_int


if __name__ == "__main__":
    key = jax.random.PRNGKey(0)
    pkey, xkey = jax.random.split(key)

    ACTION_DIM = 4
    raw = init_params(pkey, action_dim=ACTION_DIM)
    prep = prepare_params(raw)             # one-time weight repack, outside jit

    # Atari-style uint8 NCHW frames; 60x60 is what Linear(1024, 512) implies.
    x = jax.random.randint(xkey, (2, 4, 60, 60), 0, 256,
                           dtype=jnp.int32).astype(jnp.uint8)

    logits, value_ext, value_int = policy_forward(prep, x, action_dim=ACTION_DIM)
    jax.block_until_ready((logits, value_ext, value_int))

    assert logits.shape == (2, ACTION_DIM) and logits.dtype == jnp.float32
    assert value_ext.shape == (2, 1) and value_int.shape == (2, 1)

    # Semantics check vs. the f32 reference (bf16 matmul inputs/weights with
    # f32 accumulation => ~1e-2 relative error budget).
    ref_logits, ref_ve, ref_vi = _reference_forward(raw, x)
    np.testing.assert_allclose(np.asarray(logits), np.asarray(ref_logits),
                               rtol=0.1, atol=0.15)
    np.testing.assert_allclose(np.asarray(value_ext), np.asarray(ref_ve),
                               rtol=0.1, atol=0.15)
    np.testing.assert_allclose(np.asarray(value_int), np.asarray(ref_vi),
                               rtol=0.1, atol=0.15)
    print("KERNEL_OK")
</pallas_src>

<mosaic_0001>
module attributes {stable_mosaic.version = 11 : i64} {
  func.func @_policy_kernel(%arg0: i32, %arg1: memref<784x1024xbf16, #tpu.memory_space<vmem>>, %arg2: memref<1024x128xbf16, #tpu.memory_space<vmem>>, %arg3: memref<1x128xf32, #tpu.memory_space<vmem>>, %arg4: memref<512x64xbf16, #tpu.memory_space<vmem>>, %arg5: memref<1x64xf32, #tpu.memory_space<vmem>>, %arg6: memref<576x64xbf16, #tpu.memory_space<vmem>>, %arg7: memref<1x64xf32, #tpu.memory_space<vmem>>, %arg8: memref<1024x512xbf16, #tpu.memory_space<vmem>>, %arg9: memref<1x512xf32, #tpu.memory_space<vmem>>, %arg10: memref<512x128xbf16, #tpu.memory_space<vmem>>, %arg11: memref<1x128xf32, #tpu.memory_space<vmem>>, %arg12: memref<16x128xf32, #tpu.memory_space<vmem>>) attributes {dimension_semantics = [#tpu.dimension_semantics<parallel>], iteration_bounds = array<i64: 1>, scalar_prefetch = 0 : i64, scratch_operands = 0 : i64, tpu.core_type = #tpu.core_type<tc>, window_params = [{transform_indices = @transform_0, window_bounds = array<i64: 784, 1024>}, {pipeline_mode = #tpu.pipeline_mode<synchronous>, transform_indices = @transform_1, window_bounds = array<i64: 1024, 128>}, {pipeline_mode = #tpu.pipeline_mode<synchronous>, transform_indices = @transform_2, window_bounds = array<i64: 1, 128>}, {pipeline_mode = #tpu.pipeline_mode<synchronous>, transform_indices = @transform_3, window_bounds = array<i64: 512, 64>}, {pipeline_mode = #tpu.pipeline_mode<synchronous>, transform_indices = @transform_4, window_bounds = array<i64: 1, 64>}, {pipeline_mode = #tpu.pipeline_mode<synchronous>, transform_indices = @transform_5, window_bounds = array<i64: 576, 64>}, {pipeline_mode = #tpu.pipeline_mode<synchronous>, transform_indices = @transform_6, window_bounds = array<i64: 1, 64>}, {pipeline_mode = #tpu.pipeline_mode<synchronous>, transform_indices = @transform_7, window_bounds = array<i64: 1024, 512>}, {pipeline_mode = #tpu.pipeline_mode<synchronous>, transform_indices = @transform_8, window_bounds = array<i64: 1, 512>}, {pipeline_mode = #tpu.pipeline_mode<synchronous>, transform_indices = @transform_9, window_bounds = array<i64: 512, 128>}, {pipeline_mode = #tpu.pipeline_mode<synchronous>, transform_indices = @transform_10, window_bounds = array<i64: 1, 128>}, {transform_indices = @transform_11, window_bounds = array<i64: 16, 128>}]} {
    %c0 = arith.constant 0 : index
    %c0_0 = arith.constant 0 : index
    %0 = vector.load %arg1[%c0, %c0_0] : memref<784x1024xbf16, #tpu.memory_space<vmem>>, vector<784x1024xbf16>
    %c0_1 = arith.constant 0 : index
    %c0_2 = arith.constant 0 : index
    %1 = vector.load %arg2[%c0_1, %c0_2] : memref<1024x128xbf16, #tpu.memory_space<vmem>>, vector<1024x128xbf16>
    %cst = arith.constant dense<0.000000e+00> : vector<784x128xf32>
    %2 = tpu.matmul %0, %1, %cst {dimension_numbers = #tpu.dot_dimension_numbers<[1], [0], [0], [1], [0, 0, 1, 1], [], []>} : vector<784x1024xbf16>, vector<1024x128xbf16>, vector<784x128xf32> -> vector<784x128xf32>
    %c0_3 = arith.constant 0 : index
    %c0_4 = arith.constant 0 : index
    %3 = vector.load %arg3[%c0_3, %c0_4] : memref<1x128xf32, #tpu.memory_space<vmem>>, vector<1x128xf32>
    %4 = vector.broadcast %3 : vector<1x128xf32> to vector<784x128xf32>
    %5 = arith.addf %2, %4 : vector<784x128xf32>
    %cst_5 = arith.constant 0.000000e+00 : f32
    %6 = vector.broadcast %cst_5 : f32 to vector<784x128xf32>
    %7 = arith.maximumf %5, %6 : vector<784x128xf32>
    %8 = arith.truncf %7 : vector<784x128xf32> to vector<784x128xbf16>
    %9 = vector.extract_strided_slice %8 {offsets = [0, 0], sizes = [656, 128], strides = [1, 1]} : vector<784x128xbf16> to vector<656x128xbf16>
    %c0_6 = arith.constant 0 : index
    %c0_7 = arith.constant 0 : index
    %10 = vector.load %arg4[%c0_6, %c0_7] : memref<512x64xbf16, #tpu.memory_space<vmem>>, vector<128x64xbf16>
    %cst_8 = arith.constant dense<0.000000e+00> : vector<656x64xf32>
    %11 = tpu.matmul %9, %10, %cst_8 {dimension_numbers = #tpu.dot_dimension_numbers<[1], [0], [0], [1], [0, 0, 1, 1], [], []>} : vector<656x128xbf16>, vector<128x64xbf16>, vector<656x64xf32> -> vector<656x64xf32>
    %12 = vector.extract_strided_slice %8 {offsets = [16, 0], sizes = [656, 128], strides = [1, 1]} : vector<784x128xbf16> to vector<656x128xbf16>
    %c128 = arith.constant 128 : index
    %c0_9 = arith.constant 0 : index
    %13 = vector.load %arg4[%c128, %c0_9] : memref<512x64xbf16, #tpu.memory_space<vmem>>, vector<128x64xbf16>
    %cst_10 = arith.constant dense<0.000000e+00> : vector<656x64xf32>
    %14 = tpu.matmul %12, %13, %cst_10 {dimension_numbers = #tpu.dot_dimension_numbers<[1], [0], [0], [1], [0, 0, 1, 1], [], []>} : vector<656x128xbf16>, vector<128x64xbf16>, vector<656x64xf32> -> vector<656x64xf32>
    %15 = arith.addf %11, %14 : vector<656x64xf32>
    %16 = vector.extract_strided_slice %8 {offsets = [112, 0], sizes = [656, 128], strides = [1, 1]} : vector<784x128xbf16> to vector<656x128xbf16>
    %c256 = arith.constant 256 : index
    %c0_11 = arith.constant 0 : index
    %17 = vector.load %arg4[%c256, %c0_11] : memref<512x64xbf16, #tpu.memory_space<vmem>>, vector<128x64xbf16>
    %cst_12 = arith.constant dense<0.000000e+00> : vector<656x64xf32>
    %18 = tpu.matmul %16, %17, %cst_12 {dimension_numbers = #tpu.dot_dimension_numbers<[1], [0], [0], [1], [0, 0, 1, 1], [], []>} : vector<656x128xbf16>, vector<128x64xbf16>, vector<656x64xf32> -> vector<656x64xf32>
    %19 = arith.addf %15, %18 : vector<656x64xf32>
    %20 = vector.extract_strided_slice %8 {offsets = [128, 0], sizes = [656, 128], strides = [1, 1]} : vector<784x128xbf16> to vector<656x128xbf16>
    %c384 = arith.constant 384 : index
    %c0_13 = arith.constant 0 : index
    %21 = vector.load %arg4[%c384, %c0_13] : memref<512x64xbf16, #tpu.memory_space<vmem>>, vector<128x64xbf16>
    %cst_14 = arith.constant dense<0.000000e+00> : vector<656x64xf32>
    %22 = tpu.matmul %20, %21, %cst_14 {dimension_numbers = #tpu.dot_dimension_numbers<[1], [0], [0], [1], [0, 0, 1, 1], [], []>} : vector<656x128xbf16>, vector<128x64xbf16>, vector<656x64xf32> -> vector<656x64xf32>
    %23 = arith.addf %19, %22 : vector<656x64xf32>
    %c0_15 = arith.constant 0 : index
    %c0_16 = arith.constant 0 : index
    %24 = vector.load %arg5[%c0_15, %c0_16] : memref<1x64xf32, #tpu.memory_space<vmem>>, vector<1x64xf32>
    %25 = vector.broadcast %24 : vector<1x64xf32> to vector<656x64xf32>
    %26 = arith.addf %23, %25 : vector<656x64xf32>
    %cst_17 = arith.constant 0.000000e+00 : f32
    %27 = vector.broadcast %cst_17 : f32 to vector<656x64xf32>
    %28 = arith.maximumf %26, %27 : vector<656x64xf32>
    %29 = arith.truncf %28 : vector<656x64xf32> to vector<656x64xbf16>
    %30 = vector.extract_strided_slice %29 {offsets = [0, 0], sizes = [400, 64], strides = [1, 1]} : vector<656x64xbf16> to vector<400x64xbf16>
    %c0_18 = arith.constant 0 : index
    %c0_19 = arith.constant 0 : index
    %31 = vector.load %arg6[%c0_18, %c0_19] : memref<576x64xbf16, #tpu.memory_space<vmem>>, vector<64x64xbf16>
    %cst_20 = arith.constant dense<0.000000e+00> : vector<400x64xf32>
    %32 = tpu.matmul %30, %31, %cst_20 {dimension_numbers = #tpu.dot_dimension_numbers<[1], [0], [0], [1], [0, 0, 1, 1], [], []>} : vector<400x64xbf16>, vector<64x64xbf16>, vector<400x64xf32> -> vector<400x64xf32>
    %33 = vector.extract_strided_slice %29 {offsets = [16, 0], sizes = [400, 64], strides = [1, 1]} : vector<656x64xbf16> to vector<400x64xbf16>
    %c64 = arith.constant 64 : index
    %c0_21 = arith.constant 0 : index
    %34 = vector.load %arg6[%c64, %c0_21] : memref<576x64xbf16, #tpu.memory_space<vmem>>, vector<64x64xbf16>
    %cst_22 = arith.constant dense<0.000000e+00> : vector<400x64xf32>
    %35 = tpu.matmul %33, %34, %cst_22 {dimension_numbers = #tpu.dot_dimension_numbers<[1], [0], [0], [1], [0, 0, 1, 1], [], []>} : vector<400x64xbf16>, vector<64x64xbf16>, vector<400x64xf32> -> vector<400x64xf32>
    %36 = arith.addf %32, %35 : vector<400x64xf32>
    %37 = vector.extract_strided_slice %29 {offsets = [32, 0], sizes = [400, 64], strides = [1, 1]} : vector<656x64xbf16> to vector<400x64xbf16>
    %c128_23 = arith.constant 128 : index
    %c0_24 = arith.constant 0 : index
    %38 = vector.load %arg6[%c128_23, %c0_24] : memref<576x64xbf16, #tpu.memory_space<vmem>>, vector<64x64xbf16>
    %cst_25 = arith.constant dense<0.000000e+00> : vector<400x64xf32>
    %39 = tpu.matmul %37, %38, %cst_25 {dimension_numbers = #tpu.dot_dimension_numbers<[1], [0], [0], [1], [0, 0, 1, 1], [], []>} : vector<400x64xbf16>, vector<64x64xbf16>, vector<400x64xf32> -> vector<400x64xf32>
    %40 = arith.addf %36, %39 : vector<400x64xf32>
    %41 = vector.extract_strided_slice %29 {offsets = [112, 0], sizes = [400, 64], strides = [1, 1]} : vector<656x64xbf16> to vector<400x64xbf16>
    %c192 = arith.constant 192 : index
    %c0_26 = arith.constant 0 : index
    %42 = vector.load %arg6[%c192, %c0_26] : memref<576x64xbf16, #tpu.memory_space<vmem>>, vector<64x64xbf16>
    %cst_27 = arith.constant dense<0.000000e+00> : vector<400x64xf32>
    %43 = tpu.matmul %41, %42, %cst_27 {dimension_numbers = #tpu.dot_dimension_numbers<[1], [0], [0], [1], [0, 0, 1, 1], [], []>} : vector<400x64xbf16>, vector<64x64xbf16>, vector<400x64xf32> -> vector<400x64xf32>
    %44 = arith.addf %40, %43 : vector<400x64xf32>
    %45 = vector.extract_strided_slice %29 {offsets = [128, 0], sizes = [400, 64], strides = [1, 1]} : vector<656x64xbf16> to vector<400x64xbf16>
    %c256_28 = arith.constant 256 : index
    %c0_29 = arith.constant 0 : index
    %46 = vector.load %arg6[%c256_28, %c0_29] : memref<576x64xbf16, #tpu.memory_space<vmem>>, vector<64x64xbf16>
    %cst_30 = arith.constant dense<0.000000e+00> : vector<400x64xf32>
    %47 = tpu.matmul %45, %46, %cst_30 {dimension_numbers = #tpu.dot_dimension_numbers<[1], [0], [0], [1], [0, 0, 1, 1], [], []>} : vector<400x64xbf16>, vector<64x64xbf16>, vector<400x64xf32> -> vector<400x64xf32>
    %48 = arith.addf %44, %47 : vector<400x64xf32>
    %49 = vector.extract_strided_slice %29 {offsets = [144, 0], sizes = [400, 64], strides = [1, 1]} : vector<656x64xbf16> to vector<400x64xbf16>
    %c320 = arith.constant 320 : index
    %c0_31 = arith.constant 0 : index
    %50 = vector.load %arg6[%c320, %c0_31] : memref<576x64xbf16, #tpu.memory_space<vmem>>, vector<64x64xbf16>
    %cst_32 = arith.constant dense<0.000000e+00> : vector<400x64xf32>
    %51 = tpu.matmul %49, %50, %cst_32 {dimension_numbers = #tpu.dot_dimension_numbers<[1], [0], [0], [1], [0, 0, 1, 1], [], []>} : vector<400x64xbf16>, vector<64x64xbf16>, vector<400x64xf32> -> vector<400x64xf32>
    %52 = arith.addf %48, %51 : vector<400x64xf32>
    %53 = vector.extract_strided_slice %29 {offsets = [224, 0], sizes = [400, 64], strides = [1, 1]} : vector<656x64xbf16> to vector<400x64xbf16>
    %c384_33 = arith.constant 384 : index
    %c0_34 = arith.constant 0 : index
    %54 = vector.load %arg6[%c384_33, %c0_34] : memref<576x64xbf16, #tpu.memory_space<vmem>>, vector<64x64xbf16>
    %cst_35 = arith.constant dense<0.000000e+00> : vector<400x64xf32>
    %55 = tpu.matmul %53, %54, %cst_35 {dimension_numbers = #tpu.dot_dimension_numbers<[1], [0], [0], [1], [0, 0, 1, 1], [], []>} : vector<400x64xbf16>, vector<64x64xbf16>, vector<400x64xf32> -> vector<400x64xf32>
    %56 = arith.addf %52, %55 : vector<400x64xf32>
    %57 = vector.extract_strided_slice %29 {offsets = [240, 0], sizes = [400, 64], strides = [1, 1]} : vector<656x64xbf16> to vector<400x64xbf16>
    %c448 = arith.constant 448 : index
    %c0_36 = arith.constant 0 : index
    %58 = vector.load %arg6[%c448, %c0_36] : memref<576x64xbf16, #tpu.memory_space<vmem>>, vector<64x64xbf16>
    %cst_37 = arith.constant dense<0.000000e+00> : vector<400x64xf32>
    %59 = tpu.matmul %57, %58, %cst_37 {dimension_numbers = #tpu.dot_dimension_numbers<[1], [0], [0], [1], [0, 0, 1, 1], [], []>} : vector<400x64xbf16>, vector<64x64xbf16>, vector<400x64xf32> -> vector<400x64xf32>
    %60 = arith.addf %56, %59 : vector<400x64xf32>
    %61 = vector.extract_strided_slice %29 {offsets = [256, 0], sizes = [400, 64], strides = [1, 1]} : vector<656x64xbf16> to vector<400x64xbf16>
    %c512 = arith.constant 512 : index
    %c0_38 = arith.constant 0 : index
    %62 = vector.load %arg6[%c512, %c0_38] : memref<576x64xbf16, #tpu.memory_space<vmem>>, vector<64x64xbf16>
    %cst_39 = arith.constant dense<0.000000e+00> : vector<400x64xf32>
    %63 = tpu.matmul %61, %62, %cst_39 {dimension_numbers = #tpu.dot_dimension_numbers<[1], [0], [0], [1], [0, 0, 1, 1], [], []>} : vector<400x64xbf16>, vector<64x64xbf16>, vector<400x64xf32> -> vector<400x64xf32>
    %64 = arith.addf %60, %63 : vector<400x64xf32>
    %c0_40 = arith.constant 0 : index
    %c0_41 = arith.constant 0 : index
    %65 = vector.load %arg7[%c0_40, %c0_41] : memref<1x64xf32, #tpu.memory_space<vmem>>, vector<1x64xf32>
    %66 = vector.broadcast %65 : vector<1x64xf32> to vector<400x64xf32>
    %67 = arith.addf %64, %66 : vector<400x64xf32>
    %cst_42 = arith.constant 0.000000e+00 : f32
    %68 = vector.broadcast %cst_42 : f32 to vector<400x64xf32>
    %69 = arith.maximumf %67, %68 : vector<400x64xf32>
    %70 = arith.truncf %69 : vector<400x64xf32> to vector<400x64xbf16>
    %71 = vector.extract_strided_slice %70 {offsets = [0, 0], sizes = [16, 64], strides = [1, 1]} : vector<400x64xbf16> to vector<16x64xbf16>
    %c0_43 = arith.constant 0 : index
    %c0_44 = arith.constant 0 : index
    %72 = vector.load %arg8[%c0_43, %c0_44] : memref<1024x512xbf16, #tpu.memory_space<vmem>>, vector<64x512xbf16>
    %cst_45 = arith.constant dense<0.000000e+00> : vector<16x512xf32>
    %73 = tpu.matmul %71, %72, %cst_45 {dimension_numbers = #tpu.dot_dimension_numbers<[1], [0], [0], [1], [0, 0, 1, 1], [], []>} : vector<16x64xbf16>, vector<64x512xbf16>, vector<16x512xf32> -> vector<16x512xf32>
    %74 = vector.extract_strided_slice %70 {offsets = [16, 0], sizes = [16, 64], strides = [1, 1]} : vector<400x64xbf16> to vector<16x64xbf16>
    %c64_46 = arith.constant 64 : index
    %c0_47 = arith.constant 0 : index
    %75 = vector.load %arg8[%c64_46, %c0_47] : memref<1024x512xbf16, #tpu.memory_space<vmem>>, vector<64x512xbf16>
    %cst_48 = arith.constant dense<0.000000e+00> : vector<16x512xf32>
    %76 = tpu.matmul %74, %75, %cst_48 {dimension_numbers = #tpu.dot_dimension_numbers<[1], [0], [0], [1], [0, 0, 1, 1], [], []>} : vector<16x64xbf16>, vector<64x512xbf16>, vector<16x512xf32> -> vector<16x512xf32>
    %77 = arith.addf %73, %76 : vector<16x512xf32>
    %78 = vector.extract_strided_slice %70 {offsets = [32, 0], sizes = [16, 64], strides = [1, 1]} : vector<400x64xbf16> to vector<16x64xbf16>
    %c128_49 = arith.constant 128 : index
    %c0_50 = arith.constant 0 : index
    %79 = vector.load %arg8[%c128_49, %c0_50] : memref<1024x512xbf16, #tpu.memory_space<vmem>>, vector<64x512xbf16>
    %cst_51 = arith.constant dense<0.000000e+00> : vector<16x512xf32>
    %80 = tpu.matmul %78, %79, %cst_51 {dimension_numbers = #tpu.dot_dimension_numbers<[1], [0], [0], [1], [0, 0, 1, 1], [], []>} : vector<16x64xbf16>, vector<64x512xbf16>, vector<16x512xf32> -> vector<16x512xf32>
    %81 = arith.addf %77, %80 : vector<16x512xf32>
    %82 = vector.extract_strided_slice %70 {offsets = [48, 0], sizes = [16, 64], strides = [1, 1]} : vector<400x64xbf16> to vector<16x64xbf16>
    %c192_52 = arith.constant 192 : index
    %c0_53 = arith.constant 0 : index
    %83 = vector.load %arg8[%c192_52, %c0_53] : memref<1024x512xbf16, #tpu.memory_space<vmem>>, vector<64x512xbf16>
    %cst_54 = arith.constant dense<0.000000e+00> : vector<16x512xf32>
    %84 = tpu.matmul %82, %83, %cst_54 {dimension_numbers = #tpu.dot_dimension_numbers<[1], [0], [0], [1], [0, 0, 1, 1], [], []>} : vector<16x64xbf16>, vector<64x512xbf16>, vector<16x512xf32> -> vector<16x512xf32>
    %85 = arith.addf %81, %84 : vector<16x512xf32>
    %86 = vector.extract_strided_slice %70 {offsets = [112, 0], sizes = [16, 64], strides = [1, 1]} : vector<400x64xbf16> to vector<16x64xbf16>
    %c256_55 = arith.constant 256 : index
    %c0_56 = arith.constant 0 : index
    %87 = vector.load %arg8[%c256_55, %c0_56] : memref<1024x512xbf16, #tpu.memory_space<vmem>>, vector<64x512xbf16>
    %cst_57 = arith.constant dense<0.000000e+00> : vector<16x512xf32>
    %88 = tpu.matmul %86, %87, %cst_57 {dimension_numbers = #tpu.dot_dimension_numbers<[1], [0], [0], [1], [0, 0, 1, 1], [], []>} : vector<16x64xbf16>, vector<64x512xbf16>, vector<16x512xf32> -> vector<16x512xf32>
    %89 = arith.addf %85, %88 : vector<16x512xf32>
    %90 = vector.extract_strided_slice %70 {offsets = [128, 0], sizes = [16, 64], strides = [1, 1]} : vector<400x64xbf16> to vector<16x64xbf16>
    %c320_58 = arith.constant 320 : index
    %c0_59 = arith.constant 0 : index
    %91 = vector.load %arg8[%c320_58, %c0_59] : memref<1024x512xbf16, #tpu.memory_space<vmem>>, vector<64x512xbf16>
    %cst_60 = arith.constant dense<0.000000e+00> : vector<16x512xf32>
    %92 = tpu.matmul %90, %91, %cst_60 {dimension_numbers = #tpu.dot_dimension_numbers<[1], [0], [0], [1], [0, 0, 1, 1], [], []>} : vector<16x64xbf16>, vector<64x512xbf16>, vector<16x512xf32> -> vector<16x512xf32>
    %93 = arith.addf %89, %92 : vector<16x512xf32>
    %94 = vector.extract_strided_slice %70 {offsets = [144, 0], sizes = [16, 64], strides = [1, 1]} : vector<400x64xbf16> to vector<16x64xbf16>
    %c384_61 = arith.constant 384 : index
    %c0_62 = arith.constant 0 : index
    %95 = vector.load %arg8[%c384_61, %c0_62] : memref<1024x512xbf16, #tpu.memory_space<vmem>>, vector<64x512xbf16>
    %cst_63 = arith.constant dense<0.000000e+00> : vector<16x512xf32>
    %96 = tpu.matmul %94, %95, %cst_63 {dimension_numbers = #tpu.dot_dimension_numbers<[1], [0], [0], [1], [0, 0, 1, 1], [], []>} : vector<16x64xbf16>, vector<64x512xbf16>, vector<16x512xf32> -> vector<16x512xf32>
    %97 = arith.addf %93, %96 : vector<16x512xf32>
    %98 = vector.extract_strided_slice %70 {offsets = [160, 0], sizes = [16, 64], strides = [1, 1]} : vector<400x64xbf16> to vector<16x64xbf16>
    %c448_64 = arith.constant 448 : index
    %c0_65 = arith.constant 0 : index
    %99 = vector.load %arg8[%c448_64, %c0_65] : memref<1024x512xbf16, #tpu.memory_space<vmem>>, vector<64x512xbf16>
    %cst_66 = arith.constant dense<0.000000e+00> : vector<16x512xf32>
    %100 = tpu.matmul %98, %99, %cst_66 {dimension_numbers = #tpu.dot_dimension_numbers<[1], [0], [0], [1], [0, 0, 1, 1], [], []>} : vector<16x64xbf16>, vector<64x512xbf16>, vector<16x512xf32> -> vector<16x512xf32>
    %101 = arith.addf %97, %100 : vector<16x512xf32>
    %102 = vector.extract_strided_slice %70 {offsets = [224, 0], sizes = [16, 64], strides = [1, 1]} : vector<400x64xbf16> to vector<16x64xbf16>
    %c512_67 = arith.constant 512 : index
    %c0_68 = arith.constant 0 : index
    %103 = vector.load %arg8[%c512_67, %c0_68] : memref<1024x512xbf16, #tpu.memory_space<vmem>>, vector<64x512xbf16>
    %cst_69 = arith.constant dense<0.000000e+00> : vector<16x512xf32>
    %104 = tpu.matmul %102, %103, %cst_69 {dimension_numbers = #tpu.dot_dimension_numbers<[1], [0], [0], [1], [0, 0, 1, 1], [], []>} : vector<16x64xbf16>, vector<64x512xbf16>, vector<16x512xf32> -> vector<16x512xf32>
    %105 = arith.addf %101, %104 : vector<16x512xf32>
    %106 = vector.extract_strided_slice %70 {offsets = [240, 0], sizes = [16, 64], strides = [1, 1]} : vector<400x64xbf16> to vector<16x64xbf16>
    %c576 = arith.constant 576 : index
    %c0_70 = arith.constant 0 : index
    %107 = vector.load %arg8[%c576, %c0_70] : memref<1024x512xbf16, #tpu.memory_space<vmem>>, vector<64x512xbf16>
    %cst_71 = arith.constant dense<0.000000e+00> : vector<16x512xf32>
    %108 = tpu.matmul %106, %107, %cst_71 {dimension_numbers = #tpu.dot_dimension_numbers<[1], [0], [0], [1], [0, 0, 1, 1], [], []>} : vector<16x64xbf16>, vector<64x512xbf16>, vector<16x512xf32> -> vector<16x512xf32>
    %109 = arith.addf %105, %108 : vector<16x512xf32>
    %110 = vector.extract_strided_slice %70 {offsets = [256, 0], sizes = [16, 64], strides = [1, 1]} : vector<400x64xbf16> to vector<16x64xbf16>
    %c640 = arith.constant 640 : index
    %c0_72 = arith.constant 0 : index
    %111 = vector.load %arg8[%c640, %c0_72] : memref<1024x512xbf16, #tpu.memory_space<vmem>>, vector<64x512xbf16>
    %cst_73 = arith.constant dense<0.000000e+00> : vector<16x512xf32>
    %112 = tpu.matmul %110, %111, %cst_73 {dimension_numbers = #tpu.dot_dimension_numbers<[1], [0], [0], [1], [0, 0, 1, 1], [], []>} : vector<16x64xbf16>, vector<64x512xbf16>, vector<16x512xf32> -> vector<16x512xf32>
    %113 = arith.addf %109, %112 : vector<16x512xf32>
    %114 = vector.extract_strided_slice %70 {offsets = [272, 0], sizes = [16, 64], strides = [1, 1]} : vector<400x64xbf16> to vector<16x64xbf16>
    %c704 = arith.constant 704 : index
    %c0_74 = arith.constant 0 : index
    %115 = vector.load %arg8[%c704, %c0_74] : memref<1024x512xbf16, #tpu.memory_space<vmem>>, vector<64x512xbf16>
    %cst_75 = arith.constant dense<0.000000e+00> : vector<16x512xf32>
    %116 = tpu.matmul %114, %115, %cst_75 {dimension_numbers = #tpu.dot_dimension_numbers<[1], [0], [0], [1], [0, 0, 1, 1], [], []>} : vector<16x64xbf16>, vector<64x512xbf16>, vector<16x512xf32> -> vector<16x512xf32>
    %117 = arith.addf %113, %116 : vector<16x512xf32>
    %118 = vector.extract_strided_slice %70 {offsets = [336, 0], sizes = [16, 64], strides = [1, 1]} : vector<400x64xbf16> to vector<16x64xbf16>
    %c768 = arith.constant 768 : index
    %c0_76 = arith.constant 0 : index
    %119 = vector.load %arg8[%c768, %c0_76] : memref<1024x512xbf16, #tpu.memory_space<vmem>>, vector<64x512xbf16>
    %cst_77 = arith.constant dense<0.000000e+00> : vector<16x512xf32>
    %120 = tpu.matmul %118, %119, %cst_77 {dimension_numbers = #tpu.dot_dimension_numbers<[1], [0], [0], [1], [0, 0, 1, 1], [], []>} : vector<16x64xbf16>, vector<64x512xbf16>, vector<16x512xf32> -> vector<16x512xf32>
    %121 = arith.addf %117, %120 : vector<16x512xf32>
    %122 = vector.extract_strided_slice %70 {offsets = [352, 0], sizes = [16, 64], strides = [1, 1]} : vector<400x64xbf16> to vector<16x64xbf16>
    %c832 = arith.constant 832 : index
    %c0_78 = arith.constant 0 : index
    %123 = vector.load %arg8[%c832, %c0_78] : memref<1024x512xbf16, #tpu.memory_space<vmem>>, vector<64x512xbf16>
    %cst_79 = arith.constant dense<0.000000e+00> : vector<16x512xf32>
    %124 = tpu.matmul %122, %123, %cst_79 {dimension_numbers = #tpu.dot_dimension_numbers<[1], [0], [0], [1], [0, 0, 1, 1], [], []>} : vector<16x64xbf16>, vector<64x512xbf16>, vector<16x512xf32> -> vector<16x512xf32>
    %125 = arith.addf %121, %124 : vector<16x512xf32>
    %126 = vector.extract_strided_slice %70 {offsets = [368, 0], sizes = [16, 64], strides = [1, 1]} : vector<400x64xbf16> to vector<16x64xbf16>
    %c896 = arith.constant 896 : index
    %c0_80 = arith.constant 0 : index
    %127 = vector.load %arg8[%c896, %c0_80] : memref<1024x512xbf16, #tpu.memory_space<vmem>>, vector<64x512xbf16>
    %cst_81 = arith.constant dense<0.000000e+00> : vector<16x512xf32>
    %128 = tpu.matmul %126, %127, %cst_81 {dimension_numbers = #tpu.dot_dimension_numbers<[1], [0], [0], [1], [0, 0, 1, 1], [], []>} : vector<16x64xbf16>, vector<64x512xbf16>, vector<16x512xf32> -> vector<16x512xf32>
    %129 = arith.addf %125, %128 : vector<16x512xf32>
    %130 = vector.extract_strided_slice %70 {offsets = [384, 0], sizes = [16, 64], strides = [1, 1]} : vector<400x64xbf16> to vector<16x64xbf16>
    %c960 = arith.constant 960 : index
    %c0_82 = arith.constant 0 : index
    %131 = vector.load %arg8[%c960, %c0_82] : memref<1024x512xbf16, #tpu.memory_space<vmem>>, vector<64x512xbf16>
    %cst_83 = arith.constant dense<0.000000e+00> : vector<16x512xf32>
    %132 = tpu.matmul %130, %131, %cst_83 {dimension_numbers = #tpu.dot_dimension_numbers<[1], [0], [0], [1], [0, 0, 1, 1], [], []>} : vector<16x64xbf16>, vector<64x512xbf16>, vector<16x512xf32> -> vector<16x512xf32>
    %133 = arith.addf %129, %132 : vector<16x512xf32>
    %c0_84 = arith.constant 0 : index
    %c0_85 = arith.constant 0 : index
    %134 = vector.load %arg9[%c0_84, %c0_85] : memref<1x512xf32, #tpu.memory_space<vmem>>, vector<1x512xf32>
    %135 = vector.broadcast %134 : vector<1x512xf32> to vector<16x512xf32>
    %136 = arith.addf %133, %135 : vector<16x512xf32>
    %cst_86 = arith.constant 0.000000e+00 : f32
    %137 = vector.broadcast %cst_86 : f32 to vector<16x512xf32>
    %138 = arith.maximumf %136, %137 : vector<16x512xf32>
    %139 = arith.truncf %138 : vector<16x512xf32> to vector<16x512xbf16>
    %c0_87 = arith.constant 0 : index
    %c0_88 = arith.constant 0 : index
    %140 = vector.load %arg10[%c0_87, %c0_88] : memref<512x128xbf16, #tpu.memory_space<vmem>>, vector<512x128xbf16>
    %cst_89 = arith.constant dense<0.000000e+00> : vector<16x128xf32>
    %141 = tpu.matmul %139, %140, %cst_89 {dimension_numbers = #tpu.dot_dimension_numbers<[1], [0], [0], [1], [0, 0, 1, 1], [], []>} : vector<16x512xbf16>, vector<512x128xbf16>, vector<16x128xf32> -> vector<16x128xf32>
    %c0_90 = arith.constant 0 : index
    %c0_91 = arith.constant 0 : index
    %142 = vector.load %arg11[%c0_90, %c0_91] : memref<1x128xf32, #tpu.memory_space<vmem>>, vector<1x128xf32>
    %143 = vector.broadcast %142 : vector<1x128xf32> to vector<16x128xf32>
    %144 = arith.addf %141, %143 : vector<16x128xf32>
    %c0_92 = arith.constant 0 : index
    %c0_93 = arith.constant 0 : index
    %145 = vector.load %arg12[%c0_92, %c0_93] : memref<16x128xf32, #tpu.memory_space<vmem>>, vector<16x128xf32>
    tpu.vector_store %arg12[%c0_92, %c0_93], %144 {strides = array<i32>} : memref<16x128xf32, #tpu.memory_space<vmem>>, vector<16x128xf32>,
    return
  }
  func.func @transform_0(%arg0: i32) -> (i32, i32) {
    %c0_i32 = arith.constant 0 : i32
    %c0_i32_0 = arith.constant 0 : i32
    return %arg0, %c0_i32 : i32, i32
  }
  func.func @transform_1(%arg0: i32) -> (i32, i32) {
    %c0_i32 = arith.constant 0 : i32
    %c0_i32_0 = arith.constant 0 : i32
    %c0_i32_1 = arith.constant 0 : i32
    return %c0_i32, %c0_i32_0 : i32, i32
  }
  func.func @transform_2(%arg0: i32) -> (i32, i32) {
    %c0_i32 = arith.constant 0 : i32
    %c0_i32_0 = arith.constant 0 : i32
    %c0_i32_1 = arith.constant 0 : i32
    return %c0_i32, %c0_i32_0 : i32, i32
  }
  func.func @transform_3(%arg0: i32) -> (i32, i32) {
    %c0_i32 = arith.constant 0 : i32
    %c0_i32_0 = arith.constant 0 : i32
    %c0_i32_1 = arith.constant 0 : i32
    return %c0_i32, %c0_i32_0 : i32, i32
  }
  func.func @transform_4(%arg0: i32) -> (i32, i32) {
    %c0_i32 = arith.constant 0 : i32
    %c0_i32_0 = arith.constant 0 : i32
    %c0_i32_1 = arith.constant 0 : i32
    return %c0_i32, %c0_i32_0 : i32, i32
  }
  func.func @transform_5(%arg0: i32) -> (i32, i32) {
    %c0_i32 = arith.constant 0 : i32
    %c0_i32_0 = arith.constant 0 : i32
    %c0_i32_1 = arith.constant 0 : i32
    return %c0_i32, %c0_i32_0 : i32, i32
  }
  func.func @transform_6(%arg0: i32) -> (i32, i32) {
    %c0_i32 = arith.constant 0 : i32
    %c0_i32_0 = arith.constant 0 : i32
    %c0_i32_1 = arith.constant 0 : i32
    return %c0_i32, %c0_i32_0 : i32, i32
  }
  func.func @transform_7(%arg0: i32) -> (i32, i32) {
    %c0_i32 = arith.constant 0 : i32
    %c0_i32_0 = arith.constant 0 : i32
    %c0_i32_1 = arith.constant 0 : i32
    return %c0_i32, %c0_i32_0 : i32, i32
  }
  func.func @transform_8(%arg0: i32) -> (i32, i32) {
    %c0_i32 = arith.constant 0 : i32
    %c0_i32_0 = arith.constant 0 : i32
    %c0_i32_1 = arith.constant 0 : i32
    return %c0_i32, %c0_i32_0 : i32, i32
  }
  func.func @transform_9(%arg0: i32) -> (i32, i32) {
    %c0_i32 = arith.constant 0 : i32
    %c0_i32_0 = arith.constant 0 : i32
    %c0_i32_1 = arith.constant 0 : i32
    return %c0_i32, %c0_i32_0 : i32, i32
  }
  func.func @transform_10(%arg0: i32) -> (i32, i32) {
    %c0_i32 = arith.constant 0 : i32
    %c0_i32_0 = arith.constant 0 : i32
    %c0_i32_1 = arith.constant 0 : i32
    return %c0_i32, %c0_i32_0 : i32, i32
  }
  func.func @transform_11(%arg0: i32) -> (i32, i32) {
    %c0_i32 = arith.constant 0 : i32
    %c0_i32_0 = arith.constant 0 : i32
    return %arg0, %c0_i32 : i32, i32
  }
}

</mosaic_0001>

<llo_original>
// kernel: policy_forward.1
$region0: #{policy_forward.1}
  #allocation0 [shape = 'u32[]', space=smem, size = 0x4, offset = 0x4, fixed_abs, tag = 'smem constant byte address 0x4 - core index']
  #allocation1 [shape = 'u32[144,128]{1,0:T(1,128)}', space=vmem, size = 0x12000, scoped, tag = 'internal scratch']
  %s0 = inlined_call_operand.vmem [shape: bf16[784,1024], index: 0, kind: input, shape index: {}]
  %s1 = inlined_call_operand.vmem [shape: bf16[1024,128], index: 1, kind: input, shape index: {}]
  %s2 = inlined_call_operand.vmem [shape: f32[1,128], index: 2, kind: input, shape index: {}]
  %s3 = inlined_call_operand.vmem [shape: bf16[512,64], index: 3, kind: input, shape index: {}]
  %s4 = inlined_call_operand.vmem [shape: f32[1,64], index: 4, kind: input, shape index: {}]
  %s5 = inlined_call_operand.vmem [shape: bf16[576,64], index: 5, kind: input, shape index: {}]
  %s6 = inlined_call_operand.vmem [shape: f32[1,64], index: 6, kind: input, shape index: {}]
  %s7 = inlined_call_operand.vmem [shape: bf16[1024,512], index: 7, kind: input, shape index: {}]
  %s8 = inlined_call_operand.vmem [shape: f32[1,512], index: 8, kind: input, shape index: {}]
  %s9 = inlined_call_operand.vmem [shape: bf16[512,128], index: 9, kind: input, shape index: {}]
  %s10 = inlined_call_operand.vmem [shape: f32[1,128], index: 10, kind: input, shape index: {}]
  %s11 = inlined_call_operand.vmem [shape: f32[16,128], index: 11, kind: output, shape index: {}]
  %s12 = sld [smem:[#allocation0]]
  $region54: #{policy_forward.1} parent=0
    _
  %s14 = ssub.s32 1, %s12
  %s15 = scalar_select 0, %s14, %s12
  // Predicated region
  $region2: #{policy_forward.1} parent=0 // pred_check
    _
  $region3: #{policy_forward.1} parent=0 // pred_check_branch
    %17 = sbr.rel (0) target = $region5
  $region4: #{policy_forward.1} parent=0 // pred_region
    _
  $region5: #{policy_forward.1} parent=0 // pred_fallthru
    _
  // Predicated region
  $region6: #{policy_forward.1} parent=0 // pred_check
    _
  $region7: #{policy_forward.1} parent=0 // pred_check_branch
    %19 = sbr.rel (0) target = $region9
  $region8: #{policy_forward.1} parent=0 // pred_region
    _
  $region9: #{policy_forward.1} parent=0 // pred_fallthru
    _
  // Predicated region
  $region10: #{policy_forward.1} parent=0 // pred_check
    _
  $region11: #{policy_forward.1} parent=0 // pred_check_branch
    %21 = sbr.rel (0) target = $region13
  $region12: #{policy_forward.1} parent=0 // pred_region
    _
  $region13: #{policy_forward.1} parent=0 // pred_fallthru
    _
  // Predicated region
  $region14: #{policy_forward.1} parent=0 // pred_check
    _
  $region15: #{policy_forward.1} parent=0 // pred_check_branch
    %23 = sbr.rel (0) target = $region17
  $region16: #{policy_forward.1} parent=0 // pred_region
    _
  $region17: #{policy_forward.1} parent=0 // pred_fallthru
    _
  // Predicated region
  $region18: #{policy_forward.1} parent=0 // pred_check
    _
  $region19: #{policy_forward.1} parent=0 // pred_check_branch
    %25 = sbr.rel (0) target = $region21
  $region20: #{policy_forward.1} parent=0 // pred_region
    _
  $region21: #{policy_forward.1} parent=0 // pred_fallthru
    _
  // Predicated region
  $region22: #{policy_forward.1} parent=0 // pred_check
    _
  $region23: #{policy_forward.1} parent=0 // pred_check_branch
    %27 = sbr.rel (0) target = $region25
  $region24: #{policy_forward.1} parent=0 // pred_region
    _
  $region25: #{policy_forward.1} parent=0 // pred_fallthru
    _
  // Predicated region
  $region26: #{policy_forward.1} parent=0 // pred_check
    _
  $region27: #{policy_forward.1} parent=0 // pred_check_branch
    %29 = sbr.rel (0) target = $region29
  $region28: #{policy_forward.1} parent=0 // pred_region
    _
  $region29: #{policy_forward.1} parent=0 // pred_fallthru
    _
  // Predicated region
  $region30: #{policy_forward.1} parent=0 // pred_check
    _
  $region31: #{policy_forward.1} parent=0 // pred_check_branch
    %31 = sbr.rel (0) target = $region33
  $region32: #{policy_forward.1} parent=0 // pred_region
    _
  $region33: #{policy_forward.1} parent=0 // pred_fallthru
    _
  // Predicated region
  $region34: #{policy_forward.1} parent=0 // pred_check
    _
  $region35: #{policy_forward.1} parent=0 // pred_check_branch
    %33 = sbr.rel (0) target = $region37
  $region36: #{policy_forward.1} parent=0 // pred_region
    _
  $region37: #{policy_forward.1} parent=0 // pred_fallthru
    _
  // Predicated region
  $region38: #{policy_forward.1} parent=0 // pred_check
    _
  $region39: #{policy_forward.1} parent=0 // pred_check_branch
    %35 = sbr.rel (0) target = $region41
  $region40: #{policy_forward.1} parent=0 // pred_region
    _
  $region41: #{policy_forward.1} parent=0 // pred_fallthru
    _
  // Predicated region
  $region42: #{policy_forward.1} parent=0 // pred_check
    _
  $region43: #{policy_forward.1} parent=0 // pred_check_branch
    %37 = sbr.rel (0) target = $region45
  $region44: #{policy_forward.1} parent=0 // pred_region
    _
  $region45: #{policy_forward.1} parent=0 // pred_fallthru
    _
  %v39 = vld [vmem:[%s0] sm:$0xff]
  %v40 = vld [vmem:[%s0 + $0x8] sm:$0xff]
  %v41 = vld [vmem:[%s0 + $0x10] sm:$0xff]
  %v42 = vld [vmem:[%s0 + $0x18] sm:$0xff]
  %v43 = vld [vmem:[%s0 + $0x20] sm:$0xff]
  %v44 = vld [vmem:[%s0 + $0x28] sm:$0xff]
  %v45 = vld [vmem:[%s0 + $0x30] sm:$0xff]
  %v46 = vld [vmem:[%s0 + $0x38] sm:$0xff]
  %v47 = vld [vmem:[%s0 + $0x40] sm:$0xff]
  %v48 = vld [vmem:[%s0 + $0x48] sm:$0xff]
  %v49 = vld [vmem:[%s0 + $0x50] sm:$0xff]
  %v50 = vld [vmem:[%s0 + $0x58] sm:$0xff]
  %v51 = vld [vmem:[%s0 + $0x60] sm:$0xff]
  %v52 = vld [vmem:[%s0 + $0x68] sm:$0xff]
  %v53 = vld [vmem:[%s0 + $0x70] sm:$0xff]
  %v54 = vld [vmem:[%s0 + $0x78] sm:$0xff]
  %v55 = vld [vmem:[%s0 + $0x80] sm:$0xff]
  %v56 = vld [vmem:[%s0 + $0x88] sm:$0xff]
  %v57 = vld [vmem:[%s0 + $0x90] sm:$0xff]
  %v58 = vld [vmem:[%s0 + $0x98] sm:$0xff]
  %v59 = vld [vmem:[%s0 + $0xa0] sm:$0xff]
  %v60 = vld [vmem:[%s0 + $0xa8] sm:$0xff]
  %v61 = vld [vmem:[%s0 + $0xb0] sm:$0xff]
  %v62 = vld [vmem:[%s0 + $0xb8] sm:$0xff]
  %v63 = vld [vmem:[%s0 + $0xc0] sm:$0xff]
  %v64 = vld [vmem:[%s0 + $0xc8] sm:$0xff]
  %v65 = vld [vmem:[%s0 + $0xd0] sm:$0xff]
  %v66 = vld [vmem:[%s0 + $0xd8] sm:$0xff]
  %v67 = vld [vmem:[%s0 + $0xe0] sm:$0xff]
  %v68 = vld [vmem:[%s0 + $0xe8] sm:$0xff]
  %v69 = vld [vmem:[%s0 + $0xf0] sm:$0xff]
  %v70 = vld [vmem:[%s0 + $0xf8] sm:$0xff]
  %v71 = vld [vmem:[%s0 + $0x100] sm:$0xff]
  %v72 = vld [vmem:[%s0 + $0x108] sm:$0xff]
  %v73 = vld [vmem:[%s0 + $0x110] sm:$0xff]
  %v74 = vld [vmem:[%s0 + $0x118] sm:$0xff]
  %v75 = vld [vmem:[%s0 + $0x120] sm:$0xff]
  %v76 = vld [vmem:[%s0 + $0x128] sm:$0xff]
  %v77 = vld [vmem:[%s0 + $0x130] sm:$0xff]
  %v78 = vld [vmem:[%s0 + $0x138] sm:$0xff]
  %v79 = vld [vmem:[%s0 + $0x140] sm:$0xff]
  %v80 = vld [vmem:[%s0 + $0x148] sm:$0xff]
  %v81 = vld [vmem:[%s0 + $0x150] sm:$0xff]
  %v82 = vld [vmem:[%s0 + $0x158] sm:$0xff]
  %v83 = vld [vmem:[%s0 + $0x160] sm:$0xff]
  %v84 = vld [vmem:[%s0 + $0x168] sm:$0xff]
  %v85 = vld [vmem:[%s0 + $0x170] sm:$0xff]
  %v86 = vld [vmem:[%s0 + $0x178] sm:$0xff]
  %v87 = vld [vmem:[%s0 + $0x180] sm:$0xff]
  %v88 = vld [vmem:[%s0 + $0x188] sm:$0xff]
  %v89 = vld [vmem:[%s0 + $0x190] sm:$0xff]
  %v90 = vld [vmem:[%s0 + $0x198] sm:$0xff]
  %v91 = vld [vmem:[%s0 + $0x1a0] sm:$0xff]
  %v92 = vld [vmem:[%s0 + $0x1a8] sm:$0xff]
  %v93 = vld [vmem:[%s0 + $0x1b0] sm:$0xff]
  %v94 = vld [vmem:[%s0 + $0x1b8] sm:$0xff]
  %v95 = vld [vmem:[%s0 + $0x1c0] sm:$0xff]
  %v96 = vld [vmem:[%s0 + $0x1c8] sm:$0xff]
  %v97 = vld [vmem:[%s0 + $0x1d0] sm:$0xff]
  %v98 = vld [vmem:[%s0 + $0x1d8] sm:$0xff]
  %v99 = vld [vmem:[%s0 + $0x1e0] sm:$0xff]
  %v100 = vld [vmem:[%s0 + $0x1e8] sm:$0xff]
  %v101 = vld [vmem:[%s0 + $0x1f0] sm:$0xff]
  %v102 = vld [vmem:[%s0 + $0x1f8] sm:$0xff]
  %v103 = vld [vmem:[%s0 + $0x200] sm:$0xff]
  %v104 = vld [vmem:[%s0 + $0x208] sm:$0xff]
  %v105 = vld [vmem:[%s0 + $0x210] sm:$0xff]
  %v106 = vld [vmem:[%s0 + $0x218] sm:$0xff]
  %v107 = vld [vmem:[%s0 + $0x220] sm:$0xff]
  %v108 = vld [vmem:[%s0 + $0x228] sm:$0xff]
  %v109 = vld [vmem:[%s0 + $0x230] sm:$0xff]
  %v110 = vld [vmem:[%s0 + $0x238] sm:$0xff]
  %v111 = vld [vmem:[%s0 + $0x240] sm:$0xff]
  %v112 = vld [vmem:[%s0 + $0x248] sm:$0xff]
  %v113 = vld [vmem:[%s0 + $0x250] sm:$0xff]
  %v114 = vld [vmem:[%s0 + $0x258] sm:$0xff]
  %v115 = vld [vmem:[%s0 + $0x260] sm:$0xff]
  %v116 = vld [vmem:[%s0 + $0x268] sm:$0xff]
  %v117 = vld [vmem:[%s0 + $0x270] sm:$0xff]
  %v118 = vld [vmem:[%s0 + $0x278] sm:$0xff]
  %v119 = vld [vmem:[%s0 + $0x280] sm:$0xff]
  %v120 = vld [vmem:[%s0 + $0x288] sm:$0xff]
  %v121 = vld [vmem:[%s0 + $0x290] sm:$0xff]
  %v122 = vld [vmem:[%s0 + $0x298] sm:$0xff]
  %v123 = vld [vmem:[%s0 + $0x2a0] sm:$0xff]
  %v124 = vld [vmem:[%s0 + $0x2a8] sm:$0xff]
  %v125 = vld [vmem:[%s0 + $0x2b0] sm:$0xff]
  %v126 = vld [vmem:[%s0 + $0x2b8] sm:$0xff]
  %v127 = vld [vmem:[%s0 + $0x2c0] sm:$0xff]
  %v128 = vld [vmem:[%s0 + $0x2c8] sm:$0xff]
  %v129 = vld [vmem:[%s0 + $0x2d0] sm:$0xff]
  %v130 = vld [vmem:[%s0 + $0x2d8] sm:$0xff]
  %v131 = vld [vmem:[%s0 + $0x2e0] sm:$0xff]
  %v132 = vld [vmem:[%s0 + $0x2e8] sm:$0xff]
  %v133 = vld [vmem:[%s0 + $0x2f0] sm:$0xff]
  %v134 = vld [vmem:[%s0 + $0x2f8] sm:$0xff]
  %v135 = vld [vmem:[%s0 + $0x300] sm:$0xff]
  %v136 = vld [vmem:[%s0 + $0x308] sm:$0xff]
  %v137 = vld [vmem:[%s0 + $0x310] sm:$0xff]
  %v138 = vld [vmem:[%s0 + $0x318] sm:$0xff]
  %v139 = vld [vmem:[%s0 + $0x320] sm:$0xff]
  %v140 = vld [vmem:[%s0 + $0x328] sm:$0xff]
  %v141 = vld [vmem:[%s0 + $0x330] sm:$0xff]
  %v142 = vld [vmem:[%s0 + $0x338] sm:$0xff]
  %v143 = vld [vmem:[%s0 + $0x340] sm:$0xff]
  %v144 = vld [vmem:[%s0 + $0x348] sm:$0xff]
  %v145 = vld [vmem:[%s0 + $0x350] sm:$0xff]
  %v146 = vld [vmem:[%s0 + $0x358] sm:$0xff]
  %v147 = vld [vmem:[%s0 + $0x360] sm:$0xff]
  %v148 = vld [vmem:[%s0 + $0x368] sm:$0xff]
  %v149 = vld [vmem:[%s0 + $0x370] sm:$0xff]
  %v150 = vld [vmem:[%s0 + $0x378] sm:$0xff]
  %v151 = vld [vmem:[%s0 + $0x380] sm:$0xff]
  %v152 = vld [vmem:[%s0 + $0x388] sm:$0xff]
  %v153 = vld [vmem:[%s0 + $0x390] sm:$0xff]
  %v154 = vld [vmem:[%s0 + $0x398] sm:$0xff]
  %v155 = vld [vmem:[%s0 + $0x3a0] sm:$0xff]
  %v156 = vld [vmem:[%s0 + $0x3a8] sm:$0xff]
  %v157 = vld [vmem:[%s0 + $0x3b0] sm:$0xff]
  %v158 = vld [vmem:[%s0 + $0x3b8] sm:$0xff]
  %v159 = vld [vmem:[%s0 + $0x3c0] sm:$0xff]
  %v160 = vld [vmem:[%s0 + $0x3c8] sm:$0xff]
  %v161 = vld [vmem:[%s0 + $0x3d0] sm:$0xff]
  %v162 = vld [vmem:[%s0 + $0x3d8] sm:$0xff]
  %v163 = vld [vmem:[%s0 + $0x3e0] sm:$0xff]
  %v164 = vld [vmem:[%s0 + $0x3e8] sm:$0xff]
  %v165 = vld [vmem:[%s0 + $0x3f0] sm:$0xff]
  %v166 = vld [vmem:[%s0 + $0x3f8] sm:$0xff]
  %v167 = vld [vmem:[%s0 + $0x400] sm:$0xff]
  %v168 = vld [vmem:[%s0 + $0x408] sm:$0xff]
  %v169 = vld [vmem:[%s0 + $0x410] sm:$0xff]
  %v170 = vld [vmem:[%s0 + $0x418] sm:$0xff]
  %v171 = vld [vmem:[%s0 + $0x420] sm:$0xff]
  %v172 = vld [vmem:[%s0 + $0x428] sm:$0xff]
  %v173 = vld [vmem:[%s0 + $0x430] sm:$0xff]
  %v174 = vld [vmem:[%s0 + $0x438] sm:$0xff]
  %v175 = vld [vmem:[%s0 + $0x440] sm:$0xff]
  %v176 = vld [vmem:[%s0 + $0x448] sm:$0xff]
  %v177 = vld [vmem:[%s0 + $0x450] sm:$0xff]
  %v178 = vld [vmem:[%s0 + $0x458] sm:$0xff]
  %v179 = vld [vmem:[%s0 + $0x460] sm:$0xff]
  %v180 = vld [vmem:[%s0 + $0x468] sm:$0xff]
  %v181 = vld [vmem:[%s0 + $0x470] sm:$0xff]
  %v182 = vld [vmem:[%s0 + $0x478] sm:$0xff]
  %v183 = vld [vmem:[%s0 + $0x480] sm:$0xff]
  %v184 = vld [vmem:[%s0 + $0x488] sm:$0xff]
  %v185 = vld [vmem:[%s0 + $0x490] sm:$0xff]
  %v186 = vld [vmem:[%s0 + $0x498] sm:$0xff]
  %v187 = vld [vmem:[%s0 + $0x4a0] sm:$0xff]
  %v188 = vld [vmem:[%s0 + $0x4a8] sm:$0xff]
  %v189 = vld [vmem:[%s0 + $0x4b0] sm:$0xff]
  %v190 = vld [vmem:[%s0 + $0x4b8] sm:$0xff]
  %v191 = vld [vmem:[%s0 + $0x4c0] sm:$0xff]
  %v192 = vld [vmem:[%s0 + $0x4c8] sm:$0xff]
  %v193 = vld [vmem:[%s0 + $0x4d0] sm:$0xff]
  %v194 = vld [vmem:[%s0 + $0x4d8] sm:$0xff]
  %v195 = vld [vmem:[%s0 + $0x4e0] sm:$0xff]
  %v196 = vld [vmem:[%s0 + $0x4e8] sm:$0xff]
  %v197 = vld [vmem:[%s0 + $0x4f0] sm:$0xff]
  %v198 = vld [vmem:[%s0 + $0x4f8] sm:$0xff]
  %v199 = vld [vmem:[%s0 + $0x500] sm:$0xff]
  %v200 = vld [vmem:[%s0 + $0x508] sm:$0xff]
  %v201 = vld [vmem:[%s0 + $0x510] sm:$0xff]
  %v202 = vld [vmem:[%s0 + $0x518] sm:$0xff]
  %v203 = vld [vmem:[%s0 + $0x520] sm:$0xff]
  %v204 = vld [vmem:[%s0 + $0x528] sm:$0xff]
  %v205 = vld [vmem:[%s0 + $0x530] sm:$0xff]
  %v206 = vld [vmem:[%s0 + $0x538] sm:$0xff]
  %v207 = vld [vmem:[%s0 + $0x540] sm:$0xff]
  %v208 = vld [vmem:[%s0 + $0x548] sm:$0xff]
  %v209 = vld [vmem:[%s0 + $0x550] sm:$0xff]
  %v210 = vld [vmem:[%s0 + $0x558] sm:$0xff]
  %v211 = vld [vmem:[%s0 + $0x560] sm:$0xff]
  %v212 = vld [vmem:[%s0 + $0x568] sm:$0xff]
  %v213 = vld [vmem:[%s0 + $0x570] sm:$0xff]
  %v214 = vld [vmem:[%s0 + $0x578] sm:$0xff]
  %v215 = vld [vmem:[%s0 + $0x580] sm:$0xff]
  %v216 = vld [vmem:[%s0 + $0x588] sm:$0xff]
  %v217 = vld [vmem:[%s0 + $0x590] sm:$0xff]
  %v218 = vld [vmem:[%s0 + $0x598] sm:$0xff]
  %v219 = vld [vmem:[%s0 + $0x5a0] sm:$0xff]
  %v220 = vld [vmem:[%s0 + $0x5a8] sm:$0xff]
  %v221 = vld [vmem:[%s0 + $0x5b0] sm:$0xff]
  %v222 = vld [vmem:[%s0 + $0x5b8] sm:$0xff]
  %v223 = vld [vmem:[%s0 + $0x5c0] sm:$0xff]
  %v224 = vld [vmem:[%s0 + $0x5c8] sm:$0xff]
  %v225 = vld [vmem:[%s0 + $0x5d0] sm:$0xff]
  %v226 = vld [vmem:[%s0 + $0x5d8] sm:$0xff]
  %v227 = vld [vmem:[%s0 + $0x5e0] sm:$0xff]
  %v228 = vld [vmem:[%s0 + $0x5e8] sm:$0xff]
  %v229 = vld [vmem:[%s0 + $0x5f0] sm:$0xff]
  %v230 = vld [vmem:[%s0 + $0x5f8] sm:$0xff]
  %v231 = vld [vmem:[%s0 + $0x600] sm:$0xff]
  %v232 = vld [vmem:[%s0 + $0x608] sm:$0xff]
  %v233 = vld [vmem:[%s0 + $0x610] sm:$0xff]
  %v234 = vld [vmem:[%s0 + $0x618] sm:$0xff]
  %v235 = vld [vmem:[%s0 + $0x620] sm:$0xff]
  %v236 = vld [vmem:[%s0 + $0x628] sm:$0xff]
  %v237 = vld [vmem:[%s0 + $0x630] sm:$0xff]
  %v238 = vld [vmem:[%s0 + $0x638] sm:$0xff]
  %v239 = vld [vmem:[%s0 + $0x640] sm:$0xff]
  %v240 = vld [vmem:[%s0 + $0x648] sm:$0xff]
  %v241 = vld [vmem:[%s0 + $0x650] sm:$0xff]
  %v242 = vld [vmem:[%s0 + $0x658] sm:$0xff]
  %v243 = vld [vmem:[%s0 + $0x660] sm:$0xff]
  %v244 = vld [vmem:[%s0 + $0x668] sm:$0xff]
  %v245 = vld [vmem:[%s0 + $0x670] sm:$0xff]
  %v246 = vld [vmem:[%s0 + $0x678] sm:$0xff]
  %v247 = vld [vmem:[%s0 + $0x680] sm:$0xff]
  %v248 = vld [vmem:[%s0 + $0x688] sm:$0xff]
  %v249 = vld [vmem:[%s0 + $0x690] sm:$0xff]
  %v250 = vld [vmem:[%s0 + $0x698] sm:$0xff]
  %v251 = vld [vmem:[%s0 + $0x6a0] sm:$0xff]
  %v252 = vld [vmem:[%s0 + $0x6a8] sm:$0xff]
  %v253 = vld [vmem:[%s0 + $0x6b0] sm:$0xff]
  %v254 = vld [vmem:[%s0 + $0x6b8] sm:$0xff]
  %v255 = vld [vmem:[%s0 + $0x6c0] sm:$0xff]
  %v256 = vld [vmem:[%s0 + $0x6c8] sm:$0xff]
  %v257 = vld [vmem:[%s0 + $0x6d0] sm:$0xff]
  %v258 = vld [vmem:[%s0 + $0x6d8] sm:$0xff]
  %v259 = vld [vmem:[%s0 + $0x6e0] sm:$0xff]
  %v260 = vld [vmem:[%s0 + $0x6e8] sm:$0xff]
  %v261 = vld [vmem:[%s0 + $0x6f0] sm:$0xff]
  %v262 = vld [vmem:[%s0 + $0x6f8] sm:$0xff]
  %v263 = vld [vmem:[%s0 + $0x700] sm:$0xff]
  %v264 = vld [vmem:[%s0 + $0x708] sm:$0xff]
  %v265 = vld [vmem:[%s0 + $0x710] sm:$0xff]
  %v266 = vld [vmem:[%s0 + $0x718] sm:$0xff]
  %v267 = vld [vmem:[%s0 + $0x720] sm:$0xff]
  %v268 = vld [vmem:[%s0 + $0x728] sm:$0xff]
  %v269 = vld [vmem:[%s0 + $0x730] sm:$0xff]
  %v270 = vld [vmem:[%s0 + $0x738] sm:$0xff]
  %v271 = vld [vmem:[%s0 + $0x740] sm:$0xff]
  %v272 = vld [vmem:[%s0 + $0x748] sm:$0xff]
  %v273 = vld [vmem:[%s0 + $0x750] sm:$0xff]
  %v274 = vld [vmem:[%s0 + $0x758] sm:$0xff]
  %v275 = vld [vmem:[%s0 + $0x760] sm:$0xff]
  %v276 = vld [vmem:[%s0 + $0x768] sm:$0xff]
  %v277 = vld [vmem:[%s0 + $0x770] sm:$0xff]
  %v278 = vld [vmem:[%s0 + $0x778] sm:$0xff]
  %v279 = vld [vmem:[%s0 + $0x780] sm:$0xff]
  %v280 = vld [vmem:[%s0 + $0x788] sm:$0xff]
  %v281 = vld [vmem:[%s0 + $0x790] sm:$0xff]
  %v282 = vld [vmem:[%s0 + $0x798] sm:$0xff]
  %v283 = vld [vmem:[%s0 + $0x7a0] sm:$0xff]
  %v284 = vld [vmem:[%s0 + $0x7a8] sm:$0xff]
  %v285 = vld [vmem:[%s0 + $0x7b0] sm:$0xff]
  %v286 = vld [vmem:[%s0 + $0x7b8] sm:$0xff]
  %v287 = vld [vmem:[%s0 + $0x7c0] sm:$0xff]
  %v288 = vld [vmem:[%s0 + $0x7c8] sm:$0xff]
  %v289 = vld [vmem:[%s0 + $0x7d0] sm:$0xff]
  %v290 = vld [vmem:[%s0 + $0x7d8] sm:$0xff]
  %v291 = vld [vmem:[%s0 + $0x7e0] sm:$0xff]
  %v292 = vld [vmem:[%s0 + $0x7e8] sm:$0xff]
  %v293 = vld [vmem:[%s0 + $0x7f0] sm:$0xff]
  %v294 = vld [vmem:[%s0 + $0x7f8] sm:$0xff]
  %v295 = vld [vmem:[%s0 + $0x800] sm:$0xff]
  %v296 = vld [vmem:[%s0 + $0x808] sm:$0xff]
  %v297 = vld [vmem:[%s0 + $0x810] sm:$0xff]
  %v298 = vld [vmem:[%s0 + $0x818] sm:$0xff]
  %v299 = vld [vmem:[%s0 + $0x820] sm:$0xff]
  %v300 = vld [vmem:[%s0 + $0x828] sm:$0xff]
  %v301 = vld [vmem:[%s0 + $0x830] sm:$0xff]
  %v302 = vld [vmem:[%s0 + $0x838] sm:$0xff]
  %v303 = vld [vmem:[%s0 + $0x840] sm:$0xff]
  %v304 = vld [vmem:[%s0 + $0x848] sm:$0xff]
  %v305 = vld [vmem:[%s0 + $0x850] sm:$0xff]
  %v306 = vld [vmem:[%s0 + $0x858] sm:$0xff]
  %v307 = vld [vmem:[%s0 + $0x860] sm:$0xff]
  %v308 = vld [vmem:[%s0 + $0x868] sm:$0xff]
  %v309 = vld [vmem:[%s0 + $0x870] sm:$0xff]
  %v310 = vld [vmem:[%s0 + $0x878] sm:$0xff]
  %v311 = vld [vmem:[%s0 + $0x880] sm:$0xff]
  %v312 = vld [vmem:[%s0 + $0x888] sm:$0xff]
  %v313 = vld [vmem:[%s0 + $0x890] sm:$0xff]
  %v314 = vld [vmem:[%s0 + $0x898] sm:$0xff]
  %v315 = vld [vmem:[%s0 + $0x8a0] sm:$0xff]
  %v316 = vld [vmem:[%s0 + $0x8a8] sm:$0xff]
  %v317 = vld [vmem:[%s0 + $0x8b0] sm:$0xff]
  %v318 = vld [vmem:[%s0 + $0x8b8] sm:$0xff]
  %v319 = vld [vmem:[%s0 + $0x8c0] sm:$0xff]
  %v320 = vld [vmem:[%s0 + $0x8c8] sm:$0xff]
  %v321 = vld [vmem:[%s0 + $0x8d0] sm:$0xff]
  %v322 = vld [vmem:[%s0 + $0x8d8] sm:$0xff]
  %v323 = vld [vmem:[%s0 + $0x8e0] sm:$0xff]
  %v324 = vld [vmem:[%s0 + $0x8e8] sm:$0xff]
  %v325 = vld [vmem:[%s0 + $0x8f0] sm:$0xff]
  %v326 = vld [vmem:[%s0 + $0x8f8] sm:$0xff]
  %v327 = vld [vmem:[%s0 + $0x900] sm:$0xff]
  %v328 = vld [vmem:[%s0 + $0x908] sm:$0xff]
  %v329 = vld [vmem:[%s0 + $0x910] sm:$0xff]
  %v330 = vld [vmem:[%s0 + $0x918] sm:$0xff]
  %v331 = vld [vmem:[%s0 + $0x920] sm:$0xff]
  %v332 = vld [vmem:[%s0 + $0x928] sm:$0xff]
  %v333 = vld [vmem:[%s0 + $0x930] sm:$0xff]
  %v334 = vld [vmem:[%s0 + $0x938] sm:$0xff]
  %v335 = vld [vmem:[%s0 + $0x940] sm:$0xff]
  %v336 = vld [vmem:[%s0 + $0x948] sm:$0xff]
  %v337 = vld [vmem:[%s0 + $0x950] sm:$0xff]
  %v338 = vld [vmem:[%s0 + $0x958] sm:$0xff]
  %v339 = vld [vmem:[%s0 + $0x960] sm:$0xff]
  %v340 = vld [vmem:[%s0 + $0x968] sm:$0xff]
  %v341 = vld [vmem:[%s0 + $0x970] sm:$0xff]
  %v342 = vld [vmem:[%s0 + $0x978] sm:$0xff]
  %v343 = vld [vmem:[%s0 + $0x980] sm:$0xff]
  %v344 = vld [vmem:[%s0 + $0x988] sm:$0xff]
  %v345 = vld [vmem:[%s0 + $0x990] sm:$0xff]
  %v346 = vld [vmem:[%s0 + $0x998] sm:$0xff]
  %v347 = vld [vmem:[%s0 + $0x9a0] sm:$0xff]
  %v348 = vld [vmem:[%s0 + $0x9a8] sm:$0xff]
  %v349 = vld [vmem:[%s0 + $0x9b0] sm:$0xff]
  %v350 = vld [vmem:[%s0 + $0x9b8] sm:$0xff]
  %v351 = vld [vmem:[%s0 + $0x9c0] sm:$0xff]
  %v352 = vld [vmem:[%s0 + $0x9c8] sm:$0xff]
  %v353 = vld [vmem:[%s0 + $0x9d0] sm:$0xff]
  %v354 = vld [vmem:[%s0 + $0x9d8] sm:$0xff]
  %v355 = vld [vmem:[%s0 + $0x9e0] sm:$0xff]
  %v356 = vld [vmem:[%s0 + $0x9e8] sm:$0xff]
  %v357 = vld [vmem:[%s0 + $0x9f0] sm:$0xff]
  %v358 = vld [vmem:[%s0 + $0x9f8] sm:$0xff]
  %v359 = vld [vmem:[%s0 + $0xa00] sm:$0xff]
  %v360 = vld [vmem:[%s0 + $0xa08] sm:$0xff]
  %v361 = vld [vmem:[%s0 + $0xa10] sm:$0xff]
  %v362 = vld [vmem:[%s0 + $0xa18] sm:$0xff]
  %v363 = vld [vmem:[%s0 + $0xa20] sm:$0xff]
  %v364 = vld [vmem:[%s0 + $0xa28] sm:$0xff]
  %v365 = vld [vmem:[%s0 + $0xa30] sm:$0xff]
  %v366 = vld [vmem:[%s0 + $0xa38] sm:$0xff]
  %v367 = vld [vmem:[%s0 + $0xa40] sm:$0xff]
  %v368 = vld [vmem:[%s0 + $0xa48] sm:$0xff]
  %v369 = vld [vmem:[%s0 + $0xa50] sm:$0xff]
  %v370 = vld [vmem:[%s0 + $0xa58] sm:$0xff]
  %v371 = vld [vmem:[%s0 + $0xa60] sm:$0xff]
  %v372 = vld [vmem:[%s0 + $0xa68] sm:$0xff]
  %v373 = vld [vmem:[%s0 + $0xa70] sm:$0xff]
  %v374 = vld [vmem:[%s0 + $0xa78] sm:$0xff]
  %v375 = vld [vmem:[%s0 + $0xa80] sm:$0xff]
  %v376 = vld [vmem:[%s0 + $0xa88] sm:$0xff]
  %v377 = vld [vmem:[%s0 + $0xa90] sm:$0xff]
  %v378 = vld [vmem:[%s0 + $0xa98] sm:$0xff]
  %v379 = vld [vmem:[%s0 + $0xaa0] sm:$0xff]
  %v380 = vld [vmem:[%s0 + $0xaa8] sm:$0xff]
  %v381 = vld [vmem:[%s0 + $0xab0] sm:$0xff]
  %v382 = vld [vmem:[%s0 + $0xab8] sm:$0xff]
  %v383 = vld [vmem:[%s0 + $0xac0] sm:$0xff]
  %v384 = vld [vmem:[%s0 + $0xac8] sm:$0xff]
  %v385 = vld [vmem:[%s0 + $0xad0] sm:$0xff]
  %v386 = vld [vmem:[%s0 + $0xad8] sm:$0xff]
  %v387 = vld [vmem:[%s0 + $0xae0] sm:$0xff]
  %v388 = vld [vmem:[%s0 + $0xae8] sm:$0xff]
  %v389 = vld [vmem:[%s0 + $0xaf0] sm:$0xff]
  %v390 = vld [vmem:[%s0 + $0xaf8] sm:$0xff]
  %v391 = vld [vmem:[%s0 + $0xb00] sm:$0xff]
  %v392 = vld [vmem:[%s0 + $0xb08] sm:$0xff]
  %v393 = vld [vmem:[%s0 + $0xb10] sm:$0xff]
  %v394 = vld [vmem:[%s0 + $0xb18] sm:$0xff]
  %v395 = vld [vmem:[%s0 + $0xb20] sm:$0xff]
  %v396 = vld [vmem:[%s0 + $0xb28] sm:$0xff]
  %v397 = vld [vmem:[%s0 + $0xb30] sm:$0xff]
  %v398 = vld [vmem:[%s0 + $0xb38] sm:$0xff]
  %v399 = vld [vmem:[%s0 + $0xb40] sm:$0xff]
  %v400 = vld [vmem:[%s0 + $0xb48] sm:$0xff]
  %v401 = vld [vmem:[%s0 + $0xb50] sm:$0xff]
  %v402 = vld [vmem:[%s0 + $0xb58] sm:$0xff]
  %v403 = vld [vmem:[%s0 + $0xb60] sm:$0xff]
  %v404 = vld [vmem:[%s0 + $0xb68] sm:$0xff]
  %v405 = vld [vmem:[%s0 + $0xb70] sm:$0xff]
  %v406 = vld [vmem:[%s0 + $0xb78] sm:$0xff]
  %v407 = vld [vmem:[%s0 + $0xb80] sm:$0xff]
  %v408 = vld [vmem:[%s0 + $0xb88] sm:$0xff]
  %v409 = vld [vmem:[%s0 + $0xb90] sm:$0xff]
  %v410 = vld [vmem:[%s0 + $0xb98] sm:$0xff]
  %v411 = vld [vmem:[%s0 + $0xba0] sm:$0xff]
  %v412 = vld [vmem:[%s0 + $0xba8] sm:$0xff]
  %v413 = vld [vmem:[%s0 + $0xbb0] sm:$0xff]
  %v414 = vld [vmem:[%s0 + $0xbb8] sm:$0xff]
  %v415 = vld [vmem:[%s0 + $0xbc0] sm:$0xff]
  %v416 = vld [vmem:[%s0 + $0xbc8] sm:$0xff]
  %v417 = vld [vmem:[%s0 + $0xbd0] sm:$0xff]
  %v418 = vld [vmem:[%s0 + $0xbd8] sm:$0xff]
  %v419 = vld [vmem:[%s0 + $0xbe0] sm:$0xff]
  %v420 = vld [vmem:[%s0 + $0xbe8] sm:$0xff]
  %v421 = vld [vmem:[%s0 + $0xbf0] sm:$0xff]
  %v422 = vld [vmem:[%s0 + $0xbf8] sm:$0xff]
  %v423 = vld [vmem:[%s0 + $0xc00] sm:$0xff]
  %v424 = vld [vmem:[%s0 + $0xc08] sm:$0xff]
  %v425 = vld [vmem:[%s0 + $0xc10] sm:$0xff]
  %v426 = vld [vmem:[%s0 + $0xc18] sm:$0xff]
  %v427 = vld [vmem:[%s0 + $0xc20] sm:$0xff]
  %v428 = vld [vmem:[%s0 + $0xc28] sm:$0xff]
  %v429 = vld [vmem:[%s0 + $0xc30] sm:$0xff]
  %v430 = vld [vmem:[%s0 + $0xc38] sm:$0xff]
  %v431 = vld [vmem:[%s1] sm:$0xf]
  %v432 = vld [vmem:[%s1 + $0x4] sm:$0xf]
  %v433 = vld [vmem:[%s1 + $0x8] sm:$0xf]
  %v434 = vld [vmem:[%s1 + $0xc] sm:$0xf]
  %v435 = vld [vmem:[%s1 + $0x10] sm:$0xf]
  %v436 = vld [vmem:[%s1 + $0x14] sm:$0xf]
  %v437 = vld [vmem:[%s1 + $0x18] sm:$0xf]
  %v438 = vld [vmem:[%s1 + $0x1c] sm:$0xf]
  %v439 = vld [vmem:[%s1 + $0x20] sm:$0xf]
  %v440 = vld [vmem:[%s1 + $0x24] sm:$0xf]
  %v441 = vld [vmem:[%s1 + $0x28] sm:$0xf]
  %v442 = vld [vmem:[%s1 + $0x2c] sm:$0xf]
  %v443 = vld [vmem:[%s1 + $0x30] sm:$0xf]
  %v444 = vld [vmem:[%s1 + $0x34] sm:$0xf]
  %v445 = vld [vmem:[%s1 + $0x38] sm:$0xf]
  %v446 = vld [vmem:[%s1 + $0x3c] sm:$0xf]
  %v447 = vld [vmem:[%s1 + $0x40] sm:$0xf]
  %v448 = vld [vmem:[%s1 + $0x44] sm:$0xf]
  %v449 = vld [vmem:[%s1 + $0x48] sm:$0xf]
  %v450 = vld [vmem:[%s1 + $0x4c] sm:$0xf]
  %v451 = vld [vmem:[%s1 + $0x50] sm:$0xf]
  %v452 = vld [vmem:[%s1 + $0x54] sm:$0xf]
  %v453 = vld [vmem:[%s1 + $0x58] sm:$0xf]
  %v454 = vld [vmem:[%s1 + $0x5c] sm:$0xf]
  %v455 = vld [vmem:[%s1 + $0x60] sm:$0xf]
  %v456 = vld [vmem:[%s1 + $0x64] sm:$0xf]
  %v457 = vld [vmem:[%s1 + $0x68] sm:$0xf]
  %v458 = vld [vmem:[%s1 + $0x6c] sm:$0xf]
  %v459 = vld [vmem:[%s1 + $0x70] sm:$0xf]
  %v460 = vld [vmem:[%s1 + $0x74] sm:$0xf]
  %v461 = vld [vmem:[%s1 + $0x78] sm:$0xf]
  %v462 = vld [vmem:[%s1 + $0x7c] sm:$0xf]
  %v463 = vld [vmem:[%s1 + $0x80] sm:$0xf]
  %v464 = vld [vmem:[%s1 + $0x84] sm:$0xf]
  %v465 = vld [vmem:[%s1 + $0x88] sm:$0xf]
  %v466 = vld [vmem:[%s1 + $0x8c] sm:$0xf]
  %v467 = vld [vmem:[%s1 + $0x90] sm:$0xf]
  %v468 = vld [vmem:[%s1 + $0x94] sm:$0xf]
  %v469 = vld [vmem:[%s1 + $0x98] sm:$0xf]
  %v470 = vld [vmem:[%s1 + $0x9c] sm:$0xf]
  %v471 = vld [vmem:[%s1 + $0xa0] sm:$0xf]
  %v472 = vld [vmem:[%s1 + $0xa4] sm:$0xf]
  %v473 = vld [vmem:[%s1 + $0xa8] sm:$0xf]
  %v474 = vld [vmem:[%s1 + $0xac] sm:$0xf]
  %v475 = vld [vmem:[%s1 + $0xb0] sm:$0xf]
  %v476 = vld [vmem:[%s1 + $0xb4] sm:$0xf]
  %v477 = vld [vmem:[%s1 + $0xb8] sm:$0xf]
  %v478 = vld [vmem:[%s1 + $0xbc] sm:$0xf]
  %v479 = vld [vmem:[%s1 + $0xc0] sm:$0xf]
  %v480 = vld [vmem:[%s1 + $0xc4] sm:$0xf]
  %v481 = vld [vmem:[%s1 + $0xc8] sm:$0xf]
  %v482 = vld [vmem:[%s1 + $0xcc] sm:$0xf]
  %v483 = vld [vmem:[%s1 + $0xd0] sm:$0xf]
  %v484 = vld [vmem:[%s1 + $0xd4] sm:$0xf]
  %v485 = vld [vmem:[%s1 + $0xd8] sm:$0xf]
  %v486 = vld [vmem:[%s1 + $0xdc] sm:$0xf]
  %v487 = vld [vmem:[%s1 + $0xe0] sm:$0xf]
  %v488 = vld [vmem:[%s1 + $0xe4] sm:$0xf]
  %v489 = vld [vmem:[%s1 + $0xe8] sm:$0xf]
  %v490 = vld [vmem:[%s1 + $0xec] sm:$0xf]
  %v491 = vld [vmem:[%s1 + $0xf0] sm:$0xf]
  %v492 = vld [vmem:[%s1 + $0xf4] sm:$0xf]
  %v493 = vld [vmem:[%s1 + $0xf8] sm:$0xf]
  %v494 = vld [vmem:[%s1 + $0xfc] sm:$0xf]
  %v495 = vld [vmem:[%s1 + $0x100] sm:$0xf]
  %v496 = vld [vmem:[%s1 + $0x104] sm:$0xf]
  %v497 = vld [vmem:[%s1 + $0x108] sm:$0xf]
  %v498 = vld [vmem:[%s1 + $0x10c] sm:$0xf]
  %v499 = vld [vmem:[%s1 + $0x110] sm:$0xf]
  %v500 = vld [vmem:[%s1 + $0x114] sm:$0xf]
  %v501 = vld [vmem:[%s1 + $0x118] sm:$0xf]
  %v502 = vld [vmem:[%s1 + $0x11c] sm:$0xf]
  %v503 = vld [vmem:[%s1 + $0x120] sm:$0xf]
  %v504 = vld [vmem:[%s1 + $0x124] sm:$0xf]
  %v505 = vld [vmem:[%s1 + $0x128] sm:$0xf]
  %v506 = vld [vmem:[%s1 + $0x12c] sm:$0xf]
  %v507 = vld [vmem:[%s1 + $0x130] sm:$0xf]
  %v508 = vld [vmem:[%s1 + $0x134] sm:$0xf]
  %v509 = vld [vmem:[%s1 + $0x138] sm:$0xf]
  %v510 = vld [vmem:[%s1 + $0x13c] sm:$0xf]
  %v511 = vld [vmem:[%s1 + $0x140] sm:$0xf]
  %v512 = vld [vmem:[%s1 + $0x144] sm:$0xf]
  %v513 = vld [vmem:[%s1 + $0x148] sm:$0xf]
  %v514 = vld [vmem:[%s1 + $0x14c] sm:$0xf]
  %v515 = vld [vmem:[%s1 + $0x150] sm:$0xf]
  %v516 = vld [vmem:[%s1 + $0x154] sm:$0xf]
  %v517 = vld [vmem:[%s1 + $0x158] sm:$0xf]
  %v518 = vld [vmem:[%s1 + $0x15c] sm:$0xf]
  %v519 = vld [vmem:[%s1 + $0x160] sm:$0xf]
  %v520 = vld [vmem:[%s1 + $0x164] sm:$0xf]
  %v521 = vld [vmem:[%s1 + $0x168] sm:$0xf]
  %v522 = vld [vmem:[%s1 + $0x16c] sm:$0xf]
  %v523 = vld [vmem:[%s1 + $0x170] sm:$0xf]
  %v524 = vld [vmem:[%s1 + $0x174] sm:$0xf]
  %v525 = vld [vmem:[%s1 + $0x178] sm:$0xf]
  %v526 = vld [vmem:[%s1 + $0x17c] sm:$0xf]
  %v527 = vld [vmem:[%s1 + $0x180] sm:$0xf]
  %v528 = vld [vmem:[%s1 + $0x184] sm:$0xf]
  %v529 = vld [vmem:[%s1 + $0x188] sm:$0xf]
  %v530 = vld [vmem:[%s1 + $0x18c] sm:$0xf]
  %v531 = vld [vmem:[%s1 + $0x190] sm:$0xf]
  %v532 = vld [vmem:[%s1 + $0x194] sm:$0xf]
  %v533 = vld [vmem:[%s1 + $0x198] sm:$0xf]
  %v534 = vld [vmem:[%s1 + $0x19c] sm:$0xf]
  %v535 = vld [vmem:[%s1 + $0x1a0] sm:$0xf]
  %v536 = vld [vmem:[%s1 + $0x1a4] sm:$0xf]
  %v537 = vld [vmem:[%s1 + $0x1a8] sm:$0xf]
  %v538 = vld [vmem:[%s1 + $0x1ac] sm:$0xf]
  %v539 = vld [vmem:[%s1 + $0x1b0] sm:$0xf]
  %v540 = vld [vmem:[%s1 + $0x1b4] sm:$0xf]
  %v541 = vld [vmem:[%s1 + $0x1b8] sm:$0xf]
  %v542 = vld [vmem:[%s1 + $0x1bc] sm:$0xf]
  %v543 = vld [vmem:[%s1 + $0x1c0] sm:$0xf]
  %v544 = vld [vmem:[%s1 + $0x1c4] sm:$0xf]
  %v545 = vld [vmem:[%s1 + $0x1c8] sm:$0xf]
  %v546 = vld [vmem:[%s1 + $0x1cc] sm:$0xf]
  %v547 = vld [vmem:[%s1 + $0x1d0] sm:$0xf]
  %v548 = vld [vmem:[%s1 + $0x1d4] sm:$0xf]
  %v549 = vld [vmem:[%s1 + $0x1d8] sm:$0xf]
  %v550 = vld [vmem:[%s1 + $0x1dc] sm:$0xf]
  %v551 = vld [vmem:[%s1 + $0x1e0] sm:$0xf]
  %v552 = vld [vmem:[%s1 + $0x1e4] sm:$0xf]
  %v553 = vld [vmem:[%s1 + $0x1e8] sm:$0xf]
  %v554 = vld [vmem:[%s1 + $0x1ec] sm:$0xf]
  %v555 = vld [vmem:[%s1 + $0x1f0] sm:$0xf]
  %v556 = vld [vmem:[%s1 + $0x1f4] sm:$0xf]
  %v557 = vld [vmem:[%s1 + $0x1f8] sm:$0xf]
  %v558 = vld [vmem:[%s1 + $0x1fc] sm:$0xf]
  %v559 = vld [vmem:[%s2] sm:$0x1]
  %v561 = vlaneseq
  %v562 = vshrl.u32 %v561, 7
  %v563 = vsub.s32 0, %v562
  %v564 = vrot.slane %v559, %v563
  %v958 = vunpack.c.l.b16 %v39
  %v959 = vunpack.c.h.b16 %v39
  %v960 = vunpack.c.l.b16 %v40
  %v961 = vunpack.c.h.b16 %v40
  %v962 = vunpack.c.l.b16 %v41
  %v963 = vunpack.c.h.b16 %v41
  %v964 = vunpack.c.l.b16 %v42
  %v965 = vunpack.c.h.b16 %v42
  %v966 = vunpack.c.l.b16 %v43
  %v967 = vunpack.c.h.b16 %v43
  %v968 = vunpack.c.l.b16 %v44
  %v969 = vunpack.c.h.b16 %v44
  %v970 = vunpack.c.l.b16 %v45
  %v971 = vunpack.c.h.b16 %v45
  %v972 = vunpack.c.l.b16 %v46
  %v973 = vunpack.c.h.b16 %v46
  %v974 = vunpack.c.l.b16 %v47
  %v975 = vunpack.c.h.b16 %v47
  %v976 = vunpack.c.l.b16 %v48
  %v977 = vunpack.c.h.b16 %v48
  %v978 = vunpack.c.l.b16 %v49
  %v979 = vunpack.c.h.b16 %v49
  %v980 = vunpack.c.l.b16 %v50
  %v981 = vunpack.c.h.b16 %v50
  %v982 = vunpack.c.l.b16 %v51
  %v983 = vunpack.c.h.b16 %v51
  %v984 = vunpack.c.l.b16 %v52
  %v985 = vunpack.c.h.b16 %v52
  %v986 = vunpack.c.l.b16 %v53
  %v987 = vunpack.c.h.b16 %v53
  %v988 = vunpack.c.l.b16 %v54
  %v989 = vunpack.c.h.b16 %v54
  %v990 = vunpack.c.l.b16 %v55
  %v991 = vunpack.c.h.b16 %v55
  %v992 = vunpack.c.l.b16 %v56
  %v993 = vunpack.c.h.b16 %v56
  %v994 = vunpack.c.l.b16 %v57
  %v995 = vunpack.c.h.b16 %v57
  %v996 = vunpack.c.l.b16 %v58
  %v997 = vunpack.c.h.b16 %v58
  %v998 = vunpack.c.l.b16 %v59
  %v999 = vunpack.c.h.b16 %v59
  %v1000 = vunpack.c.l.b16 %v60
  %v1001 = vunpack.c.h.b16 %v60
  %v1002 = vunpack.c.l.b16 %v61
  %v1003 = vunpack.c.h.b16 %v61
  %v1004 = vunpack.c.l.b16 %v62
  %v1005 = vunpack.c.h.b16 %v62
  %v1006 = vunpack.c.l.b16 %v63
  %v1007 = vunpack.c.h.b16 %v63
  %v1008 = vunpack.c.l.b16 %v64
  %v1009 = vunpack.c.h.b16 %v64
  %v1010 = vunpack.c.l.b16 %v65
  %v1011 = vunpack.c.h.b16 %v65
  %v1012 = vunpack.c.l.b16 %v66
  %v1013 = vunpack.c.h.b16 %v66
  %v1014 = vunpack.c.l.b16 %v67
  %v1015 = vunpack.c.h.b16 %v67
  %v1016 = vunpack.c.l.b16 %v68
  %v1017 = vunpack.c.h.b16 %v68
  %v1018 = vunpack.c.l.b16 %v69
  %v1019 = vunpack.c.h.b16 %v69
  %v1020 = vunpack.c.l.b16 %v70
  %v1021 = vunpack.c.h.b16 %v70
  %v1022 = vunpack.c.l.b16 %v71
  %v1023 = vunpack.c.h.b16 %v71
  %v1024 = vunpack.c.l.b16 %v72
  %v1025 = vunpack.c.h.b16 %v72
  %v1026 = vunpack.c.l.b16 %v73
  %v1027 = vunpack.c.h.b16 %v73
  %v1028 = vunpack.c.l.b16 %v74
  %v1029 = vunpack.c.h.b16 %v74
  %v1030 = vunpack.c.l.b16 %v75
  %v1031 = vunpack.c.h.b16 %v75
  %v1032 = vunpack.c.l.b16 %v76
  %v1033 = vunpack.c.h.b16 %v76
  %v1034 = vunpack.c.l.b16 %v77
  %v1035 = vunpack.c.h.b16 %v77
  %v1036 = vunpack.c.l.b16 %v78
  %v1037 = vunpack.c.h.b16 %v78
  %v1038 = vunpack.c.l.b16 %v79
  %v1039 = vunpack.c.h.b16 %v79
  %v1040 = vunpack.c.l.b16 %v80
  %v1041 = vunpack.c.h.b16 %v80
  %v1042 = vunpack.c.l.b16 %v81
  %v1043 = vunpack.c.h.b16 %v81
  %v1044 = vunpack.c.l.b16 %v82
  %v1045 = vunpack.c.h.b16 %v82
  %v1046 = vunpack.c.l.b16 %v83
  %v1047 = vunpack.c.h.b16 %v83
  %v1048 = vunpack.c.l.b16 %v84
  %v1049 = vunpack.c.h.b16 %v84
  %v1050 = vunpack.c.l.b16 %v85
  %v1051 = vunpack.c.h.b16 %v85
  %v1052 = vunpack.c.l.b16 %v86
  %v1053 = vunpack.c.h.b16 %v86
  %v1054 = vunpack.c.l.b16 %v87
  %v1055 = vunpack.c.h.b16 %v87
  %v1056 = vunpack.c.l.b16 %v88
  %v1057 = vunpack.c.h.b16 %v88
  %v1058 = vunpack.c.l.b16 %v89
  %v1059 = vunpack.c.h.b16 %v89
  %v1060 = vunpack.c.l.b16 %v90
  %v1061 = vunpack.c.h.b16 %v90
  %v1062 = vunpack.c.l.b16 %v91
  %v1063 = vunpack.c.h.b16 %v91
  %v1064 = vunpack.c.l.b16 %v92
  %v1065 = vunpack.c.h.b16 %v92
  %v1066 = vunpack.c.l.b16 %v93
  %v1067 = vunpack.c.h.b16 %v93
  %v1068 = vunpack.c.l.b16 %v94
  %v1069 = vunpack.c.h.b16 %v94
  %v1070 = vunpack.c.l.b16 %v95
  %v1071 = vunpack.c.h.b16 %v95
  %v1072 = vunpack.c.l.b16 %v96
  %v1073 = vunpack.c.h.b16 %v96
  %v1074 = vunpack.c.l.b16 %v97
  %v1075 = vunpack.c.h.b16 %v97
  %v1076 = vunpack.c.l.b16 %v98
  %v1077 = vunpack.c.h.b16 %v98
  %v1078 = vunpack.c.l.b16 %v99
  %v1079 = vunpack.c.h.b16 %v99
  %v1080 = vunpack.c.l.b16 %v100
  %v1081 = vunpack.c.h.b16 %v100
  %v1082 = vunpack.c.l.b16 %v101
  %v1083 = vunpack.c.h.b16 %v101
  %v1084 = vunpack.c.l.b16 %v102
  %v1085 = vunpack.c.h.b16 %v102
  %v1086 = vunpack.c.l.b16 %v103
  %v1087 = vunpack.c.h.b16 %v103
  %v1088 = vunpack.c.l.b16 %v104
  %v1089 = vunpack.c.h.b16 %v104
  %v1090 = vunpack.c.l.b16 %v105
  %v1091 = vunpack.c.h.b16 %v105
  %v1092 = vunpack.c.l.b16 %v106
  %v1093 = vunpack.c.h.b16 %v106
  %v1094 = vunpack.c.l.b16 %v107
  %v1095 = vunpack.c.h.b16 %v107
  %v1096 = vunpack.c.l.b16 %v108
  %v1097 = vunpack.c.h.b16 %v108
  %v1098 = vunpack.c.l.b16 %v109
  %v1099 = vunpack.c.h.b16 %v109
  %v1100 = vunpack.c.l.b16 %v110
  %v1101 = vunpack.c.h.b16 %v110
  %v1102 = vunpack.c.l.b16 %v111
  %v1103 = vunpack.c.h.b16 %v111
  %v1104 = vunpack.c.l.b16 %v112
  %v1105 = vunpack.c.h.b16 %v112
  %v1106 = vunpack.c.l.b16 %v113
  %v1107 = vunpack.c.h.b16 %v113
  %v1108 = vunpack.c.l.b16 %v114
  %v1109 = vunpack.c.h.b16 %v114
  %v1110 = vunpack.c.l.b16 %v115
  %v1111 = vunpack.c.h.b16 %v115
  %v1112 = vunpack.c.l.b16 %v116
  %v1113 = vunpack.c.h.b16 %v116
  %v1114 = vunpack.c.l.b16 %v117
  %v1115 = vunpack.c.h.b16 %v117
  %v1116 = vunpack.c.l.b16 %v118
  %v1117 = vunpack.c.h.b16 %v118
  %v1118 = vunpack.c.l.b16 %v119
  %v1119 = vunpack.c.h.b16 %v119
  %v1120 = vunpack.c.l.b16 %v120
  %v1121 = vunpack.c.h.b16 %v120
  %v1122 = vunpack.c.l.b16 %v121
  %v1123 = vunpack.c.h.b16 %v121
  %v1124 = vunpack.c.l.b16 %v122
  %v1125 = vunpack.c.h.b16 %v122
  %v1126 = vunpack.c.l.b16 %v123
  %v1127 = vunpack.c.h.b16 %v123
  %v1128 = vunpack.c.l.b16 %v124
  %v1129 = vunpack.c.h.b16 %v124
  %v1130 = vunpack.c.l.b16 %v125
  %v1131 = vunpack.c.h.b16 %v125
  %v1132 = vunpack.c.l.b16 %v126
  %v1133 = vunpack.c.h.b16 %v126
  %v1134 = vunpack.c.l.b16 %v127
  %v1135 = vunpack.c.h.b16 %v127
  %v1136 = vunpack.c.l.b16 %v128
  %v1137 = vunpack.c.h.b16 %v128
  %v1138 = vunpack.c.l.b16 %v129
  %v1139 = vunpack.c.h.b16 %v129
  %v1140 = vunpack.c.l.b16 %v130
  %v1141 = vunpack.c.h.b16 %v130
  %v1142 = vunpack.c.l.b16 %v131
  %v1143 = vunpack.c.h.b16 %v131
  %v1144 = vunpack.c.l.b16 %v132
  %v1145 = vunpack.c.h.b16 %v132
  %v1146 = vunpack.c.l.b16 %v133
  %v1147 = vunpack.c.h.b16 %v133
  %v1148 = vunpack.c.l.b16 %v134
  %v1149 = vunpack.c.h.b16 %v134
  %v1150 = vunpack.c.l.b16 %v135
  %v1151 = vunpack.c.h.b16 %v135
  %v1152 = vunpack.c.l.b16 %v136
  %v1153 = vunpack.c.h.b16 %v136
  %v1154 = vunpack.c.l.b16 %v137
  %v1155 = vunpack.c.h.b16 %v137
  %v1156 = vunpack.c.l.b16 %v138
  %v1157 = vunpack.c.h.b16 %v138
  %v1158 = vunpack.c.l.b16 %v139
  %v1159 = vunpack.c.h.b16 %v139
  %v1160 = vunpack.c.l.b16 %v140
  %v1161 = vunpack.c.h.b16 %v140
  %v1162 = vunpack.c.l.b16 %v141
  %v1163 = vunpack.c.h.b16 %v141
  %v1164 = vunpack.c.l.b16 %v142
  %v1165 = vunpack.c.h.b16 %v142
  %v1166 = vunpack.c.l.b16 %v143
  %v1167 = vunpack.c.h.b16 %v143
  %v1168 = vunpack.c.l.b16 %v144
  %v1169 = vunpack.c.h.b16 %v144
  %v1170 = vunpack.c.l.b16 %v145
  %v1171 = vunpack.c.h.b16 %v145
  %v1172 = vunpack.c.l.b16 %v146
  %v1173 = vunpack.c.h.b16 %v146
  %v1174 = vunpack.c.l.b16 %v147
  %v1175 = vunpack.c.h.b16 %v147
  %v1176 = vunpack.c.l.b16 %v148
  %v1177 = vunpack.c.h.b16 %v148
  %v1178 = vunpack.c.l.b16 %v149
  %v1179 = vunpack.c.h.b16 %v149
  %v1180 = vunpack.c.l.b16 %v150
  %v1181 = vunpack.c.h.b16 %v150
  %v1182 = vunpack.c.l.b16 %v151
  %v1183 = vunpack.c.h.b16 %v151
  %v1184 = vunpack.c.l.b16 %v152
  %v1185 = vunpack.c.h.b16 %v152
  %v1186 = vunpack.c.l.b16 %v153
  %v1187 = vunpack.c.h.b16 %v153
  %v1188 = vunpack.c.l.b16 %v154
  %v1189 = vunpack.c.h.b16 %v154
  %v1190 = vunpack.c.l.b16 %v155
  %v1191 = vunpack.c.h.b16 %v155
  %v1192 = vunpack.c.l.b16 %v156
  %v1193 = vunpack.c.h.b16 %v156
  %v1194 = vunpack.c.l.b16 %v157
  %v1195 = vunpack.c.h.b16 %v157
  %v1196 = vunpack.c.l.b16 %v158
  %v1197 = vunpack.c.h.b16 %v158
  %v1198 = vunpack.c.l.b16 %v159
  %v1199 = vunpack.c.h.b16 %v159
  %v1200 = vunpack.c.l.b16 %v160
  %v1201 = vunpack.c.h.b16 %v160
  %v1202 = vunpack.c.l.b16 %v161
  %v1203 = vunpack.c.h.b16 %v161
  %v1204 = vunpack.c.l.b16 %v162
  %v1205 = vunpack.c.h.b16 %v162
  %v1206 = vunpack.c.l.b16 %v163
  %v1207 = vunpack.c.h.b16 %v163
  %v1208 = vunpack.c.l.b16 %v164
  %v1209 = vunpack.c.h.b16 %v164
  %v1210 = vunpack.c.l.b16 %v165
  %v1211 = vunpack.c.h.b16 %v165
  %v1212 = vunpack.c.l.b16 %v166
  %v1213 = vunpack.c.h.b16 %v166
  %v1214 = vunpack.c.l.b16 %v167
  %v1215 = vunpack.c.h.b16 %v167
  %v1216 = vunpack.c.l.b16 %v168
  %v1217 = vunpack.c.h.b16 %v168
  %v1218 = vunpack.c.l.b16 %v169
  %v1219 = vunpack.c.h.b16 %v169
  %v1220 = vunpack.c.l.b16 %v170
  %v1221 = vunpack.c.h.b16 %v170
  %v1222 = vunpack.c.l.b16 %v171
  %v1223 = vunpack.c.h.b16 %v171
  %v1224 = vunpack.c.l.b16 %v172
  %v1225 = vunpack.c.h.b16 %v172
  %v1226 = vunpack.c.l.b16 %v173
  %v1227 = vunpack.c.h.b16 %v173
  %v1228 = vunpack.c.l.b16 %v174
  %v1229 = vunpack.c.h.b16 %v174
  %v1230 = vunpack.c.l.b16 %v175
  %v1231 = vunpack.c.h.b16 %v175
  %v1232 = vunpack.c.l.b16 %v176
  %v1233 = vunpack.c.h.b16 %v176
  %v1234 = vunpack.c.l.b16 %v177
  %v1235 = vunpack.c.h.b16 %v177
  %v1236 = vunpack.c.l.b16 %v178
  %v1237 = vunpack.c.h.b16 %v178
  %v1238 = vunpack.c.l.b16 %v179
  %v1239 = vunpack.c.h.b16 %v179
  %v1240 = vunpack.c.l.b16 %v180
  %v1241 = vunpack.c.h.b16 %v180
  %v1242 = vunpack.c.l.b16 %v181
  %v1243 = vunpack.c.h.b16 %v181
  %v1244 = vunpack.c.l.b16 %v182
  %v1245 = vunpack.c.h.b16 %v182
  %v1246 = vunpack.c.l.b16 %v183
  %v1247 = vunpack.c.h.b16 %v183
  %v1248 = vunpack.c.l.b16 %v184
  %v1249 = vunpack.c.h.b16 %v184
  %v1250 = vunpack.c.l.b16 %v185
  %v1251 = vunpack.c.h.b16 %v185
  %v1252 = vunpack.c.l.b16 %v186
  %v1253 = vunpack.c.h.b16 %v186
  %v1254 = vunpack.c.l.b16 %v187
  %v1255 = vunpack.c.h.b16 %v187
  %v1256 = vunpack.c.l.b16 %v188
  %v1257 = vunpack.c.h.b16 %v188
  %v1258 = vunpack.c.l.b16 %v189
  %v1259 = vunpack.c.h.b16 %v189
  %v1260 = vunpack.c.l.b16 %v190
  %v1261 = vunpack.c.h.b16 %v190
  %v1262 = vunpack.c.l.b16 %v191
  %v1263 = vunpack.c.h.b16 %v191
  %v1264 = vunpack.c.l.b16 %v192
  %v1265 = vunpack.c.h.b16 %v192
  %v1266 = vunpack.c.l.b16 %v193
  %v1267 = vunpack.c.h.b16 %v193
  %v1268 = vunpack.c.l.b16 %v194
  %v1269 = vunpack.c.h.b16 %v194
  %v1270 = vunpack.c.l.b16 %v195
  %v1271 = vunpack.c.h.b16 %v195
  %v1272 = vunpack.c.l.b16 %v196
  %v1273 = vunpack.c.h.b16 %v196
  %v1274 = vunpack.c.l.b16 %v197
  %v1275 = vunpack.c.h.b16 %v197
  %v1276 = vunpack.c.l.b16 %v198
  %v1277 = vunpack.c.h.b16 %v198
  %v1278 = vunpack.c.l.b16 %v199
  %v1279 = vunpack.c.h.b16 %v199
  %v1280 = vunpack.c.l.b16 %v200
  %v1281 = vunpack.c.h.b16 %v200
  %v1282 = vunpack.c.l.b16 %v201
  %v1283 = vunpack.c.h.b16 %v201
  %v1284 = vunpack.c.l.b16 %v202
  %v1285 = vunpack.c.h.b16 %v202
  %v1286 = vunpack.c.l.b16 %v203
  %v1287 = vunpack.c.h.b16 %v203
  %v1288 = vunpack.c.l.b16 %v204
  %v1289 = vunpack.c.h.b16 %v204
  %v1290 = vunpack.c.l.b16 %v205
  %v1291 = vunpack.c.h.b16 %v205
  %v1292 = vunpack.c.l.b16 %v206
  %v1293 = vunpack.c.h.b16 %v206
  %v1294 = vunpack.c.l.b16 %v207
  %v1295 = vunpack.c.h.b16 %v207
  %v1296 = vunpack.c.l.b16 %v208
  %v1297 = vunpack.c.h.b16 %v208
  %v1298 = vunpack.c.l.b16 %v209
  %v1299 = vunpack.c.h.b16 %v209
  %v1300 = vunpack.c.l.b16 %v210
  %v1301 = vunpack.c.h.b16 %v210
  %v1302 = vunpack.c.l.b16 %v211
  %v1303 = vunpack.c.h.b16 %v211
  %v1304 = vunpack.c.l.b16 %v212
  %v1305 = vunpack.c.h.b16 %v212
  %v1306 = vunpack.c.l.b16 %v213
  %v1307 = vunpack.c.h.b16 %v213
  %v1308 = vunpack.c.l.b16 %v214
  %v1309 = vunpack.c.h.b16 %v214
  %v1310 = vunpack.c.l.b16 %v215
  %v1311 = vunpack.c.h.b16 %v215
  %v1312 = vunpack.c.l.b16 %v216
  %v1313 = vunpack.c.h.b16 %v216
  %v1314 = vunpack.c.l.b16 %v217
  %v1315 = vunpack.c.h.b16 %v217
  %v1316 = vunpack.c.l.b16 %v218
  %v1317 = vunpack.c.h.b16 %v218
  %v1318 = vunpack.c.l.b16 %v219
  %v1319 = vunpack.c.h.b16 %v219
  %v1320 = vunpack.c.l.b16 %v220
  %v1321 = vunpack.c.h.b16 %v220
  %v1322 = vunpack.c.l.b16 %v221
  %v1323 = vunpack.c.h.b16 %v221
  %v1324 = vunpack.c.l.b16 %v222
  %v1325 = vunpack.c.h.b16 %v222
  %v1326 = vunpack.c.l.b16 %v223
  %v1327 = vunpack.c.h.b16 %v223
  %v1328 = vunpack.c.l.b16 %v224
  %v1329 = vunpack.c.h.b16 %v224
  %v1330 = vunpack.c.l.b16 %v225
  %v1331 = vunpack.c.h.b16 %v225
  %v1332 = vunpack.c.l.b16 %v226
  %v1333 = vunpack.c.h.b16 %v226
  %v1334 = vunpack.c.l.b16 %v227
  %v1335 = vunpack.c.h.b16 %v227
  %v1336 = vunpack.c.l.b16 %v228
  %v1337 = vunpack.c.h.b16 %v228
  %v1338 = vunpack.c.l.b16 %v229
  %v1339 = vunpack.c.h.b16 %v229
  %v1340 = vunpack.c.l.b16 %v230
  %v1341 = vunpack.c.h.b16 %v230
  %v1342 = vunpack.c.l.b16 %v231
  %v1343 = vunpack.c.h.b16 %v231
  %v1344 = vunpack.c.l.b16 %v232
  %v1345 = vunpack.c.h.b16 %v232
  %v1346 = vunpack.c.l.b16 %v233
  %v1347 = vunpack.c.h.b16 %v233
  %v1348 = vunpack.c.l.b16 %v234
  %v1349 = vunpack.c.h.b16 %v234
  %v1350 = vunpack.c.l.b16 %v235
  %v1351 = vunpack.c.h.b16 %v235
  %v1352 = vunpack.c.l.b16 %v236
  %v1353 = vunpack.c.h.b16 %v236
  %v1354 = vunpack.c.l.b16 %v237
  %v1355 = vunpack.c.h.b16 %v237
  %v1356 = vunpack.c.l.b16 %v238
  %v1357 = vunpack.c.h.b16 %v238
  %v1358 = vunpack.c.l.b16 %v239
  %v1359 = vunpack.c.h.b16 %v239
  %v1360 = vunpack.c.l.b16 %v240
  %v1361 = vunpack.c.h.b16 %v240
  %v1362 = vunpack.c.l.b16 %v241
  %v1363 = vunpack.c.h.b16 %v241
  %v1364 = vunpack.c.l.b16 %v242
  %v1365 = vunpack.c.h.b16 %v242
  %v1366 = vunpack.c.l.b16 %v243
  %v1367 = vunpack.c.h.b16 %v243
  %v1368 = vunpack.c.l.b16 %v244
  %v1369 = vunpack.c.h.b16 %v244
  %v1370 = vunpack.c.l.b16 %v245
  %v1371 = vunpack.c.h.b16 %v245
  %v1372 = vunpack.c.l.b16 %v246
  %v1373 = vunpack.c.h.b16 %v246
  %v1374 = vunpack.c.l.b16 %v247
  %v1375 = vunpack.c.h.b16 %v247
  %v1376 = vunpack.c.l.b16 %v248
  %v1377 = vunpack.c.h.b16 %v248
  %v1378 = vunpack.c.l.b16 %v249
  %v1379 = vunpack.c.h.b16 %v249
  %v1380 = vunpack.c.l.b16 %v250
  %v1381 = vunpack.c.h.b16 %v250
  %v1382 = vunpack.c.l.b16 %v251
  %v1383 = vunpack.c.h.b16 %v251
  %v1384 = vunpack.c.l.b16 %v252
  %v1385 = vunpack.c.h.b16 %v252
  %v1386 = vunpack.c.l.b16 %v253
  %v1387 = vunpack.c.h.b16 %v253
  %v1388 = vunpack.c.l.b16 %v254
  %v1389 = vunpack.c.h.b16 %v254
  %v1390 = vunpack.c.l.b16 %v255
  %v1391 = vunpack.c.h.b16 %v255
  %v1392 = vunpack.c.l.b16 %v256
  %v1393 = vunpack.c.h.b16 %v256
  %v1394 = vunpack.c.l.b16 %v257
  %v1395 = vunpack.c.h.b16 %v257
  %v1396 = vunpack.c.l.b16 %v258
  %v1397 = vunpack.c.h.b16 %v258
  %v1398 = vunpack.c.l.b16 %v259
  %v1399 = vunpack.c.h.b16 %v259
  %v1400 = vunpack.c.l.b16 %v260
  %v1401 = vunpack.c.h.b16 %v260
  %v1402 = vunpack.c.l.b16 %v261
  %v1403 = vunpack.c.h.b16 %v261
  %v1404 = vunpack.c.l.b16 %v262
  %v1405 = vunpack.c.h.b16 %v262
  %v1406 = vunpack.c.l.b16 %v263
  %v1407 = vunpack.c.h.b16 %v263
  %v1408 = vunpack.c.l.b16 %v264
  %v1409 = vunpack.c.h.b16 %v264
  %v1410 = vunpack.c.l.b16 %v265
  %v1411 = vunpack.c.h.b16 %v265
  %v1412 = vunpack.c.l.b16 %v266
  %v1413 = vunpack.c.h.b16 %v266
  %v1414 = vunpack.c.l.b16 %v267
  %v1415 = vunpack.c.h.b16 %v267
  %v1416 = vunpack.c.l.b16 %v268
  %v1417 = vunpack.c.h.b16 %v268
  %v1418 = vunpack.c.l.b16 %v269
  %v1419 = vunpack.c.h.b16 %v269
  %v1420 = vunpack.c.l.b16 %v270
  %v1421 = vunpack.c.h.b16 %v270
  %v1422 = vunpack.c.l.b16 %v271
  %v1423 = vunpack.c.h.b16 %v271
  %v1424 = vunpack.c.l.b16 %v272
  %v1425 = vunpack.c.h.b16 %v272
  %v1426 = vunpack.c.l.b16 %v273
  %v1427 = vunpack.c.h.b16 %v273
  %v1428 = vunpack.c.l.b16 %v274
  %v1429 = vunpack.c.h.b16 %v274
  %v1430 = vunpack.c.l.b16 %v275
  %v1431 = vunpack.c.h.b16 %v275
  %v1432 = vunpack.c.l.b16 %v276
  %v1433 = vunpack.c.h.b16 %v276
  %v1434 = vunpack.c.l.b16 %v277
  %v1435 = vunpack.c.h.b16 %v277
  %v1436 = vunpack.c.l.b16 %v278
  %v1437 = vunpack.c.h.b16 %v278
  %v1438 = vunpack.c.l.b16 %v279
  %v1439 = vunpack.c.h.b16 %v279
  %v1440 = vunpack.c.l.b16 %v280
  %v1441 = vunpack.c.h.b16 %v280
  %v1442 = vunpack.c.l.b16 %v281
  %v1443 = vunpack.c.h.b16 %v281
  %v1444 = vunpack.c.l.b16 %v282
  %v1445 = vunpack.c.h.b16 %v282
  %v1446 = vunpack.c.l.b16 %v283
  %v1447 = vunpack.c.h.b16 %v283
  %v1448 = vunpack.c.l.b16 %v284
  %v1449 = vunpack.c.h.b16 %v284
  %v1450 = vunpack.c.l.b16 %v285
  %v1451 = vunpack.c.h.b16 %v285
  %v1452 = vunpack.c.l.b16 %v286
  %v1453 = vunpack.c.h.b16 %v286
  %v1454 = vunpack.c.l.b16 %v287
  %v1455 = vunpack.c.h.b16 %v287
  %v1456 = vunpack.c.l.b16 %v288
  %v1457 = vunpack.c.h.b16 %v288
  %v1458 = vunpack.c.l.b16 %v289
  %v1459 = vunpack.c.h.b16 %v289
  %v1460 = vunpack.c.l.b16 %v290
  %v1461 = vunpack.c.h.b16 %v290
  %v1462 = vunpack.c.l.b16 %v291
  %v1463 = vunpack.c.h.b16 %v291
  %v1464 = vunpack.c.l.b16 %v292
  %v1465 = vunpack.c.h.b16 %v292
  %v1466 = vunpack.c.l.b16 %v293
  %v1467 = vunpack.c.h.b16 %v293
  %v1468 = vunpack.c.l.b16 %v294
  %v1469 = vunpack.c.h.b16 %v294
  %v1470 = vunpack.c.l.b16 %v295
  %v1471 = vunpack.c.h.b16 %v295
  %v1472 = vunpack.c.l.b16 %v296
  %v1473 = vunpack.c.h.b16 %v296
  %v1474 = vunpack.c.l.b16 %v297
  %v1475 = vunpack.c.h.b16 %v297
  %v1476 = vunpack.c.l.b16 %v298
  %v1477 = vunpack.c.h.b16 %v298
  %v1478 = vunpack.c.l.b16 %v299
  %v1479 = vunpack.c.h.b16 %v299
  %v1480 = vunpack.c.l.b16 %v300
  %v1481 = vunpack.c.h.b16 %v300
  %v1482 = vunpack.c.l.b16 %v301
  %v1483 = vunpack.c.h.b16 %v301
  %v1484 = vunpack.c.l.b16 %v302
  %v1485 = vunpack.c.h.b16 %v302
  %v1486 = vunpack.c.l.b16 %v303
  %v1487 = vunpack.c.h.b16 %v303
  %v1488 = vunpack.c.l.b16 %v304
  %v1489 = vunpack.c.h.b16 %v304
  %v1490 = vunpack.c.l.b16 %v305
  %v1491 = vunpack.c.h.b16 %v305
  %v1492 = vunpack.c.l.b16 %v306
  %v1493 = vunpack.c.h.b16 %v306
  %v1494 = vunpack.c.l.b16 %v307
  %v1495 = vunpack.c.h.b16 %v307
  %v1496 = vunpack.c.l.b16 %v308
  %v1497 = vunpack.c.h.b16 %v308
  %v1498 = vunpack.c.l.b16 %v309
  %v1499 = vunpack.c.h.b16 %v309
  %v1500 = vunpack.c.l.b16 %v310
  %v1501 = vunpack.c.h.b16 %v310
  %v1502 = vunpack.c.l.b16 %v311
  %v1503 = vunpack.c.h.b16 %v311
  %v1504 = vunpack.c.l.b16 %v312
  %v1505 = vunpack.c.h.b16 %v312
  %v1506 = vunpack.c.l.b16 %v313
  %v1507 = vunpack.c.h.b16 %v313
  %v1508 = vunpack.c.l.b16 %v314
  %v1509 = vunpack.c.h.b16 %v314
  %v1510 = vunpack.c.l.b16 %v315
  %v1511 = vunpack.c.h.b16 %v315
  %v1512 = vunpack.c.l.b16 %v316
  %v1513 = vunpack.c.h.b16 %v316
  %v1514 = vunpack.c.l.b16 %v317
  %v1515 = vunpack.c.h.b16 %v317
  %v1516 = vunpack.c.l.b16 %v318
  %v1517 = vunpack.c.h.b16 %v318
  %v1518 = vunpack.c.l.b16 %v319
  %v1519 = vunpack.c.h.b16 %v319
  %v1520 = vunpack.c.l.b16 %v320
  %v1521 = vunpack.c.h.b16 %v320
  %v1522 = vunpack.c.l.b16 %v321
  %v1523 = vunpack.c.h.b16 %v321
  %v1524 = vunpack.c.l.b16 %v322
  %v1525 = vunpack.c.h.b16 %v322
  %v1526 = vunpack.c.l.b16 %v323
  %v1527 = vunpack.c.h.b16 %v323
  %v1528 = vunpack.c.l.b16 %v324
  %v1529 = vunpack.c.h.b16 %v324
  %v1530 = vunpack.c.l.b16 %v325
  %v1531 = vunpack.c.h.b16 %v325
  %v1532 = vunpack.c.l.b16 %v326
  %v1533 = vunpack.c.h.b16 %v326
  %v1534 = vunpack.c.l.b16 %v327
  %v1535 = vunpack.c.h.b16 %v327
  %v1536 = vunpack.c.l.b16 %v328
  %v1537 = vunpack.c.h.b16 %v328
  %v1538 = vunpack.c.l.b16 %v329
  %v1539 = vunpack.c.h.b16 %v329
  %v1540 = vunpack.c.l.b16 %v330
  %v1541 = vunpack.c.h.b16 %v330
  %v1542 = vunpack.c.l.b16 %v331
  %v1543 = vunpack.c.h.b16 %v331
  %v1544 = vunpack.c.l.b16 %v332
  %v1545 = vunpack.c.h.b16 %v332
  %v1546 = vunpack.c.l.b16 %v333
  %v1547 = vunpack.c.h.b16 %v333
  %v1548 = vunpack.c.l.b16 %v334
  %v1549 = vunpack.c.h.b16 %v334
  %v1550 = vunpack.c.l.b16 %v335
  %v1551 = vunpack.c.h.b16 %v335
  %v1552 = vunpack.c.l.b16 %v336
  %v1553 = vunpack.c.h.b16 %v336
  %v1554 = vunpack.c.l.b16 %v337
  %v1555 = vunpack.c.h.b16 %v337
  %v1556 = vunpack.c.l.b16 %v338
  %v1557 = vunpack.c.h.b16 %v338
  %v1558 = vunpack.c.l.b16 %v339
  %v1559 = vunpack.c.h.b16 %v339
  %v1560 = vunpack.c.l.b16 %v340
  %v1561 = vunpack.c.h.b16 %v340
  %v1562 = vunpack.c.l.b16 %v341
  %v1563 = vunpack.c.h.b16 %v341
  %v1564 = vunpack.c.l.b16 %v342
  %v1565 = vunpack.c.h.b16 %v342
  %v1566 = vunpack.c.l.b16 %v343
  %v1567 = vunpack.c.h.b16 %v343
  %v1568 = vunpack.c.l.b16 %v344
  %v1569 = vunpack.c.h.b16 %v344
  %v1570 = vunpack.c.l.b16 %v345
  %v1571 = vunpack.c.h.b16 %v345
  %v1572 = vunpack.c.l.b16 %v346
  %v1573 = vunpack.c.h.b16 %v346
  %v1574 = vunpack.c.l.b16 %v347
  %v1575 = vunpack.c.h.b16 %v347
  %v1576 = vunpack.c.l.b16 %v348
  %v1577 = vunpack.c.h.b16 %v348
  %v1578 = vunpack.c.l.b16 %v349
  %v1579 = vunpack.c.h.b16 %v349
  %v1580 = vunpack.c.l.b16 %v350
  %v1581 = vunpack.c.h.b16 %v350
  %v1582 = vunpack.c.l.b16 %v351
  %v1583 = vunpack.c.h.b16 %v351
  %v1584 = vunpack.c.l.b16 %v352
  %v1585 = vunpack.c.h.b16 %v352
  %v1586 = vunpack.c.l.b16 %v353
  %v1587 = vunpack.c.h.b16 %v353
  %v1588 = vunpack.c.l.b16 %v354
  %v1589 = vunpack.c.h.b16 %v354
  %v1590 = vunpack.c.l.b16 %v355
  %v1591 = vunpack.c.h.b16 %v355
  %v1592 = vunpack.c.l.b16 %v356
  %v1593 = vunpack.c.h.b16 %v356
  %v1594 = vunpack.c.l.b16 %v357
  %v1595 = vunpack.c.h.b16 %v357
  %v1596 = vunpack.c.l.b16 %v358
  %v1597 = vunpack.c.h.b16 %v358
  %v1598 = vunpack.c.l.b16 %v359
  %v1599 = vunpack.c.h.b16 %v359
  %v1600 = vunpack.c.l.b16 %v360
  %v1601 = vunpack.c.h.b16 %v360
  %v1602 = vunpack.c.l.b16 %v361
  %v1603 = vunpack.c.h.b16 %v361
  %v1604 = vunpack.c.l.b16 %v362
  %v1605 = vunpack.c.h.b16 %v362
  %v1606 = vunpack.c.l.b16 %v363
  %v1607 = vunpack.c.h.b16 %v363
  %v1608 = vunpack.c.l.b16 %v364
  %v1609 = vunpack.c.h.b16 %v364
  %v1610 = vunpack.c.l.b16 %v365
  %v1611 = vunpack.c.h.b16 %v365
  %v1612 = vunpack.c.l.b16 %v366
  %v1613 = vunpack.c.h.b16 %v366
  %v1614 = vunpack.c.l.b16 %v367
  %v1615 = vunpack.c.h.b16 %v367
  %v1616 = vunpack.c.l.b16 %v368
  %v1617 = vunpack.c.h.b16 %v368
  %v1618 = vunpack.c.l.b16 %v369
  %v1619 = vunpack.c.h.b16 %v369
  %v1620 = vunpack.c.l.b16 %v370
  %v1621 = vunpack.c.h.b16 %v370
  %v1622 = vunpack.c.l.b16 %v371
  %v1623 = vunpack.c.h.b16 %v371
  %v1624 = vunpack.c.l.b16 %v372
  %v1625 = vunpack.c.h.b16 %v372
  %v1626 = vunpack.c.l.b16 %v373
  %v1627 = vunpack.c.h.b16 %v373
  %v1628 = vunpack.c.l.b16 %v374
  %v1629 = vunpack.c.h.b16 %v374
  %v1630 = vunpack.c.l.b16 %v375
  %v1631 = vunpack.c.h.b16 %v375
  %v1632 = vunpack.c.l.b16 %v376
  %v1633 = vunpack.c.h.b16 %v376
  %v1634 = vunpack.c.l.b16 %v377
  %v1635 = vunpack.c.h.b16 %v377
  %v1636 = vunpack.c.l.b16 %v378
  %v1637 = vunpack.c.h.b16 %v378
  %v1638 = vunpack.c.l.b16 %v379
  %v1639 = vunpack.c.h.b16 %v379
  %v1640 = vunpack.c.l.b16 %v380
  %v1641 = vunpack.c.h.b16 %v380
  %v1642 = vunpack.c.l.b16 %v381
  %v1643 = vunpack.c.h.b16 %v381
  %v1644 = vunpack.c.l.b16 %v382
  %v1645 = vunpack.c.h.b16 %v382
  %v1646 = vunpack.c.l.b16 %v383
  %v1647 = vunpack.c.h.b16 %v383
  %v1648 = vunpack.c.l.b16 %v384
  %v1649 = vunpack.c.h.b16 %v384
  %v1650 = vunpack.c.l.b16 %v385
  %v1651 = vunpack.c.h.b16 %v385
  %v1652 = vunpack.c.l.b16 %v386
  %v1653 = vunpack.c.h.b16 %v386
  %v1654 = vunpack.c.l.b16 %v387
  %v1655 = vunpack.c.h.b16 %v387
  %v1656 = vunpack.c.l.b16 %v388
  %v1657 = vunpack.c.h.b16 %v388
  %v1658 = vunpack.c.l.b16 %v389
  %v1659 = vunpack.c.h.b16 %v389
  %v1660 = vunpack.c.l.b16 %v390
  %v1661 = vunpack.c.h.b16 %v390
  %v1662 = vunpack.c.l.b16 %v391
  %v1663 = vunpack.c.h.b16 %v391
  %v1664 = vunpack.c.l.b16 %v392
  %v1665 = vunpack.c.h.b16 %v392
  %v1666 = vunpack.c.l.b16 %v393
  %v1667 = vunpack.c.h.b16 %v393
  %v1668 = vunpack.c.l.b16 %v394
  %v1669 = vunpack.c.h.b16 %v394
  %v1670 = vunpack.c.l.b16 %v395
  %v1671 = vunpack.c.h.b16 %v395
  %v1672 = vunpack.c.l.b16 %v396
  %v1673 = vunpack.c.h.b16 %v396
  %v1674 = vunpack.c.l.b16 %v397
  %v1675 = vunpack.c.h.b16 %v397
  %v1676 = vunpack.c.l.b16 %v398
  %v1677 = vunpack.c.h.b16 %v398
  %v1678 = vunpack.c.l.b16 %v399
  %v1679 = vunpack.c.h.b16 %v399
  %v1680 = vunpack.c.l.b16 %v400
  %v1681 = vunpack.c.h.b16 %v400
  %v1682 = vunpack.c.l.b16 %v401
  %v1683 = vunpack.c.h.b16 %v401
  %v1684 = vunpack.c.l.b16 %v402
  %v1685 = vunpack.c.h.b16 %v402
  %v1686 = vunpack.c.l.b16 %v403
  %v1687 = vunpack.c.h.b16 %v403
  %v1688 = vunpack.c.l.b16 %v404
  %v1689 = vunpack.c.h.b16 %v404
  %v1690 = vunpack.c.l.b16 %v405
  %v1691 = vunpack.c.h.b16 %v405
  %v1692 = vunpack.c.l.b16 %v406
  %v1693 = vunpack.c.h.b16 %v406
  %v1694 = vunpack.c.l.b16 %v407
  %v1695 = vunpack.c.h.b16 %v407
  %v1696 = vunpack.c.l.b16 %v408
  %v1697 = vunpack.c.h.b16 %v408
  %v1698 = vunpack.c.l.b16 %v409
  %v1699 = vunpack.c.h.b16 %v409
  %v1700 = vunpack.c.l.b16 %v410
  %v1701 = vunpack.c.h.b16 %v410
  %v1702 = vunpack.c.l.b16 %v411
  %v1703 = vunpack.c.h.b16 %v411
  %v1704 = vunpack.c.l.b16 %v412
  %v1705 = vunpack.c.h.b16 %v412
  %v1706 = vunpack.c.l.b16 %v413
  %v1707 = vunpack.c.h.b16 %v413
  %v1708 = vunpack.c.l.b16 %v414
  %v1709 = vunpack.c.h.b16 %v414
  %v1710 = vunpack.c.l.b16 %v415
  %v1711 = vunpack.c.h.b16 %v415
  %v1712 = vunpack.c.l.b16 %v416
  %v1713 = vunpack.c.h.b16 %v416
  %v1714 = vunpack.c.l.b16 %v417
  %v1715 = vunpack.c.h.b16 %v417
  %v1716 = vunpack.c.l.b16 %v418
  %v1717 = vunpack.c.h.b16 %v418
  %v1718 = vunpack.c.l.b16 %v419
  %v1719 = vunpack.c.h.b16 %v419
  %v1720 = vunpack.c.l.b16 %v420
  %v1721 = vunpack.c.h.b16 %v420
  %v1722 = vunpack.c.l.b16 %v421
  %v1723 = vunpack.c.h.b16 %v421
  %v1724 = vunpack.c.l.b16 %v422
  %v1725 = vunpack.c.h.b16 %v422
  %v1726 = vunpack.c.l.b16 %v423
  %v1727 = vunpack.c.h.b16 %v423
  %v1728 = vunpack.c.l.b16 %v424
  %v1729 = vunpack.c.h.b16 %v424
  %v1730 = vunpack.c.l.b16 %v425
  %v1731 = vunpack.c.h.b16 %v425
  %v1732 = vunpack.c.l.b16 %v426
  %v1733 = vunpack.c.h.b16 %v426
  %v1734 = vunpack.c.l.b16 %v427
  %v1735 = vunpack.c.h.b16 %v427
  %v1736 = vunpack.c.l.b16 %v428
  %v1737 = vunpack.c.h.b16 %v428
  %v1738 = vunpack.c.l.b16 %v429
  %v1739 = vunpack.c.h.b16 %v429
  %v1740 = vunpack.c.l.b16 %v430
  %v1741 = vunpack.c.h.b16 %v430
  %v1742 = vpack.c.b16 %v966, %v958
  %v1743 = vpack.c.b16 %v967, %v959
  %v1744 = vpack.c.b16 %v968, %v960
  %v1745 = vpack.c.b16 %v969, %v961
  %v1746 = vpack.c.b16 %v970, %v962
  %v1747 = vpack.c.b16 %v971, %v963
  %v1748 = vpack.c.b16 %v972, %v964
  %v1749 = vpack.c.b16 %v973, %v965
  %v1750 = vpack.c.b16 %v982, %v974
  %v1751 = vpack.c.b16 %v983, %v975
  %v1752 = vpack.c.b16 %v984, %v976
  %v1753 = vpack.c.b16 %v985, %v977
  %v1754 = vpack.c.b16 %v986, %v978
  %v1755 = vpack.c.b16 %v987, %v979
  %v1756 = vpack.c.b16 %v988, %v980
  %v1757 = vpack.c.b16 %v989, %v981
  %v1758 = vpack.c.b16 %v998, %v990
  %v1759 = vpack.c.b16 %v999, %v991
  %v1760 = vpack.c.b16 %v1000, %v992
  %v1761 = vpack.c.b16 %v1001, %v993
  %v1762 = vpack.c.b16 %v1002, %v994
  %v1763 = vpack.c.b16 %v1003, %v995
  %v1764 = vpack.c.b16 %v1004, %v996
  %v1765 = vpack.c.b16 %v1005, %v997
  %v1766 = vpack.c.b16 %v1014, %v1006
  %v1767 = vpack.c.b16 %v1015, %v1007
  %v1768 = vpack.c.b16 %v1016, %v1008
  %v1769 = vpack.c.b16 %v1017, %v1009
  %v1770 = vpack.c.b16 %v1018, %v1010
  %v1771 = vpack.c.b16 %v1019, %v1011
  %v1772 = vpack.c.b16 %v1020, %v1012
  %v1773 = vpack.c.b16 %v1021, %v1013
  %v1774 = vpack.c.b16 %v1030, %v1022
  %v1775 = vpack.c.b16 %v1031, %v1023
  %v1776 = vpack.c.b16 %v1032, %v1024
  %v1777 = vpack.c.b16 %v1033, %v1025
  %v1778 = vpack.c.b16 %v1034, %v1026
  %v1779 = vpack.c.b16 %v1035, %v1027
  %v1780 = vpack.c.b16 %v1036, %v1028
  %v1781 = vpack.c.b16 %v1037, %v1029
  %v1782 = vpack.c.b16 %v1046, %v1038
  %v1783 = vpack.c.b16 %v1047, %v1039
  %v1784 = vpack.c.b16 %v1048, %v1040
  %v1785 = vpack.c.b16 %v1049, %v1041
  %v1786 = vpack.c.b16 %v1050, %v1042
  %v1787 = vpack.c.b16 %v1051, %v1043
  %v1788 = vpack.c.b16 %v1052, %v1044
  %v1789 = vpack.c.b16 %v1053, %v1045
  %v1790 = vpack.c.b16 %v1062, %v1054
  %v1791 = vpack.c.b16 %v1063, %v1055
  %v1792 = vpack.c.b16 %v1064, %v1056
  %v1793 = vpack.c.b16 %v1065, %v1057
  %v1794 = vpack.c.b16 %v1066, %v1058
  %v1795 = vpack.c.b16 %v1067, %v1059
  %v1796 = vpack.c.b16 %v1068, %v1060
  %v1797 = vpack.c.b16 %v1069, %v1061
  %v1798 = vpack.c.b16 %v1078, %v1070
  %v1799 = vpack.c.b16 %v1079, %v1071
  %v1800 = vpack.c.b16 %v1080, %v1072
  %v1801 = vpack.c.b16 %v1081, %v1073
  %v1802 = vpack.c.b16 %v1082, %v1074
  %v1803 = vpack.c.b16 %v1083, %v1075
  %v1804 = vpack.c.b16 %v1084, %v1076
  %v1805 = vpack.c.b16 %v1085, %v1077
  %v1806 = vpack.c.b16 %v1094, %v1086
  %v1807 = vpack.c.b16 %v1095, %v1087
  %v1808 = vpack.c.b16 %v1096, %v1088
  %v1809 = vpack.c.b16 %v1097, %v1089
  %v1810 = vpack.c.b16 %v1098, %v1090
  %v1811 = vpack.c.b16 %v1099, %v1091
  %v1812 = vpack.c.b16 %v1100, %v1092
  %v1813 = vpack.c.b16 %v1101, %v1093
  %v1814 = vpack.c.b16 %v1110, %v1102
  %v1815 = vpack.c.b16 %v1111, %v1103
  %v1816 = vpack.c.b16 %v1112, %v1104
  %v1817 = vpack.c.b16 %v1113, %v1105
  %v1818 = vpack.c.b16 %v1114, %v1106
  %v1819 = vpack.c.b16 %v1115, %v1107
  %v1820 = vpack.c.b16 %v1116, %v1108
  %v1821 = vpack.c.b16 %v1117, %v1109
  %v1822 = vpack.c.b16 %v1126, %v1118
  %v1823 = vpack.c.b16 %v1127, %v1119
  %v1824 = vpack.c.b16 %v1128, %v1120
  %v1825 = vpack.c.b16 %v1129, %v1121
  %v1826 = vpack.c.b16 %v1130, %v1122
  %v1827 = vpack.c.b16 %v1131, %v1123
  %v1828 = vpack.c.b16 %v1132, %v1124
  %v1829 = vpack.c.b16 %v1133, %v1125
  %v1830 = vpack.c.b16 %v1142, %v1134
  %v1831 = vpack.c.b16 %v1143, %v1135
  %v1832 = vpack.c.b16 %v1144, %v1136
  %v1833 = vpack.c.b16 %v1145, %v1137
  %v1834 = vpack.c.b16 %v1146, %v1138
  %v1835 = vpack.c.b16 %v1147, %v1139
  %v1836 = vpack.c.b16 %v1148, %v1140
  %v1837 = vpack.c.b16 %v1149, %v1141
  %v1838 = vpack.c.b16 %v1158, %v1150
  %v1839 = vpack.c.b16 %v1159, %v1151
  %v1840 = vpack.c.b16 %v1160, %v1152
  %v1841 = vpack.c.b16 %v1161, %v1153
  %v1842 = vpack.c.b16 %v1162, %v1154
  %v1843 = vpack.c.b16 %v1163, %v1155
  %v1844 = vpack.c.b16 %v1164, %v1156
  %v1845 = vpack.c.b16 %v1165, %v1157
  %v1846 = vpack.c.b16 %v1174, %v1166
  %v1847 = vpack.c.b16 %v1175, %v1167
  %v1848 = vpack.c.b16 %v1176, %v1168
  %v1849 = vpack.c.b16 %v1177, %v1169
  %v1850 = vpack.c.b16 %v1178, %v1170
  %v1851 = vpack.c.b16 %v1179, %v1171
  %v1852 = vpack.c.b16 %v1180, %v1172
  %v1853 = vpack.c.b16 %v1181, %v1173
  %v1854 = vpack.c.b16 %v1190, %v1182
  %v1855 = vpack.c.b16 %v1191, %v1183
  %v1856 = vpack.c.b16 %v1192, %v1184
  %v1857 = vpack.c.b16 %v1193, %v1185
  %v1858 = vpack.c.b16 %v1194, %v1186
  %v1859 = vpack.c.b16 %v1195, %v1187
  %v1860 = vpack.c.b16 %v1196, %v1188
  %v1861 = vpack.c.b16 %v1197, %v1189
  %v1862 = vpack.c.b16 %v1206, %v1198
  %v1863 = vpack.c.b16 %v1207, %v1199
  %v1864 = vpack.c.b16 %v1208, %v1200
  %v1865 = vpack.c.b16 %v1209, %v1201
  %v1866 = vpack.c.b16 %v1210, %v1202
  %v1867 = vpack.c.b16 %v1211, %v1203
  %v1868 = vpack.c.b16 %v1212, %v1204
  %v1869 = vpack.c.b16 %v1213, %v1205
  %v1870 = vpack.c.b16 %v1222, %v1214
  %v1871 = vpack.c.b16 %v1223, %v1215
  %v1872 = vpack.c.b16 %v1224, %v1216
  %v1873 = vpack.c.b16 %v1225, %v1217
  %v1874 = vpack.c.b16 %v1226, %v1218
  %v1875 = vpack.c.b16 %v1227, %v1219
  %v1876 = vpack.c.b16 %v1228, %v1220
  %v1877 = vpack.c.b16 %v1229, %v1221
  %v1878 = vpack.c.b16 %v1238, %v1230
  %v1879 = vpack.c.b16 %v1239, %v1231
  %v1880 = vpack.c.b16 %v1240, %v1232
  %v1881 = vpack.c.b16 %v1241, %v1233
  %v1882 = vpack.c.b16 %v1242, %v1234
  %v1883 = vpack.c.b16 %v1243, %v1235
  %v1884 = vpack.c.b16 %v1244, %v1236
  %v1885 = vpack.c.b16 %v1245, %v1237
  %v1886 = vpack.c.b16 %v1254, %v1246
  %v1887 = vpack.c.b16 %v1255, %v1247
  %v1888 = vpack.c.b16 %v1256, %v1248
  %v1889 = vpack.c.b16 %v1257, %v1249
  %v1890 = vpack.c.b16 %v1258, %v1250
  %v1891 = vpack.c.b16 %v1259, %v1251
  %v1892 = vpack.c.b16 %v1260, %v1252
  %v1893 = vpack.c.b16 %v1261, %v1253
  %v1894 = vpack.c.b16 %v1270, %v1262
  %v1895 = vpack.c.b16 %v1271, %v1263
  %v1896 = vpack.c.b16 %v1272, %v1264
  %v1897 = vpack.c.b16 %v1273, %v1265
  %v1898 = vpack.c.b16 %v1274, %v1266
  %v1899 = vpack.c.b16 %v1275, %v1267
  %v1900 = vpack.c.b16 %v1276, %v1268
  %v1901 = vpack.c.b16 %v1277, %v1269
  %v1902 = vpack.c.b16 %v1286, %v1278
  %v1903 = vpack.c.b16 %v1287, %v1279
  %v1904 = vpack.c.b16 %v1288, %v1280
  %v1905 = vpack.c.b16 %v1289, %v1281
  %v1906 = vpack.c.b16 %v1290, %v1282
  %v1907 = vpack.c.b16 %v1291, %v1283
  %v1908 = vpack.c.b16 %v1292, %v1284
  %v1909 = vpack.c.b16 %v1293, %v1285
  %v1910 = vpack.c.b16 %v1302, %v1294
  %v1911 = vpack.c.b16 %v1303, %v1295
  %v1912 = vpack.c.b16 %v1304, %v1296
  %v1913 = vpack.c.b16 %v1305, %v1297
  %v1914 = vpack.c.b16 %v1306, %v1298
  %v1915 = vpack.c.b16 %v1307, %v1299
  %v1916 = vpack.c.b16 %v1308, %v1300
  %v1917 = vpack.c.b16 %v1309, %v1301
  %v1918 = vpack.c.b16 %v1318, %v1310
  %v1919 = vpack.c.b16 %v1319, %v1311
  %v1920 = vpack.c.b16 %v1320, %v1312
  %v1921 = vpack.c.b16 %v1321, %v1313
  %v1922 = vpack.c.b16 %v1322, %v1314
  %v1923 = vpack.c.b16 %v1323, %v1315
  %v1924 = vpack.c.b16 %v1324, %v1316
  %v1925 = vpack.c.b16 %v1325, %v1317
  %v1926 = vpack.c.b16 %v1334, %v1326
  %v1927 = vpack.c.b16 %v1335, %v1327
  %v1928 = vpack.c.b16 %v1336, %v1328
  %v1929 = vpack.c.b16 %v1337, %v1329
  %v1930 = vpack.c.b16 %v1338, %v1330
  %v1931 = vpack.c.b16 %v1339, %v1331
  %v1932 = vpack.c.b16 %v1340, %v1332
  %v1933 = vpack.c.b16 %v1341, %v1333
  %v1934 = vpack.c.b16 %v1350, %v1342
  %v1935 = vpack.c.b16 %v1351, %v1343
  %v1936 = vpack.c.b16 %v1352, %v1344
  %v1937 = vpack.c.b16 %v1353, %v1345
  %v1938 = vpack.c.b16 %v1354, %v1346
  %v1939 = vpack.c.b16 %v1355, %v1347
  %v1940 = vpack.c.b16 %v1356, %v1348
  %v1941 = vpack.c.b16 %v1357, %v1349
  %v1942 = vpack.c.b16 %v1366, %v1358
  %v1943 = vpack.c.b16 %v1367, %v1359
  %v1944 = vpack.c.b16 %v1368, %v1360
  %v1945 = vpack.c.b16 %v1369, %v1361
  %v1946 = vpack.c.b16 %v1370, %v1362
  %v1947 = vpack.c.b16 %v1371, %v1363
  %v1948 = vpack.c.b16 %v1372, %v1364
  %v1949 = vpack.c.b16 %v1373, %v1365
  %v1950 = vpack.c.b16 %v1382, %v1374
  %v1951 = vpack.c.b16 %v1383, %v1375
  %v1952 = vpack.c.b16 %v1384, %v1376
  %v1953 = vpack.c.b16 %v1385, %v1377
  %v1954 = vpack.c.b16 %v1386, %v1378
  %v1955 = vpack.c.b16 %v1387, %v1379
  %v1956 = vpack.c.b16 %v1388, %v1380
  %v1957 = vpack.c.b16 %v1389, %v1381
  %v1958 = vpack.c.b16 %v1398, %v1390
  %v1959 = vpack.c.b16 %v1399, %v1391
  %v1960 = vpack.c.b16 %v1400, %v1392
  %v1961 = vpack.c.b16 %v1401, %v1393
  %v1962 = vpack.c.b16 %v1402, %v1394
  %v1963 = vpack.c.b16 %v1403, %v1395
  %v1964 = vpack.c.b16 %v1404, %v1396
  %v1965 = vpack.c.b16 %v1405, %v1397
  %v1966 = vpack.c.b16 %v1414, %v1406
  %v1967 = vpack.c.b16 %v1415, %v1407
  %v1968 = vpack.c.b16 %v1416, %v1408
  %v1969 = vpack.c.b16 %v1417, %v1409
  %v1970 = vpack.c.b16 %v1418, %v1410
  %v1971 = vpack.c.b16 %v1419, %v1411
  %v1972 = vpack.c.b16 %v1420, %v1412
  %v1973 = vpack.c.b16 %v1421, %v1413
  %v1974 = vpack.c.b16 %v1430, %v1422
  %v1975 = vpack.c.b16 %v1431, %v1423
  %v1976 = vpack.c.b16 %v1432, %v1424
  %v1977 = vpack.c.b16 %v1433, %v1425
  %v1978 = vpack.c.b16 %v1434, %v1426
  %v1979 = vpack.c.b16 %v1435, %v1427
  %v1980 = vpack.c.b16 %v1436, %v1428
  %v1981 = vpack.c.b16 %v1437, %v1429
  %v1982 = vpack.c.b16 %v1446, %v1438
  %v1983 = vpack.c.b16 %v1447, %v1439
  %v1984 = vpack.c.b16 %v1448, %v1440
  %v1985 = vpack.c.b16 %v1449, %v1441
  %v1986 = vpack.c.b16 %v1450, %v1442
  %v1987 = vpack.c.b16 %v1451, %v1443
  %v1988 = vpack.c.b16 %v1452, %v1444
  %v1989 = vpack.c.b16 %v1453, %v1445
  %v1990 = vpack.c.b16 %v1462, %v1454
  %v1991 = vpack.c.b16 %v1463, %v1455
  %v1992 = vpack.c.b16 %v1464, %v1456
  %v1993 = vpack.c.b16 %v1465, %v1457
  %v1994 = vpack.c.b16 %v1466, %v1458
  %v1995 = vpack.c.b16 %v1467, %v1459
  %v1996 = vpack.c.b16 %v1468, %v1460
  %v1997 = vpack.c.b16 %v1469, %v1461
  %v1998 = vpack.c.b16 %v1478, %v1470
  %v1999 = vpack.c.b16 %v1479, %v1471
  %v2000 = vpack.c.b16 %v1480, %v1472
  %v2001 = vpack.c.b16 %v1481, %v1473
  %v2002 = vpack.c.b16 %v1482, %v1474
  %v2003 = vpack.c.b16 %v1483, %v1475
  %v2004 = vpack.c.b16 %v1484, %v1476
  %v2005 = vpack.c.b16 %v1485, %v1477
  %v2006 = vpack.c.b16 %v1494, %v1486
  %v2007 = vpack.c.b16 %v1495, %v1487
  %v2008 = vpack.c.b16 %v1496, %v1488
  %v2009 = vpack.c.b16 %v1497, %v1489
  %v2010 = vpack.c.b16 %v1498, %v1490
  %v2011 = vpack.c.b16 %v1499, %v1491
  %v2012 = vpack.c.b16 %v1500, %v1492
  %v2013 = vpack.c.b16 %v1501, %v1493
  %v2014 = vpack.c.b16 %v1510, %v1502
  %v2015 = vpack.c.b16 %v1511, %v1503
  %v2016 = vpack.c.b16 %v1512, %v1504
  %v2017 = vpack.c.b16 %v1513, %v1505
  %v2018 = vpack.c.b16 %v1514, %v1506
  %v2019 = vpack.c.b16 %v1515, %v1507
  %v2020 = vpack.c.b16 %v1516, %v1508
  %v2021 = vpack.c.b16 %v1517, %v1509
  %v2022 = vpack.c.b16 %v1526, %v1518
  %v2023 = vpack.c.b16 %v1527, %v1519
  %v2024 = vpack.c.b16 %v1528, %v1520
  %v2025 = vpack.c.b16 %v1529, %v1521
  %v2026 = vpack.c.b16 %v1530, %v1522
  %v2027 = vpack.c.b16 %v1531, %v1523
  %v2028 = vpack.c.b16 %v1532, %v1524
  %v2029 = vpack.c.b16 %v1533, %v1525
  %v2030 = vpack.c.b16 %v1542, %v1534
  %v2031 = vpack.c.b16 %v1543, %v1535
  %v2032 = vpack.c.b16 %v1544, %v1536
  %v2033 = vpack.c.b16 %v1545, %v1537
  %v2034 = vpack.c.b16 %v1546, %v1538
  %v2035 = vpack.c.b16 %v1547, %v1539
  %v2036 = vpack.c.b16 %v1548, %v1540
  %v2037 = vpack.c.b16 %v1549, %v1541
  %v2038 = vpack.c.b16 %v1558, %v1550
  %v2039 = vpack.c.b16 %v1559, %v1551
  %v2040 = vpack.c.b16 %v1560, %v1552
  %v2041 = vpack.c.b16 %v1561, %v1553
  %v2042 = vpack.c.b16 %v1562, %v1554
  %v2043 = vpack.c.b16 %v1563, %v1555
  %v2044 = vpack.c.b16 %v1564, %v1556
  %v2045 = vpack.c.b16 %v1565, %v1557
  %v2046 = vpack.c.b16 %v1574, %v1566
  %v2047 = vpack.c.b16 %v1575, %v1567
  %v2048 = vpack.c.b16 %v1576, %v1568
  %v2049 = vpack.c.b16 %v1577, %v1569
  %v2050 = vpack.c.b16 %v1578, %v1570
  %v2051 = vpack.c.b16 %v1579, %v1571
  %v2052 = vpack.c.b16 %v1580, %v1572
  %v2053 = vpack.c.b16 %v1581, %v1573
  %v2054 = vpack.c.b16 %v1590, %v1582
  %v2055 = vpack.c.b16 %v1591, %v1583
  %v2056 = vpack.c.b16 %v1592, %v1584
  %v2057 = vpack.c.b16 %v1593, %v1585
  %v2058 = vpack.c.b16 %v1594, %v1586
  %v2059 = vpack.c.b16 %v1595, %v1587
  %v2060 = vpack.c.b16 %v1596, %v1588
  %v2061 = vpack.c.b16 %v1597, %v1589
  %v2062 = vpack.c.b16 %v1606, %v1598
  %v2063 = vpack.c.b16 %v1607, %v1599
  %v2064 = vpack.c.b16 %v1608, %v1600
  %v2065 = vpack.c.b16 %v1609, %v1601
  %v2066 = vpack.c.b16 %v1610, %v1602
  %v2067 = vpack.c.b16 %v1611, %v1603
  %v2068 = vpack.c.b16 %v1612, %v1604
  %v2069 = vpack.c.b16 %v1613, %v1605
  %v2070 = vpack.c.b16 %v1622, %v1614
  %v2071 = vpack.c.b16 %v1623, %v1615
  %v2072 = vpack.c.b16 %v1624, %v1616
  %v2073 = vpack.c.b16 %v1625, %v1617
  %v2074 = vpack.c.b16 %v1626, %v1618
  %v2075 = vpack.c.b16 %v1627, %v1619
  %v2076 = vpack.c.b16 %v1628, %v1620
  %v2077 = vpack.c.b16 %v1629, %v1621
  %v2078 = vpack.c.b16 %v1638, %v1630
  %v2079 = vpack.c.b16 %v1639, %v1631
  %v2080 = vpack.c.b16 %v1640, %v1632
  %v2081 = vpack.c.b16 %v1641, %v1633
  %v2082 = vpack.c.b16 %v1642, %v1634
  %v2083 = vpack.c.b16 %v1643, %v1635
  %v2084 = vpack.c.b16 %v1644, %v1636
  %v2085 = vpack.c.b16 %v1645, %v1637
  %v2086 = vpack.c.b16 %v1654, %v1646
  %v2087 = vpack.c.b16 %v1655, %v1647
  %v2088 = vpack.c.b16 %v1656, %v1648
  %v2089 = vpack.c.b16 %v1657, %v1649
  %v2090 = vpack.c.b16 %v1658, %v1650
  %v2091 = vpack.c.b16 %v1659, %v1651
  %v2092 = vpack.c.b16 %v1660, %v1652
  %v2093 = vpack.c.b16 %v1661, %v1653
  %v2094 = vpack.c.b16 %v1670, %v1662
  %v2095 = vpack.c.b16 %v1671, %v1663
  %v2096 = vpack.c.b16 %v1672, %v1664
  %v2097 = vpack.c.b16 %v1673, %v1665
  %v2098 = vpack.c.b16 %v1674, %v1666
  %v2099 = vpack.c.b16 %v1675, %v1667
  %v2100 = vpack.c.b16 %v1676, %v1668
  %v2101 = vpack.c.b16 %v1677, %v1669
  %v2102 = vpack.c.b16 %v1686, %v1678
  %v2103 = vpack.c.b16 %v1687, %v1679
  %v2104 = vpack.c.b16 %v1688, %v1680
  %v2105 = vpack.c.b16 %v1689, %v1681
  %v2106 = vpack.c.b16 %v1690, %v1682
  %v2107 = vpack.c.b16 %v1691, %v1683
  %v2108 = vpack.c.b16 %v1692, %v1684
  %v2109 = vpack.c.b16 %v1693, %v1685
  %v2110 = vpack.c.b16 %v1702, %v1694
  %v2111 = vpack.c.b16 %v1703, %v1695
  %v2112 = vpack.c.b16 %v1704, %v1696
  %v2113 = vpack.c.b16 %v1705, %v1697
  %v2114 = vpack.c.b16 %v1706, %v1698
  %v2115 = vpack.c.b16 %v1707, %v1699
  %v2116 = vpack.c.b16 %v1708, %v1700
  %v2117 = vpack.c.b16 %v1709, %v1701
  %v2118 = vpack.c.b16 %v1718, %v1710
  %v2119 = vpack.c.b16 %v1719, %v1711
  %v2120 = vpack.c.b16 %v1720, %v1712
  %v2121 = vpack.c.b16 %v1721, %v1713
  %v2122 = vpack.c.b16 %v1722, %v1714
  %v2123 = vpack.c.b16 %v1723, %v1715
  %v2124 = vpack.c.b16 %v1724, %v1716
  %v2125 = vpack.c.b16 %v1725, %v1717
  %v2126 = vpack.c.b16 %v1734, %v1726
  %v2127 = vpack.c.b16 %v1735, %v1727
  %v2128 = vpack.c.b16 %v1736, %v1728
  %v2129 = vpack.c.b16 %v1737, %v1729
  %v2130 = vpack.c.b16 %v1738, %v1730
  %v2131 = vpack.c.b16 %v1739, %v1731
  %v2132 = vpack.c.b16 %v1740, %v1732
  %v2133 = vpack.c.b16 %v1741, %v1733
  %v2654 = vunpack.c.l.b16 %v431
  %v2655 = vunpack.c.l.b16 %v432
  %v2656 = vunpack.c.l.b16 %v433
  %v2657 = vunpack.c.l.b16 %v434
  %v2658 = vunpack.c.l.b16 %v435
  %v2659 = vunpack.c.l.b16 %v436
  %v2660 = vunpack.c.l.b16 %v437
  %v2661 = vunpack.c.l.b16 %v438
  %v2662 = vunpack.c.l.b16 %v439
  %v2663 = vunpack.c.l.b16 %v440
  %v2664 = vunpack.c.l.b16 %v441
  %v2665 = vunpack.c.l.b16 %v442
  %v2666 = vunpack.c.l.b16 %v443
  %v2667 = vunpack.c.l.b16 %v444
  %v2668 = vunpack.c.l.b16 %v445
  %v2669 = vunpack.c.l.b16 %v446
  %v2670 = vunpack.c.l.b16 %v447
  %v2671 = vunpack.c.l.b16 %v448
  %v2672 = vunpack.c.l.b16 %v449
  %v2673 = vunpack.c.l.b16 %v450
  %v2674 = vunpack.c.l.b16 %v451
  %v2675 = vunpack.c.l.b16 %v452
  %v2676 = vunpack.c.l.b16 %v453
  %v2677 = vunpack.c.l.b16 %v454
  %v2678 = vunpack.c.l.b16 %v455
  %v2679 = vunpack.c.l.b16 %v456
  %v2680 = vunpack.c.l.b16 %v457
  %v2681 = vunpack.c.l.b16 %v458
  %v2682 = vunpack.c.l.b16 %v459
  %v2683 = vunpack.c.l.b16 %v460
  %v2684 = vunpack.c.l.b16 %v461
  %v2685 = vunpack.c.l.b16 %v462
  %v2686 = vunpack.c.l.b16 %v463
  %v2687 = vunpack.c.l.b16 %v464
  %v2688 = vunpack.c.l.b16 %v465
  %v2689 = vunpack.c.l.b16 %v466
  %v2690 = vunpack.c.l.b16 %v467
  %v2691 = vunpack.c.l.b16 %v468
  %v2692 = vunpack.c.l.b16 %v469
  %v2693 = vunpack.c.l.b16 %v470
  %v2694 = vunpack.c.l.b16 %v471
  %v2695 = vunpack.c.l.b16 %v472
  %v2696 = vunpack.c.l.b16 %v473
  %v2697 = vunpack.c.l.b16 %v474
  %v2698 = vunpack.c.l.b16 %v475
  %v2699 = vunpack.c.l.b16 %v476
  %v2700 = vunpack.c.l.b16 %v477
  %v2701 = vunpack.c.l.b16 %v478
  %v2702 = vunpack.c.l.b16 %v479
  %v2703 = vunpack.c.l.b16 %v480
  %v2704 = vunpack.c.l.b16 %v481
  %v2705 = vunpack.c.l.b16 %v482
  %v2706 = vunpack.c.l.b16 %v483
  %v2707 = vunpack.c.l.b16 %v484
  %v2708 = vunpack.c.l.b16 %v485
  %v2709 = vunpack.c.l.b16 %v486
  %v2710 = vunpack.c.l.b16 %v487
  %v2711 = vunpack.c.l.b16 %v488
  %v2712 = vunpack.c.l.b16 %v489
  %v2713 = vunpack.c.l.b16 %v490
  %v2714 = vunpack.c.l.b16 %v491
  %v2715 = vunpack.c.l.b16 %v492
  %v2716 = vunpack.c.l.b16 %v493
  %v2717 = vunpack.c.l.b16 %v494
  %v2718 = vunpack.c.l.b16 %v495
  %v2719 = vunpack.c.l.b16 %v496
  %v2720 = vunpack.c.l.b16 %v497
  %v2721 = vunpack.c.l.b16 %v498
  %v2722 = vunpack.c.l.b16 %v499
  %v2723 = vunpack.c.l.b16 %v500
  %v2724 = vunpack.c.l.b16 %v501
  %v2725 = vunpack.c.l.b16 %v502
  %v2726 = vunpack.c.l.b16 %v503
  %v2727 = vunpack.c.l.b16 %v504
  %v2728 = vunpack.c.l.b16 %v505
  %v2729 = vunpack.c.l.b16 %v506
  %v2730 = vunpack.c.l.b16 %v507
  %v2731 = vunpack.c.l.b16 %v508
  %v2732 = vunpack.c.l.b16 %v509
  %v2733 = vunpack.c.l.b16 %v510
  %v2734 = vunpack.c.l.b16 %v511
  %v2735 = vunpack.c.l.b16 %v512
  %v2736 = vunpack.c.l.b16 %v513
  %v2737 = vunpack.c.l.b16 %v514
  %v2738 = vunpack.c.l.b16 %v515
  %v2739 = vunpack.c.l.b16 %v516
  %v2740 = vunpack.c.l.b16 %v517
  %v2741 = vunpack.c.l.b16 %v518
  %v2742 = vunpack.c.l.b16 %v519
  %v2743 = vunpack.c.l.b16 %v520
  %v2744 = vunpack.c.l.b16 %v521
  %v2745 = vunpack.c.l.b16 %v522
  %v2746 = vunpack.c.l.b16 %v523
  %v2747 = vunpack.c.l.b16 %v524
  %v2748 = vunpack.c.l.b16 %v525
  %v2749 = vunpack.c.l.b16 %v526
  %v2750 = vunpack.c.l.b16 %v527
  %v2751 = vunpack.c.l.b16 %v528
  %v2752 = vunpack.c.l.b16 %v529
  %v2753 = vunpack.c.l.b16 %v530
  %v2754 = vunpack.c.l.b16 %v531
  %v2755 = vunpack.c.l.b16 %v532
  %v2756 = vunpack.c.l.b16 %v533
  %v2757 = vunpack.c.l.b16 %v534
  %v2758 = vunpack.c.l.b16 %v535
  %v2759 = vunpack.c.l.b16 %v536
  %v2760 = vunpack.c.l.b16 %v537
  %v2761 = vunpack.c.l.b16 %v538
  %v2762 = vunpack.c.l.b16 %v539
  %v2763 = vunpack.c.l.b16 %v540
  %v2764 = vunpack.c.l.b16 %v541
  %v2765 = vunpack.c.l.b16 %v542
  %v2766 = vunpack.c.l.b16 %v543
  %v2767 = vunpack.c.l.b16 %v544
  %v2768 = vunpack.c.l.b16 %v545
  %v2769 = vunpack.c.l.b16 %v546
  %v2770 = vunpack.c.l.b16 %v547
  %v2771 = vunpack.c.l.b16 %v548
  %v2772 = vunpack.c.l.b16 %v549
  %v2773 = vunpack.c.l.b16 %v550
  %v2774 = vunpack.c.l.b16 %v551
  %v2775 = vunpack.c.l.b16 %v552
  %v2776 = vunpack.c.l.b16 %v553
  %v2777 = vunpack.c.l.b16 %v554
  %v2778 = vunpack.c.l.b16 %v555
  %v2779 = vunpack.c.l.b16 %v556
  %v2780 = vunpack.c.l.b16 %v557
  %v2781 = vunpack.c.l.b16 %v558
  %v2782 = vpack.c.b16 %v2655, %v2654
  %v2783 = vpack.c.b16 %v2657, %v2656
  %v2784 = vpack.c.b16 %v2659, %v2658
  %v2785 = vpack.c.b16 %v2661, %v2660
  %v2786 = vpack.c.b16 %v2663, %v2662
  %v2787 = vpack.c.b16 %v2665, %v2664
  %v2788 = vpack.c.b16 %v2667, %v2666
  %v2789 = vpack.c.b16 %v2669, %v2668
  %v2790 = vpack.c.b16 %v2671, %v2670
  %v2791 = vpack.c.b16 %v2673, %v2672
  %v2792 = vpack.c.b16 %v2675, %v2674
  %v2793 = vpack.c.b16 %v2677, %v2676
  %v2794 = vpack.c.b16 %v2679, %v2678
  %v2795 = vpack.c.b16 %v2681, %v2680
  %v2796 = vpack.c.b16 %v2683, %v2682
  %v2797 = vpack.c.b16 %v2685, %v2684
  %v2798 = vpack.c.b16 %v2687, %v2686
  %v2799 = vpack.c.b16 %v2689, %v2688
  %v2800 = vpack.c.b16 %v2691, %v2690
  %v2801 = vpack.c.b16 %v2693, %v2692
  %v2802 = vpack.c.b16 %v2695, %v2694
  %v2803 = vpack.c.b16 %v2697, %v2696
  %v2804 = vpack.c.b16 %v2699, %v2698
  %v2805 = vpack.c.b16 %v2701, %v2700
  %v2806 = vpack.c.b16 %v2703, %v2702
  %v2807 = vpack.c.b16 %v2705, %v2704
  %v2808 = vpack.c.b16 %v2707, %v2706
  %v2809 = vpack.c.b16 %v2709, %v2708
  %v2810 = vpack.c.b16 %v2711, %v2710
  %v2811 = vpack.c.b16 %v2713, %v2712
  %v2812 = vpack.c.b16 %v2715, %v2714
  %v2813 = vpack.c.b16 %v2717, %v2716
  %v2814 = vpack.c.b16 %v2719, %v2718
  %v2815 = vpack.c.b16 %v2721, %v2720
  %v2816 = vpack.c.b16 %v2723, %v2722
  %v2817 = vpack.c.b16 %v2725, %v2724
  %v2818 = vpack.c.b16 %v2727, %v2726
  %v2819 = vpack.c.b16 %v2729, %v2728
  %v2820 = vpack.c.b16 %v2731, %v2730
  %v2821 = vpack.c.b16 %v2733, %v2732
  %v2822 = vpack.c.b16 %v2735, %v2734
  %v2823 = vpack.c.b16 %v2737, %v2736
  %v2824 = vpack.c.b16 %v2739, %v2738
  %v2825 = vpack.c.b16 %v2741, %v2740
  %v2826 = vpack.c.b16 %v2743, %v2742
  %v2827 = vpack.c.b16 %v2745, %v2744
  %v2828 = vpack.c.b16 %v2747, %v2746
  %v2829 = vpack.c.b16 %v2749, %v2748
  %v2830 = vpack.c.b16 %v2751, %v2750
  %v2831 = vpack.c.b16 %v2753, %v2752
  %v2832 = vpack.c.b16 %v2755, %v2754
  %v2833 = vpack.c.b16 %v2757, %v2756
  %v2834 = vpack.c.b16 %v2759, %v2758
  %v2835 = vpack.c.b16 %v2761, %v2760
  %v2836 = vpack.c.b16 %v2763, %v2762
  %v2837 = vpack.c.b16 %v2765, %v2764
  %v2838 = vpack.c.b16 %v2767, %v2766
  %v2839 = vpack.c.b16 %v2769, %v2768
  %v2840 = vpack.c.b16 %v2771, %v2770
  %v2841 = vpack.c.b16 %v2773, %v2772
  %v2842 = vpack.c.b16 %v2775, %v2774
  %v2843 = vpack.c.b16 %v2777, %v2776
  %v2844 = vpack.c.b16 %v2779, %v2778
  %v2845 = vpack.c.b16 %v2781, %v2780
  %2910 = vmatprep.subr.bf16.mxu0 0
  %2911 = vmatpush1.bf16.msra.mxu0 %v2789
  %2912 = vmatprep.subr.bf16.mxu0 0
  %2913 = vmatpush1.bf16.msra.mxu0 %v2788
  %2914 = vmatprep.subr.bf16.mxu0 0
  %2915 = vmatpush1.bf16.msra.mxu0 %v2787
  %2916 = vmatprep.subr.bf16.mxu0 0
  %2917 = vmatpush1.bf16.msra.mxu0 %v2786
  %2918 = vmatprep.subr.bf16.mxu0 0
  %2919 = vmatpush1.bf16.msra.mxu0 %v2785
  %2920 = vmatprep.subr.bf16.mxu0 0
  %2921 = vmatpush1.bf16.msra.mxu0 %v2784
  %2922 = vmatprep.subr.bf16.mxu0 0
  %2923 = vmatpush1.bf16.msra.mxu0 %v2783
  %2924 = vmatprep.subr.bf16.mxu0 0
  %2925 = vmatpush1.bf16.msra.mxu0 %v2782
  %2926 = vmatprep.subr.bf16.mxu0 0
  %2927 = vmatpush2.bf16.msra.mxu0 %v2797
  %2928 = vmatprep.subr.bf16.mxu0 0
  %2929 = vmatpush2.bf16.msra.mxu0 %v2796
  %2930 = vmatprep.subr.bf16.mxu0 0
  %2931 = vmatpush2.bf16.msra.mxu0 %v2795
  %2932 = vmatprep.subr.bf16.mxu0 0
  %2933 = vmatpush2.bf16.msra.mxu0 %v2794
  %2934 = vmatprep.subr.bf16.mxu0 0
  %2935 = vmatpush2.bf16.msra.mxu0 %v2793
  %2936 = vmatprep.subr.bf16.mxu0 0
  %2937 = vmatpush2.bf16.msra.mxu0 %v2792
  %2938 = vmatprep.subr.bf16.mxu0 0
  %2939 = vmatpush2.bf16.msra.mxu0 %v2791
  %2940 = vmatprep.subr.bf16.mxu0 0
  %2941 = vmatpush2.bf16.msra.mxu0 %v2790
  %2942 = vmatprep.mubr.bf16.mxu0 %v1743
  %2943 = vmatmul.mubr.bf16.gmra.mxu0 %v1742
  %v2944 = vpop.f32.mrf.mxu0
  %v2945 = vadd.f32 %v564, %v2944
  %v2946 = vpop.f32.mrf.mxu0
  %v2947 = vpop.f32.mrf.mxu0
  %v2948 = vadd.f32 %v564, %v2947
  %v2949 = vpop.f32.mrf.mxu0
  %2950 = vmatprep.mubr.bf16.mxu0 %v1751
  %2951 = vmatmul.mubr.bf16.gmra.mxu0 %v1750
  %v2952 = vpop.f32.mrf.mxu0
  %v2953 = vadd.f32 %v564, %v2952
  %v2954 = vpop.f32.mrf.mxu0
  %v2955 = vpop.f32.mrf.mxu0
  %v2956 = vadd.f32 %v564, %v2955
  %v2957 = vpop.f32.mrf.mxu0
  %2958 = vmatprep.mubr.bf16.mxu0 %v1759
  %2959 = vmatmul.mubr.bf16.gmra.mxu0 %v1758
  %v2960 = vpop.f32.mrf.mxu0
  %v2961 = vadd.f32 %v564, %v2960
  %v2962 = vpop.f32.mrf.mxu0
  %v2963 = vpop.f32.mrf.mxu0
  %v2964 = vadd.f32 %v564, %v2963
  %v2965 = vpop.f32.mrf.mxu0
  %2966 = vmatprep.mubr.bf16.mxu0 %v1767
  %2967 = vmatmul.mubr.bf16.gmra.mxu0 %v1766
  %v2968 = vpop.f32.mrf.mxu0
  %v2969 = vadd.f32 %v564, %v2968
  %v2970 = vpop.f32.mrf.mxu0
  %v2971 = vpop.f32.mrf.mxu0
  %v2972 = vadd.f32 %v564, %v2971
  %v2973 = vpop.f32.mrf.mxu0
  %2974 = vmatprep.mubr.bf16.mxu0 %v1775
  %2975 = vmatmul.mubr.bf16.gmra.mxu0 %v1774
  %v2976 = vpop.f32.mrf.mxu0
  %v2977 = vadd.f32 %v564, %v2976
  %v2978 = vpop.f32.mrf.mxu0
  %v2979 = vpop.f32.mrf.mxu0
  %v2980 = vadd.f32 %v564, %v2979
  %v2981 = vpop.f32.mrf.mxu0
  %2982 = vmatprep.mubr.bf16.mxu0 %v1783
  %2983 = vmatmul.mubr.bf16.gmra.mxu0 %v1782
  %v2984 = vpop.f32.mrf.mxu0
  %v2985 = vadd.f32 %v564, %v2984
  %v2986 = vpop.f32.mrf.mxu0
  %v2987 = vpop.f32.mrf.mxu0
  %v2988 = vadd.f32 %v564, %v2987
  %v2989 = vpop.f32.mrf.mxu0
  %2990 = vmatprep.mubr.bf16.mxu0 %v1791
  %2991 = vmatmul.mubr.bf16.gmra.mxu0 %v1790
  %v2992 = vpop.f32.mrf.mxu0
  %v2993 = vadd.f32 %v564, %v2992
  %v2994 = vpop.f32.mrf.mxu0
  %v2995 = vpop.f32.mrf.mxu0
  %v2996 = vadd.f32 %v564, %v2995
  %v2997 = vpop.f32.mrf.mxu0
  %2998 = vmatprep.mubr.bf16.mxu0 %v1799
  %2999 = vmatmul.mubr.bf16.gmra.mxu0 %v1798
  %v3000 = vpop.f32.mrf.mxu0
  %v3001 = vadd.f32 %v564, %v3000
  %v3002 = vpop.f32.mrf.mxu0
  %v3003 = vpop.f32.mrf.mxu0
  %v3004 = vadd.f32 %v564, %v3003
  %v3005 = vpop.f32.mrf.mxu0
  %3006 = vmatprep.mubr.bf16.mxu0 %v1807
  %3007 = vmatmul.mubr.bf16.gmra.mxu0 %v1806
  %v3008 = vpop.f32.mrf.mxu0
  %v3009 = vadd.f32 %v564, %v3008
  %v3010 = vpop.f32.mrf.mxu0
  %v3011 = vpop.f32.mrf.mxu0
  %v3012 = vadd.f32 %v564, %v3011
  %v3013 = vpop.f32.mrf.mxu0
  %3014 = vmatprep.mubr.bf16.mxu0 %v1815
  %3015 = vmatmul.mubr.bf16.gmra.mxu0 %v1814
  %v3016 = vpop.f32.mrf.mxu0
  %v3017 = vadd.f32 %v564, %v3016
  %v3018 = vpop.f32.mrf.mxu0
  %v3019 = vpop.f32.mrf.mxu0
  %v3020 = vadd.f32 %v564, %v3019
  %v3021 = vpop.f32.mrf.mxu0
  %3022 = vmatprep.mubr.bf16.mxu0 %v1823
  %3023 = vmatmul.mubr.bf16.gmra.mxu0 %v1822
  %v3024 = vpop.f32.mrf.mxu0
  %v3025 = vadd.f32 %v564, %v3024
  %v3026 = vpop.f32.mrf.mxu0
  %v3027 = vpop.f32.mrf.mxu0
  %v3028 = vadd.f32 %v564, %v3027
  %v3029 = vpop.f32.mrf.mxu0
  %3030 = vmatprep.mubr.bf16.mxu0 %v1831
  %3031 = vmatmul.mubr.bf16.gmra.mxu0 %v1830
  %v3032 = vpop.f32.mrf.mxu0
  %v3033 = vadd.f32 %v564, %v3032
  %v3034 = vpop.f32.mrf.mxu0
  %v3035 = vpop.f32.mrf.mxu0
  %v3036 = vadd.f32 %v564, %v3035
  %v3037 = vpop.f32.mrf.mxu0
  %3038 = vmatprep.mubr.bf16.mxu0 %v1839
  %3039 = vmatmul.mubr.bf16.gmra.mxu0 %v1838
  %v3040 = vpop.f32.mrf.mxu0
  %v3041 = vadd.f32 %v564, %v3040
  %v3042 = vpop.f32.mrf.mxu0
  %v3043 = vpop.f32.mrf.mxu0
  %v3044 = vadd.f32 %v564, %v3043
  %v3045 = vpop.f32.mrf.mxu0
  %3046 = vmatprep.mubr.bf16.mxu0 %v1847
  %3047 = vmatmul.mubr.bf16.gmra.mxu0 %v1846
  %v3048 = vpop.f32.mrf.mxu0
  %v3049 = vadd.f32 %v564, %v3048
  %v3050 = vpop.f32.mrf.mxu0
  %v3051 = vpop.f32.mrf.mxu0
  %v3052 = vadd.f32 %v564, %v3051
  %v3053 = vpop.f32.mrf.mxu0
  %3054 = vmatprep.mubr.bf16.mxu0 %v1855
  %3055 = vmatmul.mubr.bf16.gmra.mxu0 %v1854
  %v3056 = vpop.f32.mrf.mxu0
  %v3057 = vadd.f32 %v564, %v3056
  %v3058 = vpop.f32.mrf.mxu0
  %v3059 = vpop.f32.mrf.mxu0
  %v3060 = vadd.f32 %v564, %v3059
  %v3061 = vpop.f32.mrf.mxu0
  %3062 = vmatprep.mubr.bf16.mxu0 %v1863
  %3063 = vmatmul.mubr.bf16.gmra.mxu0 %v1862
  %v3064 = vpop.f32.mrf.mxu0
  %v3065 = vadd.f32 %v564, %v3064
  %v3066 = vpop.f32.mrf.mxu0
  %v3067 = vpop.f32.mrf.mxu0
  %v3068 = vadd.f32 %v564, %v3067
  %v3069 = vpop.f32.mrf.mxu0
  %3070 = vmatprep.mubr.bf16.mxu0 %v1871
  %3071 = vmatmul.mubr.bf16.gmra.mxu0 %v1870
  %v3072 = vpop.f32.mrf.mxu0
  %v3073 = vadd.f32 %v564, %v3072
  %v3074 = vpop.f32.mrf.mxu0
  %v3075 = vpop.f32.mrf.mxu0
  %v3076 = vadd.f32 %v564, %v3075
  %v3077 = vpop.f32.mrf.mxu0
  %3078 = vmatprep.mubr.bf16.mxu0 %v1879
  %3079 = vmatmul.mubr.bf16.gmra.mxu0 %v1878
  %v3080 = vpop.f32.mrf.mxu0
  %v3081 = vadd.f32 %v564, %v3080
  %v3082 = vpop.f32.mrf.mxu0
  %v3083 = vpop.f32.mrf.mxu0
  %v3084 = vadd.f32 %v564, %v3083
  %v3085 = vpop.f32.mrf.mxu0
  %3086 = vmatprep.mubr.bf16.mxu0 %v1887
  %3087 = vmatmul.mubr.bf16.gmra.mxu0 %v1886
  %v3088 = vpop.f32.mrf.mxu0
  %v3089 = vadd.f32 %v564, %v3088
  %v3090 = vpop.f32.mrf.mxu0
  %v3091 = vpop.f32.mrf.mxu0
  %v3092 = vadd.f32 %v564, %v3091
  %v3093 = vpop.f32.mrf.mxu0
  %3094 = vmatprep.mubr.bf16.mxu0 %v1895
  %3095 = vmatmul.mubr.bf16.gmra.mxu0 %v1894
  %v3096 = vpop.f32.mrf.mxu0
  %v3097 = vadd.f32 %v564, %v3096
  %v3098 = vpop.f32.mrf.mxu0
  %v3099 = vpop.f32.mrf.mxu0
  %v3100 = vadd.f32 %v564, %v3099
  %v3101 = vpop.f32.mrf.mxu0
  %3102 = vmatprep.mubr.bf16.mxu0 %v1903
  %3103 = vmatmul.mubr.bf16.gmra.mxu0 %v1902
  %v3104 = vpop.f32.mrf.mxu0
  %v3105 = vadd.f32 %v564, %v3104
  %v3106 = vpop.f32.mrf.mxu0
  %v3107 = vpop.f32.mrf.mxu0
  %v3108 = vadd.f32 %v564, %v3107
  %v3109 = vpop.f32.mrf.mxu0
  %3110 = vmatprep.mubr.bf16.mxu0 %v1911
  %3111 = vmatmul.mubr.bf16.gmra.mxu0 %v1910
  %v3112 = vpop.f32.mrf.mxu0
  %v3113 = vadd.f32 %v564, %v3112
  %v3114 = vpop.f32.mrf.mxu0
  %v3115 = vpop.f32.mrf.mxu0
  %v3116 = vadd.f32 %v564, %v3115
  %v3117 = vpop.f32.mrf.mxu0
  %3118 = vmatprep.mubr.bf16.mxu0 %v1919
  %3119 = vmatmul.mubr.bf16.gmra.mxu0 %v1918
  %v3120 = vpop.f32.mrf.mxu0
  %v3121 = vadd.f32 %v564, %v3120
  %v3122 = vpop.f32.mrf.mxu0
  %v3123 = vpop.f32.mrf.mxu0
  %v3124 = vadd.f32 %v564, %v3123
  %v3125 = vpop.f32.mrf.mxu0
  %3126 = vmatprep.mubr.bf16.mxu0 %v1927
  %3127 = vmatmul.mubr.bf16.gmra.mxu0 %v1926
  %v3128 = vpop.f32.mrf.mxu0
  %v3129 = vadd.f32 %v564, %v3128
  %v3130 = vpop.f32.mrf.mxu0
  %v3131 = vpop.f32.mrf.mxu0
  %v3132 = vadd.f32 %v564, %v3131
  %v3133 = vpop.f32.mrf.mxu0
  %3134 = vmatprep.mubr.bf16.mxu0 %v1935
  %3135 = vmatmul.mubr.bf16.gmra.mxu0 %v1934
  %v3136 = vpop.f32.mrf.mxu0
  %v3137 = vadd.f32 %v564, %v3136
  %v3138 = vpop.f32.mrf.mxu0
  %v3139 = vpop.f32.mrf.mxu0
  %v3140 = vadd.f32 %v564, %v3139
  %v3141 = vpop.f32.mrf.mxu0
  %3142 = vmatprep.mubr.bf16.mxu0 %v1943
  %3143 = vmatmul.mubr.bf16.gmra.mxu0 %v1942
  %v3144 = vpop.f32.mrf.mxu0
  %v3145 = vadd.f32 %v564, %v3144
  %v3146 = vpop.f32.mrf.mxu0
  %v3147 = vpop.f32.mrf.mxu0
  %v3148 = vadd.f32 %v564, %v3147
  %v3149 = vpop.f32.mrf.mxu0
  %3150 = vmatprep.mubr.bf16.mxu0 %v1951
  %3151 = vmatmul.mubr.bf16.gmra.mxu0 %v1950
  %v3152 = vpop.f32.mrf.mxu0
  %v3153 = vadd.f32 %v564, %v3152
  %v3154 = vpop.f32.mrf.mxu0
  %v3155 = vpop.f32.mrf.mxu0
  %v3156 = vadd.f32 %v564, %v3155
  %v3157 = vpop.f32.mrf.mxu0
  %3158 = vmatprep.mubr.bf16.mxu0 %v1959
  %3159 = vmatmul.mubr.bf16.gmra.mxu0 %v1958
  %v3160 = vpop.f32.mrf.mxu0
  %v3161 = vadd.f32 %v564, %v3160
  %v3162 = vpop.f32.mrf.mxu0
  %v3163 = vpop.f32.mrf.mxu0
  %v3164 = vadd.f32 %v564, %v3163
  %v3165 = vpop.f32.mrf.mxu0
  %3166 = vmatprep.mubr.bf16.mxu0 %v1967
  %3167 = vmatmul.mubr.bf16.gmra.mxu0 %v1966
  %v3168 = vpop.f32.mrf.mxu0
  %v3169 = vadd.f32 %v564, %v3168
  %v3170 = vpop.f32.mrf.mxu0
  %v3171 = vpop.f32.mrf.mxu0
  %v3172 = vadd.f32 %v564, %v3171
  %v3173 = vpop.f32.mrf.mxu0
  %3174 = vmatprep.mubr.bf16.mxu0 %v1975
  %3175 = vmatmul.mubr.bf16.gmra.mxu0 %v1974
  %v3176 = vpop.f32.mrf.mxu0
  %v3177 = vadd.f32 %v564, %v3176
  %v3178 = vpop.f32.mrf.mxu0
  %v3179 = vpop.f32.mrf.mxu0
  %v3180 = vadd.f32 %v564, %v3179
  %v3181 = vpop.f32.mrf.mxu0
  %3182 = vmatprep.mubr.bf16.mxu0 %v1983
  %3183 = vmatmul.mubr.bf16.gmra.mxu0 %v1982
  %v3184 = vpop.f32.mrf.mxu0
  %v3185 = vadd.f32 %v564, %v3184
  %v3186 = vpop.f32.mrf.mxu0
  %v3187 = vpop.f32.mrf.mxu0
  %v3188 = vadd.f32 %v564, %v3187
  %v3189 = vpop.f32.mrf.mxu0
  %3190 = vmatprep.mubr.bf16.mxu0 %v1991
  %3191 = vmatmul.mubr.bf16.gmra.mxu0 %v1990
  %v3192 = vpop.f32.mrf.mxu0
  %v3193 = vadd.f32 %v564, %v3192
  %v3194 = vpop.f32.mrf.mxu0
  %v3195 = vpop.f32.mrf.mxu0
  %v3196 = vadd.f32 %v564, %v3195
  %v3197 = vpop.f32.mrf.mxu0
  %3198 = vmatprep.mubr.bf16.mxu0 %v1999
  %3199 = vmatmul.mubr.bf16.gmra.mxu0 %v1998
  %v3200 = vpop.f32.mrf.mxu0
  %v3201 = vadd.f32 %v564, %v3200
  %v3202 = vpop.f32.mrf.mxu0
  %v3203 = vpop.f32.mrf.mxu0
  %v3204 = vadd.f32 %v564, %v3203
  %v3205 = vpop.f32.mrf.mxu0
  %3206 = vmatprep.mubr.bf16.mxu0 %v2007
  %3207 = vmatmul.mubr.bf16.gmra.mxu0 %v2006
  %v3208 = vpop.f32.mrf.mxu0
  %v3209 = vadd.f32 %v564, %v3208
  %v3210 = vpop.f32.mrf.mxu0
  %v3211 = vpop.f32.mrf.mxu0
  %v3212 = vadd.f32 %v564, %v3211
  %v3213 = vpop.f32.mrf.mxu0
  %3214 = vmatprep.mubr.bf16.mxu0 %v2015
  %3215 = vmatmul.mubr.bf16.gmra.mxu0 %v2014
  %v3216 = vpop.f32.mrf.mxu0
  %v3217 = vadd.f32 %v564, %v3216
  %v3218 = vpop.f32.mrf.mxu0
  %v3219 = vpop.f32.mrf.mxu0
  %v3220 = vadd.f32 %v564, %v3219
  %v3221 = vpop.f32.mrf.mxu0
  %3222 = vmatprep.mubr.bf16.mxu0 %v2023
  %3223 = vmatmul.mubr.bf16.gmra.mxu0 %v2022
  %v3224 = vpop.f32.mrf.mxu0
  %v3225 = vadd.f32 %v564, %v3224
  %v3226 = vpop.f32.mrf.mxu0
  %v3227 = vpop.f32.mrf.mxu0
  %v3228 = vadd.f32 %v564, %v3227
  %v3229 = vpop.f32.mrf.mxu0
  %3230 = vmatprep.mubr.bf16.mxu0 %v2031
  %3231 = vmatmul.mubr.bf16.gmra.mxu0 %v2030
  %v3232 = vpop.f32.mrf.mxu0
  %v3233 = vadd.f32 %v564, %v3232
  %v3234 = vpop.f32.mrf.mxu0
  %v3235 = vpop.f32.mrf.mxu0
  %v3236 = vadd.f32 %v564, %v3235
  %v3237 = vpop.f32.mrf.mxu0
  %3238 = vmatprep.mubr.bf16.mxu0 %v2039
  %3239 = vmatmul.mubr.bf16.gmra.mxu0 %v2038
  %v3240 = vpop.f32.mrf.mxu0
  %v3241 = vadd.f32 %v564, %v3240
  %v3242 = vpop.f32.mrf.mxu0
  %v3243 = vpop.f32.mrf.mxu0
  %v3244 = vadd.f32 %v564, %v3243
  %v3245 = vpop.f32.mrf.mxu0
  %3246 = vmatprep.mubr.bf16.mxu0 %v2047
  %3247 = vmatmul.mubr.bf16.gmra.mxu0 %v2046
  %v3248 = vpop.f32.mrf.mxu0
  %v3249 = vadd.f32 %v564, %v3248
  %v3250 = vpop.f32.mrf.mxu0
  %v3251 = vpop.f32.mrf.mxu0
  %v3252 = vadd.f32 %v564, %v3251
  %v3253 = vpop.f32.mrf.mxu0
  %3254 = vmatprep.mubr.bf16.mxu0 %v2055
  %3255 = vmatmul.mubr.bf16.gmra.mxu0 %v2054
  %v3256 = vpop.f32.mrf.mxu0
  %v3257 = vadd.f32 %v564, %v3256
  %v3258 = vpop.f32.mrf.mxu0
  %v3259 = vpop.f32.mrf.mxu0
  %v3260 = vadd.f32 %v564, %v3259
  %v3261 = vpop.f32.mrf.mxu0
  %3262 = vmatprep.mubr.bf16.mxu0 %v2063
  %3263 = vmatmul.mubr.bf16.gmra.mxu0 %v2062
  %v3264 = vpop.f32.mrf.mxu0
  %v3265 = vadd.f32 %v564, %v3264
  %v3266 = vpop.f32.mrf.mxu0
  %v3267 = vpop.f32.mrf.mxu0
  %v3268 = vadd.f32 %v564, %v3267
  %v3269 = vpop.f32.mrf.mxu0
  %3270 = vmatprep.mubr.bf16.mxu0 %v2071
  %3271 = vmatmul.mubr.bf16.gmra.mxu0 %v2070
  %v3272 = vpop.f32.mrf.mxu0
  %v3273 = vadd.f32 %v564, %v3272
  %v3274 = vpop.f32.mrf.mxu0
  %v3275 = vpop.f32.mrf.mxu0
  %v3276 = vadd.f32 %v564, %v3275
  %v3277 = vpop.f32.mrf.mxu0
  %3278 = vmatprep.mubr.bf16.mxu0 %v2079
  %3279 = vmatmul.mubr.bf16.gmra.mxu0 %v2078
  %v3280 = vpop.f32.mrf.mxu0
  %v3281 = vadd.f32 %v564, %v3280
  %v3282 = vpop.f32.mrf.mxu0
  %v3283 = vpop.f32.mrf.mxu0
  %v3284 = vadd.f32 %v564, %v3283
  %v3285 = vpop.f32.mrf.mxu0
  %3286 = vmatprep.mubr.bf16.mxu0 %v2087
  %3287 = vmatmul.mubr.bf16.gmra.mxu0 %v2086
  %v3288 = vpop.f32.mrf.mxu0
  %v3289 = vadd.f32 %v564, %v3288
  %v3290 = vpop.f32.mrf.mxu0
  %v3291 = vpop.f32.mrf.mxu0
  %v3292 = vadd.f32 %v564, %v3291
  %v3293 = vpop.f32.mrf.mxu0
  %3294 = vmatprep.mubr.bf16.mxu0 %v2095
  %3295 = vmatmul.mubr.bf16.gmra.mxu0 %v2094
  %v3296 = vpop.f32.mrf.mxu0
  %v3297 = vadd.f32 %v564, %v3296
  %v3298 = vpop.f32.mrf.mxu0
  %v3299 = vpop.f32.mrf.mxu0
  %v3300 = vadd.f32 %v564, %v3299
  %v3301 = vpop.f32.mrf.mxu0
  %3302 = vmatprep.mubr.bf16.mxu0 %v2103
  %3303 = vmatmul.mubr.bf16.gmra.mxu0 %v2102
  %v3304 = vpop.f32.mrf.mxu0
  %v3305 = vadd.f32 %v564, %v3304
  %v3306 = vpop.f32.mrf.mxu0
  %v3307 = vpop.f32.mrf.mxu0
  %v3308 = vadd.f32 %v564, %v3307
  %v3309 = vpop.f32.mrf.mxu0
  %3310 = vmatprep.mubr.bf16.mxu0 %v2111
  %3311 = vmatmul.mubr.bf16.gmra.mxu0 %v2110
  %v3312 = vpop.f32.mrf.mxu0
  %v3313 = vadd.f32 %v564, %v3312
  %v3314 = vpop.f32.mrf.mxu0
  %v3315 = vpop.f32.mrf.mxu0
  %v3316 = vadd.f32 %v564, %v3315
  %v3317 = vpop.f32.mrf.mxu0
  %3318 = vmatprep.mubr.bf16.mxu0 %v2119
  %3319 = vmatmul.mubr.bf16.gmra.mxu0 %v2118
  %v3320 = vpop.f32.mrf.mxu0
  %v3321 = vadd.f32 %v564, %v3320
  %v3322 = vpop.f32.mrf.mxu0
  %v3323 = vpop.f32.mrf.mxu0
  %v3324 = vadd.f32 %v564, %v3323
  %v3325 = vpop.f32.mrf.mxu0
  %3326 = vmatprep.mubr.bf16.mxu0 %v2127
  %3327 = vmatmul.mubr.bf16.gmra.mxu0 %v2126
  %v3328 = vpop.f32.mrf.mxu0
  %v3329 = vadd.f32 %v564, %v3328
  %v3330 = vpop.f32.mrf.mxu0
  %v3331 = vpop.f32.mrf.mxu0
  %v3332 = vadd.f32 %v564, %v3331
  %v3333 = vpop.f32.mrf.mxu0
  %3334 = vdwg.mxu0
  %3335 = vmatprep.subr.bf16.mxu0 0
  %3336 = vmatpush1.bf16.msra.mxu0 %v2805
  %3337 = vmatprep.subr.bf16.mxu0 0
  %3338 = vmatpush1.bf16.msra.mxu0 %v2804
  %3339 = vmatprep.subr.bf16.mxu0 0
  %3340 = vmatpush1.bf16.msra.mxu0 %v2803
  %3341 = vmatprep.subr.bf16.mxu0 0
  %3342 = vmatpush1.bf16.msra.mxu0 %v2802
  %3343 = vmatprep.subr.bf16.mxu0 0
  %3344 = vmatpush1.bf16.msra.mxu0 %v2801
  %3345 = vmatprep.subr.bf16.mxu0 0
  %3346 = vmatpush1.bf16.msra.mxu0 %v2800
  %3347 = vmatprep.subr.bf16.mxu0 0
  %3348 = vmatpush1.bf16.msra.mxu0 %v2799
  %3349 = vmatprep.subr.bf16.mxu0 0
  %3350 = vmatpush1.bf16.msra.mxu0 %v2798
  %3351 = vmatprep.subr.bf16.mxu0 0
  %3352 = vmatpush2.bf16.msra.mxu0 %v2813
  %3353 = vmatprep.subr.bf16.mxu0 0
  %3354 = vmatpush2.bf16.msra.mxu0 %v2812
  %3355 = vmatprep.subr.bf16.mxu0 0
  %3356 = vmatpush2.bf16.msra.mxu0 %v2811
  %3357 = vmatprep.subr.bf16.mxu0 0
  %3358 = vmatpush2.bf16.msra.mxu0 %v2810
  %3359 = vmatprep.subr.bf16.mxu0 0
  %3360 = vmatpush2.bf16.msra.mxu0 %v2809
  %3361 = vmatprep.subr.bf16.mxu0 0
  %3362 = vmatpush2.bf16.msra.mxu0 %v2808
  %3363 = vmatprep.subr.bf16.mxu0 0
  %3364 = vmatpush2.bf16.msra.mxu0 %v2807
  %3365 = vmatprep.subr.bf16.mxu0 0
  %3366 = vmatpush2.bf16.msra.mxu0 %v2806
  %3367 = vmatprep.mubr.bf16.mxu0 %v1745
  %3368 = vmatmul.mubr.bf16.gmra.mxu0 %v1744
  %v3369 = vpop.f32.mrf.mxu0
  %v3370 = vadd.f32 %v2945, %v3369
  %v3371 = vpop.f32.mrf.mxu0
  %v3372 = vpop.f32.mrf.mxu0
  %v3373 = vadd.f32 %v2948, %v3372
  %v3374 = vpop.f32.mrf.mxu0
  %3375 = vmatprep.mubr.bf16.mxu0 %v1753
  %3376 = vmatmul.mubr.bf16.gmra.mxu0 %v1752
  %v3377 = vpop.f32.mrf.mxu0
  %v3378 = vadd.f32 %v2953, %v3377
  %v3379 = vpop.f32.mrf.mxu0
  %v3380 = vpop.f32.mrf.mxu0
  %v3381 = vadd.f32 %v2956, %v3380
  %v3382 = vpop.f32.mrf.mxu0
  %3383 = vmatprep.mubr.bf16.mxu0 %v1761
  %3384 = vmatmul.mubr.bf16.gmra.mxu0 %v1760
  %v3385 = vpop.f32.mrf.mxu0
  %v3386 = vadd.f32 %v2961, %v3385
  %v3387 = vpop.f32.mrf.mxu0
  %v3388 = vpop.f32.mrf.mxu0
  %v3389 = vadd.f32 %v2964, %v3388
  %v3390 = vpop.f32.mrf.mxu0
  %3391 = vmatprep.mubr.bf16.mxu0 %v1769
  %3392 = vmatmul.mubr.bf16.gmra.mxu0 %v1768
  %v3393 = vpop.f32.mrf.mxu0
  %v3394 = vadd.f32 %v2969, %v3393
  %v3395 = vpop.f32.mrf.mxu0
  %v3396 = vpop.f32.mrf.mxu0
  %v3397 = vadd.f32 %v2972, %v3396
  %v3398 = vpop.f32.mrf.mxu0
  %3399 = vmatprep.mubr.bf16.mxu0 %v1777
  %3400 = vmatmul.mubr.bf16.gmra.mxu0 %v1776
  %v3401 = vpop.f32.mrf.mxu0
  %v3402 = vadd.f32 %v2977, %v3401
  %v3403 = vpop.f32.mrf.mxu0
  %v3404 = vpop.f32.mrf.mxu0
  %v3405 = vadd.f32 %v2980, %v3404
  %v3406 = vpop.f32.mrf.mxu0
  %3407 = vmatprep.mubr.bf16.mxu0 %v1785
  %3408 = vmatmul.mubr.bf16.gmra.mxu0 %v1784
  %v3409 = vpop.f32.mrf.mxu0
  %v3410 = vadd.f32 %v2985, %v3409
  %v3411 = vpop.f32.mrf.mxu0
  %v3412 = vpop.f32.mrf.mxu0
  %v3413 = vadd.f32 %v2988, %v3412
  %v3414 = vpop.f32.mrf.mxu0
  %3415 = vmatprep.mubr.bf16.mxu0 %v1793
  %3416 = vmatmul.mubr.bf16.gmra.mxu0 %v1792
  %v3417 = vpop.f32.mrf.mxu0
  %v3418 = vadd.f32 %v2993, %v3417
  %v3419 = vpop.f32.mrf.mxu0
  %v3420 = vpop.f32.mrf.mxu0
  %v3421 = vadd.f32 %v2996, %v3420
  %v3422 = vpop.f32.mrf.mxu0
  %3423 = vmatprep.mubr.bf16.mxu0 %v1801
  %3424 = vmatmul.mubr.bf16.gmra.mxu0 %v1800
  %v3425 = vpop.f32.mrf.mxu0
  %v3426 = vadd.f32 %v3001, %v3425
  %v3427 = vpop.f32.mrf.mxu0
  %v3428 = vpop.f32.mrf.mxu0
  %v3429 = vadd.f32 %v3004, %v3428
  %v3430 = vpop.f32.mrf.mxu0
  %3431 = vmatprep.mubr.bf16.mxu0 %v1809
  %3432 = vmatmul.mubr.bf16.gmra.mxu0 %v1808
  %v3433 = vpop.f32.mrf.mxu0
  %v3434 = vadd.f32 %v3009, %v3433
  %v3435 = vpop.f32.mrf.mxu0
  %v3436 = vpop.f32.mrf.mxu0
  %v3437 = vadd.f32 %v3012, %v3436
  %v3438 = vpop.f32.mrf.mxu0
  %3439 = vmatprep.mubr.bf16.mxu0 %v1817
  %3440 = vmatmul.mubr.bf16.gmra.mxu0 %v1816
  %v3441 = vpop.f32.mrf.mxu0
  %v3442 = vadd.f32 %v3017, %v3441
  %v3443 = vpop.f32.mrf.mxu0
  %v3444 = vpop.f32.mrf.mxu0
  %v3445 = vadd.f32 %v3020, %v3444
  %v3446 = vpop.f32.mrf.mxu0
  %3447 = vmatprep.mubr.bf16.mxu0 %v1825
  %3448 = vmatmul.mubr.bf16.gmra.mxu0 %v1824
  %v3449 = vpop.f32.mrf.mxu0
  %v3450 = vadd.f32 %v3025, %v3449
  %v3451 = vpop.f32.mrf.mxu0
  %v3452 = vpop.f32.mrf.mxu0
  %v3453 = vadd.f32 %v3028, %v3452
  %v3454 = vpop.f32.mrf.mxu0
  %3455 = vmatprep.mubr.bf16.mxu0 %v1833
  %3456 = vmatmul.mubr.bf16.gmra.mxu0 %v1832
  %v3457 = vpop.f32.mrf.mxu0
  %v3458 = vadd.f32 %v3033, %v3457
  %v3459 = vpop.f32.mrf.mxu0
  %v3460 = vpop.f32.mrf.mxu0
  %v3461 = vadd.f32 %v3036, %v3460
  %v3462 = vpop.f32.mrf.mxu0
  %3463 = vmatprep.mubr.bf16.mxu0 %v1841
  %3464 = vmatmul.mubr.bf16.gmra.mxu0 %v1840
  %v3465 = vpop.f32.mrf.mxu0
  %v3466 = vadd.f32 %v3041, %v3465
  %v3467 = vpop.f32.mrf.mxu0
  %v3468 = vpop.f32.mrf.mxu0
  %v3469 = vadd.f32 %v3044, %v3468
  %v3470 = vpop.f32.mrf.mxu0
  %3471 = vmatprep.mubr.bf16.mxu0 %v1849
  %3472 = vmatmul.mubr.bf16.gmra.mxu0 %v1848
  %v3473 = vpop.f32.mrf.mxu0
  %v3474 = vadd.f32 %v3049, %v3473
  %v3475 = vpop.f32.mrf.mxu0
  %v3476 = vpop.f32.mrf.mxu0
  %v3477 = vadd.f32 %v3052, %v3476
  %v3478 = vpop.f32.mrf.mxu0
  %3479 = vmatprep.mubr.bf16.mxu0 %v1857
  %3480 = vmatmul.mubr.bf16.gmra.mxu0 %v1856
  %v3481 = vpop.f32.mrf.mxu0
  %v3482 = vadd.f32 %v3057, %v3481
  %v3483 = vpop.f32.mrf.mxu0
  %v3484 = vpop.f32.mrf.mxu0
  %v3485 = vadd.f32 %v3060, %v3484
  %v3486 = vpop.f32.mrf.mxu0
  %3487 = vmatprep.mubr.bf16.mxu0 %v1865
  %3488 = vmatmul.mubr.bf16.gmra.mxu0 %v1864
  %v3489 = vpop.f32.mrf.mxu0
  %v3490 = vadd.f32 %v3065, %v3489
  %v3491 = vpop.f32.mrf.mxu0
  %v3492 = vpop.f32.mrf.mxu0
  %v3493 = vadd.f32 %v3068, %v3492
  %v3494 = vpop.f32.mrf.mxu0
  %3495 = vmatprep.mubr.bf16.mxu0 %v1873
  %3496 = vmatmul.mubr.bf16.gmra.mxu0 %v1872
  %v3497 = vpop.f32.mrf.mxu0
  %v3498 = vadd.f32 %v3073, %v3497
  %v3499 = vpop.f32.mrf.mxu0
  %v3500 = vpop.f32.mrf.mxu0
  %v3501 = vadd.f32 %v3076, %v3500
  %v3502 = vpop.f32.mrf.mxu0
  %3503 = vmatprep.mubr.bf16.mxu0 %v1881
  %3504 = vmatmul.mubr.bf16.gmra.mxu0 %v1880
  %v3505 = vpop.f32.mrf.mxu0
  %v3506 = vadd.f32 %v3081, %v3505
  %v3507 = vpop.f32.mrf.mxu0
  %v3508 = vpop.f32.mrf.mxu0
  %v3509 = vadd.f32 %v3084, %v3508
  %v3510 = vpop.f32.mrf.mxu0
  %3511 = vmatprep.mubr.bf16.mxu0 %v1889
  %3512 = vmatmul.mubr.bf16.gmra.mxu0 %v1888
  %v3513 = vpop.f32.mrf.mxu0
  %v3514 = vadd.f32 %v3089, %v3513
  %v3515 = vpop.f32.mrf.mxu0
  %v3516 = vpop.f32.mrf.mxu0
  %v3517 = vadd.f32 %v3092, %v3516
  %v3518 = vpop.f32.mrf.mxu0
  %3519 = vmatprep.mubr.bf16.mxu0 %v1897
  %3520 = vmatmul.mubr.bf16.gmra.mxu0 %v1896
  %v3521 = vpop.f32.mrf.mxu0
  %v3522 = vadd.f32 %v3097, %v3521
  %v3523 = vpop.f32.mrf.mxu0
  %v3524 = vpop.f32.mrf.mxu0
  %v3525 = vadd.f32 %v3100, %v3524
  %v3526 = vpop.f32.mrf.mxu0
  %3527 = vmatprep.mubr.bf16.mxu0 %v1905
  %3528 = vmatmul.mubr.bf16.gmra.mxu0 %v1904
  %v3529 = vpop.f32.mrf.mxu0
  %v3530 = vadd.f32 %v3105, %v3529
  %v3531 = vpop.f32.mrf.mxu0
  %v3532 = vpop.f32.mrf.mxu0
  %v3533 = vadd.f32 %v3108, %v3532
  %v3534 = vpop.f32.mrf.mxu0
  %3535 = vmatprep.mubr.bf16.mxu0 %v1913
  %3536 = vmatmul.mubr.bf16.gmra.mxu0 %v1912
  %v3537 = vpop.f32.mrf.mxu0
  %v3538 = vadd.f32 %v3113, %v3537
  %v3539 = vpop.f32.mrf.mxu0
  %v3540 = vpop.f32.mrf.mxu0
  %v3541 = vadd.f32 %v3116, %v3540
  %v3542 = vpop.f32.mrf.mxu0
  %3543 = vmatprep.mubr.bf16.mxu0 %v1921
  %3544 = vmatmul.mubr.bf16.gmra.mxu0 %v1920
  %v3545 = vpop.f32.mrf.mxu0
  %v3546 = vadd.f32 %v3121, %v3545
  %v3547 = vpop.f32.mrf.mxu0
  %v3548 = vpop.f32.mrf.mxu0
  %v3549 = vadd.f32 %v3124, %v3548
  %v3550 = vpop.f32.mrf.mxu0
  %3551 = vmatprep.mubr.bf16.mxu0 %v1929
  %3552 = vmatmul.mubr.bf16.gmra.mxu0 %v1928
  %v3553 = vpop.f32.mrf.mxu0
  %v3554 = vadd.f32 %v3129, %v3553
  %v3555 = vpop.f32.mrf.mxu0
  %v3556 = vpop.f32.mrf.mxu0
  %v3557 = vadd.f32 %v3132, %v3556
  %v3558 = vpop.f32.mrf.mxu0
  %3559 = vmatprep.mubr.bf16.mxu0 %v1937
  %3560 = vmatmul.mubr.bf16.gmra.mxu0 %v1936
  %v3561 = vpop.f32.mrf.mxu0
  %v3562 = vadd.f32 %v3137, %v3561
  %v3563 = vpop.f32.mrf.mxu0
  %v3564 = vpop.f32.mrf.mxu0
  %v3565 = vadd.f32 %v3140, %v3564
  %v3566 = vpop.f32.mrf.mxu0
  %3567 = vmatprep.mubr.bf16.mxu0 %v1945
  %3568 = vmatmul.mubr.bf16.gmra.mxu0 %v1944
  %v3569 = vpop.f32.mrf.mxu0
  %v3570 = vadd.f32 %v3145, %v3569
  %v3571 = vpop.f32.mrf.mxu0
  %v3572 = vpop.f32.mrf.mxu0
  %v3573 = vadd.f32 %v3148, %v3572
  %v3574 = vpop.f32.mrf.mxu0
  %3575 = vmatprep.mubr.bf16.mxu0 %v1953
  %3576 = vmatmul.mubr.bf16.gmra.mxu0 %v1952
  %v3577 = vpop.f32.mrf.mxu0
  %v3578 = vadd.f32 %v3153, %v3577
  %v3579 = vpop.f32.mrf.mxu0
  %v3580 = vpop.f32.mrf.mxu0
  %v3581 = vadd.f32 %v3156, %v3580
  %v3582 = vpop.f32.mrf.mxu0
  %3583 = vmatprep.mubr.bf16.mxu0 %v1961
  %3584 = vmatmul.mubr.bf16.gmra.mxu0 %v1960
  %v3585 = vpop.f32.mrf.mxu0
  %v3586 = vadd.f32 %v3161, %v3585
  %v3587 = vpop.f32.mrf.mxu0
  %v3588 = vpop.f32.mrf.mxu0
  %v3589 = vadd.f32 %v3164, %v3588
  %v3590 = vpop.f32.mrf.mxu0
  %3591 = vmatprep.mubr.bf16.mxu0 %v1969
  %3592 = vmatmul.mubr.bf16.gmra.mxu0 %v1968
  %v3593 = vpop.f32.mrf.mxu0
  %v3594 = vadd.f32 %v3169, %v3593
  %v3595 = vpop.f32.mrf.mxu0
  %v3596 = vpop.f32.mrf.mxu0
  %v3597 = vadd.f32 %v3172, %v3596
  %v3598 = vpop.f32.mrf.mxu0
  %3599 = vmatprep.mubr.bf16.mxu0 %v1977
  %3600 = vmatmul.mubr.bf16.gmra.mxu0 %v1976
  %v3601 = vpop.f32.mrf.mxu0
  %v3602 = vadd.f32 %v3177, %v3601
  %v3603 = vpop.f32.mrf.mxu0
  %v3604 = vpop.f32.mrf.mxu0
  %v3605 = vadd.f32 %v3180, %v3604
  %v3606 = vpop.f32.mrf.mxu0
  %3607 = vmatprep.mubr.bf16.mxu0 %v1985
  %3608 = vmatmul.mubr.bf16.gmra.mxu0 %v1984
  %v3609 = vpop.f32.mrf.mxu0
  %v3610 = vadd.f32 %v3185, %v3609
  %v3611 = vpop.f32.mrf.mxu0
  %v3612 = vpop.f32.mrf.mxu0
  %v3613 = vadd.f32 %v3188, %v3612
  %v3614 = vpop.f32.mrf.mxu0
  %3615 = vmatprep.mubr.bf16.mxu0 %v1993
  %3616 = vmatmul.mubr.bf16.gmra.mxu0 %v1992
  %v3617 = vpop.f32.mrf.mxu0
  %v3618 = vadd.f32 %v3193, %v3617
  %v3619 = vpop.f32.mrf.mxu0
  %v3620 = vpop.f32.mrf.mxu0
  %v3621 = vadd.f32 %v3196, %v3620
  %v3622 = vpop.f32.mrf.mxu0
  %3623 = vmatprep.mubr.bf16.mxu0 %v2001
  %3624 = vmatmul.mubr.bf16.gmra.mxu0 %v2000
  %v3625 = vpop.f32.mrf.mxu0
  %v3626 = vadd.f32 %v3201, %v3625
  %v3627 = vpop.f32.mrf.mxu0
  %v3628 = vpop.f32.mrf.mxu0
  %v3629 = vadd.f32 %v3204, %v3628
  %v3630 = vpop.f32.mrf.mxu0
  %3631 = vmatprep.mubr.bf16.mxu0 %v2009
  %3632 = vmatmul.mubr.bf16.gmra.mxu0 %v2008
  %v3633 = vpop.f32.mrf.mxu0
  %v3634 = vadd.f32 %v3209, %v3633
  %v3635 = vpop.f32.mrf.mxu0
  %v3636 = vpop.f32.mrf.mxu0
  %v3637 = vadd.f32 %v3212, %v3636
  %v3638 = vpop.f32.mrf.mxu0
  %3639 = vmatprep.mubr.bf16.mxu0 %v2017
  %3640 = vmatmul.mubr.bf16.gmra.mxu0 %v2016
  %v3641 = vpop.f32.mrf.mxu0
  %v3642 = vadd.f32 %v3217, %v3641
  %v3643 = vpop.f32.mrf.mxu0
  %v3644 = vpop.f32.mrf.mxu0
  %v3645 = vadd.f32 %v3220, %v3644
  %v3646 = vpop.f32.mrf.mxu0
  %3647 = vmatprep.mubr.bf16.mxu0 %v2025
  %3648 = vmatmul.mubr.bf16.gmra.mxu0 %v2024
  %v3649 = vpop.f32.mrf.mxu0
  %v3650 = vadd.f32 %v3225, %v3649
  %v3651 = vpop.f32.mrf.mxu0
  %v3652 = vpop.f32.mrf.mxu0
  %v3653 = vadd.f32 %v3228, %v3652
  %v3654 = vpop.f32.mrf.mxu0
  %3655 = vmatprep.mubr.bf16.mxu0 %v2033
  %3656 = vmatmul.mubr.bf16.gmra.mxu0 %v2032
  %v3657 = vpop.f32.mrf.mxu0
  %v3658 = vadd.f32 %v3233, %v3657
  %v3659 = vpop.f32.mrf.mxu0
  %v3660 = vpop.f32.mrf.mxu0
  %v3661 = vadd.f32 %v3236, %v3660
  %v3662 = vpop.f32.mrf.mxu0
  %3663 = vmatprep.mubr.bf16.mxu0 %v2041
  %3664 = vmatmul.mubr.bf16.gmra.mxu0 %v2040
  %v3665 = vpop.f32.mrf.mxu0
  %v3666 = vadd.f32 %v3241, %v3665
  %v3667 = vpop.f32.mrf.mxu0
  %v3668 = vpop.f32.mrf.mxu0
  %v3669 = vadd.f32 %v3244, %v3668
  %v3670 = vpop.f32.mrf.mxu0
  %3671 = vmatprep.mubr.bf16.mxu0 %v2049
  %3672 = vmatmul.mubr.bf16.gmra.mxu0 %v2048
  %v3673 = vpop.f32.mrf.mxu0
  %v3674 = vadd.f32 %v3249, %v3673
  %v3675 = vpop.f32.mrf.mxu0
  %v3676 = vpop.f32.mrf.mxu0
  %v3677 = vadd.f32 %v3252, %v3676
  %v3678 = vpop.f32.mrf.mxu0
  %3679 = vmatprep.mubr.bf16.mxu0 %v2057
  %3680 = vmatmul.mubr.bf16.gmra.mxu0 %v2056
  %v3681 = vpop.f32.mrf.mxu0
  %v3682 = vadd.f32 %v3257, %v3681
  %v3683 = vpop.f32.mrf.mxu0
  %v3684 = vpop.f32.mrf.mxu0
  %v3685 = vadd.f32 %v3260, %v3684
  %v3686 = vpop.f32.mrf.mxu0
  %3687 = vmatprep.mubr.bf16.mxu0 %v2065
  %3688 = vmatmul.mubr.bf16.gmra.mxu0 %v2064
  %v3689 = vpop.f32.mrf.mxu0
  %v3690 = vadd.f32 %v3265, %v3689
  %v3691 = vpop.f32.mrf.mxu0
  %v3692 = vpop.f32.mrf.mxu0
  %v3693 = vadd.f32 %v3268, %v3692
  %v3694 = vpop.f32.mrf.mxu0
  %3695 = vmatprep.mubr.bf16.mxu0 %v2073
  %3696 = vmatmul.mubr.bf16.gmra.mxu0 %v2072
  %v3697 = vpop.f32.mrf.mxu0
  %v3698 = vadd.f32 %v3273, %v3697
  %v3699 = vpop.f32.mrf.mxu0
  %v3700 = vpop.f32.mrf.mxu0
  %v3701 = vadd.f32 %v3276, %v3700
  %v3702 = vpop.f32.mrf.mxu0
  %3703 = vmatprep.mubr.bf16.mxu0 %v2081
  %3704 = vmatmul.mubr.bf16.gmra.mxu0 %v2080
  %v3705 = vpop.f32.mrf.mxu0
  %v3706 = vadd.f32 %v3281, %v3705
  %v3707 = vpop.f32.mrf.mxu0
  %v3708 = vpop.f32.mrf.mxu0
  %v3709 = vadd.f32 %v3284, %v3708
  %v3710 = vpop.f32.mrf.mxu0
  %3711 = vmatprep.mubr.bf16.mxu0 %v2089
  %3712 = vmatmul.mubr.bf16.gmra.mxu0 %v2088
  %v3713 = vpop.f32.mrf.mxu0
  %v3714 = vadd.f32 %v3289, %v3713
  %v3715 = vpop.f32.mrf.mxu0
  %v3716 = vpop.f32.mrf.mxu0
  %v3717 = vadd.f32 %v3292, %v3716
  %v3718 = vpop.f32.mrf.mxu0
  %3719 = vmatprep.mubr.bf16.mxu0 %v2097
  %3720 = vmatmul.mubr.bf16.gmra.mxu0 %v2096
  %v3721 = vpop.f32.mrf.mxu0
  %v3722 = vadd.f32 %v3297, %v3721
  %v3723 = vpop.f32.mrf.mxu0
  %v3724 = vpop.f32.mrf.mxu0
  %v3725 = vadd.f32 %v3300, %v3724
  %v3726 = vpop.f32.mrf.mxu0
  %3727 = vmatprep.mubr.bf16.mxu0 %v2105
  %3728 = vmatmul.mubr.bf16.gmra.mxu0 %v2104
  %v3729 = vpop.f32.mrf.mxu0
  %v3730 = vadd.f32 %v3305, %v3729
  %v3731 = vpop.f32.mrf.mxu0
  %v3732 = vpop.f32.mrf.mxu0
  %v3733 = vadd.f32 %v3308, %v3732
  %v3734 = vpop.f32.mrf.mxu0
  %3735 = vmatprep.mubr.bf16.mxu0 %v2113
  %3736 = vmatmul.mubr.bf16.gmra.mxu0 %v2112
  %v3737 = vpop.f32.mrf.mxu0
  %v3738 = vadd.f32 %v3313, %v3737
  %v3739 = vpop.f32.mrf.mxu0
  %v3740 = vpop.f32.mrf.mxu0
  %v3741 = vadd.f32 %v3316, %v3740
  %v3742 = vpop.f32.mrf.mxu0
  %3743 = vmatprep.mubr.bf16.mxu0 %v2121
  %3744 = vmatmul.mubr.bf16.gmra.mxu0 %v2120
  %v3745 = vpop.f32.mrf.mxu0
  %v3746 = vadd.f32 %v3321, %v3745
  %v3747 = vpop.f32.mrf.mxu0
  %v3748 = vpop.f32.mrf.mxu0
  %v3749 = vadd.f32 %v3324, %v3748
  %v3750 = vpop.f32.mrf.mxu0
  %3751 = vmatprep.mubr.bf16.mxu0 %v2129
  %3752 = vmatmul.mubr.bf16.gmra.mxu0 %v2128
  %v3753 = vpop.f32.mrf.mxu0
  %v3754 = vadd.f32 %v3329, %v3753
  %v3755 = vpop.f32.mrf.mxu0
  %v3756 = vpop.f32.mrf.mxu0
  %v3757 = vadd.f32 %v3332, %v3756
  %v3758 = vpop.f32.mrf.mxu0
  %3759 = vdwg.mxu0
  %3760 = vmatprep.subr.bf16.mxu0 0
  %3761 = vmatpush1.bf16.msra.mxu0 %v2821
  %3762 = vmatprep.subr.bf16.mxu0 0
  %3763 = vmatpush1.bf16.msra.mxu0 %v2820
  %3764 = vmatprep.subr.bf16.mxu0 0
  %3765 = vmatpush1.bf16.msra.mxu0 %v2819
  %3766 = vmatprep.subr.bf16.mxu0 0
  %3767 = vmatpush1.bf16.msra.mxu0 %v2818
  %3768 = vmatprep.subr.bf16.mxu0 0
  %3769 = vmatpush1.bf16.msra.mxu0 %v2817
  %3770 = vmatprep.subr.bf16.mxu0 0
  %3771 = vmatpush1.bf16.msra.mxu0 %v2816
  %3772 = vmatprep.subr.bf16.mxu0 0
  %3773 = vmatpush1.bf16.msra.mxu0 %v2815
  %3774 = vmatprep.subr.bf16.mxu0 0
  %3775 = vmatpush1.bf16.msra.mxu0 %v2814
  %3776 = vmatprep.subr.bf16.mxu0 0
  %3777 = vmatpush2.bf16.msra.mxu0 %v2829
  %3778 = vmatprep.subr.bf16.mxu0 0
  %3779 = vmatpush2.bf16.msra.mxu0 %v2828
  %3780 = vmatprep.subr.bf16.mxu0 0
  %3781 = vmatpush2.bf16.msra.mxu0 %v2827
  %3782 = vmatprep.subr.bf16.mxu0 0
  %3783 = vmatpush2.bf16.msra.mxu0 %v2826
  %3784 = vmatprep.subr.bf16.mxu0 0
  %3785 = vmatpush2.bf16.msra.mxu0 %v2825
  %3786 = vmatprep.subr.bf16.mxu0 0
  %3787 = vmatpush2.bf16.msra.mxu0 %v2824
  %3788 = vmatprep.subr.bf16.mxu0 0
  %3789 = vmatpush2.bf16.msra.mxu0 %v2823
  %3790 = vmatprep.subr.bf16.mxu0 0
  %3791 = vmatpush2.bf16.msra.mxu0 %v2822
  %3792 = vmatprep.mubr.bf16.mxu0 %v1747
  %3793 = vmatmul.mubr.bf16.gmra.mxu0 %v1746
  %v3794 = vpop.f32.mrf.mxu0
  %v3795 = vadd.f32 %v3370, %v3794
  %v3796 = vpop.f32.mrf.mxu0
  %v3797 = vpop.f32.mrf.mxu0
  %v3798 = vadd.f32 %v3373, %v3797
  %v3799 = vpop.f32.mrf.mxu0
  %3800 = vmatprep.mubr.bf16.mxu0 %v1755
  %3801 = vmatmul.mubr.bf16.gmra.mxu0 %v1754
  %v3802 = vpop.f32.mrf.mxu0
  %v3803 = vadd.f32 %v3378, %v3802
  %v3804 = vpop.f32.mrf.mxu0
  %v3805 = vpop.f32.mrf.mxu0
  %v3806 = vadd.f32 %v3381, %v3805
  %v3807 = vpop.f32.mrf.mxu0
  %3808 = vmatprep.mubr.bf16.mxu0 %v1763
  %3809 = vmatmul.mubr.bf16.gmra.mxu0 %v1762
  %v3810 = vpop.f32.mrf.mxu0
  %v3811 = vadd.f32 %v3386, %v3810
  %v3812 = vpop.f32.mrf.mxu0
  %v3813 = vpop.f32.mrf.mxu0
  %v3814 = vadd.f32 %v3389, %v3813
  %v3815 = vpop.f32.mrf.mxu0
  %3816 = vmatprep.mubr.bf16.mxu0 %v1771
  %3817 = vmatmul.mubr.bf16.gmra.mxu0 %v1770
  %v3818 = vpop.f32.mrf.mxu0
  %v3819 = vadd.f32 %v3394, %v3818
  %v3820 = vpop.f32.mrf.mxu0
  %v3821 = vpop.f32.mrf.mxu0
  %v3822 = vadd.f32 %v3397, %v3821
  %v3823 = vpop.f32.mrf.mxu0
  %3824 = vmatprep.mubr.bf16.mxu0 %v1779
  %3825 = vmatmul.mubr.bf16.gmra.mxu0 %v1778
  %v3826 = vpop.f32.mrf.mxu0
  %v3827 = vadd.f32 %v3402, %v3826
  %v3828 = vpop.f32.mrf.mxu0
  %v3829 = vpop.f32.mrf.mxu0
  %v3830 = vadd.f32 %v3405, %v3829
  %v3831 = vpop.f32.mrf.mxu0
  %3832 = vmatprep.mubr.bf16.mxu0 %v1787
  %3833 = vmatmul.mubr.bf16.gmra.mxu0 %v1786
  %v3834 = vpop.f32.mrf.mxu0
  %v3835 = vadd.f32 %v3410, %v3834
  %v3836 = vpop.f32.mrf.mxu0
  %v3837 = vpop.f32.mrf.mxu0
  %v3838 = vadd.f32 %v3413, %v3837
  %v3839 = vpop.f32.mrf.mxu0
  %3840 = vmatprep.mubr.bf16.mxu0 %v1795
  %3841 = vmatmul.mubr.bf16.gmra.mxu0 %v1794
  %v3842 = vpop.f32.mrf.mxu0
  %v3843 = vadd.f32 %v3418, %v3842
  %v3844 = vpop.f32.mrf.mxu0
  %v3845 = vpop.f32.mrf.mxu0
  %v3846 = vadd.f32 %v3421, %v3845
  %v3847 = vpop.f32.mrf.mxu0
  %3848 = vmatprep.mubr.bf16.mxu0 %v1803
  %3849 = vmatmul.mubr.bf16.gmra.mxu0 %v1802
  %v3850 = vpop.f32.mrf.mxu0
  %v3851 = vadd.f32 %v3426, %v3850
  %v3852 = vpop.f32.mrf.mxu0
  %v3853 = vpop.f32.mrf.mxu0
  %v3854 = vadd.f32 %v3429, %v3853
  %v3855 = vpop.f32.mrf.mxu0
  %3856 = vmatprep.mubr.bf16.mxu0 %v1811
  %3857 = vmatmul.mubr.bf16.gmra.mxu0 %v1810
  %v3858 = vpop.f32.mrf.mxu0
  %v3859 = vadd.f32 %v3434, %v3858
  %v3860 = vpop.f32.mrf.mxu0
  %v3861 = vpop.f32.mrf.mxu0
  %v3862 = vadd.f32 %v3437, %v3861
  %v3863 = vpop.f32.mrf.mxu0
  %3864 = vmatprep.mubr.bf16.mxu0 %v1819
  %3865 = vmatmul.mubr.bf16.gmra.mxu0 %v1818
  %v3866 = vpop.f32.mrf.mxu0
  %v3867 = vadd.f32 %v3442, %v3866
  %v3868 = vpop.f32.mrf.mxu0
  %v3869 = vpop.f32.mrf.mxu0
  %v3870 = vadd.f32 %v3445, %v3869
  %v3871 = vpop.f32.mrf.mxu0
  %3872 = vmatprep.mubr.bf16.mxu0 %v1827
  %3873 = vmatmul.mubr.bf16.gmra.mxu0 %v1826
  %v3874 = vpop.f32.mrf.mxu0
  %v3875 = vadd.f32 %v3450, %v3874
  %v3876 = vpop.f32.mrf.mxu0
  %v3877 = vpop.f32.mrf.mxu0
  %v3878 = vadd.f32 %v3453, %v3877
  %v3879 = vpop.f32.mrf.mxu0
  %3880 = vmatprep.mubr.bf16.mxu0 %v1835
  %3881 = vmatmul.mubr.bf16.gmra.mxu0 %v1834
  %v3882 = vpop.f32.mrf.mxu0
  %v3883 = vadd.f32 %v3458, %v3882
  %v3884 = vpop.f32.mrf.mxu0
  %v3885 = vpop.f32.mrf.mxu0
  %v3886 = vadd.f32 %v3461, %v3885
  %v3887 = vpop.f32.mrf.mxu0
  %3888 = vmatprep.mubr.bf16.mxu0 %v1843
  %3889 = vmatmul.mubr.bf16.gmra.mxu0 %v1842
  %v3890 = vpop.f32.mrf.mxu0
  %v3891 = vadd.f32 %v3466, %v3890
  %v3892 = vpop.f32.mrf.mxu0
  %v3893 = vpop.f32.mrf.mxu0
  %v3894 = vadd.f32 %v3469, %v3893
  %v3895 = vpop.f32.mrf.mxu0
  %3896 = vmatprep.mubr.bf16.mxu0 %v1851
  %3897 = vmatmul.mubr.bf16.gmra.mxu0 %v1850
  %v3898 = vpop.f32.mrf.mxu0
  %v3899 = vadd.f32 %v3474, %v3898
  %v3900 = vpop.f32.mrf.mxu0
  %v3901 = vpop.f32.mrf.mxu0
  %v3902 = vadd.f32 %v3477, %v3901
  %v3903 = vpop.f32.mrf.mxu0
  %3904 = vmatprep.mubr.bf16.mxu0 %v1859
  %3905 = vmatmul.mubr.bf16.gmra.mxu0 %v1858
  %v3906 = vpop.f32.mrf.mxu0
  %v3907 = vadd.f32 %v3482, %v3906
  %v3908 = vpop.f32.mrf.mxu0
  %v3909 = vpop.f32.mrf.mxu0
  %v3910 = vadd.f32 %v3485, %v3909
  %v3911 = vpop.f32.mrf.mxu0
  %3912 = vmatprep.mubr.bf16.mxu0 %v1867
  %3913 = vmatmul.mubr.bf16.gmra.mxu0 %v1866
  %v3914 = vpop.f32.mrf.mxu0
  %v3915 = vadd.f32 %v3490, %v3914
  %v3916 = vpop.f32.mrf.mxu0
  %v3917 = vpop.f32.mrf.mxu0
  %v3918 = vadd.f32 %v3493, %v3917
  %v3919 = vpop.f32.mrf.mxu0
  %3920 = vmatprep.mubr.bf16.mxu0 %v1875
  %3921 = vmatmul.mubr.bf16.gmra.mxu0 %v1874
  %v3922 = vpop.f32.mrf.mxu0
  %v3923 = vadd.f32 %v3498, %v3922
  %v3924 = vpop.f32.mrf.mxu0
  %v3925 = vpop.f32.mrf.mxu0
  %v3926 = vadd.f32 %v3501, %v3925
  %v3927 = vpop.f32.mrf.mxu0
  %3928 = vmatprep.mubr.bf16.mxu0 %v1883
  %3929 = vmatmul.mubr.bf16.gmra.mxu0 %v1882
  %v3930 = vpop.f32.mrf.mxu0
  %v3931 = vadd.f32 %v3506, %v3930
  %v3932 = vpop.f32.mrf.mxu0
  %v3933 = vpop.f32.mrf.mxu0
  %v3934 = vadd.f32 %v3509, %v3933
  %v3935 = vpop.f32.mrf.mxu0
  %3936 = vmatprep.mubr.bf16.mxu0 %v1891
  %3937 = vmatmul.mubr.bf16.gmra.mxu0 %v1890
  %v3938 = vpop.f32.mrf.mxu0
  %v3939 = vadd.f32 %v3514, %v3938
  %v3940 = vpop.f32.mrf.mxu0
  %v3941 = vpop.f32.mrf.mxu0
  %v3942 = vadd.f32 %v3517, %v3941
  %v3943 = vpop.f32.mrf.mxu0
  %3944 = vmatprep.mubr.bf16.mxu0 %v1899
  %3945 = vmatmul.mubr.bf16.gmra.mxu0 %v1898
  %v3946 = vpop.f32.mrf.mxu0
  %v3947 = vadd.f32 %v3522, %v3946
  %v3948 = vpop.f32.mrf.mxu0
  %v3949 = vpop.f32.mrf.mxu0
  %v3950 = vadd.f32 %v3525, %v3949
  %v3951 = vpop.f32.mrf.mxu0
  %3952 = vmatprep.mubr.bf16.mxu0 %v1907
  %3953 = vmatmul.mubr.bf16.gmra.mxu0 %v1906
  %v3954 = vpop.f32.mrf.mxu0
  %v3955 = vadd.f32 %v3530, %v3954
  %v3956 = vpop.f32.mrf.mxu0
  %v3957 = vpop.f32.mrf.mxu0
  %v3958 = vadd.f32 %v3533, %v3957
  %v3959 = vpop.f32.mrf.mxu0
  %3960 = vmatprep.mubr.bf16.mxu0 %v1915
  %3961 = vmatmul.mubr.bf16.gmra.mxu0 %v1914
  %v3962 = vpop.f32.mrf.mxu0
  %v3963 = vadd.f32 %v3538, %v3962
  %v3964 = vpop.f32.mrf.mxu0
  %v3965 = vpop.f32.mrf.mxu0
  %v3966 = vadd.f32 %v3541, %v3965
  %v3967 = vpop.f32.mrf.mxu0
  %3968 = vmatprep.mubr.bf16.mxu0 %v1923
  %3969 = vmatmul.mubr.bf16.gmra.mxu0 %v1922
  %v3970 = vpop.f32.mrf.mxu0
  %v3971 = vadd.f32 %v3546, %v3970
  %v3972 = vpop.f32.mrf.mxu0
  %v3973 = vpop.f32.mrf.mxu0
  %v3974 = vadd.f32 %v3549, %v3973
  %v3975 = vpop.f32.mrf.mxu0
  %3976 = vmatprep.mubr.bf16.mxu0 %v1931
  %3977 = vmatmul.mubr.bf16.gmra.mxu0 %v1930
  %v3978 = vpop.f32.mrf.mxu0
  %v3979 = vadd.f32 %v3554, %v3978
  %v3980 = vpop.f32.mrf.mxu0
  %v3981 = vpop.f32.mrf.mxu0
  %v3982 = vadd.f32 %v3557, %v3981
  %v3983 = vpop.f32.mrf.mxu0
  %3984 = vmatprep.mubr.bf16.mxu0 %v1939
  %3985 = vmatmul.mubr.bf16.gmra.mxu0 %v1938
  %v3986 = vpop.f32.mrf.mxu0
  %v3987 = vadd.f32 %v3562, %v3986
  %v3988 = vpop.f32.mrf.mxu0
  %v3989 = vpop.f32.mrf.mxu0
  %v3990 = vadd.f32 %v3565, %v3989
  %v3991 = vpop.f32.mrf.mxu0
  %3992 = vmatprep.mubr.bf16.mxu0 %v1947
  %3993 = vmatmul.mubr.bf16.gmra.mxu0 %v1946
  %v3994 = vpop.f32.mrf.mxu0
  %v3995 = vadd.f32 %v3570, %v3994
  %v3996 = vpop.f32.mrf.mxu0
  %v3997 = vpop.f32.mrf.mxu0
  %v3998 = vadd.f32 %v3573, %v3997
  %v3999 = vpop.f32.mrf.mxu0
  %4000 = vmatprep.mubr.bf16.mxu0 %v1955
  %4001 = vmatmul.mubr.bf16.gmra.mxu0 %v1954
  %v4002 = vpop.f32.mrf.mxu0
  %v4003 = vadd.f32 %v3578, %v4002
  %v4004 = vpop.f32.mrf.mxu0
  %v4005 = vpop.f32.mrf.mxu0
  %v4006 = vadd.f32 %v3581, %v4005
  %v4007 = vpop.f32.mrf.mxu0
  %4008 = vmatprep.mubr.bf16.mxu0 %v1963
  %4009 = vmatmul.mubr.bf16.gmra.mxu0 %v1962
  %v4010 = vpop.f32.mrf.mxu0
  %v4011 = vadd.f32 %v3586, %v4010
  %v4012 = vpop.f32.mrf.mxu0
  %v4013 = vpop.f32.mrf.mxu0
  %v4014 = vadd.f32 %v3589, %v4013
  %v4015 = vpop.f32.mrf.mxu0
  %4016 = vmatprep.mubr.bf16.mxu0 %v1971
  %4017 = vmatmul.mubr.bf16.gmra.mxu0 %v1970
  %v4018 = vpop.f32.mrf.mxu0
  %v4019 = vadd.f32 %v3594, %v4018
  %v4020 = vpop.f32.mrf.mxu0
  %v4021 = vpop.f32.mrf.mxu0
  %v4022 = vadd.f32 %v3597, %v4021
  %v4023 = vpop.f32.mrf.mxu0
  %4024 = vmatprep.mubr.bf16.mxu0 %v1979
  %4025 = vmatmul.mubr.bf16.gmra.mxu0 %v1978
  %v4026 = vpop.f32.mrf.mxu0
  %v4027 = vadd.f32 %v3602, %v4026
  %v4028 = vpop.f32.mrf.mxu0
  %v4029 = vpop.f32.mrf.mxu0
  %v4030 = vadd.f32 %v3605, %v4029
  %v4031 = vpop.f32.mrf.mxu0
  %4032 = vmatprep.mubr.bf16.mxu0 %v1987
  %4033 = vmatmul.mubr.bf16.gmra.mxu0 %v1986
  %v4034 = vpop.f32.mrf.mxu0
  %v4035 = vadd.f32 %v3610, %v4034
  %v4036 = vpop.f32.mrf.mxu0
  %v4037 = vpop.f32.mrf.mxu0
  %v4038 = vadd.f32 %v3613, %v4037
  %v4039 = vpop.f32.mrf.mxu0
  %4040 = vmatprep.mubr.bf16.mxu0 %v1995
  %4041 = vmatmul.mubr.bf16.gmra.mxu0 %v1994
  %v4042 = vpop.f32.mrf.mxu0
  %v4043 = vadd.f32 %v3618, %v4042
  %v4044 = vpop.f32.mrf.mxu0
  %v4045 = vpop.f32.mrf.mxu0
  %v4046 = vadd.f32 %v3621, %v4045
  %v4047 = vpop.f32.mrf.mxu0
  %4048 = vmatprep.mubr.bf16.mxu0 %v2003
  %4049 = vmatmul.mubr.bf16.gmra.mxu0 %v2002
  %v4050 = vpop.f32.mrf.mxu0
  %v4051 = vadd.f32 %v3626, %v4050
  %v4052 = vpop.f32.mrf.mxu0
  %v4053 = vpop.f32.mrf.mxu0
  %v4054 = vadd.f32 %v3629, %v4053
  %v4055 = vpop.f32.mrf.mxu0
  %4056 = vmatprep.mubr.bf16.mxu0 %v2011
  %4057 = vmatmul.mubr.bf16.gmra.mxu0 %v2010
  %v4058 = vpop.f32.mrf.mxu0
  %v4059 = vadd.f32 %v3634, %v4058
  %v4060 = vpop.f32.mrf.mxu0
  %v4061 = vpop.f32.mrf.mxu0
  %v4062 = vadd.f32 %v3637, %v4061
  %v4063 = vpop.f32.mrf.mxu0
  %4064 = vmatprep.mubr.bf16.mxu0 %v2019
  %4065 = vmatmul.mubr.bf16.gmra.mxu0 %v2018
  %v4066 = vpop.f32.mrf.mxu0
  %v4067 = vadd.f32 %v3642, %v4066
  %v4068 = vpop.f32.mrf.mxu0
  %v4069 = vpop.f32.mrf.mxu0
  %v4070 = vadd.f32 %v3645, %v4069
  %v4071 = vpop.f32.mrf.mxu0
  %4072 = vmatprep.mubr.bf16.mxu0 %v2027
  %4073 = vmatmul.mubr.bf16.gmra.mxu0 %v2026
  %v4074 = vpop.f32.mrf.mxu0
  %v4075 = vadd.f32 %v3650, %v4074
  %v4076 = vpop.f32.mrf.mxu0
  %v4077 = vpop.f32.mrf.mxu0
  %v4078 = vadd.f32 %v3653, %v4077
  %v4079 = vpop.f32.mrf.mxu0
  %4080 = vmatprep.mubr.bf16.mxu0 %v2035
  %4081 = vmatmul.mubr.bf16.gmra.mxu0 %v2034
  %v4082 = vpop.f32.mrf.mxu0
  %v4083 = vadd.f32 %v3658, %v4082
  %v4084 = vpop.f32.mrf.mxu0
  %v4085 = vpop.f32.mrf.mxu0
  %v4086 = vadd.f32 %v3661, %v4085
  %v4087 = vpop.f32.mrf.mxu0
  %4088 = vmatprep.mubr.bf16.mxu0 %v2043
  %4089 = vmatmul.mubr.bf16.gmra.mxu0 %v2042
  %v4090 = vpop.f32.mrf.mxu0
  %v4091 = vadd.f32 %v3666, %v4090
  %v4092 = vpop.f32.mrf.mxu0
  %v4093 = vpop.f32.mrf.mxu0
  %v4094 = vadd.f32 %v3669, %v4093
  %v4095 = vpop.f32.mrf.mxu0
  %4096 = vmatprep.mubr.bf16.mxu0 %v2051
  %4097 = vmatmul.mubr.bf16.gmra.mxu0 %v2050
  %v4098 = vpop.f32.mrf.mxu0
  %v4099 = vadd.f32 %v3674, %v4098
  %v4100 = vpop.f32.mrf.mxu0
  %v4101 = vpop.f32.mrf.mxu0
  %v4102 = vadd.f32 %v3677, %v4101
  %v4103 = vpop.f32.mrf.mxu0
  %4104 = vmatprep.mubr.bf16.mxu0 %v2059
  %4105 = vmatmul.mubr.bf16.gmra.mxu0 %v2058
  %v4106 = vpop.f32.mrf.mxu0
  %v4107 = vadd.f32 %v3682, %v4106
  %v4108 = vpop.f32.mrf.mxu0
  %v4109 = vpop.f32.mrf.mxu0
  %v4110 = vadd.f32 %v3685, %v4109
  %v4111 = vpop.f32.mrf.mxu0
  %4112 = vmatprep.mubr.bf16.mxu0 %v2067
  %4113 = vmatmul.mubr.bf16.gmra.mxu0 %v2066
  %v4114 = vpop.f32.mrf.mxu0
  %v4115 = vadd.f32 %v3690, %v4114
  %v4116 = vpop.f32.mrf.mxu0
  %v4117 = vpop.f32.mrf.mxu0
  %v4118 = vadd.f32 %v3693, %v4117
  %v4119 = vpop.f32.mrf.mxu0
  %4120 = vmatprep.mubr.bf16.mxu0 %v2075
  %4121 = vmatmul.mubr.bf16.gmra.mxu0 %v2074
  %v4122 = vpop.f32.mrf.mxu0
  %v4123 = vadd.f32 %v3698, %v4122
  %v4124 = vpop.f32.mrf.mxu0
  %v4125 = vpop.f32.mrf.mxu0
  %v4126 = vadd.f32 %v3701, %v4125
  %v4127 = vpop.f32.mrf.mxu0
  %4128 = vmatprep.mubr.bf16.mxu0 %v2083
  %4129 = vmatmul.mubr.bf16.gmra.mxu0 %v2082
  %v4130 = vpop.f32.mrf.mxu0
  %v4131 = vadd.f32 %v3706, %v4130
  %v4132 = vpop.f32.mrf.mxu0
  %v4133 = vpop.f32.mrf.mxu0
  %v4134 = vadd.f32 %v3709, %v4133
  %v4135 = vpop.f32.mrf.mxu0
  %4136 = vmatprep.mubr.bf16.mxu0 %v2091
  %4137 = vmatmul.mubr.bf16.gmra.mxu0 %v2090
  %v4138 = vpop.f32.mrf.mxu0
  %v4139 = vadd.f32 %v3714, %v4138
  %v4140 = vpop.f32.mrf.mxu0
  %v4141 = vpop.f32.mrf.mxu0
  %v4142 = vadd.f32 %v3717, %v4141
  %v4143 = vpop.f32.mrf.mxu0
  %4144 = vmatprep.mubr.bf16.mxu0 %v2099
  %4145 = vmatmul.mubr.bf16.gmra.mxu0 %v2098
  %v4146 = vpop.f32.mrf.mxu0
  %v4147 = vadd.f32 %v3722, %v4146
  %v4148 = vpop.f32.mrf.mxu0
  %v4149 = vpop.f32.mrf.mxu0
  %v4150 = vadd.f32 %v3725, %v4149
  %v4151 = vpop.f32.mrf.mxu0
  %4152 = vmatprep.mubr.bf16.mxu0 %v2107
  %4153 = vmatmul.mubr.bf16.gmra.mxu0 %v2106
  %v4154 = vpop.f32.mrf.mxu0
  %v4155 = vadd.f32 %v3730, %v4154
  %v4156 = vpop.f32.mrf.mxu0
  %v4157 = vpop.f32.mrf.mxu0
  %v4158 = vadd.f32 %v3733, %v4157
  %v4159 = vpop.f32.mrf.mxu0
  %4160 = vmatprep.mubr.bf16.mxu0 %v2115
  %4161 = vmatmul.mubr.bf16.gmra.mxu0 %v2114
  %v4162 = vpop.f32.mrf.mxu0
  %v4163 = vadd.f32 %v3738, %v4162
  %v4164 = vpop.f32.mrf.mxu0
  %v4165 = vpop.f32.mrf.mxu0
  %v4166 = vadd.f32 %v3741, %v4165
  %v4167 = vpop.f32.mrf.mxu0
  %4168 = vmatprep.mubr.bf16.mxu0 %v2123
  %4169 = vmatmul.mubr.bf16.gmra.mxu0 %v2122
  %v4170 = vpop.f32.mrf.mxu0
  %v4171 = vadd.f32 %v3746, %v4170
  %v4172 = vpop.f32.mrf.mxu0
  %v4173 = vpop.f32.mrf.mxu0
  %v4174 = vadd.f32 %v3749, %v4173
  %v4175 = vpop.f32.mrf.mxu0
  %4176 = vmatprep.mubr.bf16.mxu0 %v2131
  %4177 = vmatmul.mubr.bf16.gmra.mxu0 %v2130
  %v4178 = vpop.f32.mrf.mxu0
  %v4179 = vadd.f32 %v3754, %v4178
  %v4180 = vpop.f32.mrf.mxu0
  %v4181 = vpop.f32.mrf.mxu0
  %v4182 = vadd.f32 %v3757, %v4181
  %v4183 = vpop.f32.mrf.mxu0
  %4184 = vdwg.mxu0
  %4185 = vmatprep.subr.bf16.mxu0 0
  %4186 = vmatpush1.bf16.msra.mxu0 %v2837
  %4187 = vmatprep.subr.bf16.mxu0 0
  %4188 = vmatpush1.bf16.msra.mxu0 %v2836
  %4189 = vmatprep.subr.bf16.mxu0 0
  %4190 = vmatpush1.bf16.msra.mxu0 %v2835
  %4191 = vmatprep.subr.bf16.mxu0 0
  %4192 = vmatpush1.bf16.msra.mxu0 %v2834
  %4193 = vmatprep.subr.bf16.mxu0 0
  %4194 = vmatpush1.bf16.msra.mxu0 %v2833
  %4195 = vmatprep.subr.bf16.mxu0 0
  %4196 = vmatpush1.bf16.msra.mxu0 %v2832
  %4197 = vmatprep.subr.bf16.mxu0 0
  %4198 = vmatpush1.bf16.msra.mxu0 %v2831
  %4199 = vmatprep.subr.bf16.mxu0 0
  %4200 = vmatpush1.bf16.msra.mxu0 %v2830
  %4201 = vmatprep.subr.bf16.mxu0 0
  %4202 = vmatpush2.bf16.msra.mxu0 %v2845
  %4203 = vmatprep.subr.bf16.mxu0 0
  %4204 = vmatpush2.bf16.msra.mxu0 %v2844
  %4205 = vmatprep.subr.bf16.mxu0 0
  %4206 = vmatpush2.bf16.msra.mxu0 %v2843
  %4207 = vmatprep.subr.bf16.mxu0 0
  %4208 = vmatpush2.bf16.msra.mxu0 %v2842
  %4209 = vmatprep.subr.bf16.mxu0 0
  %4210 = vmatpush2.bf16.msra.mxu0 %v2841
  %4211 = vmatprep.subr.bf16.mxu0 0
  %4212 = vmatpush2.bf16.msra.mxu0 %v2840
  %4213 = vmatprep.subr.bf16.mxu0 0
  %4214 = vmatpush2.bf16.msra.mxu0 %v2839
  %4215 = vmatprep.subr.bf16.mxu0 0
  %4216 = vmatpush2.bf16.msra.mxu0 %v2838
  %4217 = vmatprep.mubr.bf16.mxu0 %v1749
  %4218 = vmatmul.mubr.bf16.gmra.mxu0 %v1748
  %v4219 = vpop.f32.mrf.mxu0
  %v4220 = vadd.f32 %v3795, %v4219
  %v4221 = vpop.f32.mrf.mxu0
  %v4222 = vpop.f32.mrf.mxu0
  %v4223 = vadd.f32 %v3798, %v4222
  %v4224 = vpop.f32.mrf.mxu0
  %4225 = vmatprep.mubr.bf16.mxu0 %v1757
  %4226 = vmatmul.mubr.bf16.gmra.mxu0 %v1756
  %v4227 = vpop.f32.mrf.mxu0
  %v4228 = vadd.f32 %v3803, %v4227
  %v4229 = vpop.f32.mrf.mxu0
  %v4230 = vpop.f32.mrf.mxu0
  %v4231 = vadd.f32 %v3806, %v4230
  %v4232 = vpop.f32.mrf.mxu0
  %4233 = vmatprep.mubr.bf16.mxu0 %v1765
  %4234 = vmatmul.mubr.bf16.gmra.mxu0 %v1764
  %v4235 = vpop.f32.mrf.mxu0
  %v4236 = vadd.f32 %v3811, %v4235
  %v4237 = vpop.f32.mrf.mxu0
  %v4238 = vpop.f32.mrf.mxu0
  %v4239 = vadd.f32 %v3814, %v4238
  %v4240 = vpop.f32.mrf.mxu0
  %4241 = vmatprep.mubr.bf16.mxu0 %v1773
  %4242 = vmatmul.mubr.bf16.gmra.mxu0 %v1772
  %v4243 = vpop.f32.mrf.mxu0
  %v4244 = vadd.f32 %v3819, %v4243
  %v4245 = vpop.f32.mrf.mxu0
  %v4246 = vpop.f32.mrf.mxu0
  %v4247 = vadd.f32 %v3822, %v4246
  %v4248 = vpop.f32.mrf.mxu0
  %4249 = vmatprep.mubr.bf16.mxu0 %v1781
  %4250 = vmatmul.mubr.bf16.gmra.mxu0 %v1780
  %v4251 = vpop.f32.mrf.mxu0
  %v4252 = vadd.f32 %v3827, %v4251
  %v4253 = vpop.f32.mrf.mxu0
  %v4254 = vpop.f32.mrf.mxu0
  %v4255 = vadd.f32 %v3830, %v4254
  %v4256 = vpop.f32.mrf.mxu0
  %4257 = vmatprep.mubr.bf16.mxu0 %v1789
  %4258 = vmatmul.mubr.bf16.gmra.mxu0 %v1788
  %v4259 = vpop.f32.mrf.mxu0
  %v4260 = vadd.f32 %v3835, %v4259
  %v4261 = vpop.f32.mrf.mxu0
  %v4262 = vpop.f32.mrf.mxu0
  %v4263 = vadd.f32 %v3838, %v4262
  %v4264 = vpop.f32.mrf.mxu0
  %4265 = vmatprep.mubr.bf16.mxu0 %v1797
  %4266 = vmatmul.mubr.bf16.gmra.mxu0 %v1796
  %v4267 = vpop.f32.mrf.mxu0
  %v4268 = vadd.f32 %v3843, %v4267
  %v4269 = vpop.f32.mrf.mxu0
  %v4270 = vpop.f32.mrf.mxu0
  %v4271 = vadd.f32 %v3846, %v4270
  %v4272 = vpop.f32.mrf.mxu0
  %4273 = vmatprep.mubr.bf16.mxu0 %v1805
  %4274 = vmatmul.mubr.bf16.gmra.mxu0 %v1804
  %v4275 = vpop.f32.mrf.mxu0
  %v4276 = vadd.f32 %v3851, %v4275
  %v4277 = vpop.f32.mrf.mxu0
  %v4278 = vpop.f32.mrf.mxu0
  %v4279 = vadd.f32 %v3854, %v4278
  %v4280 = vpop.f32.mrf.mxu0
  %4281 = vmatprep.mubr.bf16.mxu0 %v1813
  %4282 = vmatmul.mubr.bf16.gmra.mxu0 %v1812
  %v4283 = vpop.f32.mrf.mxu0
  %v4284 = vadd.f32 %v3859, %v4283
  %v4285 = vpop.f32.mrf.mxu0
  %v4286 = vpop.f32.mrf.mxu0
  %v4287 = vadd.f32 %v3862, %v4286
  %v4288 = vpop.f32.mrf.mxu0
  %4289 = vmatprep.mubr.bf16.mxu0 %v1821
  %4290 = vmatmul.mubr.bf16.gmra.mxu0 %v1820
  %v4291 = vpop.f32.mrf.mxu0
  %v4292 = vadd.f32 %v3867, %v4291
  %v4293 = vpop.f32.mrf.mxu0
  %v4294 = vpop.f32.mrf.mxu0
  %v4295 = vadd.f32 %v3870, %v4294
  %v4296 = vpop.f32.mrf.mxu0
  %4297 = vmatprep.mubr.bf16.mxu0 %v1829
  %4298 = vmatmul.mubr.bf16.gmra.mxu0 %v1828
  %v4299 = vpop.f32.mrf.mxu0
  %v4300 = vadd.f32 %v3875, %v4299
  %v4301 = vpop.f32.mrf.mxu0
  %v4302 = vpop.f32.mrf.mxu0
  %v4303 = vadd.f32 %v3878, %v4302
  %v4304 = vpop.f32.mrf.mxu0
  %4305 = vmatprep.mubr.bf16.mxu0 %v1837
  %4306 = vmatmul.mubr.bf16.gmra.mxu0 %v1836
  %v4307 = vpop.f32.mrf.mxu0
  %v4308 = vadd.f32 %v3883, %v4307
  %v4309 = vpop.f32.mrf.mxu0
  %v4310 = vpop.f32.mrf.mxu0
  %v4311 = vadd.f32 %v3886, %v4310
  %v4312 = vpop.f32.mrf.mxu0
  %4313 = vmatprep.mubr.bf16.mxu0 %v1845
  %4314 = vmatmul.mubr.bf16.gmra.mxu0 %v1844
  %v4315 = vpop.f32.mrf.mxu0
  %v4316 = vadd.f32 %v3891, %v4315
  %v4317 = vpop.f32.mrf.mxu0
  %v4318 = vpop.f32.mrf.mxu0
  %v4319 = vadd.f32 %v3894, %v4318
  %v4320 = vpop.f32.mrf.mxu0
  %4321 = vmatprep.mubr.bf16.mxu0 %v1853
  %4322 = vmatmul.mubr.bf16.gmra.mxu0 %v1852
  %v4323 = vpop.f32.mrf.mxu0
  %v4324 = vadd.f32 %v3899, %v4323
  %v4325 = vpop.f32.mrf.mxu0
  %v4326 = vpop.f32.mrf.mxu0
  %v4327 = vadd.f32 %v3902, %v4326
  %v4328 = vpop.f32.mrf.mxu0
  %4329 = vmatprep.mubr.bf16.mxu0 %v1861
  %4330 = vmatmul.mubr.bf16.gmra.mxu0 %v1860
  %v4331 = vpop.f32.mrf.mxu0
  %v4332 = vadd.f32 %v3907, %v4331
  %v4333 = vpop.f32.mrf.mxu0
  %v4334 = vpop.f32.mrf.mxu0
  %v4335 = vadd.f32 %v3910, %v4334
  %v4336 = vpop.f32.mrf.mxu0
  %4337 = vmatprep.mubr.bf16.mxu0 %v1869
  %4338 = vmatmul.mubr.bf16.gmra.mxu0 %v1868
  %v4339 = vpop.f32.mrf.mxu0
  %v4340 = vadd.f32 %v3915, %v4339
  %v4341 = vpop.f32.mrf.mxu0
  %v4342 = vpop.f32.mrf.mxu0
  %v4343 = vadd.f32 %v3918, %v4342
  %v4344 = vpop.f32.mrf.mxu0
  %4345 = vmatprep.mubr.bf16.mxu0 %v1877
  %4346 = vmatmul.mubr.bf16.gmra.mxu0 %v1876
  %v4347 = vpop.f32.mrf.mxu0
  %v4348 = vadd.f32 %v3923, %v4347
  %v4349 = vpop.f32.mrf.mxu0
  %v4350 = vpop.f32.mrf.mxu0
  %v4351 = vadd.f32 %v3926, %v4350
  %v4352 = vpop.f32.mrf.mxu0
  %4353 = vmatprep.mubr.bf16.mxu0 %v1885
  %4354 = vmatmul.mubr.bf16.gmra.mxu0 %v1884
  %v4355 = vpop.f32.mrf.mxu0
  %v4356 = vadd.f32 %v3931, %v4355
  %v4357 = vpop.f32.mrf.mxu0
  %v4358 = vpop.f32.mrf.mxu0
  %v4359 = vadd.f32 %v3934, %v4358
  %v4360 = vpop.f32.mrf.mxu0
  %4361 = vmatprep.mubr.bf16.mxu0 %v1893
  %4362 = vmatmul.mubr.bf16.gmra.mxu0 %v1892
  %v4363 = vpop.f32.mrf.mxu0
  %v4364 = vadd.f32 %v3939, %v4363
  %v4365 = vpop.f32.mrf.mxu0
  %v4366 = vpop.f32.mrf.mxu0
  %v4367 = vadd.f32 %v3942, %v4366
  %v4368 = vpop.f32.mrf.mxu0
  %4369 = vmatprep.mubr.bf16.mxu0 %v1901
  %4370 = vmatmul.mubr.bf16.gmra.mxu0 %v1900
  %v4371 = vpop.f32.mrf.mxu0
  %v4372 = vadd.f32 %v3947, %v4371
  %v4373 = vpop.f32.mrf.mxu0
  %v4374 = vpop.f32.mrf.mxu0
  %v4375 = vadd.f32 %v3950, %v4374
  %v4376 = vpop.f32.mrf.mxu0
  %4377 = vmatprep.mubr.bf16.mxu0 %v1909
  %4378 = vmatmul.mubr.bf16.gmra.mxu0 %v1908
  %v4379 = vpop.f32.mrf.mxu0
  %v4380 = vadd.f32 %v3955, %v4379
  %v4381 = vpop.f32.mrf.mxu0
  %v4382 = vpop.f32.mrf.mxu0
  %v4383 = vadd.f32 %v3958, %v4382
  %v4384 = vpop.f32.mrf.mxu0
  %4385 = vmatprep.mubr.bf16.mxu0 %v1917
  %4386 = vmatmul.mubr.bf16.gmra.mxu0 %v1916
  %v4387 = vpop.f32.mrf.mxu0
  %v4388 = vadd.f32 %v3963, %v4387
  %v4389 = vpop.f32.mrf.mxu0
  %v4390 = vpop.f32.mrf.mxu0
  %v4391 = vadd.f32 %v3966, %v4390
  %v4392 = vpop.f32.mrf.mxu0
  %4393 = vmatprep.mubr.bf16.mxu0 %v1925
  %4394 = vmatmul.mubr.bf16.gmra.mxu0 %v1924
  %v4395 = vpop.f32.mrf.mxu0
  %v4396 = vadd.f32 %v3971, %v4395
  %v4397 = vpop.f32.mrf.mxu0
  %v4398 = vpop.f32.mrf.mxu0
  %v4399 = vadd.f32 %v3974, %v4398
  %v4400 = vpop.f32.mrf.mxu0
  %4401 = vmatprep.mubr.bf16.mxu0 %v1933
  %4402 = vmatmul.mubr.bf16.gmra.mxu0 %v1932
  %v4403 = vpop.f32.mrf.mxu0
  %v4404 = vadd.f32 %v3979, %v4403
  %v4405 = vpop.f32.mrf.mxu0
  %v4406 = vpop.f32.mrf.mxu0
  %v4407 = vadd.f32 %v3982, %v4406
  %v4408 = vpop.f32.mrf.mxu0
  %4409 = vmatprep.mubr.bf16.mxu0 %v1941
  %4410 = vmatmul.mubr.bf16.gmra.mxu0 %v1940
  %v4411 = vpop.f32.mrf.mxu0
  %v4412 = vadd.f32 %v3987, %v4411
  %v4413 = vpop.f32.mrf.mxu0
  %v4414 = vpop.f32.mrf.mxu0
  %v4415 = vadd.f32 %v3990, %v4414
  %v4416 = vpop.f32.mrf.mxu0
  %4417 = vmatprep.mubr.bf16.mxu0 %v1949
  %4418 = vmatmul.mubr.bf16.gmra.mxu0 %v1948
  %v4419 = vpop.f32.mrf.mxu0
  %v4420 = vadd.f32 %v3995, %v4419
  %v4421 = vpop.f32.mrf.mxu0
  %v4422 = vpop.f32.mrf.mxu0
  %v4423 = vadd.f32 %v3998, %v4422
  %v4424 = vpop.f32.mrf.mxu0
  %4425 = vmatprep.mubr.bf16.mxu0 %v1957
  %4426 = vmatmul.mubr.bf16.gmra.mxu0 %v1956
  %v4427 = vpop.f32.mrf.mxu0
  %v4428 = vadd.f32 %v4003, %v4427
  %v4429 = vpop.f32.mrf.mxu0
  %v4430 = vpop.f32.mrf.mxu0
  %v4431 = vadd.f32 %v4006, %v4430
  %v4432 = vpop.f32.mrf.mxu0
  %4433 = vmatprep.mubr.bf16.mxu0 %v1965
  %4434 = vmatmul.mubr.bf16.gmra.mxu0 %v1964
  %v4435 = vpop.f32.mrf.mxu0
  %v4436 = vadd.f32 %v4011, %v4435
  %v4437 = vpop.f32.mrf.mxu0
  %v4438 = vpop.f32.mrf.mxu0
  %v4439 = vadd.f32 %v4014, %v4438
  %v4440 = vpop.f32.mrf.mxu0
  %4441 = vmatprep.mubr.bf16.mxu0 %v1973
  %4442 = vmatmul.mubr.bf16.gmra.mxu0 %v1972
  %v4443 = vpop.f32.mrf.mxu0
  %v4444 = vadd.f32 %v4019, %v4443
  %v4445 = vpop.f32.mrf.mxu0
  %v4446 = vpop.f32.mrf.mxu0
  %v4447 = vadd.f32 %v4022, %v4446
  %v4448 = vpop.f32.mrf.mxu0
  %4449 = vmatprep.mubr.bf16.mxu0 %v1981
  %4450 = vmatmul.mubr.bf16.gmra.mxu0 %v1980
  %v4451 = vpop.f32.mrf.mxu0
  %v4452 = vadd.f32 %v4027, %v4451
  %v4453 = vpop.f32.mrf.mxu0
  %v4454 = vpop.f32.mrf.mxu0
  %v4455 = vadd.f32 %v4030, %v4454
  %v4456 = vpop.f32.mrf.mxu0
  %4457 = vmatprep.mubr.bf16.mxu0 %v1989
  %4458 = vmatmul.mubr.bf16.gmra.mxu0 %v1988
  %v4459 = vpop.f32.mrf.mxu0
  %v4460 = vadd.f32 %v4035, %v4459
  %v4461 = vpop.f32.mrf.mxu0
  %v4462 = vpop.f32.mrf.mxu0
  %v4463 = vadd.f32 %v4038, %v4462
  %v4464 = vpop.f32.mrf.mxu0
  %4465 = vmatprep.mubr.bf16.mxu0 %v1997
  %4466 = vmatmul.mubr.bf16.gmra.mxu0 %v1996
  %v4467 = vpop.f32.mrf.mxu0
  %v4468 = vadd.f32 %v4043, %v4467
  %v4469 = vpop.f32.mrf.mxu0
  %v4470 = vpop.f32.mrf.mxu0
  %v4471 = vadd.f32 %v4046, %v4470
  %v4472 = vpop.f32.mrf.mxu0
  %4473 = vmatprep.mubr.bf16.mxu0 %v2005
  %4474 = vmatmul.mubr.bf16.gmra.mxu0 %v2004
  %v4475 = vpop.f32.mrf.mxu0
  %v4476 = vadd.f32 %v4051, %v4475
  %v4477 = vpop.f32.mrf.mxu0
  %v4478 = vpop.f32.mrf.mxu0
  %v4479 = vadd.f32 %v4054, %v4478
  %v4480 = vpop.f32.mrf.mxu0
  %4481 = vmatprep.mubr.bf16.mxu0 %v2013
  %4482 = vmatmul.mubr.bf16.gmra.mxu0 %v2012
  %v4483 = vpop.f32.mrf.mxu0
  %v4484 = vadd.f32 %v4059, %v4483
  %v4485 = vpop.f32.mrf.mxu0
  %v4486 = vpop.f32.mrf.mxu0
  %v4487 = vadd.f32 %v4062, %v4486
  %v4488 = vpop.f32.mrf.mxu0
  %4489 = vmatprep.mubr.bf16.mxu0 %v2021
  %4490 = vmatmul.mubr.bf16.gmra.mxu0 %v2020
  %v4491 = vpop.f32.mrf.mxu0
  %v4492 = vadd.f32 %v4067, %v4491
  %v4493 = vpop.f32.mrf.mxu0
  %v4494 = vpop.f32.mrf.mxu0
  %v4495 = vadd.f32 %v4070, %v4494
  %v4496 = vpop.f32.mrf.mxu0
  %4497 = vmatprep.mubr.bf16.mxu0 %v2029
  %4498 = vmatmul.mubr.bf16.gmra.mxu0 %v2028
  %v4499 = vpop.f32.mrf.mxu0
  %v4500 = vadd.f32 %v4075, %v4499
  %v4501 = vpop.f32.mrf.mxu0
  %v4502 = vpop.f32.mrf.mxu0
  %v4503 = vadd.f32 %v4078, %v4502
  %v4504 = vpop.f32.mrf.mxu0
  %4505 = vmatprep.mubr.bf16.mxu0 %v2037
  %4506 = vmatmul.mubr.bf16.gmra.mxu0 %v2036
  %v4507 = vpop.f32.mrf.mxu0
  %v4508 = vadd.f32 %v4083, %v4507
  %v4509 = vpop.f32.mrf.mxu0
  %v4510 = vpop.f32.mrf.mxu0
  %v4511 = vadd.f32 %v4086, %v4510
  %v4512 = vpop.f32.mrf.mxu0
  %4513 = vmatprep.mubr.bf16.mxu0 %v2045
  %4514 = vmatmul.mubr.bf16.gmra.mxu0 %v2044
  %v4515 = vpop.f32.mrf.mxu0
  %v4516 = vadd.f32 %v4091, %v4515
  %v4517 = vpop.f32.mrf.mxu0
  %v4518 = vpop.f32.mrf.mxu0
  %v4519 = vadd.f32 %v4094, %v4518
  %v4520 = vpop.f32.mrf.mxu0
  %4521 = vmatprep.mubr.bf16.mxu0 %v2053
  %4522 = vmatmul.mubr.bf16.gmra.mxu0 %v2052
  %v4523 = vpop.f32.mrf.mxu0
  %v4524 = vadd.f32 %v4099, %v4523
  %v4525 = vpop.f32.mrf.mxu0
  %v4526 = vpop.f32.mrf.mxu0
  %v4527 = vadd.f32 %v4102, %v4526
  %v4528 = vpop.f32.mrf.mxu0
  %4529 = vmatprep.mubr.bf16.mxu0 %v2061
  %4530 = vmatmul.mubr.bf16.gmra.mxu0 %v2060
  %v4531 = vpop.f32.mrf.mxu0
  %v4532 = vadd.f32 %v4107, %v4531
  %v4533 = vpop.f32.mrf.mxu0
  %v4534 = vpop.f32.mrf.mxu0
  %v4535 = vadd.f32 %v4110, %v4534
  %v4536 = vpop.f32.mrf.mxu0
  %4537 = vmatprep.mubr.bf16.mxu0 %v2069
  %4538 = vmatmul.mubr.bf16.gmra.mxu0 %v2068
  %v4539 = vpop.f32.mrf.mxu0
  %v4540 = vadd.f32 %v4115, %v4539
  %v4541 = vpop.f32.mrf.mxu0
  %v4542 = vpop.f32.mrf.mxu0
  %v4543 = vadd.f32 %v4118, %v4542
  %v4544 = vpop.f32.mrf.mxu0
  %4545 = vmatprep.mubr.bf16.mxu0 %v2077
  %4546 = vmatmul.mubr.bf16.gmra.mxu0 %v2076
  %v4547 = vpop.f32.mrf.mxu0
  %v4548 = vadd.f32 %v4123, %v4547
  %v4549 = vpop.f32.mrf.mxu0
  %v4550 = vpop.f32.mrf.mxu0
  %v4551 = vadd.f32 %v4126, %v4550
  %v4552 = vpop.f32.mrf.mxu0
  %4553 = vmatprep.mubr.bf16.mxu0 %v2085
  %4554 = vmatmul.mubr.bf16.gmra.mxu0 %v2084
  %v4555 = vpop.f32.mrf.mxu0
  %v4556 = vadd.f32 %v4131, %v4555
  %v4557 = vpop.f32.mrf.mxu0
  %v4558 = vpop.f32.mrf.mxu0
  %v4559 = vadd.f32 %v4134, %v4558
  %v4560 = vpop.f32.mrf.mxu0
  %4561 = vmatprep.mubr.bf16.mxu0 %v2093
  %4562 = vmatmul.mubr.bf16.gmra.mxu0 %v2092
  %v4563 = vpop.f32.mrf.mxu0
  %v4564 = vadd.f32 %v4139, %v4563
  %v4565 = vpop.f32.mrf.mxu0
  %v4566 = vpop.f32.mrf.mxu0
  %v4567 = vadd.f32 %v4142, %v4566
  %v4568 = vpop.f32.mrf.mxu0
  %4569 = vmatprep.mubr.bf16.mxu0 %v2101
  %4570 = vmatmul.mubr.bf16.gmra.mxu0 %v2100
  %v4571 = vpop.f32.mrf.mxu0
  %v4572 = vadd.f32 %v4147, %v4571
  %v4573 = vpop.f32.mrf.mxu0
  %v4574 = vpop.f32.mrf.mxu0
  %v4575 = vadd.f32 %v4150, %v4574
  %v4576 = vpop.f32.mrf.mxu0
  %4577 = vmatprep.mubr.bf16.mxu0 %v2109
  %4578 = vmatmul.mubr.bf16.gmra.mxu0 %v2108
  %v4579 = vpop.f32.mrf.mxu0
  %v4580 = vadd.f32 %v4155, %v4579
  %v4581 = vpop.f32.mrf.mxu0
  %v4582 = vpop.f32.mrf.mxu0
  %v4583 = vadd.f32 %v4158, %v4582
  %v4584 = vpop.f32.mrf.mxu0
  %4585 = vmatprep.mubr.bf16.mxu0 %v2117
  %4586 = vmatmul.mubr.bf16.gmra.mxu0 %v2116
  %v4587 = vpop.f32.mrf.mxu0
  %v4588 = vadd.f32 %v4163, %v4587
  %v4589 = vpop.f32.mrf.mxu0
  %v4590 = vpop.f32.mrf.mxu0
  %v4591 = vadd.f32 %v4166, %v4590
  %v4592 = vpop.f32.mrf.mxu0
  %4593 = vmatprep.mubr.bf16.mxu0 %v2125
  %4594 = vmatmul.mubr.bf16.gmra.mxu0 %v2124
  %v4595 = vpop.f32.mrf.mxu0
  %v4596 = vadd.f32 %v4171, %v4595
  %v4597 = vpop.f32.mrf.mxu0
  %v4598 = vpop.f32.mrf.mxu0
  %v4599 = vadd.f32 %v4174, %v4598
  %v4600 = vpop.f32.mrf.mxu0
  %4601 = vmatprep.mubr.bf16.mxu0 %v2133
  %4602 = vmatmul.mubr.bf16.gmra.mxu0 %v2132
  %v4603 = vpop.f32.mrf.mxu0
  %v4604 = vadd.f32 %v4179, %v4603
  %v4605 = vpop.f32.mrf.mxu0
  %v4606 = vpop.f32.mrf.mxu0
  %v4607 = vadd.f32 %v4182, %v4606
  %v4608 = vpop.f32.mrf.mxu0
  %4609 = vdwg.mxu0
  %v4610 = vmax.f32 %v4220, 0.0
  %v4611 = vmax.f32 %v4223, 0.0
  %v4612 = vmax.f32 %v4228, 0.0
  %v4613 = vmax.f32 %v4231, 0.0
  %v4614 = vmax.f32 %v4236, 0.0
  %v4615 = vmax.f32 %v4239, 0.0
  %v4616 = vmax.f32 %v4244, 0.0
  %v4617 = vmax.f32 %v4247, 0.0
  %v4618 = vmax.f32 %v4252, 0.0
  %v4619 = vmax.f32 %v4255, 0.0
  %v4620 = vmax.f32 %v4260, 0.0
  %v4621 = vmax.f32 %v4263, 0.0
  %v4622 = vmax.f32 %v4268, 0.0
  %v4623 = vmax.f32 %v4271, 0.0
  %v4624 = vmax.f32 %v4276, 0.0
  %v4625 = vmax.f32 %v4279, 0.0
  %v4626 = vmax.f32 %v4284, 0.0
  %v4627 = vmax.f32 %v4287, 0.0
  %v4628 = vmax.f32 %v4292, 0.0
  %v4629 = vmax.f32 %v4295, 0.0
  %v4630 = vmax.f32 %v4300, 0.0
  %v4631 = vmax.f32 %v4303, 0.0
  %v4632 = vmax.f32 %v4308, 0.0
  %v4633 = vmax.f32 %v4311, 0.0
  %v4634 = vmax.f32 %v4316, 0.0
  %v4635 = vmax.f32 %v4319, 0.0
  %v4636 = vmax.f32 %v4324, 0.0
  %v4637 = vmax.f32 %v4327, 0.0
  %v4638 = vmax.f32 %v4332, 0.0
  %v4639 = vmax.f32 %v4335, 0.0
  %v4640 = vmax.f32 %v4340, 0.0
  %v4641 = vmax.f32 %v4343, 0.0
  %v4642 = vmax.f32 %v4348, 0.0
  %v4643 = vmax.f32 %v4351, 0.0
  %v4644 = vmax.f32 %v4356, 0.0
  %v4645 = vmax.f32 %v4359, 0.0
  %v4646 = vmax.f32 %v4364, 0.0
  %v4647 = vmax.f32 %v4367, 0.0
  %v4648 = vmax.f32 %v4372, 0.0
  %v4649 = vmax.f32 %v4375, 0.0
  %v4650 = vmax.f32 %v4380, 0.0
  %v4651 = vmax.f32 %v4383, 0.0
  %v4652 = vmax.f32 %v4388, 0.0
  %v4653 = vmax.f32 %v4391, 0.0
  %v4654 = vmax.f32 %v4396, 0.0
  %v4655 = vmax.f32 %v4399, 0.0
  %v4656 = vmax.f32 %v4404, 0.0
  %v4657 = vmax.f32 %v4407, 0.0
  %v4658 = vmax.f32 %v4412, 0.0
  %v4659 = vmax.f32 %v4415, 0.0
  %v4660 = vmax.f32 %v4420, 0.0
  %v4661 = vmax.f32 %v4423, 0.0
  %v4662 = vmax.f32 %v4428, 0.0
  %v4663 = vmax.f32 %v4431, 0.0
  %v4664 = vmax.f32 %v4436, 0.0
  %v4665 = vmax.f32 %v4439, 0.0
  %v4666 = vmax.f32 %v4444, 0.0
  %v4667 = vmax.f32 %v4447, 0.0
  %v4668 = vmax.f32 %v4452, 0.0
  %v4669 = vmax.f32 %v4455, 0.0
  %v4670 = vmax.f32 %v4460, 0.0
  %v4671 = vmax.f32 %v4463, 0.0
  %v4672 = vmax.f32 %v4468, 0.0
  %v4673 = vmax.f32 %v4471, 0.0
  %v4674 = vmax.f32 %v4476, 0.0
  %v4675 = vmax.f32 %v4479, 0.0
  %v4676 = vmax.f32 %v4484, 0.0
  %v4677 = vmax.f32 %v4487, 0.0
  %v4678 = vmax.f32 %v4492, 0.0
  %v4679 = vmax.f32 %v4495, 0.0
  %v4680 = vmax.f32 %v4500, 0.0
  %v4681 = vmax.f32 %v4503, 0.0
  %v4682 = vmax.f32 %v4508, 0.0
  %v4683 = vmax.f32 %v4511, 0.0
  %v4684 = vmax.f32 %v4516, 0.0
  %v4685 = vmax.f32 %v4519, 0.0
  %v4686 = vmax.f32 %v4524, 0.0
  %v4687 = vmax.f32 %v4527, 0.0
  %v4688 = vmax.f32 %v4532, 0.0
  %v4689 = vmax.f32 %v4535, 0.0
  %v4690 = vmax.f32 %v4540, 0.0
  %v4691 = vmax.f32 %v4543, 0.0
  %v4692 = vmax.f32 %v4548, 0.0
  %v4693 = vmax.f32 %v4551, 0.0
  %v4694 = vmax.f32 %v4556, 0.0
  %v4695 = vmax.f32 %v4559, 0.0
  %v4696 = vmax.f32 %v4564, 0.0
  %v4697 = vmax.f32 %v4567, 0.0
  %v4698 = vmax.f32 %v4572, 0.0
  %v4699 = vmax.f32 %v4575, 0.0
  %v4700 = vmax.f32 %v4580, 0.0
  %v4701 = vmax.f32 %v4583, 0.0
  %v4702 = vmax.f32 %v4588, 0.0
  %v4703 = vmax.f32 %v4591, 0.0
  %v4704 = vmax.f32 %v4596, 0.0
  %v4705 = vmax.f32 %v4599, 0.0
  %v4706 = vmax.f32 %v4604, 0.0
  %v4707 = vmax.f32 %v4607, 0.0
  %v4708 = vpack.c.bf16 %v4611, %v4610
  %v4709 = vpack.c.bf16 %v4613, %v4612
  %v4710 = vpack.c.bf16 %v4615, %v4614
  %v4711 = vpack.c.bf16 %v4617, %v4616
  %v4712 = vpack.c.bf16 %v4619, %v4618
  %v4713 = vpack.c.bf16 %v4621, %v4620
  %v4714 = vpack.c.bf16 %v4623, %v4622
  %v4715 = vpack.c.bf16 %v4625, %v4624
  %v4716 = vpack.c.bf16 %v4627, %v4626
  %v4717 = vpack.c.bf16 %v4629, %v4628
  %v4718 = vpack.c.bf16 %v4631, %v4630
  %v4719 = vpack.c.bf16 %v4633, %v4632
  %v4720 = vpack.c.bf16 %v4635, %v4634
  %v4721 = vpack.c.bf16 %v4637, %v4636
  %v4722 = vpack.c.bf16 %v4639, %v4638
  %v4723 = vpack.c.bf16 %v4641, %v4640
  %v4724 = vpack.c.bf16 %v4643, %v4642
  %v4725 = vpack.c.bf16 %v4645, %v4644
  %v4726 = vpack.c.bf16 %v4647, %v4646
  %v4727 = vpack.c.bf16 %v4649, %v4648
  %v4728 = vpack.c.bf16 %v4651, %v4650
  %v4729 = vpack.c.bf16 %v4653, %v4652
  %v4730 = vpack.c.bf16 %v4655, %v4654
  %v4731 = vpack.c.bf16 %v4657, %v4656
  %v4732 = vpack.c.bf16 %v4659, %v4658
  %v4733 = vpack.c.bf16 %v4661, %v4660
  %v4734 = vpack.c.bf16 %v4663, %v4662
  %v4735 = vpack.c.bf16 %v4665, %v4664
  %v4736 = vpack.c.bf16 %v4667, %v4666
  %v4737 = vpack.c.bf16 %v4669, %v4668
  %v4738 = vpack.c.bf16 %v4671, %v4670
  %v4739 = vpack.c.bf16 %v4673, %v4672
  %v4740 = vpack.c.bf16 %v4675, %v4674
  %v4741 = vpack.c.bf16 %v4677, %v4676
  %v4742 = vpack.c.bf16 %v4679, %v4678
  %v4743 = vpack.c.bf16 %v4681, %v4680
  %v4744 = vpack.c.bf16 %v4683, %v4682
  %v4745 = vpack.c.bf16 %v4685, %v4684
  %v4746 = vpack.c.bf16 %v4687, %v4686
  %v4747 = vpack.c.bf16 %v4689, %v4688
  %v4748 = vpack.c.bf16 %v4691, %v4690
  %v4749 = vpack.c.bf16 %v4693, %v4692
  %v4750 = vpack.c.bf16 %v4695, %v4694
  %v4751 = vpack.c.bf16 %v4697, %v4696
  %v4752 = vpack.c.bf16 %v4699, %v4698
  %v4753 = vpack.c.bf16 %v4701, %v4700
  %v4754 = vpack.c.bf16 %v4703, %v4702
  %v4755 = vpack.c.bf16 %v4705, %v4704
  %v4756 = vpack.c.bf16 %v4707, %v4706
  %v4757 = vld [vmem:[%s3] sm:$0xf]
  %v4758 = vld [vmem:[%s3 + $0x4] sm:$0xf]
  %v4759 = vld [vmem:[%s3 + $0x8] sm:$0xf]
  %v4760 = vld [vmem:[%s3 + $0xc] sm:$0xf]
  %v4761 = vld [vmem:[%s3 + $0x10] sm:$0xf]
  %v4762 = vld [vmem:[%s3 + $0x14] sm:$0xf]
  %v4763 = vld [vmem:[%s3 + $0x18] sm:$0xf]
  %v4764 = vld [vmem:[%s3 + $0x1c] sm:$0xf]
  %v4765 = vld [vmem:[%s3 + $0x20] sm:$0xf]
  %v4766 = vld [vmem:[%s3 + $0x24] sm:$0xf]
  %v4767 = vld [vmem:[%s3 + $0x28] sm:$0xf]
  %v4768 = vld [vmem:[%s3 + $0x2c] sm:$0xf]
  %v4769 = vld [vmem:[%s3 + $0x30] sm:$0xf]
  %v4770 = vld [vmem:[%s3 + $0x34] sm:$0xf]
  %v4771 = vld [vmem:[%s3 + $0x38] sm:$0xf]
  %v4772 = vld [vmem:[%s3 + $0x3c] sm:$0xf]
  %v4773 = vld [vmem:[%s3 + $0x40] sm:$0xf]
  %v4774 = vld [vmem:[%s3 + $0x44] sm:$0xf]
  %v4775 = vld [vmem:[%s3 + $0x48] sm:$0xf]
  %v4776 = vld [vmem:[%s3 + $0x4c] sm:$0xf]
  %v4777 = vld [vmem:[%s3 + $0x50] sm:$0xf]
  %v4778 = vld [vmem:[%s3 + $0x54] sm:$0xf]
  %v4779 = vld [vmem:[%s3 + $0x58] sm:$0xf]
  %v4780 = vld [vmem:[%s3 + $0x5c] sm:$0xf]
  %v4781 = vld [vmem:[%s3 + $0x60] sm:$0xf]
  %v4782 = vld [vmem:[%s3 + $0x64] sm:$0xf]
  %v4783 = vld [vmem:[%s3 + $0x68] sm:$0xf]
  %v4784 = vld [vmem:[%s3 + $0x6c] sm:$0xf]
  %v4785 = vld [vmem:[%s3 + $0x70] sm:$0xf]
  %v4786 = vld [vmem:[%s3 + $0x74] sm:$0xf]
  %v4787 = vld [vmem:[%s3 + $0x78] sm:$0xf]
  %v4788 = vld [vmem:[%s3 + $0x7c] sm:$0xf]
  %v4805 = vunpack.c.l.b16 %v4773
  %v4806 = vunpack.c.l.b16 %v4774
  %v4807 = vunpack.c.l.b16 %v4775
  %v4808 = vunpack.c.l.b16 %v4776
  %v4809 = vunpack.c.l.b16 %v4777
  %v4810 = vunpack.c.l.b16 %v4778
  %v4811 = vunpack.c.l.b16 %v4779
  %v4812 = vunpack.c.l.b16 %v4780
  %v4813 = vunpack.c.l.b16 %v4781
  %v4814 = vunpack.c.l.b16 %v4782
  %v4815 = vunpack.c.l.b16 %v4783
  %v4816 = vunpack.c.l.b16 %v4784
  %v4817 = vunpack.c.l.b16 %v4785
  %v4818 = vunpack.c.l.b16 %v4786
  %v4819 = vunpack.c.l.b16 %v4787
  %v4820 = vunpack.c.l.b16 %v4788
  %v4821 = vpack.c.b16 %v4806, %v4805
  %v4822 = vpack.c.b16 %v4808, %v4807
  %v4823 = vpack.c.b16 %v4810, %v4809
  %v4824 = vpack.c.b16 %v4812, %v4811
  %v4825 = vpack.c.b16 %v4814, %v4813
  %v4826 = vpack.c.b16 %v4816, %v4815
  %v4827 = vpack.c.b16 %v4818, %v4817
  %v4828 = vpack.c.b16 %v4820, %v4819
  %4837 = vmatprep.subr.bf16.mxu0 0
  %4838 = vmatpush1.bf16.msra.mxu0 %v4828
  %4839 = vmatprep.subr.bf16.mxu0 0
  %4840 = vmatpush1.bf16.msra.mxu0 %v4827
  %4841 = vmatprep.subr.bf16.mxu0 0
  %4842 = vmatpush1.bf16.msra.mxu0 %v4826
  %4843 = vmatprep.subr.bf16.mxu0 0
  %4844 = vmatpush1.bf16.msra.mxu0 %v4825
  %4845 = vmatprep.subr.bf16.mxu0 0
  %4846 = vmatpush1.bf16.msra.mxu0 %v4824
  %4847 = vmatprep.subr.bf16.mxu0 0
  %4848 = vmatpush1.bf16.msra.mxu0 %v4823
  %4849 = vmatprep.subr.bf16.mxu0 0
  %4850 = vmatpush1.bf16.msra.mxu0 %v4822
  %4851 = vmatprep.subr.bf16.mxu0 0
  %4852 = vmatpush1.bf16.msra.mxu0 %v4821
  %4853 = vmatprep.subr.bf16.mxu0 0
  %4854 = vmatpush2.bf16.msra.mxu0 0
  %4855 = vmatprep.subr.bf16.mxu0 0
  %4856 = vmatpush2.bf16.msra.mxu0 0
  %4857 = vmatprep.subr.bf16.mxu0 0
  %4858 = vmatpush2.bf16.msra.mxu0 0
  %4859 = vmatprep.subr.bf16.mxu0 0
  %4860 = vmatpush2.bf16.msra.mxu0 0
  %4861 = vmatprep.subr.bf16.mxu0 0
  %4862 = vmatpush2.bf16.msra.mxu0 0
  %4863 = vmatprep.subr.bf16.mxu0 0
  %4864 = vmatpush2.bf16.msra.mxu0 0
  %4865 = vmatprep.subr.bf16.mxu0 0
  %4866 = vmatpush2.bf16.msra.mxu0 0
  %4867 = vmatprep.subr.bf16.mxu0 0
  %4868 = vmatpush2.bf16.msra.mxu0 0
  %4869 = vmatprep.mubr.bf16.mxu0 0
  %4870 = vmatmul.mubr.bf16.gmra.mxu0 %v4709
  %v4871 = vpop.f32.mrf.mxu0
  %v4872 = vadd.f32 0.0, %v4871
  %v4873 = vpop.f32.mrf.mxu0
  %v4874 = vpop.f32.mrf.mxu0
  %v4875 = vadd.f32 0.0, %v4874
  %v4876 = vpop.f32.mrf.mxu0
  %4877 = vmatprep.mubr.bf16.mxu0 0
  %4878 = vmatmul.mubr.bf16.gmra.mxu0 %v4710
  %v4879 = vpop.f32.mrf.mxu0
  %v4880 = vadd.f32 0.0, %v4879
  %v4881 = vpop.f32.mrf.mxu0
  %v4882 = vpop.f32.mrf.mxu0
  %v4883 = vadd.f32 0.0, %v4882
  %v4884 = vpop.f32.mrf.mxu0
  %4885 = vmatprep.mubr.bf16.mxu0 0
  %4886 = vmatmul.mubr.bf16.gmra.mxu0 %v4711
  %v4887 = vpop.f32.mrf.mxu0
  %v4888 = vadd.f32 0.0, %v4887
  %v4889 = vpop.f32.mrf.mxu0
  %v4890 = vpop.f32.mrf.mxu0
  %v4891 = vadd.f32 0.0, %v4890
  %v4892 = vpop.f32.mrf.mxu0
  %4893 = vmatprep.mubr.bf16.mxu0 0
  %4894 = vmatmul.mubr.bf16.gmra.mxu0 %v4712
  %v4895 = vpop.f32.mrf.mxu0
  %v4896 = vadd.f32 0.0, %v4895
  %v4897 = vpop.f32.mrf.mxu0
  %v4898 = vpop.f32.mrf.mxu0
  %v4899 = vadd.f32 0.0, %v4898
  %v4900 = vpop.f32.mrf.mxu0
  %4901 = vmatprep.mubr.bf16.mxu0 0
  %4902 = vmatmul.mubr.bf16.gmra.mxu0 %v4713
  %v4903 = vpop.f32.mrf.mxu0
  %v4904 = vadd.f32 0.0, %v4903
  %v4905 = vpop.f32.mrf.mxu0
  %v4906 = vpop.f32.mrf.mxu0
  %v4907 = vadd.f32 0.0, %v4906
  %v4908 = vpop.f32.mrf.mxu0
  %4909 = vmatprep.mubr.bf16.mxu0 0
  %4910 = vmatmul.mubr.bf16.gmra.mxu0 %v4714
  %v4911 = vpop.f32.mrf.mxu0
  %v4912 = vadd.f32 0.0, %v4911
  %v4913 = vpop.f32.mrf.mxu0
  %v4914 = vpop.f32.mrf.mxu0
  %v4915 = vadd.f32 0.0, %v4914
  %v4916 = vpop.f32.mrf.mxu0
  %4917 = vmatprep.mubr.bf16.mxu0 0
  %4918 = vmatmul.mubr.bf16.gmra.mxu0 %v4715
  %v4919 = vpop.f32.mrf.mxu0
  %v4920 = vadd.f32 0.0, %v4919
  %v4921 = vpop.f32.mrf.mxu0
  %v4922 = vpop.f32.mrf.mxu0
  %v4923 = vadd.f32 0.0, %v4922
  %v4924 = vpop.f32.mrf.mxu0
  %4925 = vmatprep.mubr.bf16.mxu0 0
  %4926 = vmatmul.mubr.bf16.gmra.mxu0 %v4716
  %v4927 = vpop.f32.mrf.mxu0
  %v4928 = vadd.f32 0.0, %v4927
  %v4929 = vpop.f32.mrf.mxu0
  %v4930 = vpop.f32.mrf.mxu0
  %v4931 = vadd.f32 0.0, %v4930
  %v4932 = vpop.f32.mrf.mxu0
  %4933 = vmatprep.mubr.bf16.mxu0 0
  %4934 = vmatmul.mubr.bf16.gmra.mxu0 %v4717
  %v4935 = vpop.f32.mrf.mxu0
  %v4936 = vadd.f32 0.0, %v4935
  %v4937 = vpop.f32.mrf.mxu0
  %v4938 = vpop.f32.mrf.mxu0
  %v4939 = vadd.f32 0.0, %v4938
  %v4940 = vpop.f32.mrf.mxu0
  %4941 = vmatprep.mubr.bf16.mxu0 0
  %4942 = vmatmul.mubr.bf16.gmra.mxu0 %v4718
  %v4943 = vpop.f32.mrf.mxu0
  %v4944 = vadd.f32 0.0, %v4943
  %v4945 = vpop.f32.mrf.mxu0
  %v4946 = vpop.f32.mrf.mxu0
  %v4947 = vadd.f32 0.0, %v4946
  %v4948 = vpop.f32.mrf.mxu0
  %4949 = vmatprep.mubr.bf16.mxu0 0
  %4950 = vmatmul.mubr.bf16.gmra.mxu0 %v4719
  %v4951 = vpop.f32.mrf.mxu0
  %v4952 = vadd.f32 0.0, %v4951
  %v4953 = vpop.f32.mrf.mxu0
  %v4954 = vpop.f32.mrf.mxu0
  %v4955 = vadd.f32 0.0, %v4954
  %v4956 = vpop.f32.mrf.mxu0
  %4957 = vmatprep.mubr.bf16.mxu0 0
  %4958 = vmatmul.mubr.bf16.gmra.mxu0 %v4720
  %v4959 = vpop.f32.mrf.mxu0
  %v4960 = vadd.f32 0.0, %v4959
  %v4961 = vpop.f32.mrf.mxu0
  %v4962 = vpop.f32.mrf.mxu0
  %v4963 = vadd.f32 0.0, %v4962
  %v4964 = vpop.f32.mrf.mxu0
  %4965 = vmatprep.mubr.bf16.mxu0 0
  %4966 = vmatmul.mubr.bf16.gmra.mxu0 %v4721
  %v4967 = vpop.f32.mrf.mxu0
  %v4968 = vadd.f32 0.0, %v4967
  %v4969 = vpop.f32.mrf.mxu0
  %v4970 = vpop.f32.mrf.mxu0
  %v4971 = vadd.f32 0.0, %v4970
  %v4972 = vpop.f32.mrf.mxu0
  %4973 = vmatprep.mubr.bf16.mxu0 0
  %4974 = vmatmul.mubr.bf16.gmra.mxu0 %v4722
  %v4975 = vpop.f32.mrf.mxu0
  %v4976 = vadd.f32 0.0, %v4975
  %v4977 = vpop.f32.mrf.mxu0
  %v4978 = vpop.f32.mrf.mxu0
  %v4979 = vadd.f32 0.0, %v4978
  %v4980 = vpop.f32.mrf.mxu0
  %4981 = vmatprep.mubr.bf16.mxu0 0
  %4982 = vmatmul.mubr.bf16.gmra.mxu0 %v4723
  %v4983 = vpop.f32.mrf.mxu0
  %v4984 = vadd.f32 0.0, %v4983
  %v4985 = vpop.f32.mrf.mxu0
  %v4986 = vpop.f32.mrf.mxu0
  %v4987 = vadd.f32 0.0, %v4986
  %v4988 = vpop.f32.mrf.mxu0
  %4989 = vmatprep.mubr.bf16.mxu0 0
  %4990 = vmatmul.mubr.bf16.gmra.mxu0 %v4724
  %v4991 = vpop.f32.mrf.mxu0
  %v4992 = vadd.f32 0.0, %v4991
  %v4993 = vpop.f32.mrf.mxu0
  %v4994 = vpop.f32.mrf.mxu0
  %v4995 = vadd.f32 0.0, %v4994
  %v4996 = vpop.f32.mrf.mxu0
  %4997 = vmatprep.mubr.bf16.mxu0 0
  %4998 = vmatmul.mubr.bf16.gmra.mxu0 %v4725
  %v4999 = vpop.f32.mrf.mxu0
  %v5000 = vadd.f32 0.0, %v4999
  %v5001 = vpop.f32.mrf.mxu0
  %v5002 = vpop.f32.mrf.mxu0
  %v5003 = vadd.f32 0.0, %v5002
  %v5004 = vpop.f32.mrf.mxu0
  %5005 = vmatprep.mubr.bf16.mxu0 0
  %5006 = vmatmul.mubr.bf16.gmra.mxu0 %v4726
  %v5007 = vpop.f32.mrf.mxu0
  %v5008 = vadd.f32 0.0, %v5007
  %v5009 = vpop.f32.mrf.mxu0
  %v5010 = vpop.f32.mrf.mxu0
  %v5011 = vadd.f32 0.0, %v5010
  %v5012 = vpop.f32.mrf.mxu0
  %5013 = vmatprep.mubr.bf16.mxu0 0
  %5014 = vmatmul.mubr.bf16.gmra.mxu0 %v4727
  %v5015 = vpop.f32.mrf.mxu0
  %v5016 = vadd.f32 0.0, %v5015
  %v5017 = vpop.f32.mrf.mxu0
  %v5018 = vpop.f32.mrf.mxu0
  %v5019 = vadd.f32 0.0, %v5018
  %v5020 = vpop.f32.mrf.mxu0
  %5021 = vmatprep.mubr.bf16.mxu0 0
  %5022 = vmatmul.mubr.bf16.gmra.mxu0 %v4728
  %v5023 = vpop.f32.mrf.mxu0
  %v5024 = vadd.f32 0.0, %v5023
  %v5025 = vpop.f32.mrf.mxu0
  %v5026 = vpop.f32.mrf.mxu0
  %v5027 = vadd.f32 0.0, %v5026
  %v5028 = vpop.f32.mrf.mxu0
  %5029 = vmatprep.mubr.bf16.mxu0 0
  %5030 = vmatmul.mubr.bf16.gmra.mxu0 %v4729
  %v5031 = vpop.f32.mrf.mxu0
  %v5032 = vadd.f32 0.0, %v5031
  %v5033 = vpop.f32.mrf.mxu0
  %v5034 = vpop.f32.mrf.mxu0
  %v5035 = vadd.f32 0.0, %v5034
  %v5036 = vpop.f32.mrf.mxu0
  %5037 = vmatprep.mubr.bf16.mxu0 0
  %5038 = vmatmul.mubr.bf16.gmra.mxu0 %v4730
  %v5039 = vpop.f32.mrf.mxu0
  %v5040 = vadd.f32 0.0, %v5039
  %v5041 = vpop.f32.mrf.mxu0
  %v5042 = vpop.f32.mrf.mxu0
  %v5043 = vadd.f32 0.0, %v5042
  %v5044 = vpop.f32.mrf.mxu0
  %5045 = vmatprep.mubr.bf16.mxu0 0
  %5046 = vmatmul.mubr.bf16.gmra.mxu0 %v4731
  %v5047 = vpop.f32.mrf.mxu0
  %v5048 = vadd.f32 0.0, %v5047
  %v5049 = vpop.f32.mrf.mxu0
  %v5050 = vpop.f32.mrf.mxu0
  %v5051 = vadd.f32 0.0, %v5050
  %v5052 = vpop.f32.mrf.mxu0
  %5053 = vmatprep.mubr.bf16.mxu0 0
  %5054 = vmatmul.mubr.bf16.gmra.mxu0 %v4732
  %v5055 = vpop.f32.mrf.mxu0
  %v5056 = vadd.f32 0.0, %v5055
  %v5057 = vpop.f32.mrf.mxu0
  %v5058 = vpop.f32.mrf.mxu0
  %v5059 = vadd.f32 0.0, %v5058
  %v5060 = vpop.f32.mrf.mxu0
  %5061 = vmatprep.mubr.bf16.mxu0 0
  %5062 = vmatmul.mubr.bf16.gmra.mxu0 %v4733
  %v5063 = vpop.f32.mrf.mxu0
  %v5064 = vadd.f32 0.0, %v5063
  %v5065 = vpop.f32.mrf.mxu0
  %v5066 = vpop.f32.mrf.mxu0
  %v5067 = vadd.f32 0.0, %v5066
  %v5068 = vpop.f32.mrf.mxu0
  %5069 = vmatprep.mubr.bf16.mxu0 0
  %5070 = vmatmul.mubr.bf16.gmra.mxu0 %v4734
  %v5071 = vpop.f32.mrf.mxu0
  %v5072 = vadd.f32 0.0, %v5071
  %v5073 = vpop.f32.mrf.mxu0
  %v5074 = vpop.f32.mrf.mxu0
  %v5075 = vadd.f32 0.0, %v5074
  %v5076 = vpop.f32.mrf.mxu0
  %5077 = vmatprep.mubr.bf16.mxu0 0
  %5078 = vmatmul.mubr.bf16.gmra.mxu0 %v4735
  %v5079 = vpop.f32.mrf.mxu0
  %v5080 = vadd.f32 0.0, %v5079
  %v5081 = vpop.f32.mrf.mxu0
  %v5082 = vpop.f32.mrf.mxu0
  %v5083 = vadd.f32 0.0, %v5082
  %v5084 = vpop.f32.mrf.mxu0
  %5085 = vmatprep.mubr.bf16.mxu0 0
  %5086 = vmatmul.mubr.bf16.gmra.mxu0 %v4736
  %v5087 = vpop.f32.mrf.mxu0
  %v5088 = vadd.f32 0.0, %v5087
  %v5089 = vpop.f32.mrf.mxu0
  %v5090 = vpop.f32.mrf.mxu0
  %v5091 = vadd.f32 0.0, %v5090
  %v5092 = vpop.f32.mrf.mxu0
  %5093 = vmatprep.mubr.bf16.mxu0 0
  %5094 = vmatmul.mubr.bf16.gmra.mxu0 %v4737
  %v5095 = vpop.f32.mrf.mxu0
  %v5096 = vadd.f32 0.0, %v5095
  %v5097 = vpop.f32.mrf.mxu0
  %v5098 = vpop.f32.mrf.mxu0
  %v5099 = vadd.f32 0.0, %v5098
  %v5100 = vpop.f32.mrf.mxu0
  %5101 = vmatprep.mubr.bf16.mxu0 0
  %5102 = vmatmul.mubr.bf16.gmra.mxu0 %v4738
  %v5103 = vpop.f32.mrf.mxu0
  %v5104 = vadd.f32 0.0, %v5103
  %v5105 = vpop.f32.mrf.mxu0
  %v5106 = vpop.f32.mrf.mxu0
  %v5107 = vadd.f32 0.0, %v5106
  %v5108 = vpop.f32.mrf.mxu0
  %5109 = vmatprep.mubr.bf16.mxu0 0
  %5110 = vmatmul.mubr.bf16.gmra.mxu0 %v4739
  %v5111 = vpop.f32.mrf.mxu0
  %v5112 = vadd.f32 0.0, %v5111
  %v5113 = vpop.f32.mrf.mxu0
  %v5114 = vpop.f32.mrf.mxu0
  %v5115 = vadd.f32 0.0, %v5114
  %v5116 = vpop.f32.mrf.mxu0
  %5117 = vmatprep.mubr.bf16.mxu0 0
  %5118 = vmatmul.mubr.bf16.gmra.mxu0 %v4740
  %v5119 = vpop.f32.mrf.mxu0
  %v5120 = vadd.f32 0.0, %v5119
  %v5121 = vpop.f32.mrf.mxu0
  %v5122 = vpop.f32.mrf.mxu0
  %v5123 = vadd.f32 0.0, %v5122
  %v5124 = vpop.f32.mrf.mxu0
  %5125 = vmatprep.mubr.bf16.mxu0 0
  %5126 = vmatmul.mubr.bf16.gmra.mxu0 %v4741
  %v5127 = vpop.f32.mrf.mxu0
  %v5128 = vadd.f32 0.0, %v5127
  %v5129 = vpop.f32.mrf.mxu0
  %v5130 = vpop.f32.mrf.mxu0
  %v5131 = vadd.f32 0.0, %v5130
  %v5132 = vpop.f32.mrf.mxu0
  %5133 = vmatprep.mubr.bf16.mxu0 0
  %5134 = vmatmul.mubr.bf16.gmra.mxu0 %v4742
  %v5135 = vpop.f32.mrf.mxu0
  %v5136 = vadd.f32 0.0, %v5135
  %v5137 = vpop.f32.mrf.mxu0
  %v5138 = vpop.f32.mrf.mxu0
  %v5139 = vadd.f32 0.0, %v5138
  %v5140 = vpop.f32.mrf.mxu0
  %5141 = vmatprep.mubr.bf16.mxu0 0
  %5142 = vmatmul.mubr.bf16.gmra.mxu0 %v4743
  %v5143 = vpop.f32.mrf.mxu0
  %v5144 = vadd.f32 0.0, %v5143
  %v5145 = vpop.f32.mrf.mxu0
  %v5146 = vpop.f32.mrf.mxu0
  %v5147 = vadd.f32 0.0, %v5146
  %v5148 = vpop.f32.mrf.mxu0
  %5149 = vmatprep.mubr.bf16.mxu0 0
  %5150 = vmatmul.mubr.bf16.gmra.mxu0 %v4744
  %v5151 = vpop.f32.mrf.mxu0
  %v5152 = vadd.f32 0.0, %v5151
  %v5153 = vpop.f32.mrf.mxu0
  %v5154 = vpop.f32.mrf.mxu0
  %v5155 = vadd.f32 0.0, %v5154
  %v5156 = vpop.f32.mrf.mxu0
  %5157 = vmatprep.mubr.bf16.mxu0 0
  %5158 = vmatmul.mubr.bf16.gmra.mxu0 %v4745
  %v5159 = vpop.f32.mrf.mxu0
  %v5160 = vadd.f32 0.0, %v5159
  %v5161 = vpop.f32.mrf.mxu0
  %v5162 = vpop.f32.mrf.mxu0
  %v5163 = vadd.f32 0.0, %v5162
  %v5164 = vpop.f32.mrf.mxu0
  %5165 = vmatprep.mubr.bf16.mxu0 0
  %5166 = vmatmul.mubr.bf16.gmra.mxu0 %v4746
  %v5167 = vpop.f32.mrf.mxu0
  %v5168 = vadd.f32 0.0, %v5167
  %v5169 = vpop.f32.mrf.mxu0
  %v5170 = vpop.f32.mrf.mxu0
  %v5171 = vadd.f32 0.0, %v5170
  %v5172 = vpop.f32.mrf.mxu0
  %5173 = vmatprep.mubr.bf16.mxu0 0
  %5174 = vmatmul.mubr.bf16.gmra.mxu0 %v4747
  %v5175 = vpop.f32.mrf.mxu0
  %v5176 = vadd.f32 0.0, %v5175
  %v5177 = vpop.f32.mrf.mxu0
  %v5178 = vpop.f32.mrf.mxu0
  %v5179 = vadd.f32 0.0, %v5178
  %v5180 = vpop.f32.mrf.mxu0
  %5181 = vmatprep.mubr.bf16.mxu0 0
  %5182 = vmatmul.mubr.bf16.gmra.mxu0 %v4748
  %v5183 = vpop.f32.mrf.mxu0
  %v5184 = vadd.f32 0.0, %v5183
  %v5185 = vpop.f32.mrf.mxu0
  %v5186 = vpop.f32.mrf.mxu0
  %v5187 = vadd.f32 0.0, %v5186
  %v5188 = vpop.f32.mrf.mxu0
  %5189 = vmatprep.mubr.bf16.mxu0 0
  %5190 = vmatmul.mubr.bf16.gmra.mxu0 %v4749
  %v5191 = vpop.f32.mrf.mxu0
  %v5192 = vadd.f32 0.0, %v5191
  %v5193 = vpop.f32.mrf.mxu0
  %v5194 = vpop.f32.mrf.mxu0
  %v5195 = vadd.f32 0.0, %v5194
  %v5196 = vpop.f32.mrf.mxu0
  %5197 = vdwg.mxu0
  %v5214 = vunpack.c.l.b16 %v4757
  %v5215 = vunpack.c.l.b16 %v4758
  %v5216 = vunpack.c.l.b16 %v4759
  %v5217 = vunpack.c.l.b16 %v4760
  %v5218 = vunpack.c.l.b16 %v4761
  %v5219 = vunpack.c.l.b16 %v4762
  %v5220 = vunpack.c.l.b16 %v4763
  %v5221 = vunpack.c.l.b16 %v4764
  %v5222 = vunpack.c.l.b16 %v4765
  %v5223 = vunpack.c.l.b16 %v4766
  %v5224 = vunpack.c.l.b16 %v4767
  %v5225 = vunpack.c.l.b16 %v4768
  %v5226 = vunpack.c.l.b16 %v4769
  %v5227 = vunpack.c.l.b16 %v4770
  %v5228 = vunpack.c.l.b16 %v4771
  %v5229 = vunpack.c.l.b16 %v4772
  %v5230 = vpack.c.b16 %v5215, %v5214
  %v5231 = vpack.c.b16 %v5217, %v5216
  %v5232 = vpack.c.b16 %v5219, %v5218
  %v5233 = vpack.c.b16 %v5221, %v5220
  %v5234 = vpack.c.b16 %v5223, %v5222
  %v5235 = vpack.c.b16 %v5225, %v5224
  %v5236 = vpack.c.b16 %v5227, %v5226
  %v5237 = vpack.c.b16 %v5229, %v5228
  %5246 = vmatprep.subr.bf16.mxu0 0
  %5247 = vmatpush1.bf16.msra.mxu0 %v5237
  %5248 = vmatprep.subr.bf16.mxu0 0
  %5249 = vmatpush1.bf16.msra.mxu0 %v5236
  %5250 = vmatprep.subr.bf16.mxu0 0
  %5251 = vmatpush1.bf16.msra.mxu0 %v5235
  %5252 = vmatprep.subr.bf16.mxu0 0
  %5253 = vmatpush1.bf16.msra.mxu0 %v5234
  %5254 = vmatprep.subr.bf16.mxu0 0
  %5255 = vmatpush1.bf16.msra.mxu0 %v5233
  %5256 = vmatprep.subr.bf16.mxu0 0
  %5257 = vmatpush1.bf16.msra.mxu0 %v5232
  %5258 = vmatprep.subr.bf16.mxu0 0
  %5259 = vmatpush1.bf16.msra.mxu0 %v5231
  %5260 = vmatprep.subr.bf16.mxu0 0
  %5261 = vmatpush1.bf16.msra.mxu0 %v5230
  %5262 = vmatprep.subr.bf16.mxu0 0
  %5263 = vmatpush2.bf16.msra.mxu0 0
  %5264 = vmatprep.subr.bf16.mxu0 0
  %5265 = vmatpush2.bf16.msra.mxu0 0
  %5266 = vmatprep.subr.bf16.mxu0 0
  %5267 = vmatpush2.bf16.msra.mxu0 0
  %5268 = vmatprep.subr.bf16.mxu0 0
  %5269 = vmatpush2.bf16.msra.mxu0 0
  %5270 = vmatprep.subr.bf16.mxu0 0
  %5271 = vmatpush2.bf16.msra.mxu0 0
  %5272 = vmatprep.subr.bf16.mxu0 0
  %5273 = vmatpush2.bf16.msra.mxu0 0
  %5274 = vmatprep.subr.bf16.mxu0 0
  %5275 = vmatpush2.bf16.msra.mxu0 0
  %5276 = vmatprep.subr.bf16.mxu0 0
  %5277 = vmatpush2.bf16.msra.mxu0 0
  %5278 = vmatprep.mubr.bf16.mxu0 0
  %5279 = vmatmul.mubr.bf16.gmra.mxu0 %v4708
  %v5280 = vpop.f32.mrf.mxu0
  %v5281 = vadd.f32 %v4872, %v5280
  %v5282 = vpop.f32.mrf.mxu0
  %v5283 = vpop.f32.mrf.mxu0
  %v5284 = vadd.f32 %v4875, %v5283
  %v5285 = vpop.f32.mrf.mxu0
  %5286 = vmatprep.mubr.bf16.mxu0 0
  %5287 = vmatmul.mubr.bf16.gmra.mxu0 %v4709
  %v5288 = vpop.f32.mrf.mxu0
  %v5289 = vadd.f32 %v4880, %v5288
  %v5290 = vpop.f32.mrf.mxu0
  %v5291 = vpop.f32.mrf.mxu0
  %v5292 = vadd.f32 %v4883, %v5291
  %v5293 = vpop.f32.mrf.mxu0
  %5294 = vmatprep.mubr.bf16.mxu0 0
  %5295 = vmatmul.mubr.bf16.gmra.mxu0 %v4710
  %v5296 = vpop.f32.mrf.mxu0
  %v5297 = vadd.f32 %v4888, %v5296
  %v5298 = vpop.f32.mrf.mxu0
  %v5299 = vpop.f32.mrf.mxu0
  %v5300 = vadd.f32 %v4891, %v5299
  %v5301 = vpop.f32.mrf.mxu0
  %5302 = vmatprep.mubr.bf16.mxu0 0
  %5303 = vmatmul.mubr.bf16.gmra.mxu0 %v4711
  %v5304 = vpop.f32.mrf.mxu0
  %v5305 = vadd.f32 %v4896, %v5304
  %v5306 = vpop.f32.mrf.mxu0
  %v5307 = vpop.f32.mrf.mxu0
  %v5308 = vadd.f32 %v4899, %v5307
  %v5309 = vpop.f32.mrf.mxu0
  %5310 = vmatprep.mubr.bf16.mxu0 0
  %5311 = vmatmul.mubr.bf16.gmra.mxu0 %v4712
  %v5312 = vpop.f32.mrf.mxu0
  %v5313 = vadd.f32 %v4904, %v5312
  %v5314 = vpop.f32.mrf.mxu0
  %v5315 = vpop.f32.mrf.mxu0
  %v5316 = vadd.f32 %v4907, %v5315
  %v5317 = vpop.f32.mrf.mxu0
  %5318 = vmatprep.mubr.bf16.mxu0 0
  %5319 = vmatmul.mubr.bf16.gmra.mxu0 %v4713
  %v5320 = vpop.f32.mrf.mxu0
  %v5321 = vadd.f32 %v4912, %v5320
  %v5322 = vpop.f32.mrf.mxu0
  %v5323 = vpop.f32.mrf.mxu0
  %v5324 = vadd.f32 %v4915, %v5323
  %v5325 = vpop.f32.mrf.mxu0
  %5326 = vmatprep.mubr.bf16.mxu0 0
  %5327 = vmatmul.mubr.bf16.gmra.mxu0 %v4714
  %v5328 = vpop.f32.mrf.mxu0
  %v5329 = vadd.f32 %v4920, %v5328
  %v5330 = vpop.f32.mrf.mxu0
  %v5331 = vpop.f32.mrf.mxu0
  %v5332 = vadd.f32 %v4923, %v5331
  %v5333 = vpop.f32.mrf.mxu0
  %5334 = vmatprep.mubr.bf16.mxu0 0
  %5335 = vmatmul.mubr.bf16.gmra.mxu0 %v4715
  %v5336 = vpop.f32.mrf.mxu0
  %v5337 = vadd.f32 %v4928, %v5336
  %v5338 = vpop.f32.mrf.mxu0
  %v5339 = vpop.f32.mrf.mxu0
  %v5340 = vadd.f32 %v4931, %v5339
  %v5341 = vpop.f32.mrf.mxu0
  %5342 = vmatprep.mubr.bf16.mxu0 0
  %5343 = vmatmul.mubr.bf16.gmra.mxu0 %v4716
  %v5344 = vpop.f32.mrf.mxu0
  %v5345 = vadd.f32 %v4936, %v5344
  %v5346 = vpop.f32.mrf.mxu0
  %v5347 = vpop.f32.mrf.mxu0
  %v5348 = vadd.f32 %v4939, %v5347
  %v5349 = vpop.f32.mrf.mxu0
  %5350 = vmatprep.mubr.bf16.mxu0 0
  %5351 = vmatmul.mubr.bf16.gmra.mxu0 %v4717
  %v5352 = vpop.f32.mrf.mxu0
  %v5353 = vadd.f32 %v4944, %v5352
  %v5354 = vpop.f32.mrf.mxu0
  %v5355 = vpop.f32.mrf.mxu0
  %v5356 = vadd.f32 %v4947, %v5355
  %v5357 = vpop.f32.mrf.mxu0
  %5358 = vmatprep.mubr.bf16.mxu0 0
  %5359 = vmatmul.mubr.bf16.gmra.mxu0 %v4718
  %v5360 = vpop.f32.mrf.mxu0
  %v5361 = vadd.f32 %v4952, %v5360
  %v5362 = vpop.f32.mrf.mxu0
  %v5363 = vpop.f32.mrf.mxu0
  %v5364 = vadd.f32 %v4955, %v5363
  %v5365 = vpop.f32.mrf.mxu0
  %5366 = vmatprep.mubr.bf16.mxu0 0
  %5367 = vmatmul.mubr.bf16.gmra.mxu0 %v4719
  %v5368 = vpop.f32.mrf.mxu0
  %v5369 = vadd.f32 %v4960, %v5368
  %v5370 = vpop.f32.mrf.mxu0
  %v5371 = vpop.f32.mrf.mxu0
  %v5372 = vadd.f32 %v4963, %v5371
  %v5373 = vpop.f32.mrf.mxu0
  %5374 = vmatprep.mubr.bf16.mxu0 0
  %5375 = vmatmul.mubr.bf16.gmra.mxu0 %v4720
  %v5376 = vpop.f32.mrf.mxu0
  %v5377 = vadd.f32 %v4968, %v5376
  %v5378 = vpop.f32.mrf.mxu0
  %v5379 = vpop.f32.mrf.mxu0
  %v5380 = vadd.f32 %v4971, %v5379
  %v5381 = vpop.f32.mrf.mxu0
  %5382 = vmatprep.mubr.bf16.mxu0 0
  %5383 = vmatmul.mubr.bf16.gmra.mxu0 %v4721
  %v5384 = vpop.f32.mrf.mxu0
  %v5385 = vadd.f32 %v4976, %v5384
  %v5386 = vpop.f32.mrf.mxu0
  %v5387 = vpop.f32.mrf.mxu0
  %v5388 = vadd.f32 %v4979, %v5387
  %v5389 = vpop.f32.mrf.mxu0
  %5390 = vmatprep.mubr.bf16.mxu0 0
  %5391 = vmatmul.mubr.bf16.gmra.mxu0 %v4722
  %v5392 = vpop.f32.mrf.mxu0
  %v5393 = vadd.f32 %v4984, %v5392
  %v5394 = vpop.f32.mrf.mxu0
  %v5395 = vpop.f32.mrf.mxu0
  %v5396 = vadd.f32 %v4987, %v5395
  %v5397 = vpop.f32.mrf.mxu0
  %5398 = vmatprep.mubr.bf16.mxu0 0
  %5399 = vmatmul.mubr.bf16.gmra.mxu0 %v4723
  %v5400 = vpop.f32.mrf.mxu0
  %v5401 = vadd.f32 %v4992, %v5400
  %v5402 = vpop.f32.mrf.mxu0
  %v5403 = vpop.f32.mrf.mxu0
  %v5404 = vadd.f32 %v4995, %v5403
  %v5405 = vpop.f32.mrf.mxu0
  %5406 = vmatprep.mubr.bf16.mxu0 0
  %5407 = vmatmul.mubr.bf16.gmra.mxu0 %v4724
  %v5408 = vpop.f32.mrf.mxu0
  %v5409 = vadd.f32 %v5000, %v5408
  %v5410 = vpop.f32.mrf.mxu0
  %v5411 = vpop.f32.mrf.mxu0
  %v5412 = vadd.f32 %v5003, %v5411
  %v5413 = vpop.f32.mrf.mxu0
  %5414 = vmatprep.mubr.bf16.mxu0 0
  %5415 = vmatmul.mubr.bf16.gmra.mxu0 %v4725
  %v5416 = vpop.f32.mrf.mxu0
  %v5417 = vadd.f32 %v5008, %v5416
  %v5418 = vpop.f32.mrf.mxu0
  %v5419 = vpop.f32.mrf.mxu0
  %v5420 = vadd.f32 %v5011, %v5419
  %v5421 = vpop.f32.mrf.mxu0
  %5422 = vmatprep.mubr.bf16.mxu0 0
  %5423 = vmatmul.mubr.bf16.gmra.mxu0 %v4726
  %v5424 = vpop.f32.mrf.mxu0
  %v5425 = vadd.f32 %v5016, %v5424
  %v5426 = vpop.f32.mrf.mxu0
  %v5427 = vpop.f32.mrf.mxu0
  %v5428 = vadd.f32 %v5019, %v5427
  %v5429 = vpop.f32.mrf.mxu0
  %5430 = vmatprep.mubr.bf16.mxu0 0
  %5431 = vmatmul.mubr.bf16.gmra.mxu0 %v4727
  %v5432 = vpop.f32.mrf.mxu0
  %v5433 = vadd.f32 %v5024, %v5432
  %v5434 = vpop.f32.mrf.mxu0
  %v5435 = vpop.f32.mrf.mxu0
  %v5436 = vadd.f32 %v5027, %v5435
  %v5437 = vpop.f32.mrf.mxu0
  %5438 = vmatprep.mubr.bf16.mxu0 0
  %5439 = vmatmul.mubr.bf16.gmra.mxu0 %v4728
  %v5440 = vpop.f32.mrf.mxu0
  %v5441 = vadd.f32 %v5032, %v5440
  %v5442 = vpop.f32.mrf.mxu0
  %v5443 = vpop.f32.mrf.mxu0
  %v5444 = vadd.f32 %v5035, %v5443
  %v5445 = vpop.f32.mrf.mxu0
  %5446 = vmatprep.mubr.bf16.mxu0 0
  %5447 = vmatmul.mubr.bf16.gmra.mxu0 %v4729
  %v5448 = vpop.f32.mrf.mxu0
  %v5449 = vadd.f32 %v5040, %v5448
  %v5450 = vpop.f32.mrf.mxu0
  %v5451 = vpop.f32.mrf.mxu0
  %v5452 = vadd.f32 %v5043, %v5451
  %v5453 = vpop.f32.mrf.mxu0
  %5454 = vmatprep.mubr.bf16.mxu0 0
  %5455 = vmatmul.mubr.bf16.gmra.mxu0 %v4730
  %v5456 = vpop.f32.mrf.mxu0
  %v5457 = vadd.f32 %v5048, %v5456
  %v5458 = vpop.f32.mrf.mxu0
  %v5459 = vpop.f32.mrf.mxu0
  %v5460 = vadd.f32 %v5051, %v5459
  %v5461 = vpop.f32.mrf.mxu0
  %5462 = vmatprep.mubr.bf16.mxu0 0
  %5463 = vmatmul.mubr.bf16.gmra.mxu0 %v4731
  %v5464 = vpop.f32.mrf.mxu0
  %v5465 = vadd.f32 %v5056, %v5464
  %v5466 = vpop.f32.mrf.mxu0
  %v5467 = vpop.f32.mrf.mxu0
  %v5468 = vadd.f32 %v5059, %v5467
  %v5469 = vpop.f32.mrf.mxu0
  %5470 = vmatprep.mubr.bf16.mxu0 0
  %5471 = vmatmul.mubr.bf16.gmra.mxu0 %v4732
  %v5472 = vpop.f32.mrf.mxu0
  %v5473 = vadd.f32 %v5064, %v5472
  %v5474 = vpop.f32.mrf.mxu0
  %v5475 = vpop.f32.mrf.mxu0
  %v5476 = vadd.f32 %v5067, %v5475
  %v5477 = vpop.f32.mrf.mxu0
  %5478 = vmatprep.mubr.bf16.mxu0 0
  %5479 = vmatmul.mubr.bf16.gmra.mxu0 %v4733
  %v5480 = vpop.f32.mrf.mxu0
  %v5481 = vadd.f32 %v5072, %v5480
  %v5482 = vpop.f32.mrf.mxu0
  %v5483 = vpop.f32.mrf.mxu0
  %v5484 = vadd.f32 %v5075, %v5483
  %v5485 = vpop.f32.mrf.mxu0
  %5486 = vmatprep.mubr.bf16.mxu0 0
  %5487 = vmatmul.mubr.bf16.gmra.mxu0 %v4734
  %v5488 = vpop.f32.mrf.mxu0
  %v5489 = vadd.f32 %v5080, %v5488
  %v5490 = vpop.f32.mrf.mxu0
  %v5491 = vpop.f32.mrf.mxu0
  %v5492 = vadd.f32 %v5083, %v5491
  %v5493 = vpop.f32.mrf.mxu0
  %5494 = vmatprep.mubr.bf16.mxu0 0
  %5495 = vmatmul.mubr.bf16.gmra.mxu0 %v4735
  %v5496 = vpop.f32.mrf.mxu0
  %v5497 = vadd.f32 %v5088, %v5496
  %v5498 = vpop.f32.mrf.mxu0
  %v5499 = vpop.f32.mrf.mxu0
  %v5500 = vadd.f32 %v5091, %v5499
  %v5501 = vpop.f32.mrf.mxu0
  %5502 = vmatprep.mubr.bf16.mxu0 0
  %5503 = vmatmul.mubr.bf16.gmra.mxu0 %v4736
  %v5504 = vpop.f32.mrf.mxu0
  %v5505 = vadd.f32 %v5096, %v5504
  %v5506 = vpop.f32.mrf.mxu0
  %v5507 = vpop.f32.mrf.mxu0
  %v5508 = vadd.f32 %v5099, %v5507
  %v5509 = vpop.f32.mrf.mxu0
  %5510 = vmatprep.mubr.bf16.mxu0 0
  %5511 = vmatmul.mubr.bf16.gmra.mxu0 %v4737
  %v5512 = vpop.f32.mrf.mxu0
  %v5513 = vadd.f32 %v5104, %v5512
  %v5514 = vpop.f32.mrf.mxu0
  %v5515 = vpop.f32.mrf.mxu0
  %v5516 = vadd.f32 %v5107, %v5515
  %v5517 = vpop.f32.mrf.mxu0
  %5518 = vmatprep.mubr.bf16.mxu0 0
  %5519 = vmatmul.mubr.bf16.gmra.mxu0 %v4738
  %v5520 = vpop.f32.mrf.mxu0
  %v5521 = vadd.f32 %v5112, %v5520
  %v5522 = vpop.f32.mrf.mxu0
  %v5523 = vpop.f32.mrf.mxu0
  %v5524 = vadd.f32 %v5115, %v5523
  %v5525 = vpop.f32.mrf.mxu0
  %5526 = vmatprep.mubr.bf16.mxu0 0
  %5527 = vmatmul.mubr.bf16.gmra.mxu0 %v4739
  %v5528 = vpop.f32.mrf.mxu0
  %v5529 = vadd.f32 %v5120, %v5528
  %v5530 = vpop.f32.mrf.mxu0
  %v5531 = vpop.f32.mrf.mxu0
  %v5532 = vadd.f32 %v5123, %v5531
  %v5533 = vpop.f32.mrf.mxu0
  %5534 = vmatprep.mubr.bf16.mxu0 0
  %5535 = vmatmul.mubr.bf16.gmra.mxu0 %v4740
  %v5536 = vpop.f32.mrf.mxu0
  %v5537 = vadd.f32 %v5128, %v5536
  %v5538 = vpop.f32.mrf.mxu0
  %v5539 = vpop.f32.mrf.mxu0
  %v5540 = vadd.f32 %v5131, %v5539
  %v5541 = vpop.f32.mrf.mxu0
  %5542 = vmatprep.mubr.bf16.mxu0 0
  %5543 = vmatmul.mubr.bf16.gmra.mxu0 %v4741
  %v5544 = vpop.f32.mrf.mxu0
  %v5545 = vadd.f32 %v5136, %v5544
  %v5546 = vpop.f32.mrf.mxu0
  %v5547 = vpop.f32.mrf.mxu0
  %v5548 = vadd.f32 %v5139, %v5547
  %v5549 = vpop.f32.mrf.mxu0
  %5550 = vmatprep.mubr.bf16.mxu0 0
  %5551 = vmatmul.mubr.bf16.gmra.mxu0 %v4742
  %v5552 = vpop.f32.mrf.mxu0
  %v5553 = vadd.f32 %v5144, %v5552
  %v5554 = vpop.f32.mrf.mxu0
  %v5555 = vpop.f32.mrf.mxu0
  %v5556 = vadd.f32 %v5147, %v5555
  %v5557 = vpop.f32.mrf.mxu0
  %5558 = vmatprep.mubr.bf16.mxu0 0
  %5559 = vmatmul.mubr.bf16.gmra.mxu0 %v4743
  %v5560 = vpop.f32.mrf.mxu0
  %v5561 = vadd.f32 %v5152, %v5560
  %v5562 = vpop.f32.mrf.mxu0
  %v5563 = vpop.f32.mrf.mxu0
  %v5564 = vadd.f32 %v5155, %v5563
  %v5565 = vpop.f32.mrf.mxu0
  %5566 = vmatprep.mubr.bf16.mxu0 0
  %5567 = vmatmul.mubr.bf16.gmra.mxu0 %v4744
  %v5568 = vpop.f32.mrf.mxu0
  %v5569 = vadd.f32 %v5160, %v5568
  %v5570 = vpop.f32.mrf.mxu0
  %v5571 = vpop.f32.mrf.mxu0
  %v5572 = vadd.f32 %v5163, %v5571
  %v5573 = vpop.f32.mrf.mxu0
  %5574 = vmatprep.mubr.bf16.mxu0 0
  %5575 = vmatmul.mubr.bf16.gmra.mxu0 %v4745
  %v5576 = vpop.f32.mrf.mxu0
  %v5577 = vadd.f32 %v5168, %v5576
  %v5578 = vpop.f32.mrf.mxu0
  %v5579 = vpop.f32.mrf.mxu0
  %v5580 = vadd.f32 %v5171, %v5579
  %v5581 = vpop.f32.mrf.mxu0
  %5582 = vmatprep.mubr.bf16.mxu0 0
  %5583 = vmatmul.mubr.bf16.gmra.mxu0 %v4746
  %v5584 = vpop.f32.mrf.mxu0
  %v5585 = vadd.f32 %v5176, %v5584
  %v5586 = vpop.f32.mrf.mxu0
  %v5587 = vpop.f32.mrf.mxu0
  %v5588 = vadd.f32 %v5179, %v5587
  %v5589 = vpop.f32.mrf.mxu0
  %5590 = vmatprep.mubr.bf16.mxu0 0
  %5591 = vmatmul.mubr.bf16.gmra.mxu0 %v4747
  %v5592 = vpop.f32.mrf.mxu0
  %v5593 = vadd.f32 %v5184, %v5592
  %v5594 = vpop.f32.mrf.mxu0
  %v5595 = vpop.f32.mrf.mxu0
  %v5596 = vadd.f32 %v5187, %v5595
  %v5597 = vpop.f32.mrf.mxu0
  %5598 = vmatprep.mubr.bf16.mxu0 0
  %5599 = vmatmul.mubr.bf16.gmra.mxu0 %v4748
  %v5600 = vpop.f32.mrf.mxu0
  %v5601 = vadd.f32 %v5192, %v5600
  %v5602 = vpop.f32.mrf.mxu0
  %v5603 = vpop.f32.mrf.mxu0
  %v5604 = vadd.f32 %v5195, %v5603
  %v5605 = vpop.f32.mrf.mxu0
  %5606 = vdwg.mxu0
  %v5607 = vld [vmem:[%s3 + $0x80] sm:$0xf]
  %v5608 = vld [vmem:[%s3 + $0x84] sm:$0xf]
  %v5609 = vld [vmem:[%s3 + $0x88] sm:$0xf]
  %v5610 = vld [vmem:[%s3 + $0x8c] sm:$0xf]
  %v5611 = vld [vmem:[%s3 + $0x90] sm:$0xf]
  %v5612 = vld [vmem:[%s3 + $0x94] sm:$0xf]
  %v5613 = vld [vmem:[%s3 + $0x98] sm:$0xf]
  %v5614 = vld [vmem:[%s3 + $0x9c] sm:$0xf]
  %v5615 = vld [vmem:[%s3 + $0xa0] sm:$0xf]
  %v5616 = vld [vmem:[%s3 + $0xa4] sm:$0xf]
  %v5617 = vld [vmem:[%s3 + $0xa8] sm:$0xf]
  %v5618 = vld [vmem:[%s3 + $0xac] sm:$0xf]
  %v5619 = vld [vmem:[%s3 + $0xb0] sm:$0xf]
  %v5620 = vld [vmem:[%s3 + $0xb4] sm:$0xf]
  %v5621 = vld [vmem:[%s3 + $0xb8] sm:$0xf]
  %v5622 = vld [vmem:[%s3 + $0xbc] sm:$0xf]
  %v5639 = vunpack.c.l.b16 %v5607
  %v5640 = vunpack.c.l.b16 %v5608
  %v5641 = vunpack.c.l.b16 %v5609
  %v5642 = vunpack.c.l.b16 %v5610
  %v5643 = vunpack.c.l.b16 %v5611
  %v5644 = vunpack.c.l.b16 %v5612
  %v5645 = vunpack.c.l.b16 %v5613
  %v5646 = vunpack.c.l.b16 %v5614
  %v5647 = vunpack.c.l.b16 %v5615
  %v5648 = vunpack.c.l.b16 %v5616
  %v5649 = vunpack.c.l.b16 %v5617
  %v5650 = vunpack.c.l.b16 %v5618
  %v5651 = vunpack.c.l.b16 %v5619
  %v5652 = vunpack.c.l.b16 %v5620
  %v5653 = vunpack.c.l.b16 %v5621
  %v5654 = vunpack.c.l.b16 %v5622
  %v5655 = vpack.c.b16 %v5640, %v5639
  %v5656 = vpack.c.b16 %v5642, %v5641
  %v5657 = vpack.c.b16 %v5644, %v5643
  %v5658 = vpack.c.b16 %v5646, %v5645
  %v5659 = vpack.c.b16 %v5648, %v5647
  %v5660 = vpack.c.b16 %v5650, %v5649
  %v5661 = vpack.c.b16 %v5652, %v5651
  %v5662 = vpack.c.b16 %v5654, %v5653
  %5671 = vmatprep.subr.bf16.mxu0 0
  %5672 = vmatpush1.bf16.msra.mxu0 %v5662
  %5673 = vmatprep.subr.bf16.mxu0 0
  %5674 = vmatpush1.bf16.msra.mxu0 %v5661
  %5675 = vmatprep.subr.bf16.mxu0 0
  %5676 = vmatpush1.bf16.msra.mxu0 %v5660
  %5677 = vmatprep.subr.bf16.mxu0 0
  %5678 = vmatpush1.bf16.msra.mxu0 %v5659
  %5679 = vmatprep.subr.bf16.mxu0 0
  %5680 = vmatpush1.bf16.msra.mxu0 %v5658
  %5681 = vmatprep.subr.bf16.mxu0 0
  %5682 = vmatpush1.bf16.msra.mxu0 %v5657
  %5683 = vmatprep.subr.bf16.mxu0 0
  %5684 = vmatpush1.bf16.msra.mxu0 %v5656
  %5685 = vmatprep.subr.bf16.mxu0 0
  %5686 = vmatpush1.bf16.msra.mxu0 %v5655
  %5687 = vmatprep.subr.bf16.mxu0 0
  %5688 = vmatpush2.bf16.msra.mxu0 0
  %5689 = vmatprep.subr.bf16.mxu0 0
  %5690 = vmatpush2.bf16.msra.mxu0 0
  %5691 = vmatprep.subr.bf16.mxu0 0
  %5692 = vmatpush2.bf16.msra.mxu0 0
  %5693 = vmatprep.subr.bf16.mxu0 0
  %5694 = vmatpush2.bf16.msra.mxu0 0
  %5695 = vmatprep.subr.bf16.mxu0 0
  %5696 = vmatpush2.bf16.msra.mxu0 0
  %5697 = vmatprep.subr.bf16.mxu0 0
  %5698 = vmatpush2.bf16.msra.mxu0 0
  %5699 = vmatprep.subr.bf16.mxu0 0
  %5700 = vmatpush2.bf16.msra.mxu0 0
  %5701 = vmatprep.subr.bf16.mxu0 0
  %5702 = vmatpush2.bf16.msra.mxu0 0
  %5703 = vmatprep.mubr.bf16.mxu0 0
  %5704 = vmatmul.mubr.bf16.gmra.mxu0 %v4715
  %v5705 = vpop.f32.mrf.mxu0
  %v5706 = vadd.f32 0.0, %v5705
  %v5707 = vpop.f32.mrf.mxu0
  %v5708 = vpop.f32.mrf.mxu0
  %v5709 = vadd.f32 0.0, %v5708
  %v5710 = vpop.f32.mrf.mxu0
  %5711 = vmatprep.mubr.bf16.mxu0 0
  %5712 = vmatmul.mubr.bf16.gmra.mxu0 %v4716
  %v5713 = vpop.f32.mrf.mxu0
  %v5714 = vadd.f32 0.0, %v5713
  %v5715 = vpop.f32.mrf.mxu0
  %v5716 = vpop.f32.mrf.mxu0
  %v5717 = vadd.f32 0.0, %v5716
  %v5718 = vpop.f32.mrf.mxu0
  %5719 = vmatprep.mubr.bf16.mxu0 0
  %5720 = vmatmul.mubr.bf16.gmra.mxu0 %v4717
  %v5721 = vpop.f32.mrf.mxu0
  %v5722 = vadd.f32 0.0, %v5721
  %v5723 = vpop.f32.mrf.mxu0
  %v5724 = vpop.f32.mrf.mxu0
  %v5725 = vadd.f32 0.0, %v5724
  %v5726 = vpop.f32.mrf.mxu0
  %5727 = vmatprep.mubr.bf16.mxu0 0
  %5728 = vmatmul.mubr.bf16.gmra.mxu0 %v4718
  %v5729 = vpop.f32.mrf.mxu0
  %v5730 = vadd.f32 0.0, %v5729
  %v5731 = vpop.f32.mrf.mxu0
  %v5732 = vpop.f32.mrf.mxu0
  %v5733 = vadd.f32 0.0, %v5732
  %v5734 = vpop.f32.mrf.mxu0
  %5735 = vmatprep.mubr.bf16.mxu0 0
  %5736 = vmatmul.mubr.bf16.gmra.mxu0 %v4719
  %v5737 = vpop.f32.mrf.mxu0
  %v5738 = vadd.f32 0.0, %v5737
  %v5739 = vpop.f32.mrf.mxu0
  %v5740 = vpop.f32.mrf.mxu0
  %v5741 = vadd.f32 0.0, %v5740
  %v5742 = vpop.f32.mrf.mxu0
  %5743 = vmatprep.mubr.bf16.mxu0 0
  %5744 = vmatmul.mubr.bf16.gmra.mxu0 %v4720
  %v5745 = vpop.f32.mrf.mxu0
  %v5746 = vadd.f32 0.0, %v5745
  %v5747 = vpop.f32.mrf.mxu0
  %v5748 = vpop.f32.mrf.mxu0
  %v5749 = vadd.f32 0.0, %v5748
  %v5750 = vpop.f32.mrf.mxu0
  %5751 = vmatprep.mubr.bf16.mxu0 0
  %5752 = vmatmul.mubr.bf16.gmra.mxu0 %v4721
  %v5753 = vpop.f32.mrf.mxu0
  %v5754 = vadd.f32 0.0, %v5753
  %v5755 = vpop.f32.mrf.mxu0
  %v5756 = vpop.f32.mrf.mxu0
  %v5757 = vadd.f32 0.0, %v5756
  %v5758 = vpop.f32.mrf.mxu0
  %5759 = vmatprep.mubr.bf16.mxu0 0
  %5760 = vmatmul.mubr.bf16.gmra.mxu0 %v4722
  %v5761 = vpop.f32.mrf.mxu0
  %v5762 = vadd.f32 0.0, %v5761
  %v5763 = vpop.f32.mrf.mxu0
  %v5764 = vpop.f32.mrf.mxu0
  %v5765 = vadd.f32 0.0, %v5764
  %v5766 = vpop.f32.mrf.mxu0
  %5767 = vmatprep.mubr.bf16.mxu0 0
  %5768 = vmatmul.mubr.bf16.gmra.mxu0 %v4723
  %v5769 = vpop.f32.mrf.mxu0
  %v5770 = vadd.f32 0.0, %v5769
  %v5771 = vpop.f32.mrf.mxu0
  %v5772 = vpop.f32.mrf.mxu0
  %v5773 = vadd.f32 0.0, %v5772
  %v5774 = vpop.f32.mrf.mxu0
  %5775 = vmatprep.mubr.bf16.mxu0 0
  %5776 = vmatmul.mubr.bf16.gmra.mxu0 %v4724
  %v5777 = vpop.f32.mrf.mxu0
  %v5778 = vadd.f32 0.0, %v5777
  %v5779 = vpop.f32.mrf.mxu0
  %v5780 = vpop.f32.mrf.mxu0
  %v5781 = vadd.f32 0.0, %v5780
  %v5782 = vpop.f32.mrf.mxu0
  %5783 = vmatprep.mubr.bf16.mxu0 0
  %5784 = vmatmul.mubr.bf16.gmra.mxu0 %v4725
  %v5785 = vpop.f32.mrf.mxu0
  %v5786 = vadd.f32 0.0, %v5785
  %v5787 = vpop.f32.mrf.mxu0
  %v5788 = vpop.f32.mrf.mxu0
  %v5789 = vadd.f32 0.0, %v5788
  %v5790 = vpop.f32.mrf.mxu0
  %5791 = vmatprep.mubr.bf16.mxu0 0
  %5792 = vmatmul.mubr.bf16.gmra.mxu0 %v4726
  %v5793 = vpop.f32.mrf.mxu0
  %v5794 = vadd.f32 0.0, %v5793
  %v5795 = vpop.f32.mrf.mxu0
  %v5796 = vpop.f32.mrf.mxu0
  %v5797 = vadd.f32 0.0, %v5796
  %v5798 = vpop.f32.mrf.mxu0
  %5799 = vmatprep.mubr.bf16.mxu0 0
  %5800 = vmatmul.mubr.bf16.gmra.mxu0 %v4727
  %v5801 = vpop.f32.mrf.mxu0
  %v5802 = vadd.f32 0.0, %v5801
  %v5803 = vpop.f32.mrf.mxu0
  %v5804 = vpop.f32.mrf.mxu0
  %v5805 = vadd.f32 0.0, %v5804
  %v5806 = vpop.f32.mrf.mxu0
  %5807 = vmatprep.mubr.bf16.mxu0 0
  %5808 = vmatmul.mubr.bf16.gmra.mxu0 %v4728
  %v5809 = vpop.f32.mrf.mxu0
  %v5810 = vadd.f32 0.0, %v5809
  %v5811 = vpop.f32.mrf.mxu0
  %v5812 = vpop.f32.mrf.mxu0
  %v5813 = vadd.f32 0.0, %v5812
  %v5814 = vpop.f32.mrf.mxu0
  %5815 = vmatprep.mubr.bf16.mxu0 0
  %5816 = vmatmul.mubr.bf16.gmra.mxu0 %v4729
  %v5817 = vpop.f32.mrf.mxu0
  %v5818 = vadd.f32 0.0, %v5817
  %v5819 = vpop.f32.mrf.mxu0
  %v5820 = vpop.f32.mrf.mxu0
  %v5821 = vadd.f32 0.0, %v5820
  %v5822 = vpop.f32.mrf.mxu0
  %5823 = vmatprep.mubr.bf16.mxu0 0
  %5824 = vmatmul.mubr.bf16.gmra.mxu0 %v4730
  %v5825 = vpop.f32.mrf.mxu0
  %v5826 = vadd.f32 0.0, %v5825
  %v5827 = vpop.f32.mrf.mxu0
  %v5828 = vpop.f32.mrf.mxu0
  %v5829 = vadd.f32 0.0, %v5828
  %v5830 = vpop.f32.mrf.mxu0
  %5831 = vmatprep.mubr.bf16.mxu0 0
  %5832 = vmatmul.mubr.bf16.gmra.mxu0 %v4731
  %v5833 = vpop.f32.mrf.mxu0
  %v5834 = vadd.f32 0.0, %v5833
  %v5835 = vpop.f32.mrf.mxu0
  %v5836 = vpop.f32.mrf.mxu0
  %v5837 = vadd.f32 0.0, %v5836
  %v5838 = vpop.f32.mrf.mxu0
  %5839 = vmatprep.mubr.bf16.mxu0 0
  %5840 = vmatmul.mubr.bf16.gmra.mxu0 %v4732
  %v5841 = vpop.f32.mrf.mxu0
  %v5842 = vadd.f32 0.0, %v5841
  %v5843 = vpop.f32.mrf.mxu0
  %v5844 = vpop.f32.mrf.mxu0
  %v5845 = vadd.f32 0.0, %v5844
  %v5846 = vpop.f32.mrf.mxu0
  %5847 = vmatprep.mubr.bf16.mxu0 0
  %5848 = vmatmul.mubr.bf16.gmra.mxu0 %v4733
  %v5849 = vpop.f32.mrf.mxu0
  %v5850 = vadd.f32 0.0, %v5849
  %v5851 = vpop.f32.mrf.mxu0
  %v5852 = vpop.f32.mrf.mxu0
  %v5853 = vadd.f32 0.0, %v5852
  %v5854 = vpop.f32.mrf.mxu0
  %5855 = vmatprep.mubr.bf16.mxu0 0
  %5856 = vmatmul.mubr.bf16.gmra.mxu0 %v4734
  %v5857 = vpop.f32.mrf.mxu0
  %v5858 = vadd.f32 0.0, %v5857
  %v5859 = vpop.f32.mrf.mxu0
  %v5860 = vpop.f32.mrf.mxu0
  %v5861 = vadd.f32 0.0, %v5860
  %v5862 = vpop.f32.mrf.mxu0
  %5863 = vmatprep.mubr.bf16.mxu0 0
  %5864 = vmatmul.mubr.bf16.gmra.mxu0 %v4735
  %v5865 = vpop.f32.mrf.mxu0
  %v5866 = vadd.f32 0.0, %v5865
  %v5867 = vpop.f32.mrf.mxu0
  %v5868 = vpop.f32.mrf.mxu0
  %v5869 = vadd.f32 0.0, %v5868
  %v5870 = vpop.f32.mrf.mxu0
  %5871 = vmatprep.mubr.bf16.mxu0 0
  %5872 = vmatmul.mubr.bf16.gmra.mxu0 %v4736
  %v5873 = vpop.f32.mrf.mxu0
  %v5874 = vadd.f32 0.0, %v5873
  %v5875 = vpop.f32.mrf.mxu0
  %v5876 = vpop.f32.mrf.mxu0
  %v5877 = vadd.f32 0.0, %v5876
  %v5878 = vpop.f32.mrf.mxu0
  %5879 = vmatprep.mubr.bf16.mxu0 0
  %5880 = vmatmul.mubr.bf16.gmra.mxu0 %v4737
  %v5881 = vpop.f32.mrf.mxu0
  %v5882 = vadd.f32 0.0, %v5881
  %v5883 = vpop.f32.mrf.mxu0
  %v5884 = vpop.f32.mrf.mxu0
  %v5885 = vadd.f32 0.0, %v5884
  %v5886 = vpop.f32.mrf.mxu0
  %5887 = vmatprep.mubr.bf16.mxu0 0
  %5888 = vmatmul.mubr.bf16.gmra.mxu0 %v4738
  %v5889 = vpop.f32.mrf.mxu0
  %v5890 = vadd.f32 0.0, %v5889
  %v5891 = vpop.f32.mrf.mxu0
  %v5892 = vpop.f32.mrf.mxu0
  %v5893 = vadd.f32 0.0, %v5892
  %v5894 = vpop.f32.mrf.mxu0
  %5895 = vmatprep.mubr.bf16.mxu0 0
  %5896 = vmatmul.mubr.bf16.gmra.mxu0 %v4739
  %v5897 = vpop.f32.mrf.mxu0
  %v5898 = vadd.f32 0.0, %v5897
  %v5899 = vpop.f32.mrf.mxu0
  %v5900 = vpop.f32.mrf.mxu0
  %v5901 = vadd.f32 0.0, %v5900
  %v5902 = vpop.f32.mrf.mxu0
  %5903 = vmatprep.mubr.bf16.mxu0 0
  %5904 = vmatmul.mubr.bf16.gmra.mxu0 %v4740
  %v5905 = vpop.f32.mrf.mxu0
  %v5906 = vadd.f32 0.0, %v5905
  %v5907 = vpop.f32.mrf.mxu0
  %v5908 = vpop.f32.mrf.mxu0
  %v5909 = vadd.f32 0.0, %v5908
  %v5910 = vpop.f32.mrf.mxu0
  %5911 = vmatprep.mubr.bf16.mxu0 0
  %5912 = vmatmul.mubr.bf16.gmra.mxu0 %v4741
  %v5913 = vpop.f32.mrf.mxu0
  %v5914 = vadd.f32 0.0, %v5913
  %v5915 = vpop.f32.mrf.mxu0
  %v5916 = vpop.f32.mrf.mxu0
  %v5917 = vadd.f32 0.0, %v5916
  %v5918 = vpop.f32.mrf.mxu0
  %5919 = vmatprep.mubr.bf16.mxu0 0
  %5920 = vmatmul.mubr.bf16.gmra.mxu0 %v4742
  %v5921 = vpop.f32.mrf.mxu0
  %v5922 = vadd.f32 0.0, %v5921
  %v5923 = vpop.f32.mrf.mxu0
  %v5924 = vpop.f32.mrf.mxu0
  %v5925 = vadd.f32 0.0, %v5924
  %v5926 = vpop.f32.mrf.mxu0
  %5927 = vmatprep.mubr.bf16.mxu0 0
  %5928 = vmatmul.mubr.bf16.gmra.mxu0 %v4743
  %v5929 = vpop.f32.mrf.mxu0
  %v5930 = vadd.f32 0.0, %v5929
  %v5931 = vpop.f32.mrf.mxu0
  %v5932 = vpop.f32.mrf.mxu0
  %v5933 = vadd.f32 0.0, %v5932
  %v5934 = vpop.f32.mrf.mxu0
  %5935 = vmatprep.mubr.bf16.mxu0 0
  %5936 = vmatmul.mubr.bf16.gmra.mxu0 %v4744
  %v5937 = vpop.f32.mrf.mxu0
  %v5938 = vadd.f32 0.0, %v5937
  %v5939 = vpop.f32.mrf.mxu0
  %v5940 = vpop.f32.mrf.mxu0
  %v5941 = vadd.f32 0.0, %v5940
  %v5942 = vpop.f32.mrf.mxu0
  %5943 = vmatprep.mubr.bf16.mxu0 0
  %5944 = vmatmul.mubr.bf16.gmra.mxu0 %v4745
  %v5945 = vpop.f32.mrf.mxu0
  %v5946 = vadd.f32 0.0, %v5945
  %v5947 = vpop.f32.mrf.mxu0
  %v5948 = vpop.f32.mrf.mxu0
  %v5949 = vadd.f32 0.0, %v5948
  %v5950 = vpop.f32.mrf.mxu0
  %5951 = vmatprep.mubr.bf16.mxu0 0
  %5952 = vmatmul.mubr.bf16.gmra.mxu0 %v4746
  %v5953 = vpop.f32.mrf.mxu0
  %v5954 = vadd.f32 0.0, %v5953
  %v5955 = vpop.f32.mrf.mxu0
  %v5956 = vpop.f32.mrf.mxu0
  %v5957 = vadd.f32 0.0, %v5956
  %v5958 = vpop.f32.mrf.mxu0
  %5959 = vmatprep.mubr.bf16.mxu0 0
  %5960 = vmatmul.mubr.bf16.gmra.mxu0 %v4747
  %v5961 = vpop.f32.mrf.mxu0
  %v5962 = vadd.f32 0.0, %v5961
  %v5963 = vpop.f32.mrf.mxu0
  %v5964 = vpop.f32.mrf.mxu0
  %v5965 = vadd.f32 0.0, %v5964
  %v5966 = vpop.f32.mrf.mxu0
  %5967 = vmatprep.mubr.bf16.mxu0 0
  %5968 = vmatmul.mubr.bf16.gmra.mxu0 %v4748
  %v5969 = vpop.f32.mrf.mxu0
  %v5970 = vadd.f32 0.0, %v5969
  %v5971 = vpop.f32.mrf.mxu0
  %v5972 = vpop.f32.mrf.mxu0
  %v5973 = vadd.f32 0.0, %v5972
  %v5974 = vpop.f32.mrf.mxu0
  %5975 = vmatprep.mubr.bf16.mxu0 0
  %5976 = vmatmul.mubr.bf16.gmra.mxu0 %v4749
  %v5977 = vpop.f32.mrf.mxu0
  %v5978 = vadd.f32 0.0, %v5977
  %v5979 = vpop.f32.mrf.mxu0
  %v5980 = vpop.f32.mrf.mxu0
  %v5981 = vadd.f32 0.0, %v5980
  %v5982 = vpop.f32.mrf.mxu0
  %5983 = vmatprep.mubr.bf16.mxu0 0
  %5984 = vmatmul.mubr.bf16.gmra.mxu0 %v4750
  %v5985 = vpop.f32.mrf.mxu0
  %v5986 = vadd.f32 0.0, %v5985
  %v5987 = vpop.f32.mrf.mxu0
  %v5988 = vpop.f32.mrf.mxu0
  %v5989 = vadd.f32 0.0, %v5988
  %v5990 = vpop.f32.mrf.mxu0
  %5991 = vmatprep.mubr.bf16.mxu0 0
  %5992 = vmatmul.mubr.bf16.gmra.mxu0 %v4751
  %v5993 = vpop.f32.mrf.mxu0
  %v5994 = vadd.f32 0.0, %v5993
  %v5995 = vpop.f32.mrf.mxu0
  %v5996 = vpop.f32.mrf.mxu0
  %v5997 = vadd.f32 0.0, %v5996
  %v5998 = vpop.f32.mrf.mxu0
  %5999 = vmatprep.mubr.bf16.mxu0 0
  %6000 = vmatmul.mubr.bf16.gmra.mxu0 %v4752
  %v6001 = vpop.f32.mrf.mxu0
  %v6002 = vadd.f32 0.0, %v6001
  %v6003 = vpop.f32.mrf.mxu0
  %v6004 = vpop.f32.mrf.mxu0
  %v6005 = vadd.f32 0.0, %v6004
  %v6006 = vpop.f32.mrf.mxu0
  %6007 = vmatprep.mubr.bf16.mxu0 0
  %6008 = vmatmul.mubr.bf16.gmra.mxu0 %v4753
  %v6009 = vpop.f32.mrf.mxu0
  %v6010 = vadd.f32 0.0, %v6009
  %v6011 = vpop.f32.mrf.mxu0
  %v6012 = vpop.f32.mrf.mxu0
  %v6013 = vadd.f32 0.0, %v6012
  %v6014 = vpop.f32.mrf.mxu0
  %6015 = vmatprep.mubr.bf16.mxu0 0
  %6016 = vmatmul.mubr.bf16.gmra.mxu0 %v4754
  %v6017 = vpop.f32.mrf.mxu0
  %v6018 = vadd.f32 0.0, %v6017
  %v6019 = vpop.f32.mrf.mxu0
  %v6020 = vpop.f32.mrf.mxu0
  %v6021 = vadd.f32 0.0, %v6020
  %v6022 = vpop.f32.mrf.mxu0
  %6023 = vmatprep.mubr.bf16.mxu0 0
  %6024 = vmatmul.mubr.bf16.gmra.mxu0 %v4755
  %v6025 = vpop.f32.mrf.mxu0
  %v6026 = vadd.f32 0.0, %v6025
  %v6027 = vpop.f32.mrf.mxu0
  %v6028 = vpop.f32.mrf.mxu0
  %v6029 = vadd.f32 0.0, %v6028
  %v6030 = vpop.f32.mrf.mxu0
  %6031 = vdwg.mxu0
  %v6032 = vadd.f32 %v5281, %v5706
  %v6033 = vadd.f32 %v5284, %v5709
  %v6034 = vadd.f32 %v5289, %v5714
  %v6035 = vadd.f32 %v5292, %v5717
  %v6036 = vadd.f32 %v5297, %v5722
  %v6037 = vadd.f32 %v5300, %v5725
  %v6038 = vadd.f32 %v5305, %v5730
  %v6039 = vadd.f32 %v5308, %v5733
  %v6040 = vadd.f32 %v5313, %v5738
  %v6041 = vadd.f32 %v5316, %v5741
  %v6042 = vadd.f32 %v5321, %v5746
  %v6043 = vadd.f32 %v5324, %v5749
  %v6044 = vadd.f32 %v5329, %v5754
  %v6045 = vadd.f32 %v5332, %v5757
  %v6046 = vadd.f32 %v5337, %v5762
  %v6047 = vadd.f32 %v5340, %v5765
  %v6048 = vadd.f32 %v5345, %v5770
  %v6049 = vadd.f32 %v5348, %v5773
  %v6050 = vadd.f32 %v5353, %v5778
  %v6051 = vadd.f32 %v5356, %v5781
  %v6052 = vadd.f32 %v5361, %v5786
  %v6053 = vadd.f32 %v5364, %v5789
  %v6054 = vadd.f32 %v5369, %v5794
  %v6055 = vadd.f32 %v5372, %v5797
  %v6056 = vadd.f32 %v5377, %v5802
  %v6057 = vadd.f32 %v5380, %v5805
  %v6058 = vadd.f32 %v5385, %v5810
  %v6059 = vadd.f32 %v5388, %v5813
  %v6060 = vadd.f32 %v5393, %v5818
  %v6061 = vadd.f32 %v5396, %v5821
  %v6062 = vadd.f32 %v5401, %v5826
  %v6063 = vadd.f32 %v5404, %v5829
  %v6064 = vadd.f32 %v5409, %v5834
  %v6065 = vadd.f32 %v5412, %v5837
  %v6066 = vadd.f32 %v5417, %v5842
  %v6067 = vadd.f32 %v5420, %v5845
  %v6068 = vadd.f32 %v5425, %v5850
  %v6069 = vadd.f32 %v5428, %v5853
  %v6070 = vadd.f32 %v5433, %v5858
  %v6071 = vadd.f32 %v5436, %v5861
  %v6072 = vadd.f32 %v5441, %v5866
  %v6073 = vadd.f32 %v5444, %v5869
  %v6074 = vadd.f32 %v5449, %v5874
  %v6075 = vadd.f32 %v5452, %v5877
  %v6076 = vadd.f32 %v5457, %v5882
  %v6077 = vadd.f32 %v5460, %v5885
  %v6078 = vadd.f32 %v5465, %v5890
  %v6079 = vadd.f32 %v5468, %v5893
  %v6080 = vadd.f32 %v5473, %v5898
  %v6081 = vadd.f32 %v5476, %v5901
  %v6082 = vadd.f32 %v5481, %v5906
  %v6083 = vadd.f32 %v5484, %v5909
  %v6084 = vadd.f32 %v5489, %v5914
  %v6085 = vadd.f32 %v5492, %v5917
  %v6086 = vadd.f32 %v5497, %v5922
  %v6087 = vadd.f32 %v5500, %v5925
  %v6088 = vadd.f32 %v5505, %v5930
  %v6089 = vadd.f32 %v5508, %v5933
  %v6090 = vadd.f32 %v5513, %v5938
  %v6091 = vadd.f32 %v5516, %v5941
  %v6092 = vadd.f32 %v5521, %v5946
  %v6093 = vadd.f32 %v5524, %v5949
  %v6094 = vadd.f32 %v5529, %v5954
  %v6095 = vadd.f32 %v5532, %v5957
  %v6096 = vadd.f32 %v5537, %v5962
  %v6097 = vadd.f32 %v5540, %v5965
  %v6098 = vadd.f32 %v5545, %v5970
  %v6099 = vadd.f32 %v5548, %v5973
  %v6100 = vadd.f32 %v5553, %v5978
  %v6101 = vadd.f32 %v5556, %v5981
  %v6102 = vadd.f32 %v5561, %v5986
  %v6103 = vadd.f32 %v5564, %v5989
  %v6104 = vadd.f32 %v5569, %v5994
  %v6105 = vadd.f32 %v5572, %v5997
  %v6106 = vadd.f32 %v5577, %v6002
  %v6107 = vadd.f32 %v5580, %v6005
  %v6108 = vadd.f32 %v5585, %v6010
  %v6109 = vadd.f32 %v5588, %v6013
  %v6110 = vadd.f32 %v5593, %v6018
  %v6111 = vadd.f32 %v5596, %v6021
  %v6112 = vadd.f32 %v5601, %v6026
  %v6113 = vadd.f32 %v5604, %v6029
  %v6114 = vld [vmem:[%s3 + $0xc0] sm:$0xf]
  %v6115 = vld [vmem:[%s3 + $0xc4] sm:$0xf]
  %v6116 = vld [vmem:[%s3 + $0xc8] sm:$0xf]
  %v6117 = vld [vmem:[%s3 + $0xcc] sm:$0xf]
  %v6118 = vld [vmem:[%s3 + $0xd0] sm:$0xf]
  %v6119 = vld [vmem:[%s3 + $0xd4] sm:$0xf]
  %v6120 = vld [vmem:[%s3 + $0xd8] sm:$0xf]
  %v6121 = vld [vmem:[%s3 + $0xdc] sm:$0xf]
  %v6122 = vld [vmem:[%s3 + $0xe0] sm:$0xf]
  %v6123 = vld [vmem:[%s3 + $0xe4] sm:$0xf]
  %v6124 = vld [vmem:[%s3 + $0xe8] sm:$0xf]
  %v6125 = vld [vmem:[%s3 + $0xec] sm:$0xf]
  %v6126 = vld [vmem:[%s3 + $0xf0] sm:$0xf]
  %v6127 = vld [vmem:[%s3 + $0xf4] sm:$0xf]
  %v6128 = vld [vmem:[%s3 + $0xf8] sm:$0xf]
  %v6129 = vld [vmem:[%s3 + $0xfc] sm:$0xf]
  %v6146 = vunpack.c.l.b16 %v6114
  %v6147 = vunpack.c.l.b16 %v6115
  %v6148 = vunpack.c.l.b16 %v6116
  %v6149 = vunpack.c.l.b16 %v6117
  %v6150 = vunpack.c.l.b16 %v6118
  %v6151 = vunpack.c.l.b16 %v6119
  %v6152 = vunpack.c.l.b16 %v6120
  %v6153 = vunpack.c.l.b16 %v6121
  %v6154 = vunpack.c.l.b16 %v6122
  %v6155 = vunpack.c.l.b16 %v6123
  %v6156 = vunpack.c.l.b16 %v6124
  %v6157 = vunpack.c.l.b16 %v6125
  %v6158 = vunpack.c.l.b16 %v6126
  %v6159 = vunpack.c.l.b16 %v6127
  %v6160 = vunpack.c.l.b16 %v6128
  %v6161 = vunpack.c.l.b16 %v6129
  %v6162 = vpack.c.b16 %v6147, %v6146
  %v6163 = vpack.c.b16 %v6149, %v6148
  %v6164 = vpack.c.b16 %v6151, %v6150
  %v6165 = vpack.c.b16 %v6153, %v6152
  %v6166 = vpack.c.b16 %v6155, %v6154
  %v6167 = vpack.c.b16 %v6157, %v6156
  %v6168 = vpack.c.b16 %v6159, %v6158
  %v6169 = vpack.c.b16 %v6161, %v6160
  %6178 = vmatprep.subr.bf16.mxu0 0
  %6179 = vmatpush1.bf16.msra.mxu0 %v6169
  %6180 = vmatprep.subr.bf16.mxu0 0
  %6181 = vmatpush1.bf16.msra.mxu0 %v6168
  %6182 = vmatprep.subr.bf16.mxu0 0
  %6183 = vmatpush1.bf16.msra.mxu0 %v6167
  %6184 = vmatprep.subr.bf16.mxu0 0
  %6185 = vmatpush1.bf16.msra.mxu0 %v6166
  %6186 = vmatprep.subr.bf16.mxu0 0
  %6187 = vmatpush1.bf16.msra.mxu0 %v6165
  %6188 = vmatprep.subr.bf16.mxu0 0
  %6189 = vmatpush1.bf16.msra.mxu0 %v6164
  %6190 = vmatprep.subr.bf16.mxu0 0
  %6191 = vmatpush1.bf16.msra.mxu0 %v6163
  %6192 = vmatprep.subr.bf16.mxu0 0
  %6193 = vmatpush1.bf16.msra.mxu0 %v6162
  %6194 = vmatprep.subr.bf16.mxu0 0
  %6195 = vmatpush2.bf16.msra.mxu0 0
  %6196 = vmatprep.subr.bf16.mxu0 0
  %6197 = vmatpush2.bf16.msra.mxu0 0
  %6198 = vmatprep.subr.bf16.mxu0 0
  %6199 = vmatpush2.bf16.msra.mxu0 0
  %6200 = vmatprep.subr.bf16.mxu0 0
  %6201 = vmatpush2.bf16.msra.mxu0 0
  %6202 = vmatprep.subr.bf16.mxu0 0
  %6203 = vmatpush2.bf16.msra.mxu0 0
  %6204 = vmatprep.subr.bf16.mxu0 0
  %6205 = vmatpush2.bf16.msra.mxu0 0
  %6206 = vmatprep.subr.bf16.mxu0 0
  %6207 = vmatpush2.bf16.msra.mxu0 0
  %6208 = vmatprep.subr.bf16.mxu0 0
  %6209 = vmatpush2.bf16.msra.mxu0 0
  %6210 = vmatprep.mubr.bf16.mxu0 0
  %6211 = vmatmul.mubr.bf16.gmra.mxu0 %v4716
  %v6212 = vpop.f32.mrf.mxu0
  %v6213 = vadd.f32 0.0, %v6212
  %v6214 = vpop.f32.mrf.mxu0
  %v6215 = vpop.f32.mrf.mxu0
  %v6216 = vadd.f32 0.0, %v6215
  %v6217 = vpop.f32.mrf.mxu0
  %6218 = vmatprep.mubr.bf16.mxu0 0
  %6219 = vmatmul.mubr.bf16.gmra.mxu0 %v4717
  %v6220 = vpop.f32.mrf.mxu0
  %v6221 = vadd.f32 0.0, %v6220
  %v6222 = vpop.f32.mrf.mxu0
  %v6223 = vpop.f32.mrf.mxu0
  %v6224 = vadd.f32 0.0, %v6223
  %v6225 = vpop.f32.mrf.mxu0
  %6226 = vmatprep.mubr.bf16.mxu0 0
  %6227 = vmatmul.mubr.bf16.gmra.mxu0 %v4718
  %v6228 = vpop.f32.mrf.mxu0
  %v6229 = vadd.f32 0.0, %v6228
  %v6230 = vpop.f32.mrf.mxu0
  %v6231 = vpop.f32.mrf.mxu0
  %v6232 = vadd.f32 0.0, %v6231
  %v6233 = vpop.f32.mrf.mxu0
  %6234 = vmatprep.mubr.bf16.mxu0 0
  %6235 = vmatmul.mubr.bf16.gmra.mxu0 %v4719
  %v6236 = vpop.f32.mrf.mxu0
  %v6237 = vadd.f32 0.0, %v6236
  %v6238 = vpop.f32.mrf.mxu0
  %v6239 = vpop.f32.mrf.mxu0
  %v6240 = vadd.f32 0.0, %v6239
  %v6241 = vpop.f32.mrf.mxu0
  %6242 = vmatprep.mubr.bf16.mxu0 0
  %6243 = vmatmul.mubr.bf16.gmra.mxu0 %v4720
  %v6244 = vpop.f32.mrf.mxu0
  %v6245 = vadd.f32 0.0, %v6244
  %v6246 = vpop.f32.mrf.mxu0
  %v6247 = vpop.f32.mrf.mxu0
  %v6248 = vadd.f32 0.0, %v6247
  %v6249 = vpop.f32.mrf.mxu0
  %6250 = vmatprep.mubr.bf16.mxu0 0
  %6251 = vmatmul.mubr.bf16.gmra.mxu0 %v4721
  %v6252 = vpop.f32.mrf.mxu0
  %v6253 = vadd.f32 0.0, %v6252
  %v6254 = vpop.f32.mrf.mxu0
  %v6255 = vpop.f32.mrf.mxu0
  %v6256 = vadd.f32 0.0, %v6255
  %v6257 = vpop.f32.mrf.mxu0
  %6258 = vmatprep.mubr.bf16.mxu0 0
  %6259 = vmatmul.mubr.bf16.gmra.mxu0 %v4722
  %v6260 = vpop.f32.mrf.mxu0
  %v6261 = vadd.f32 0.0, %v6260
  %v6262 = vpop.f32.mrf.mxu0
  %v6263 = vpop.f32.mrf.mxu0
  %v6264 = vadd.f32 0.0, %v6263
  %v6265 = vpop.f32.mrf.mxu0
  %6266 = vmatprep.mubr.bf16.mxu0 0
  %6267 = vmatmul.mubr.bf16.gmra.mxu0 %v4723
  %v6268 = vpop.f32.mrf.mxu0
  %v6269 = vadd.f32 0.0, %v6268
  %v6270 = vpop.f32.mrf.mxu0
  %v6271 = vpop.f32.mrf.mxu0
  %v6272 = vadd.f32 0.0, %v6271
  %v6273 = vpop.f32.mrf.mxu0
  %6274 = vmatprep.mubr.bf16.mxu0 0
  %6275 = vmatmul.mubr.bf16.gmra.mxu0 %v4724
  %v6276 = vpop.f32.mrf.mxu0
  %v6277 = vadd.f32 0.0, %v6276
  %v6278 = vpop.f32.mrf.mxu0
  %v6279 = vpop.f32.mrf.mxu0
  %v6280 = vadd.f32 0.0, %v6279
  %v6281 = vpop.f32.mrf.mxu0
  %6282 = vmatprep.mubr.bf16.mxu0 0
  %6283 = vmatmul.mubr.bf16.gmra.mxu0 %v4725
  %v6284 = vpop.f32.mrf.mxu0
  %v6285 = vadd.f32 0.0, %v6284
  %v6286 = vpop.f32.mrf.mxu0
  %v6287 = vpop.f32.mrf.mxu0
  %v6288 = vadd.f32 0.0, %v6287
  %v6289 = vpop.f32.mrf.mxu0
  %6290 = vmatprep.mubr.bf16.mxu0 0
  %6291 = vmatmul.mubr.bf16.gmra.mxu0 %v4726
  %v6292 = vpop.f32.mrf.mxu0
  %v6293 = vadd.f32 0.0, %v6292
  %v6294 = vpop.f32.mrf.mxu0
  %v6295 = vpop.f32.mrf.mxu0
  %v6296 = vadd.f32 0.0, %v6295
  %v6297 = vpop.f32.mrf.mxu0
  %6298 = vmatprep.mubr.bf16.mxu0 0
  %6299 = vmatmul.mubr.bf16.gmra.mxu0 %v4727
  %v6300 = vpop.f32.mrf.mxu0
  %v6301 = vadd.f32 0.0, %v6300
  %v6302 = vpop.f32.mrf.mxu0
  %v6303 = vpop.f32.mrf.mxu0
  %v6304 = vadd.f32 0.0, %v6303
  %v6305 = vpop.f32.mrf.mxu0
  %6306 = vmatprep.mubr.bf16.mxu0 0
  %6307 = vmatmul.mubr.bf16.gmra.mxu0 %v4728
  %v6308 = vpop.f32.mrf.mxu0
  %v6309 = vadd.f32 0.0, %v6308
  %v6310 = vpop.f32.mrf.mxu0
  %v6311 = vpop.f32.mrf.mxu0
  %v6312 = vadd.f32 0.0, %v6311
  %v6313 = vpop.f32.mrf.mxu0
  %6314 = vmatprep.mubr.bf16.mxu0 0
  %6315 = vmatmul.mubr.bf16.gmra.mxu0 %v4729
  %v6316 = vpop.f32.mrf.mxu0
  %v6317 = vadd.f32 0.0, %v6316
  %v6318 = vpop.f32.mrf.mxu0
  %v6319 = vpop.f32.mrf.mxu0
  %v6320 = vadd.f32 0.0, %v6319
  %v6321 = vpop.f32.mrf.mxu0
  %6322 = vmatprep.mubr.bf16.mxu0 0
  %6323 = vmatmul.mubr.bf16.gmra.mxu0 %v4730
  %v6324 = vpop.f32.mrf.mxu0
  %v6325 = vadd.f32 0.0, %v6324
  %v6326 = vpop.f32.mrf.mxu0
  %v6327 = vpop.f32.mrf.mxu0
  %v6328 = vadd.f32 0.0, %v6327
  %v6329 = vpop.f32.mrf.mxu0
  %6330 = vmatprep.mubr.bf16.mxu0 0
  %6331 = vmatmul.mubr.bf16.gmra.mxu0 %v4731
  %v6332 = vpop.f32.mrf.mxu0
  %v6333 = vadd.f32 0.0, %v6332
  %v6334 = vpop.f32.mrf.mxu0
  %v6335 = vpop.f32.mrf.mxu0
  %v6336 = vadd.f32 0.0, %v6335
  %v6337 = vpop.f32.mrf.mxu0
  %6338 = vmatprep.mubr.bf16.mxu0 0
  %6339 = vmatmul.mubr.bf16.gmra.mxu0 %v4732
  %v6340 = vpop.f32.mrf.mxu0
  %v6341 = vadd.f32 0.0, %v6340
  %v6342 = vpop.f32.mrf.mxu0
  %v6343 = vpop.f32.mrf.mxu0
  %v6344 = vadd.f32 0.0, %v6343
  %v6345 = vpop.f32.mrf.mxu0
  %6346 = vmatprep.mubr.bf16.mxu0 0
  %6347 = vmatmul.mubr.bf16.gmra.mxu0 %v4733
  %v6348 = vpop.f32.mrf.mxu0
  %v6349 = vadd.f32 0.0, %v6348
  %v6350 = vpop.f32.mrf.mxu0
  %v6351 = vpop.f32.mrf.mxu0
  %v6352 = vadd.f32 0.0, %v6351
  %v6353 = vpop.f32.mrf.mxu0
  %6354 = vmatprep.mubr.bf16.mxu0 0
  %6355 = vmatmul.mubr.bf16.gmra.mxu0 %v4734
  %v6356 = vpop.f32.mrf.mxu0
  %v6357 = vadd.f32 0.0, %v6356
  %v6358 = vpop.f32.mrf.mxu0
  %v6359 = vpop.f32.mrf.mxu0
  %v6360 = vadd.f32 0.0, %v6359
  %v6361 = vpop.f32.mrf.mxu0
  %6362 = vmatprep.mubr.bf16.mxu0 0
  %6363 = vmatmul.mubr.bf16.gmra.mxu0 %v4735
  %v6364 = vpop.f32.mrf.mxu0
  %v6365 = vadd.f32 0.0, %v6364
  %v6366 = vpop.f32.mrf.mxu0
  %v6367 = vpop.f32.mrf.mxu0
  %v6368 = vadd.f32 0.0, %v6367
  %v6369 = vpop.f32.mrf.mxu0
  %6370 = vmatprep.mubr.bf16.mxu0 0
  %6371 = vmatmul.mubr.bf16.gmra.mxu0 %v4736
  %v6372 = vpop.f32.mrf.mxu0
  %v6373 = vadd.f32 0.0, %v6372
  %v6374 = vpop.f32.mrf.mxu0
  %v6375 = vpop.f32.mrf.mxu0
  %v6376 = vadd.f32 0.0, %v6375
  %v6377 = vpop.f32.mrf.mxu0
  %6378 = vmatprep.mubr.bf16.mxu0 0
  %6379 = vmatmul.mubr.bf16.gmra.mxu0 %v4737
  %v6380 = vpop.f32.mrf.mxu0
  %v6381 = vadd.f32 0.0, %v6380
  %v6382 = vpop.f32.mrf.mxu0
  %v6383 = vpop.f32.mrf.mxu0
  %v6384 = vadd.f32 0.0, %v6383
  %v6385 = vpop.f32.mrf.mxu0
  %6386 = vmatprep.mubr.bf16.mxu0 0
  %6387 = vmatmul.mubr.bf16.gmra.mxu0 %v4738
  %v6388 = vpop.f32.mrf.mxu0
  %v6389 = vadd.f32 0.0, %v6388
  %v6390 = vpop.f32.mrf.mxu0
  %v6391 = vpop.f32.mrf.mxu0
  %v6392 = vadd.f32 0.0, %v6391
  %v6393 = vpop.f32.mrf.mxu0
  %6394 = vmatprep.mubr.bf16.mxu0 0
  %6395 = vmatmul.mubr.bf16.gmra.mxu0 %v4739
  %v6396 = vpop.f32.mrf.mxu0
  %v6397 = vadd.f32 0.0, %v6396
  %v6398 = vpop.f32.mrf.mxu0
  %v6399 = vpop.f32.mrf.mxu0
  %v6400 = vadd.f32 0.0, %v6399
  %v6401 = vpop.f32.mrf.mxu0
  %6402 = vmatprep.mubr.bf16.mxu0 0
  %6403 = vmatmul.mubr.bf16.gmra.mxu0 %v4740
  %v6404 = vpop.f32.mrf.mxu0
  %v6405 = vadd.f32 0.0, %v6404
  %v6406 = vpop.f32.mrf.mxu0
  %v6407 = vpop.f32.mrf.mxu0
  %v6408 = vadd.f32 0.0, %v6407
  %v6409 = vpop.f32.mrf.mxu0
  %6410 = vmatprep.mubr.bf16.mxu0 0
  %6411 = vmatmul.mubr.bf16.gmra.mxu0 %v4741
  %v6412 = vpop.f32.mrf.mxu0
  %v6413 = vadd.f32 0.0, %v6412
  %v6414 = vpop.f32.mrf.mxu0
  %v6415 = vpop.f32.mrf.mxu0
  %v6416 = vadd.f32 0.0, %v6415
  %v6417 = vpop.f32.mrf.mxu0
  %6418 = vmatprep.mubr.bf16.mxu0 0
  %6419 = vmatmul.mubr.bf16.gmra.mxu0 %v4742
  %v6420 = vpop.f32.mrf.mxu0
  %v6421 = vadd.f32 0.0, %v6420
  %v6422 = vpop.f32.mrf.mxu0
  %v6423 = vpop.f32.mrf.mxu0
  %v6424 = vadd.f32 0.0, %v6423
  %v6425 = vpop.f32.mrf.mxu0
  %6426 = vmatprep.mubr.bf16.mxu0 0
  %6427 = vmatmul.mubr.bf16.gmra.mxu0 %v4743
  %v6428 = vpop.f32.mrf.mxu0
  %v6429 = vadd.f32 0.0, %v6428
  %v6430 = vpop.f32.mrf.mxu0
  %v6431 = vpop.f32.mrf.mxu0
  %v6432 = vadd.f32 0.0, %v6431
  %v6433 = vpop.f32.mrf.mxu0
  %6434 = vmatprep.mubr.bf16.mxu0 0
  %6435 = vmatmul.mubr.bf16.gmra.mxu0 %v4744
  %v6436 = vpop.f32.mrf.mxu0
  %v6437 = vadd.f32 0.0, %v6436
  %v6438 = vpop.f32.mrf.mxu0
  %v6439 = vpop.f32.mrf.mxu0
  %v6440 = vadd.f32 0.0, %v6439
  %v6441 = vpop.f32.mrf.mxu0
  %6442 = vmatprep.mubr.bf16.mxu0 0
  %6443 = vmatmul.mubr.bf16.gmra.mxu0 %v4745
  %v6444 = vpop.f32.mrf.mxu0
  %v6445 = vadd.f32 0.0, %v6444
  %v6446 = vpop.f32.mrf.mxu0
  %v6447 = vpop.f32.mrf.mxu0
  %v6448 = vadd.f32 0.0, %v6447
  %v6449 = vpop.f32.mrf.mxu0
  %6450 = vmatprep.mubr.bf16.mxu0 0
  %6451 = vmatmul.mubr.bf16.gmra.mxu0 %v4746
  %v6452 = vpop.f32.mrf.mxu0
  %v6453 = vadd.f32 0.0, %v6452
  %v6454 = vpop.f32.mrf.mxu0
  %v6455 = vpop.f32.mrf.mxu0
  %v6456 = vadd.f32 0.0, %v6455
  %v6457 = vpop.f32.mrf.mxu0
  %6458 = vmatprep.mubr.bf16.mxu0 0
  %6459 = vmatmul.mubr.bf16.gmra.mxu0 %v4747
  %v6460 = vpop.f32.mrf.mxu0
  %v6461 = vadd.f32 0.0, %v6460
  %v6462 = vpop.f32.mrf.mxu0
  %v6463 = vpop.f32.mrf.mxu0
  %v6464 = vadd.f32 0.0, %v6463
  %v6465 = vpop.f32.mrf.mxu0
  %6466 = vmatprep.mubr.bf16.mxu0 0
  %6467 = vmatmul.mubr.bf16.gmra.mxu0 %v4748
  %v6468 = vpop.f32.mrf.mxu0
  %v6469 = vadd.f32 0.0, %v6468
  %v6470 = vpop.f32.mrf.mxu0
  %v6471 = vpop.f32.mrf.mxu0
  %v6472 = vadd.f32 0.0, %v6471
  %v6473 = vpop.f32.mrf.mxu0
  %6474 = vmatprep.mubr.bf16.mxu0 0
  %6475 = vmatmul.mubr.bf16.gmra.mxu0 %v4749
  %v6476 = vpop.f32.mrf.mxu0
  %v6477 = vadd.f32 0.0, %v6476
  %v6478 = vpop.f32.mrf.mxu0
  %v6479 = vpop.f32.mrf.mxu0
  %v6480 = vadd.f32 0.0, %v6479
  %v6481 = vpop.f32.mrf.mxu0
  %6482 = vmatprep.mubr.bf16.mxu0 0
  %6483 = vmatmul.mubr.bf16.gmra.mxu0 %v4750
  %v6484 = vpop.f32.mrf.mxu0
  %v6485 = vadd.f32 0.0, %v6484
  %v6486 = vpop.f32.mrf.mxu0
  %v6487 = vpop.f32.mrf.mxu0
  %v6488 = vadd.f32 0.0, %v6487
  %v6489 = vpop.f32.mrf.mxu0
  %6490 = vmatprep.mubr.bf16.mxu0 0
  %6491 = vmatmul.mubr.bf16.gmra.mxu0 %v4751
  %v6492 = vpop.f32.mrf.mxu0
  %v6493 = vadd.f32 0.0, %v6492
  %v6494 = vpop.f32.mrf.mxu0
  %v6495 = vpop.f32.mrf.mxu0
  %v6496 = vadd.f32 0.0, %v6495
  %v6497 = vpop.f32.mrf.mxu0
  %6498 = vmatprep.mubr.bf16.mxu0 0
  %6499 = vmatmul.mubr.bf16.gmra.mxu0 %v4752
  %v6500 = vpop.f32.mrf.mxu0
  %v6501 = vadd.f32 0.0, %v6500
  %v6502 = vpop.f32.mrf.mxu0
  %v6503 = vpop.f32.mrf.mxu0
  %v6504 = vadd.f32 0.0, %v6503
  %v6505 = vpop.f32.mrf.mxu0
  %6506 = vmatprep.mubr.bf16.mxu0 0
  %6507 = vmatmul.mubr.bf16.gmra.mxu0 %v4753
  %v6508 = vpop.f32.mrf.mxu0
  %v6509 = vadd.f32 0.0, %v6508
  %v6510 = vpop.f32.mrf.mxu0
  %v6511 = vpop.f32.mrf.mxu0
  %v6512 = vadd.f32 0.0, %v6511
  %v6513 = vpop.f32.mrf.mxu0
  %6514 = vmatprep.mubr.bf16.mxu0 0
  %6515 = vmatmul.mubr.bf16.gmra.mxu0 %v4754
  %v6516 = vpop.f32.mrf.mxu0
  %v6517 = vadd.f32 0.0, %v6516
  %v6518 = vpop.f32.mrf.mxu0
  %v6519 = vpop.f32.mrf.mxu0
  %v6520 = vadd.f32 0.0, %v6519
  %v6521 = vpop.f32.mrf.mxu0
  %6522 = vmatprep.mubr.bf16.mxu0 0
  %6523 = vmatmul.mubr.bf16.gmra.mxu0 %v4755
  %v6524 = vpop.f32.mrf.mxu0
  %v6525 = vadd.f32 0.0, %v6524
  %v6526 = vpop.f32.mrf.mxu0
  %v6527 = vpop.f32.mrf.mxu0
  %v6528 = vadd.f32 0.0, %v6527
  %v6529 = vpop.f32.mrf.mxu0
  %6530 = vmatprep.mubr.bf16.mxu0 0
  %6531 = vmatmul.mubr.bf16.gmra.mxu0 %v4756
  %v6532 = vpop.f32.mrf.mxu0
  %v6533 = vadd.f32 0.0, %v6532
  %v6534 = vpop.f32.mrf.mxu0
  %v6535 = vpop.f32.mrf.mxu0
  %v6536 = vadd.f32 0.0, %v6535
  %v6537 = vpop.f32.mrf.mxu0
  %6538 = vdwg.mxu0
  %v6539 = vadd.f32 %v6032, %v6213
  %v6540 = vadd.f32 %v6033, %v6216
  %v6541 = vadd.f32 %v6034, %v6221
  %v6542 = vadd.f32 %v6035, %v6224
  %v6543 = vadd.f32 %v6036, %v6229
  %v6544 = vadd.f32 %v6037, %v6232
  %v6545 = vadd.f32 %v6038, %v6237
  %v6546 = vadd.f32 %v6039, %v6240
  %v6547 = vadd.f32 %v6040, %v6245
  %v6548 = vadd.f32 %v6041, %v6248
  %v6549 = vadd.f32 %v6042, %v6253
  %v6550 = vadd.f32 %v6043, %v6256
  %v6551 = vadd.f32 %v6044, %v6261
  %v6552 = vadd.f32 %v6045, %v6264
  %v6553 = vadd.f32 %v6046, %v6269
  %v6554 = vadd.f32 %v6047, %v6272
  %v6555 = vadd.f32 %v6048, %v6277
  %v6556 = vadd.f32 %v6049, %v6280
  %v6557 = vadd.f32 %v6050, %v6285
  %v6558 = vadd.f32 %v6051, %v6288
  %v6559 = vadd.f32 %v6052, %v6293
  %v6560 = vadd.f32 %v6053, %v6296
  %v6561 = vadd.f32 %v6054, %v6301
  %v6562 = vadd.f32 %v6055, %v6304
  %v6563 = vadd.f32 %v6056, %v6309
  %v6564 = vadd.f32 %v6057, %v6312
  %v6565 = vadd.f32 %v6058, %v6317
  %v6566 = vadd.f32 %v6059, %v6320
  %v6567 = vadd.f32 %v6060, %v6325
  %v6568 = vadd.f32 %v6061, %v6328
  %v6569 = vadd.f32 %v6062, %v6333
  %v6570 = vadd.f32 %v6063, %v6336
  %v6571 = vadd.f32 %v6064, %v6341
  %v6572 = vadd.f32 %v6065, %v6344
  %v6573 = vadd.f32 %v6066, %v6349
  %v6574 = vadd.f32 %v6067, %v6352
  %v6575 = vadd.f32 %v6068, %v6357
  %v6576 = vadd.f32 %v6069, %v6360
  %v6577 = vadd.f32 %v6070, %v6365
  %v6578 = vadd.f32 %v6071, %v6368
  %v6579 = vadd.f32 %v6072, %v6373
  %v6580 = vadd.f32 %v6073, %v6376
  %v6581 = vadd.f32 %v6074, %v6381
  %v6582 = vadd.f32 %v6075, %v6384
  %v6583 = vadd.f32 %v6076, %v6389
  %v6584 = vadd.f32 %v6077, %v6392
  %v6585 = vadd.f32 %v6078, %v6397
  %v6586 = vadd.f32 %v6079, %v6400
  %v6587 = vadd.f32 %v6080, %v6405
  %v6588 = vadd.f32 %v6081, %v6408
  %v6589 = vadd.f32 %v6082, %v6413
  %v6590 = vadd.f32 %v6083, %v6416
  %v6591 = vadd.f32 %v6084, %v6421
  %v6592 = vadd.f32 %v6085, %v6424
  %v6593 = vadd.f32 %v6086, %v6429
  %v6594 = vadd.f32 %v6087, %v6432
  %v6595 = vadd.f32 %v6088, %v6437
  %v6596 = vadd.f32 %v6089, %v6440
  %v6597 = vadd.f32 %v6090, %v6445
  %v6598 = vadd.f32 %v6091, %v6448
  %v6599 = vadd.f32 %v6092, %v6453
  %v6600 = vadd.f32 %v6093, %v6456
  %v6601 = vadd.f32 %v6094, %v6461
  %v6602 = vadd.f32 %v6095, %v6464
  %v6603 = vadd.f32 %v6096, %v6469
  %v6604 = vadd.f32 %v6097, %v6472
  %v6605 = vadd.f32 %v6098, %v6477
  %v6606 = vadd.f32 %v6099, %v6480
  %v6607 = vadd.f32 %v6100, %v6485
  %v6608 = vadd.f32 %v6101, %v6488
  %v6609 = vadd.f32 %v6102, %v6493
  %v6610 = vadd.f32 %v6103, %v6496
  %v6611 = vadd.f32 %v6104, %v6501
  %v6612 = vadd.f32 %v6105, %v6504
  %v6613 = vadd.f32 %v6106, %v6509
  %v6614 = vadd.f32 %v6107, %v6512
  %v6615 = vadd.f32 %v6108, %v6517
  %v6616 = vadd.f32 %v6109, %v6520
  %v6617 = vadd.f32 %v6110, %v6525
  %v6618 = vadd.f32 %v6111, %v6528
  %v6619 = vadd.f32 %v6112, %v6533
  %v6620 = vadd.f32 %v6113, %v6536
  %v6621 = vld [vmem:[%s4] sm:$0x1]
  %v6623 = vlaneseq
  %v6624 = vshrl.u32 %v6623, 7
  %v6625 = vsub.s32 0, %v6624
  %v6626 = vrot.slane %v6621, %v6625
  %v6628 = vadd.f32 %v6539, %v6626
  %v6629 = vadd.f32 %v6540, %v6626
  %v6630 = vadd.f32 %v6541, %v6626
  %v6631 = vadd.f32 %v6542, %v6626
  %v6632 = vadd.f32 %v6543, %v6626
  %v6633 = vadd.f32 %v6544, %v6626
  %v6634 = vadd.f32 %v6545, %v6626
  %v6635 = vadd.f32 %v6546, %v6626
  %v6636 = vadd.f32 %v6547, %v6626
  %v6637 = vadd.f32 %v6548, %v6626
  %v6638 = vadd.f32 %v6549, %v6626
  %v6639 = vadd.f32 %v6550, %v6626
  %v6640 = vadd.f32 %v6551, %v6626
  %v6641 = vadd.f32 %v6552, %v6626
  %v6642 = vadd.f32 %v6553, %v6626
  %v6643 = vadd.f32 %v6554, %v6626
  %v6644 = vadd.f32 %v6555, %v6626
  %v6645 = vadd.f32 %v6556, %v6626
  %v6646 = vadd.f32 %v6557, %v6626
  %v6647 = vadd.f32 %v6558, %v6626
  %v6648 = vadd.f32 %v6559, %v6626
  %v6649 = vadd.f32 %v6560, %v6626
  %v6650 = vadd.f32 %v6561, %v6626
  %v6651 = vadd.f32 %v6562, %v6626
  %v6652 = vadd.f32 %v6563, %v6626
  %v6653 = vadd.f32 %v6564, %v6626
  %v6654 = vadd.f32 %v6565, %v6626
  %v6655 = vadd.f32 %v6566, %v6626
  %v6656 = vadd.f32 %v6567, %v6626
  %v6657 = vadd.f32 %v6568, %v6626
  %v6658 = vadd.f32 %v6569, %v6626
  %v6659 = vadd.f32 %v6570, %v6626
  %v6660 = vadd.f32 %v6571, %v6626
  %v6661 = vadd.f32 %v6572, %v6626
  %v6662 = vadd.f32 %v6573, %v6626
  %v6663 = vadd.f32 %v6574, %v6626
  %v6664 = vadd.f32 %v6575, %v6626
  %v6665 = vadd.f32 %v6576, %v6626
  %v6666 = vadd.f32 %v6577, %v6626
  %v6667 = vadd.f32 %v6578, %v6626
  %v6668 = vadd.f32 %v6579, %v6626
  %v6669 = vadd.f32 %v6580, %v6626
  %v6670 = vadd.f32 %v6581, %v6626
  %v6671 = vadd.f32 %v6582, %v6626
  %v6672 = vadd.f32 %v6583, %v6626
  %v6673 = vadd.f32 %v6584, %v6626
  %v6674 = vadd.f32 %v6585, %v6626
  %v6675 = vadd.f32 %v6586, %v6626
  %v6676 = vadd.f32 %v6587, %v6626
  %v6677 = vadd.f32 %v6588, %v6626
  %v6678 = vadd.f32 %v6589, %v6626
  %v6679 = vadd.f32 %v6590, %v6626
  %v6680 = vadd.f32 %v6591, %v6626
  %v6681 = vadd.f32 %v6592, %v6626
  %v6682 = vadd.f32 %v6593, %v6626
  %v6683 = vadd.f32 %v6594, %v6626
  %v6684 = vadd.f32 %v6595, %v6626
  %v6685 = vadd.f32 %v6596, %v6626
  %v6686 = vadd.f32 %v6597, %v6626
  %v6687 = vadd.f32 %v6598, %v6626
  %v6688 = vadd.f32 %v6599, %v6626
  %v6689 = vadd.f32 %v6600, %v6626
  %v6690 = vadd.f32 %v6601, %v6626
  %v6691 = vadd.f32 %v6602, %v6626
  %v6692 = vadd.f32 %v6603, %v6626
  %v6693 = vadd.f32 %v6604, %v6626
  %v6694 = vadd.f32 %v6605, %v6626
  %v6695 = vadd.f32 %v6606, %v6626
  %v6696 = vadd.f32 %v6607, %v6626
  %v6697 = vadd.f32 %v6608, %v6626
  %v6698 = vadd.f32 %v6609, %v6626
  %v6699 = vadd.f32 %v6610, %v6626
  %v6700 = vadd.f32 %v6611, %v6626
  %v6701 = vadd.f32 %v6612, %v6626
  %v6702 = vadd.f32 %v6613, %v6626
  %v6703 = vadd.f32 %v6614, %v6626
  %v6704 = vadd.f32 %v6615, %v6626
  %v6705 = vadd.f32 %v6616, %v6626
  %v6706 = vadd.f32 %v6617, %v6626
  %v6707 = vadd.f32 %v6618, %v6626
  %v6708 = vadd.f32 %v6619, %v6626
  %v6709 = vadd.f32 %v6620, %v6626
  %v6710 = vmax.f32 %v6628, 0.0
  %v6711 = vmax.f32 %v6629, 0.0
  %v6712 = vmax.f32 %v6630, 0.0
  %v6713 = vmax.f32 %v6631, 0.0
  %v6714 = vmax.f32 %v6632, 0.0
  %v6715 = vmax.f32 %v6633, 0.0
  %v6716 = vmax.f32 %v6634, 0.0
  %v6717 = vmax.f32 %v6635, 0.0
  %v6718 = vmax.f32 %v6636, 0.0
  %v6719 = vmax.f32 %v6637, 0.0
  %v6720 = vmax.f32 %v6638, 0.0
  %v6721 = vmax.f32 %v6639, 0.0
  %v6722 = vmax.f32 %v6640, 0.0
  %v6723 = vmax.f32 %v6641, 0.0
  %v6724 = vmax.f32 %v6642, 0.0
  %v6725 = vmax.f32 %v6643, 0.0
  %v6726 = vmax.f32 %v6644, 0.0
  %v6727 = vmax.f32 %v6645, 0.0
  %v6728 = vmax.f32 %v6646, 0.0
  %v6729 = vmax.f32 %v6647, 0.0
  %v6730 = vmax.f32 %v6648, 0.0
  %v6731 = vmax.f32 %v6649, 0.0
  %v6732 = vmax.f32 %v6650, 0.0
  %v6733 = vmax.f32 %v6651, 0.0
  %v6734 = vmax.f32 %v6652, 0.0
  %v6735 = vmax.f32 %v6653, 0.0
  %v6736 = vmax.f32 %v6654, 0.0
  %v6737 = vmax.f32 %v6655, 0.0
  %v6738 = vmax.f32 %v6656, 0.0
  %v6739 = vmax.f32 %v6657, 0.0
  %v6740 = vmax.f32 %v6658, 0.0
  %v6741 = vmax.f32 %v6659, 0.0
  %v6742 = vmax.f32 %v6660, 0.0
  %v6743 = vmax.f32 %v6661, 0.0
  %v6744 = vmax.f32 %v6662, 0.0
  %v6745 = vmax.f32 %v6663, 0.0
  %v6746 = vmax.f32 %v6664, 0.0
  %v6747 = vmax.f32 %v6665, 0.0
  %v6748 = vmax.f32 %v6666, 0.0
  %v6749 = vmax.f32 %v6667, 0.0
  %v6750 = vmax.f32 %v6668, 0.0
  %v6751 = vmax.f32 %v6669, 0.0
  %v6752 = vmax.f32 %v6670, 0.0
  %v6753 = vmax.f32 %v6671, 0.0
  %v6754 = vmax.f32 %v6672, 0.0
  %v6755 = vmax.f32 %v6673, 0.0
  %v6756 = vmax.f32 %v6674, 0.0
  %v6757 = vmax.f32 %v6675, 0.0
  %v6758 = vmax.f32 %v6676, 0.0
  %v6759 = vmax.f32 %v6677, 0.0
  %v6760 = vmax.f32 %v6678, 0.0
  %v6761 = vmax.f32 %v6679, 0.0
  %v6762 = vmax.f32 %v6680, 0.0
  %v6763 = vmax.f32 %v6681, 0.0
  %v6764 = vmax.f32 %v6682, 0.0
  %v6765 = vmax.f32 %v6683, 0.0
  %v6766 = vmax.f32 %v6684, 0.0
  %v6767 = vmax.f32 %v6685, 0.0
  %v6768 = vmax.f32 %v6686, 0.0
  %v6769 = vmax.f32 %v6687, 0.0
  %v6770 = vmax.f32 %v6688, 0.0
  %v6771 = vmax.f32 %v6689, 0.0
  %v6772 = vmax.f32 %v6690, 0.0
  %v6773 = vmax.f32 %v6691, 0.0
  %v6774 = vmax.f32 %v6692, 0.0
  %v6775 = vmax.f32 %v6693, 0.0
  %v6776 = vmax.f32 %v6694, 0.0
  %v6777 = vmax.f32 %v6695, 0.0
  %v6778 = vmax.f32 %v6696, 0.0
  %v6779 = vmax.f32 %v6697, 0.0
  %v6780 = vmax.f32 %v6698, 0.0
  %v6781 = vmax.f32 %v6699, 0.0
  %v6782 = vmax.f32 %v6700, 0.0
  %v6783 = vmax.f32 %v6701, 0.0
  %v6784 = vmax.f32 %v6702, 0.0
  %v6785 = vmax.f32 %v6703, 0.0
  %v6786 = vmax.f32 %v6704, 0.0
  %v6787 = vmax.f32 %v6705, 0.0
  %v6788 = vmax.f32 %v6706, 0.0
  %v6789 = vmax.f32 %v6707, 0.0
  %v6790 = vmax.f32 %v6708, 0.0
  %v6791 = vmax.f32 %v6709, 0.0
  %v6792 = vpack.c.bf16 %v6711, %v6710
  %v6793 = vpack.c.bf16 %v6713, %v6712
  %v6794 = vpack.c.bf16 %v6715, %v6714
  %v6795 = vpack.c.bf16 %v6717, %v6716
  %v6796 = vpack.c.bf16 %v6719, %v6718
  %v6797 = vpack.c.bf16 %v6721, %v6720
  %v6798 = vpack.c.bf16 %v6723, %v6722
  %v6799 = vpack.c.bf16 %v6725, %v6724
  %v6800 = vpack.c.bf16 %v6727, %v6726
  %v6801 = vpack.c.bf16 %v6729, %v6728
  %v6802 = vpack.c.bf16 %v6731, %v6730
  %v6803 = vpack.c.bf16 %v6733, %v6732
  %v6804 = vpack.c.bf16 %v6735, %v6734
  %v6805 = vpack.c.bf16 %v6737, %v6736
  %v6806 = vpack.c.bf16 %v6739, %v6738
  %v6807 = vpack.c.bf16 %v6741, %v6740
  %v6808 = vpack.c.bf16 %v6743, %v6742
  %v6809 = vpack.c.bf16 %v6745, %v6744
  %v6810 = vpack.c.bf16 %v6747, %v6746
  %v6811 = vpack.c.bf16 %v6749, %v6748
  %v6812 = vpack.c.bf16 %v6751, %v6750
  %v6813 = vpack.c.bf16 %v6753, %v6752
  %v6814 = vpack.c.bf16 %v6755, %v6754
  %v6815 = vpack.c.bf16 %v6757, %v6756
  %v6816 = vpack.c.bf16 %v6759, %v6758
  %v6817 = vpack.c.bf16 %v6761, %v6760
  %v6818 = vpack.c.bf16 %v6763, %v6762
  %v6819 = vpack.c.bf16 %v6765, %v6764
  %v6820 = vpack.c.bf16 %v6767, %v6766
  %v6821 = vpack.c.bf16 %v6769, %v6768
  %v6822 = vpack.c.bf16 %v6771, %v6770
  %v6823 = vpack.c.bf16 %v6773, %v6772
  %v6824 = vpack.c.bf16 %v6775, %v6774
  %v6825 = vpack.c.bf16 %v6777, %v6776
  %v6826 = vpack.c.bf16 %v6779, %v6778
  %v6827 = vpack.c.bf16 %v6781, %v6780
  %v6828 = vpack.c.bf16 %v6783, %v6782
  %v6829 = vpack.c.bf16 %v6785, %v6784
  %v6830 = vpack.c.bf16 %v6787, %v6786
  %v6831 = vpack.c.bf16 %v6789, %v6788
  %v6832 = vpack.c.bf16 %v6791, %v6790
  %v6833 = vld [vmem:[%s5] sm:$0xf]
  %v6834 = vld [vmem:[%s5 + $0x4] sm:$0xf]
  %v6835 = vld [vmem:[%s5 + $0x8] sm:$0xf]
  %v6836 = vld [vmem:[%s5 + $0xc] sm:$0xf]
  %v6837 = vld [vmem:[%s5 + $0x10] sm:$0xf]
  %v6838 = vld [vmem:[%s5 + $0x14] sm:$0xf]
  %v6839 = vld [vmem:[%s5 + $0x18] sm:$0xf]
  %v6840 = vld [vmem:[%s5 + $0x1c] sm:$0xf]
  %v6841 = vld [vmem:[%s5 + $0x20] sm:$0xf]
  %v6842 = vld [vmem:[%s5 + $0x24] sm:$0xf]
  %v6843 = vld [vmem:[%s5 + $0x28] sm:$0xf]
  %v6844 = vld [vmem:[%s5 + $0x2c] sm:$0xf]
  %v6845 = vld [vmem:[%s5 + $0x30] sm:$0xf]
  %v6846 = vld [vmem:[%s5 + $0x34] sm:$0xf]
  %v6847 = vld [vmem:[%s5 + $0x38] sm:$0xf]
  %v6848 = vld [vmem:[%s5 + $0x3c] sm:$0xf]
  %v6857 = vunpack.c.l.b16 %v6841
  %v6858 = vunpack.c.l.b16 %v6842
  %v6859 = vunpack.c.l.b16 %v6843
  %v6860 = vunpack.c.l.b16 %v6844
  %v6861 = vunpack.c.l.b16 %v6845
  %v6862 = vunpack.c.l.b16 %v6846
  %v6863 = vunpack.c.l.b16 %v6847
  %v6864 = vunpack.c.l.b16 %v6848
  %v6865 = vpack.c.b16 %v6858, %v6857
  %v6866 = vpack.c.b16 %v6860, %v6859
  %v6867 = vpack.c.b16 %v6862, %v6861
  %v6868 = vpack.c.b16 %v6864, %v6863
  %vm6873 = vcmask 523264
  %v6875 = vsel %vm6873, %v6793, 0
  %v6878 = vsel %vm6873, %v6794, 0
  %v6881 = vsel %vm6873, %v6795, 0
  %v6884 = vsel %vm6873, %v6796, 0
  %v6887 = vsel %vm6873, %v6797, 0
  %v6890 = vsel %vm6873, %v6798, 0
  %v6893 = vsel %vm6873, %v6799, 0
  %v6896 = vsel %vm6873, %v6800, 0
  %v6899 = vsel %vm6873, %v6801, 0
  %v6902 = vsel %vm6873, %v6802, 0
  %v6905 = vsel %vm6873, %v6803, 0
  %v6908 = vsel %vm6873, %v6804, 0
  %v6911 = vsel %vm6873, %v6805, 0
  %v6914 = vsel %vm6873, %v6806, 0
  %v6917 = vsel %vm6873, %v6807, 0
  %v6920 = vsel %vm6873, %v6808, 0
  %v6923 = vsel %vm6873, %v6809, 0
  %v6926 = vsel %vm6873, %v6810, 0
  %v6929 = vsel %vm6873, %v6811, 0
  %v6932 = vsel %vm6873, %v6812, 0
  %v6935 = vsel %vm6873, %v6813, 0
  %v6938 = vsel %vm6873, %v6814, 0
  %v6941 = vsel %vm6873, %v6815, 0
  %v6944 = vsel %vm6873, %v6816, 0
  %v6947 = vsel %vm6873, %v6817, 0
  %6949 = vmatprep.subr.bf16.mxu0 0
  %6950 = vmatpush1.bf16.msra.mxu0 0
  %6951 = vmatprep.subr.bf16.mxu0 0
  %6952 = vmatpush1.bf16.msra.mxu0 0
  %6953 = vmatprep.subr.bf16.mxu0 0
  %6954 = vmatpush1.bf16.msra.mxu0 0
  %6955 = vmatprep.subr.bf16.mxu0 0
  %6956 = vmatpush1.bf16.msra.mxu0 0
  %6957 = vmatprep.subr.bf16.mxu0 0
  %6958 = vmatpush1.bf16.msra.mxu0 %v6868
  %6959 = vmatprep.subr.bf16.mxu0 0
  %6960 = vmatpush1.bf16.msra.mxu0 %v6867
  %6961 = vmatprep.subr.bf16.mxu0 0
  %6962 = vmatpush1.bf16.msra.mxu0 %v6866
  %6963 = vmatprep.subr.bf16.mxu0 0
  %6964 = vmatpush1.bf16.msra.mxu0 %v6865
  %6965 = vmatprep.subr.bf16.mxu0 0
  %6966 = vmatpush2.bf16.msra.mxu0 0
  %6967 = vmatprep.subr.bf16.mxu0 0
  %6968 = vmatpush2.bf16.msra.mxu0 0
  %6969 = vmatprep.subr.bf16.mxu0 0
  %6970 = vmatpush2.bf16.msra.mxu0 0
  %6971 = vmatprep.subr.bf16.mxu0 0
  %6972 = vmatpush2.bf16.msra.mxu0 0
  %6973 = vmatprep.subr.bf16.mxu0 0
  %6974 = vmatpush2.bf16.msra.mxu0 0
  %6975 = vmatprep.subr.bf16.mxu0 0
  %6976 = vmatpush2.bf16.msra.mxu0 0
  %6977 = vmatprep.subr.bf16.mxu0 0
  %6978 = vmatpush2.bf16.msra.mxu0 0
  %6979 = vmatprep.subr.bf16.mxu0 0
  %6980 = vmatpush2.bf16.msra.mxu0 0
  %6981 = vmatprep.mubr.bf16.mxu0 0
  %6982 = vmatmul.mubr.bf16.gmra.mxu0 %v6875
  %v6983 = vpop.f32.mrf.mxu0
  %v6984 = vadd.f32 0.0, %v6983
  %v6985 = vpop.f32.mrf.mxu0
  %v6986 = vpop.f32.mrf.mxu0
  %v6987 = vadd.f32 0.0, %v6986
  %v6988 = vpop.f32.mrf.mxu0
  %6989 = vmatprep.mubr.bf16.mxu0 0
  %6990 = vmatmul.mubr.bf16.gmra.mxu0 %v6878
  %v6991 = vpop.f32.mrf.mxu0
  %v6992 = vadd.f32 0.0, %v6991
  %v6993 = vpop.f32.mrf.mxu0
  %v6994 = vpop.f32.mrf.mxu0
  %v6995 = vadd.f32 0.0, %v6994
  %v6996 = vpop.f32.mrf.mxu0
  %6997 = vmatprep.mubr.bf16.mxu0 0
  %6998 = vmatmul.mubr.bf16.gmra.mxu0 %v6881
  %v6999 = vpop.f32.mrf.mxu0
  %v7000 = vadd.f32 0.0, %v6999
  %v7001 = vpop.f32.mrf.mxu0
  %v7002 = vpop.f32.mrf.mxu0
  %v7003 = vadd.f32 0.0, %v7002
  %v7004 = vpop.f32.mrf.mxu0
  %7005 = vmatprep.mubr.bf16.mxu0 0
  %7006 = vmatmul.mubr.bf16.gmra.mxu0 %v6884
  %v7007 = vpop.f32.mrf.mxu0
  %v7008 = vadd.f32 0.0, %v7007
  %v7009 = vpop.f32.mrf.mxu0
  %v7010 = vpop.f32.mrf.mxu0
  %v7011 = vadd.f32 0.0, %v7010
  %v7012 = vpop.f32.mrf.mxu0
  %7013 = vmatprep.mubr.bf16.mxu0 0
  %7014 = vmatmul.mubr.bf16.gmra.mxu0 %v6887
  %v7015 = vpop.f32.mrf.mxu0
  %v7016 = vpop.f32.mrf.mxu0
  %v7017 = vpop.f32.mrf.mxu0
  %v7018 = vpop.f32.mrf.mxu0
  %7019 = vmatprep.mubr.bf16.mxu0 0
  %7020 = vmatmul.mubr.bf16.gmra.mxu0 %v6890
  %v7021 = vpop.f32.mrf.mxu0
  %v7022 = vpop.f32.mrf.mxu0
  %v7023 = vpop.f32.mrf.mxu0
  %v7024 = vpop.f32.mrf.mxu0
  %7025 = vmatprep.mubr.bf16.mxu0 0
  %7026 = vmatmul.mubr.bf16.gmra.mxu0 %v6893
  %v7027 = vpop.f32.mrf.mxu0
  %v7028 = vpop.f32.mrf.mxu0
  %v7029 = vpop.f32.mrf.mxu0
  %v7030 = vpop.f32.mrf.mxu0
  %7031 = vmatprep.mubr.bf16.mxu0 0
  %7032 = vmatmul.mubr.bf16.gmra.mxu0 %v6896
  %v7033 = vpop.f32.mrf.mxu0
  %v7034 = vadd.f32 0.0, %v7033
  %v7035 = vpop.f32.mrf.mxu0
  %v7036 = vpop.f32.mrf.mxu0
  %v7037 = vadd.f32 0.0, %v7036
  %v7038 = vpop.f32.mrf.mxu0
  %7039 = vmatprep.mubr.bf16.mxu0 0
  %7040 = vmatmul.mubr.bf16.gmra.mxu0 %v6899
  %v7041 = vpop.f32.mrf.mxu0
  %v7042 = vadd.f32 0.0, %v7041
  %v7043 = vpop.f32.mrf.mxu0
  %v7044 = vpop.f32.mrf.mxu0
  %v7045 = vadd.f32 0.0, %v7044
  %v7046 = vpop.f32.mrf.mxu0
  %7047 = vmatprep.mubr.bf16.mxu0 0
  %7048 = vmatmul.mubr.bf16.gmra.mxu0 %v6902
  %v7049 = vpop.f32.mrf.mxu0
  %v7050 = vadd.f32 0.0, %v7049
  %v7051 = vpop.f32.mrf.mxu0
  %v7052 = vpop.f32.mrf.mxu0
  %v7053 = vadd.f32 0.0, %v7052
  %v7054 = vpop.f32.mrf.mxu0
  %7055 = vmatprep.mubr.bf16.mxu0 0
  %7056 = vmatmul.mubr.bf16.gmra.mxu0 %v6905
  %v7057 = vpop.f32.mrf.mxu0
  %v7058 = vadd.f32 0.0, %v7057
  %v7059 = vpop.f32.mrf.mxu0
  %v7060 = vpop.f32.mrf.mxu0
  %v7061 = vadd.f32 0.0, %v7060
  %v7062 = vpop.f32.mrf.mxu0
  %7063 = vmatprep.mubr.bf16.mxu0 0
  %7064 = vmatmul.mubr.bf16.gmra.mxu0 %v6908
  %v7065 = vpop.f32.mrf.mxu0
  %v7066 = vpop.f32.mrf.mxu0
  %v7067 = vpop.f32.mrf.mxu0
  %v7068 = vpop.f32.mrf.mxu0
  %7069 = vmatprep.mubr.bf16.mxu0 0
  %7070 = vmatmul.mubr.bf16.gmra.mxu0 %v6911
  %v7071 = vpop.f32.mrf.mxu0
  %v7072 = vpop.f32.mrf.mxu0
  %v7073 = vpop.f32.mrf.mxu0
  %v7074 = vpop.f32.mrf.mxu0
  %7075 = vmatprep.mubr.bf16.mxu0 0
  %7076 = vmatmul.mubr.bf16.gmra.mxu0 %v6914
  %v7077 = vpop.f32.mrf.mxu0
  %v7078 = vpop.f32.mrf.mxu0
  %v7079 = vpop.f32.mrf.mxu0
  %v7080 = vpop.f32.mrf.mxu0
  %7081 = vmatprep.mubr.bf16.mxu0 0
  %7082 = vmatmul.mubr.bf16.gmra.mxu0 %v6917
  %v7083 = vpop.f32.mrf.mxu0
  %v7084 = vadd.f32 0.0, %v7083
  %v7085 = vpop.f32.mrf.mxu0
  %v7086 = vpop.f32.mrf.mxu0
  %v7087 = vadd.f32 0.0, %v7086
  %v7088 = vpop.f32.mrf.mxu0
  %7089 = vmatprep.mubr.bf16.mxu0 0
  %7090 = vmatmul.mubr.bf16.gmra.mxu0 %v6920
  %v7091 = vpop.f32.mrf.mxu0
  %v7092 = vadd.f32 0.0, %v7091
  %v7093 = vpop.f32.mrf.mxu0
  %v7094 = vpop.f32.mrf.mxu0
  %v7095 = vadd.f32 0.0, %v7094
  %v7096 = vpop.f32.mrf.mxu0
  %7097 = vmatprep.mubr.bf16.mxu0 0
  %7098 = vmatmul.mubr.bf16.gmra.mxu0 %v6923
  %v7099 = vpop.f32.mrf.mxu0
  %v7100 = vadd.f32 0.0, %v7099
  %v7101 = vpop.f32.mrf.mxu0
  %v7102 = vpop.f32.mrf.mxu0
  %v7103 = vadd.f32 0.0, %v7102
  %v7104 = vpop.f32.mrf.mxu0
  %7105 = vmatprep.mubr.bf16.mxu0 0
  %7106 = vmatmul.mubr.bf16.gmra.mxu0 %v6926
  %v7107 = vpop.f32.mrf.mxu0
  %v7108 = vadd.f32 0.0, %v7107
  %v7109 = vpop.f32.mrf.mxu0
  %v7110 = vpop.f32.mrf.mxu0
  %v7111 = vadd.f32 0.0, %v7110
  %v7112 = vpop.f32.mrf.mxu0
  %7113 = vmatprep.mubr.bf16.mxu0 0
  %7114 = vmatmul.mubr.bf16.gmra.mxu0 %v6929
  %v7115 = vpop.f32.mrf.mxu0
  %v7116 = vpop.f32.mrf.mxu0
  %v7117 = vpop.f32.mrf.mxu0
  %v7118 = vpop.f32.mrf.mxu0
  %7119 = vmatprep.mubr.bf16.mxu0 0
  %7120 = vmatmul.mubr.bf16.gmra.mxu0 %v6932
  %v7121 = vpop.f32.mrf.mxu0
  %v7122 = vpop.f32.mrf.mxu0
  %v7123 = vpop.f32.mrf.mxu0
  %v7124 = vpop.f32.mrf.mxu0
  %7125 = vmatprep.mubr.bf16.mxu0 0
  %7126 = vmatmul.mubr.bf16.gmra.mxu0 %v6935
  %v7127 = vpop.f32.mrf.mxu0
  %v7128 = vpop.f32.mrf.mxu0
  %v7129 = vpop.f32.mrf.mxu0
  %v7130 = vpop.f32.mrf.mxu0
  %7131 = vmatprep.mubr.bf16.mxu0 0
  %7132 = vmatmul.mubr.bf16.gmra.mxu0 %v6938
  %v7133 = vpop.f32.mrf.mxu0
  %v7134 = vadd.f32 0.0, %v7133
  %v7135 = vpop.f32.mrf.mxu0
  %v7136 = vpop.f32.mrf.mxu0
  %v7137 = vadd.f32 0.0, %v7136
  %v7138 = vpop.f32.mrf.mxu0
  %7139 = vmatprep.mubr.bf16.mxu0 0
  %7140 = vmatmul.mubr.bf16.gmra.mxu0 %v6941
  %v7141 = vpop.f32.mrf.mxu0
  %v7142 = vadd.f32 0.0, %v7141
  %v7143 = vpop.f32.mrf.mxu0
  %v7144 = vpop.f32.mrf.mxu0
  %v7145 = vadd.f32 0.0, %v7144
  %v7146 = vpop.f32.mrf.mxu0
  %7147 = vmatprep.mubr.bf16.mxu0 0
  %7148 = vmatmul.mubr.bf16.gmra.mxu0 %v6944
  %v7149 = vpop.f32.mrf.mxu0
  %v7150 = vadd.f32 0.0, %v7149
  %v7151 = vpop.f32.mrf.mxu0
  %v7152 = vpop.f32.mrf.mxu0
  %v7153 = vadd.f32 0.0, %v7152
  %v7154 = vpop.f32.mrf.mxu0
  %7155 = vmatprep.mubr.bf16.mxu0 0
  %7156 = vmatmul.mubr.bf16.gmra.mxu0 %v6947
  %v7157 = vpop.f32.mrf.mxu0
  %v7158 = vadd.f32 0.0, %v7157
  %v7159 = vpop.f32.mrf.mxu0
  %v7160 = vpop.f32.mrf.mxu0
  %v7161 = vadd.f32 0.0, %v7160
  %v7162 = vpop.f32.mrf.mxu0
  %7163 = vdwg.mxu0
  %v7172 = vunpack.c.l.b16 %v6833
  %v7173 = vunpack.c.l.b16 %v6834
  %v7174 = vunpack.c.l.b16 %v6835
  %v7175 = vunpack.c.l.b16 %v6836
  %v7176 = vunpack.c.l.b16 %v6837
  %v7177 = vunpack.c.l.b16 %v6838
  %v7178 = vunpack.c.l.b16 %v6839
  %v7179 = vunpack.c.l.b16 %v6840
  %v7180 = vpack.c.b16 %v7173, %v7172
  %v7181 = vpack.c.b16 %v7175, %v7174
  %v7182 = vpack.c.b16 %v7177, %v7176
  %v7183 = vpack.c.b16 %v7179, %v7178
  %v7189 = vsel %vm6873, %v6792, 0
  %7191 = vmatprep.subr.bf16.mxu0 0
  %7192 = vmatpush1.bf16.msra.mxu0 0
  %7193 = vmatprep.subr.bf16.mxu0 0
  %7194 = vmatpush1.bf16.msra.mxu0 0
  %7195 = vmatprep.subr.bf16.mxu0 0
  %7196 = vmatpush1.bf16.msra.mxu0 0
  %7197 = vmatprep.subr.bf16.mxu0 0
  %7198 = vmatpush1.bf16.msra.mxu0 0
  %7199 = vmatprep.subr.bf16.mxu0 0
  %7200 = vmatpush1.bf16.msra.mxu0 %v7183
  %7201 = vmatprep.subr.bf16.mxu0 0
  %7202 = vmatpush1.bf16.msra.mxu0 %v7182
  %7203 = vmatprep.subr.bf16.mxu0 0
  %7204 = vmatpush1.bf16.msra.mxu0 %v7181
  %7205 = vmatprep.subr.bf16.mxu0 0
  %7206 = vmatpush1.bf16.msra.mxu0 %v7180
  %7207 = vmatprep.subr.bf16.mxu0 0
  %7208 = vmatpush2.bf16.msra.mxu0 0
  %7209 = vmatprep.subr.bf16.mxu0 0
  %7210 = vmatpush2.bf16.msra.mxu0 0
  %7211 = vmatprep.subr.bf16.mxu0 0
  %7212 = vmatpush2.bf16.msra.mxu0 0
  %7213 = vmatprep.subr.bf16.mxu0 0
  %7214 = vmatpush2.bf16.msra.mxu0 0
  %7215 = vmatprep.subr.bf16.mxu0 0
  %7216 = vmatpush2.bf16.msra.mxu0 0
  %7217 = vmatprep.subr.bf16.mxu0 0
  %7218 = vmatpush2.bf16.msra.mxu0 0
  %7219 = vmatprep.subr.bf16.mxu0 0
  %7220 = vmatpush2.bf16.msra.mxu0 0
  %7221 = vmatprep.subr.bf16.mxu0 0
  %7222 = vmatpush2.bf16.msra.mxu0 0
  %7223 = vmatprep.mubr.bf16.mxu0 0
  %7224 = vmatmul.mubr.bf16.gmra.mxu0 %v7189
  %v7225 = vpop.f32.mrf.mxu0
  %v7226 = vadd.f32 %v6984, %v7225
  %v7227 = vpop.f32.mrf.mxu0
  %v7228 = vpop.f32.mrf.mxu0
  %v7229 = vadd.f32 %v6987, %v7228
  %v7230 = vpop.f32.mrf.mxu0
  %7231 = vmatprep.mubr.bf16.mxu0 0
  %7232 = vmatmul.mubr.bf16.gmra.mxu0 %v6875
  %v7233 = vpop.f32.mrf.mxu0
  %v7234 = vadd.f32 %v6992, %v7233
  %v7235 = vpop.f32.mrf.mxu0
  %v7236 = vpop.f32.mrf.mxu0
  %v7237 = vadd.f32 %v6995, %v7236
  %v7238 = vpop.f32.mrf.mxu0
  %7239 = vmatprep.mubr.bf16.mxu0 0
  %7240 = vmatmul.mubr.bf16.gmra.mxu0 %v6878
  %v7241 = vpop.f32.mrf.mxu0
  %v7242 = vadd.f32 %v7000, %v7241
  %v7243 = vpop.f32.mrf.mxu0
  %v7244 = vpop.f32.mrf.mxu0
  %v7245 = vadd.f32 %v7003, %v7244
  %v7246 = vpop.f32.mrf.mxu0
  %7247 = vmatprep.mubr.bf16.mxu0 0
  %7248 = vmatmul.mubr.bf16.gmra.mxu0 %v6881
  %v7249 = vpop.f32.mrf.mxu0
  %v7250 = vadd.f32 %v7008, %v7249
  %v7251 = vpop.f32.mrf.mxu0
  %v7252 = vpop.f32.mrf.mxu0
  %v7253 = vadd.f32 %v7011, %v7252
  %v7254 = vpop.f32.mrf.mxu0
  %7255 = vmatprep.mubr.bf16.mxu0 0
  %7256 = vmatmul.mubr.bf16.gmra.mxu0 %v6884
  %v7257 = vpop.f32.mrf.mxu0
  %v7258 = vpop.f32.mrf.mxu0
  %v7259 = vpop.f32.mrf.mxu0
  %v7260 = vpop.f32.mrf.mxu0
  %7261 = vmatprep.mubr.bf16.mxu0 0
  %7262 = vmatmul.mubr.bf16.gmra.mxu0 %v6887
  %v7263 = vpop.f32.mrf.mxu0
  %v7264 = vpop.f32.mrf.mxu0
  %v7265 = vpop.f32.mrf.mxu0
  %v7266 = vpop.f32.mrf.mxu0
  %7267 = vmatprep.mubr.bf16.mxu0 0
  %7268 = vmatmul.mubr.bf16.gmra.mxu0 %v6890
  %v7269 = vpop.f32.mrf.mxu0
  %v7270 = vpop.f32.mrf.mxu0
  %v7271 = vpop.f32.mrf.mxu0
  %v7272 = vpop.f32.mrf.mxu0
  %7273 = vmatprep.mubr.bf16.mxu0 0
  %7274 = vmatmul.mubr.bf16.gmra.mxu0 %v6893
  %v7275 = vpop.f32.mrf.mxu0
  %v7276 = vadd.f32 %v7034, %v7275
  %v7277 = vpop.f32.mrf.mxu0
  %v7278 = vpop.f32.mrf.mxu0
  %v7279 = vadd.f32 %v7037, %v7278
  %v7280 = vpop.f32.mrf.mxu0
  %7281 = vmatprep.mubr.bf16.mxu0 0
  %7282 = vmatmul.mubr.bf16.gmra.mxu0 %v6896
  %v7283 = vpop.f32.mrf.mxu0
  %v7284 = vadd.f32 %v7042, %v7283
  %v7285 = vpop.f32.mrf.mxu0
  %v7286 = vpop.f32.mrf.mxu0
  %v7287 = vadd.f32 %v7045, %v7286
  %v7288 = vpop.f32.mrf.mxu0
  %7289 = vmatprep.mubr.bf16.mxu0 0
  %7290 = vmatmul.mubr.bf16.gmra.mxu0 %v6899
  %v7291 = vpop.f32.mrf.mxu0
  %v7292 = vadd.f32 %v7050, %v7291
  %v7293 = vpop.f32.mrf.mxu0
  %v7294 = vpop.f32.mrf.mxu0
  %v7295 = vadd.f32 %v7053, %v7294
  %v7296 = vpop.f32.mrf.mxu0
  %7297 = vmatprep.mubr.bf16.mxu0 0
  %7298 = vmatmul.mubr.bf16.gmra.mxu0 %v6902
  %v7299 = vpop.f32.mrf.mxu0
  %v7300 = vadd.f32 %v7058, %v7299
  %v7301 = vpop.f32.mrf.mxu0
  %v7302 = vpop.f32.mrf.mxu0
  %v7303 = vadd.f32 %v7061, %v7302
  %v7304 = vpop.f32.mrf.mxu0
  %7305 = vmatprep.mubr.bf16.mxu0 0
  %7306 = vmatmul.mubr.bf16.gmra.mxu0 %v6905
  %v7307 = vpop.f32.mrf.mxu0
  %v7308 = vpop.f32.mrf.mxu0
  %v7309 = vpop.f32.mrf.mxu0
  %v7310 = vpop.f32.mrf.mxu0
  %7311 = vmatprep.mubr.bf16.mxu0 0
  %7312 = vmatmul.mubr.bf16.gmra.mxu0 %v6908
  %v7313 = vpop.f32.mrf.mxu0
  %v7314 = vpop.f32.mrf.mxu0
  %v7315 = vpop.f32.mrf.mxu0
  %v7316 = vpop.f32.mrf.mxu0
  %7317 = vmatprep.mubr.bf16.mxu0 0
  %7318 = vmatmul.mubr.bf16.gmra.mxu0 %v6911
  %v7319 = vpop.f32.mrf.mxu0
  %v7320 = vpop.f32.mrf.mxu0
  %v7321 = vpop.f32.mrf.mxu0
  %v7322 = vpop.f32.mrf.mxu0
  %7323 = vmatprep.mubr.bf16.mxu0 0
  %7324 = vmatmul.mubr.bf16.gmra.mxu0 %v6914
  %v7325 = vpop.f32.mrf.mxu0
  %v7326 = vadd.f32 %v7084, %v7325
  %v7327 = vpop.f32.mrf.mxu0
  %v7328 = vpop.f32.mrf.mxu0
  %v7329 = vadd.f32 %v7087, %v7328
  %v7330 = vpop.f32.mrf.mxu0
  %7331 = vmatprep.mubr.bf16.mxu0 0
  %7332 = vmatmul.mubr.bf16.gmra.mxu0 %v6917
  %v7333 = vpop.f32.mrf.mxu0
  %v7334 = vadd.f32 %v7092, %v7333
  %v7335 = vpop.f32.mrf.mxu0
  %v7336 = vpop.f32.mrf.mxu0
  %v7337 = vadd.f32 %v7095, %v7336
  %v7338 = vpop.f32.mrf.mxu0
  %7339 = vmatprep.mubr.bf16.mxu0 0
  %7340 = vmatmul.mubr.bf16.gmra.mxu0 %v6920
  %v7341 = vpop.f32.mrf.mxu0
  %v7342 = vadd.f32 %v7100, %v7341
  %v7343 = vpop.f32.mrf.mxu0
  %v7344 = vpop.f32.mrf.mxu0
  %v7345 = vadd.f32 %v7103, %v7344
  %v7346 = vpop.f32.mrf.mxu0
  %7347 = vmatprep.mubr.bf16.mxu0 0
  %7348 = vmatmul.mubr.bf16.gmra.mxu0 %v6923
  %v7349 = vpop.f32.mrf.mxu0
  %v7350 = vadd.f32 %v7108, %v7349
  %v7351 = vpop.f32.mrf.mxu0
  %v7352 = vpop.f32.mrf.mxu0
  %v7353 = vadd.f32 %v7111, %v7352
  %v7354 = vpop.f32.mrf.mxu0
  %7355 = vmatprep.mubr.bf16.mxu0 0
  %7356 = vmatmul.mubr.bf16.gmra.mxu0 %v6926
  %v7357 = vpop.f32.mrf.mxu0
  %v7358 = vpop.f32.mrf.mxu0
  %v7359 = vpop.f32.mrf.mxu0
  %v7360 = vpop.f32.mrf.mxu0
  %7361 = vmatprep.mubr.bf16.mxu0 0
  %7362 = vmatmul.mubr.bf16.gmra.mxu0 %v6929
  %v7363 = vpop.f32.mrf.mxu0
  %v7364 = vpop.f32.mrf.mxu0
  %v7365 = vpop.f32.mrf.mxu0
  %v7366 = vpop.f32.mrf.mxu0
  %7367 = vmatprep.mubr.bf16.mxu0 0
  %7368 = vmatmul.mubr.bf16.gmra.mxu0 %v6932
  %v7369 = vpop.f32.mrf.mxu0
  %v7370 = vpop.f32.mrf.mxu0
  %v7371 = vpop.f32.mrf.mxu0
  %v7372 = vpop.f32.mrf.mxu0
  %7373 = vmatprep.mubr.bf16.mxu0 0
  %7374 = vmatmul.mubr.bf16.gmra.mxu0 %v6935
  %v7375 = vpop.f32.mrf.mxu0
  %v7376 = vadd.f32 %v7134, %v7375
  %v7377 = vpop.f32.mrf.mxu0
  %v7378 = vpop.f32.mrf.mxu0
  %v7379 = vadd.f32 %v7137, %v7378
  %v7380 = vpop.f32.mrf.mxu0
  %7381 = vmatprep.mubr.bf16.mxu0 0
  %7382 = vmatmul.mubr.bf16.gmra.mxu0 %v6938
  %v7383 = vpop.f32.mrf.mxu0
  %v7384 = vadd.f32 %v7142, %v7383
  %v7385 = vpop.f32.mrf.mxu0
  %v7386 = vpop.f32.mrf.mxu0
  %v7387 = vadd.f32 %v7145, %v7386
  %v7388 = vpop.f32.mrf.mxu0
  %7389 = vmatprep.mubr.bf16.mxu0 0
  %7390 = vmatmul.mubr.bf16.gmra.mxu0 %v6941
  %v7391 = vpop.f32.mrf.mxu0
  %v7392 = vadd.f32 %v7150, %v7391
  %v7393 = vpop.f32.mrf.mxu0
  %v7394 = vpop.f32.mrf.mxu0
  %v7395 = vadd.f32 %v7153, %v7394
  %v7396 = vpop.f32.mrf.mxu0
  %7397 = vmatprep.mubr.bf16.mxu0 0
  %7398 = vmatmul.mubr.bf16.gmra.mxu0 %v6944
  %v7399 = vpop.f32.mrf.mxu0
  %v7400 = vadd.f32 %v7158, %v7399
  %v7401 = vpop.f32.mrf.mxu0
  %v7402 = vpop.f32.mrf.mxu0
  %v7403 = vadd.f32 %v7161, %v7402
  %v7404 = vpop.f32.mrf.mxu0
  %7405 = vdwg.mxu0
  %v7406 = vld [vmem:[%s5 + $0x40] sm:$0xf]
  %v7407 = vld [vmem:[%s5 + $0x44] sm:$0xf]
  %v7408 = vld [vmem:[%s5 + $0x48] sm:$0xf]
  %v7409 = vld [vmem:[%s5 + $0x4c] sm:$0xf]
  %v7410 = vld [vmem:[%s5 + $0x50] sm:$0xf]
  %v7411 = vld [vmem:[%s5 + $0x54] sm:$0xf]
  %v7412 = vld [vmem:[%s5 + $0x58] sm:$0xf]
  %v7413 = vld [vmem:[%s5 + $0x5c] sm:$0xf]
  %v7422 = vunpack.c.l.b16 %v7406
  %v7423 = vunpack.c.l.b16 %v7407
  %v7424 = vunpack.c.l.b16 %v7408
  %v7425 = vunpack.c.l.b16 %v7409
  %v7426 = vunpack.c.l.b16 %v7410
  %v7427 = vunpack.c.l.b16 %v7411
  %v7428 = vunpack.c.l.b16 %v7412
  %v7429 = vunpack.c.l.b16 %v7413
  %v7430 = vpack.c.b16 %v7423, %v7422
  %v7431 = vpack.c.b16 %v7425, %v7424
  %v7432 = vpack.c.b16 %v7427, %v7426
  %v7433 = vpack.c.b16 %v7429, %v7428
  %v7439 = vsel %vm6873, %v6818, 0
  %7441 = vmatprep.subr.bf16.mxu0 0
  %7442 = vmatpush1.bf16.msra.mxu0 0
  %7443 = vmatprep.subr.bf16.mxu0 0
  %7444 = vmatpush1.bf16.msra.mxu0 0
  %7445 = vmatprep.subr.bf16.mxu0 0
  %7446 = vmatpush1.bf16.msra.mxu0 0
  %7447 = vmatprep.subr.bf16.mxu0 0
  %7448 = vmatpush1.bf16.msra.mxu0 0
  %7449 = vmatprep.subr.bf16.mxu0 0
  %7450 = vmatpush1.bf16.msra.mxu0 %v7433
  %7451 = vmatprep.subr.bf16.mxu0 0
  %7452 = vmatpush1.bf16.msra.mxu0 %v7432
  %7453 = vmatprep.subr.bf16.mxu0 0
  %7454 = vmatpush1.bf16.msra.mxu0 %v7431
  %7455 = vmatprep.subr.bf16.mxu0 0
  %7456 = vmatpush1.bf16.msra.mxu0 %v7430
  %7457 = vmatprep.subr.bf16.mxu0 0
  %7458 = vmatpush2.bf16.msra.mxu0 0
  %7459 = vmatprep.subr.bf16.mxu0 0
  %7460 = vmatpush2.bf16.msra.mxu0 0
  %7461 = vmatprep.subr.bf16.mxu0 0
  %7462 = vmatpush2.bf16.msra.mxu0 0
  %7463 = vmatprep.subr.bf16.mxu0 0
  %7464 = vmatpush2.bf16.msra.mxu0 0
  %7465 = vmatprep.subr.bf16.mxu0 0
  %7466 = vmatpush2.bf16.msra.mxu0 0
  %7467 = vmatprep.subr.bf16.mxu0 0
  %7468 = vmatpush2.bf16.msra.mxu0 0
  %7469 = vmatprep.subr.bf16.mxu0 0
  %7470 = vmatpush2.bf16.msra.mxu0 0
  %7471 = vmatprep.subr.bf16.mxu0 0
  %7472 = vmatpush2.bf16.msra.mxu0 0
  %7473 = vmatprep.mubr.bf16.mxu0 0
  %7474 = vmatmul.mubr.bf16.gmra.mxu0 %v6878
  %v7475 = vpop.f32.mrf.mxu0
  %v7476 = vadd.f32 0.0, %v7475
  %v7477 = vpop.f32.mrf.mxu0
  %v7478 = vpop.f32.mrf.mxu0
  %v7479 = vadd.f32 0.0, %v7478
  %v7480 = vpop.f32.mrf.mxu0
  %7481 = vmatprep.mubr.bf16.mxu0 0
  %7482 = vmatmul.mubr.bf16.gmra.mxu0 %v6881
  %v7483 = vpop.f32.mrf.mxu0
  %v7484 = vadd.f32 0.0, %v7483
  %v7485 = vpop.f32.mrf.mxu0
  %v7486 = vpop.f32.mrf.mxu0
  %v7487 = vadd.f32 0.0, %v7486
  %v7488 = vpop.f32.mrf.mxu0
  %7489 = vmatprep.mubr.bf16.mxu0 0
  %7490 = vmatmul.mubr.bf16.gmra.mxu0 %v6884
  %v7491 = vpop.f32.mrf.mxu0
  %v7492 = vadd.f32 0.0, %v7491
  %v7493 = vpop.f32.mrf.mxu0
  %v7494 = vpop.f32.mrf.mxu0
  %v7495 = vadd.f32 0.0, %v7494
  %v7496 = vpop.f32.mrf.mxu0
  %7497 = vmatprep.mubr.bf16.mxu0 0
  %7498 = vmatmul.mubr.bf16.gmra.mxu0 %v6887
  %v7499 = vpop.f32.mrf.mxu0
  %v7500 = vadd.f32 0.0, %v7499
  %v7501 = vpop.f32.mrf.mxu0
  %v7502 = vpop.f32.mrf.mxu0
  %v7503 = vadd.f32 0.0, %v7502
  %v7504 = vpop.f32.mrf.mxu0
  %7505 = vmatprep.mubr.bf16.mxu0 0
  %7506 = vmatmul.mubr.bf16.gmra.mxu0 %v6890
  %v7507 = vpop.f32.mrf.mxu0
  %v7508 = vpop.f32.mrf.mxu0
  %v7509 = vpop.f32.mrf.mxu0
  %v7510 = vpop.f32.mrf.mxu0
  %7511 = vmatprep.mubr.bf16.mxu0 0
  %7512 = vmatmul.mubr.bf16.gmra.mxu0 %v6893
  %v7513 = vpop.f32.mrf.mxu0
  %v7514 = vpop.f32.mrf.mxu0
  %v7515 = vpop.f32.mrf.mxu0
  %v7516 = vpop.f32.mrf.mxu0
  %7517 = vmatprep.mubr.bf16.mxu0 0
  %7518 = vmatmul.mubr.bf16.gmra.mxu0 %v6896
  %v7519 = vpop.f32.mrf.mxu0
  %v7520 = vpop.f32.mrf.mxu0
  %v7521 = vpop.f32.mrf.mxu0
  %v7522 = vpop.f32.mrf.mxu0
  %7523 = vmatprep.mubr.bf16.mxu0 0
  %7524 = vmatmul.mubr.bf16.gmra.mxu0 %v6899
  %v7525 = vpop.f32.mrf.mxu0
  %v7526 = vadd.f32 0.0, %v7525
  %v7527 = vpop.f32.mrf.mxu0
  %v7528 = vpop.f32.mrf.mxu0
  %v7529 = vadd.f32 0.0, %v7528
  %v7530 = vpop.f32.mrf.mxu0
  %7531 = vmatprep.mubr.bf16.mxu0 0
  %7532 = vmatmul.mubr.bf16.gmra.mxu0 %v6902
  %v7533 = vpop.f32.mrf.mxu0
  %v7534 = vadd.f32 0.0, %v7533
  %v7535 = vpop.f32.mrf.mxu0
  %v7536 = vpop.f32.mrf.mxu0
  %v7537 = vadd.f32 0.0, %v7536
  %v7538 = vpop.f32.mrf.mxu0
  %7539 = vmatprep.mubr.bf16.mxu0 0
  %7540 = vmatmul.mubr.bf16.gmra.mxu0 %v6905
  %v7541 = vpop.f32.mrf.mxu0
  %v7542 = vadd.f32 0.0, %v7541
  %v7543 = vpop.f32.mrf.mxu0
  %v7544 = vpop.f32.mrf.mxu0
  %v7545 = vadd.f32 0.0, %v7544
  %v7546 = vpop.f32.mrf.mxu0
  %7547 = vmatprep.mubr.bf16.mxu0 0
  %7548 = vmatmul.mubr.bf16.gmra.mxu0 %v6908
  %v7549 = vpop.f32.mrf.mxu0
  %v7550 = vadd.f32 0.0, %v7549
  %v7551 = vpop.f32.mrf.mxu0
  %v7552 = vpop.f32.mrf.mxu0
  %v7553 = vadd.f32 0.0, %v7552
  %v7554 = vpop.f32.mrf.mxu0
  %7555 = vmatprep.mubr.bf16.mxu0 0
  %7556 = vmatmul.mubr.bf16.gmra.mxu0 %v6911
  %v7557 = vpop.f32.mrf.mxu0
  %v7558 = vpop.f32.mrf.mxu0
  %v7559 = vpop.f32.mrf.mxu0
  %v7560 = vpop.f32.mrf.mxu0
  %7561 = vmatprep.mubr.bf16.mxu0 0
  %7562 = vmatmul.mubr.bf16.gmra.mxu0 %v6914
  %v7563 = vpop.f32.mrf.mxu0
  %v7564 = vpop.f32.mrf.mxu0
  %v7565 = vpop.f32.mrf.mxu0
  %v7566 = vpop.f32.mrf.mxu0
  %7567 = vmatprep.mubr.bf16.mxu0 0
  %7568 = vmatmul.mubr.bf16.gmra.mxu0 %v6917
  %v7569 = vpop.f32.mrf.mxu0
  %v7570 = vpop.f32.mrf.mxu0
  %v7571 = vpop.f32.mrf.mxu0
  %v7572 = vpop.f32.mrf.mxu0
  %7573 = vmatprep.mubr.bf16.mxu0 0
  %7574 = vmatmul.mubr.bf16.gmra.mxu0 %v6920
  %v7575 = vpop.f32.mrf.mxu0
  %v7576 = vadd.f32 0.0, %v7575
  %v7577 = vpop.f32.mrf.mxu0
  %v7578 = vpop.f32.mrf.mxu0
  %v7579 = vadd.f32 0.0, %v7578
  %v7580 = vpop.f32.mrf.mxu0
  %7581 = vmatprep.mubr.bf16.mxu0 0
  %7582 = vmatmul.mubr.bf16.gmra.mxu0 %v6923
  %v7583 = vpop.f32.mrf.mxu0
  %v7584 = vadd.f32 0.0, %v7583
  %v7585 = vpop.f32.mrf.mxu0
  %v7586 = vpop.f32.mrf.mxu0
  %v7587 = vadd.f32 0.0, %v7586
  %v7588 = vpop.f32.mrf.mxu0
  %7589 = vmatprep.mubr.bf16.mxu0 0
  %7590 = vmatmul.mubr.bf16.gmra.mxu0 %v6926
  %v7591 = vpop.f32.mrf.mxu0
  %v7592 = vadd.f32 0.0, %v7591
  %v7593 = vpop.f32.mrf.mxu0
  %v7594 = vpop.f32.mrf.mxu0
  %v7595 = vadd.f32 0.0, %v7594
  %v7596 = vpop.f32.mrf.mxu0
  %7597 = vmatprep.mubr.bf16.mxu0 0
  %7598 = vmatmul.mubr.bf16.gmra.mxu0 %v6929
  %v7599 = vpop.f32.mrf.mxu0
  %v7600 = vadd.f32 0.0, %v7599
  %v7601 = vpop.f32.mrf.mxu0
  %v7602 = vpop.f32.mrf.mxu0
  %v7603 = vadd.f32 0.0, %v7602
  %v7604 = vpop.f32.mrf.mxu0
  %7605 = vmatprep.mubr.bf16.mxu0 0
  %7606 = vmatmul.mubr.bf16.gmra.mxu0 %v6932
  %v7607 = vpop.f32.mrf.mxu0
  %v7608 = vpop.f32.mrf.mxu0
  %v7609 = vpop.f32.mrf.mxu0
  %v7610 = vpop.f32.mrf.mxu0
  %7611 = vmatprep.mubr.bf16.mxu0 0
  %7612 = vmatmul.mubr.bf16.gmra.mxu0 %v6935
  %v7613 = vpop.f32.mrf.mxu0
  %v7614 = vpop.f32.mrf.mxu0
  %v7615 = vpop.f32.mrf.mxu0
  %v7616 = vpop.f32.mrf.mxu0
  %7617 = vmatprep.mubr.bf16.mxu0 0
  %7618 = vmatmul.mubr.bf16.gmra.mxu0 %v6938
  %v7619 = vpop.f32.mrf.mxu0
  %v7620 = vpop.f32.mrf.mxu0
  %v7621 = vpop.f32.mrf.mxu0
  %v7622 = vpop.f32.mrf.mxu0
  %7623 = vmatprep.mubr.bf16.mxu0 0
  %7624 = vmatmul.mubr.bf16.gmra.mxu0 %v6941
  %v7625 = vpop.f32.mrf.mxu0
  %v7626 = vadd.f32 0.0, %v7625
  %v7627 = vpop.f32.mrf.mxu0
  %v7628 = vpop.f32.mrf.mxu0
  %v7629 = vadd.f32 0.0, %v7628
  %v7630 = vpop.f32.mrf.mxu0
  %7631 = vmatprep.mubr.bf16.mxu0 0
  %7632 = vmatmul.mubr.bf16.gmra.mxu0 %v6944
  %v7633 = vpop.f32.mrf.mxu0
  %v7634 = vadd.f32 0.0, %v7633
  %v7635 = vpop.f32.mrf.mxu0
  %v7636 = vpop.f32.mrf.mxu0
  %v7637 = vadd.f32 0.0, %v7636
  %v7638 = vpop.f32.mrf.mxu0
  %7639 = vmatprep.mubr.bf16.mxu0 0
  %7640 = vmatmul.mubr.bf16.gmra.mxu0 %v6947
  %v7641 = vpop.f32.mrf.mxu0
  %v7642 = vadd.f32 0.0, %v7641
  %v7643 = vpop.f32.mrf.mxu0
  %v7644 = vpop.f32.mrf.mxu0
  %v7645 = vadd.f32 0.0, %v7644
  %v7646 = vpop.f32.mrf.mxu0
  %7647 = vmatprep.mubr.bf16.mxu0 0
  %7648 = vmatmul.mubr.bf16.gmra.mxu0 %v7439
  %v7649 = vpop.f32.mrf.mxu0
  %v7650 = vadd.f32 0.0, %v7649
  %v7651 = vpop.f32.mrf.mxu0
  %v7652 = vpop.f32.mrf.mxu0
  %v7653 = vadd.f32 0.0, %v7652
  %v7654 = vpop.f32.mrf.mxu0
  %7655 = vdwg.mxu0
  %v7656 = vadd.f32 %v7226, %v7476
  %v7657 = vadd.f32 %v7229, %v7479
  %v7658 = vadd.f32 %v7234, %v7484
  %v7659 = vadd.f32 %v7237, %v7487
  %v7660 = vadd.f32 %v7242, %v7492
  %v7661 = vadd.f32 %v7245, %v7495
  %v7662 = vadd.f32 %v7250, %v7500
  %v7663 = vadd.f32 %v7253, %v7503
  %v7664 = vadd.f32 %v7276, %v7526
  %v7665 = vadd.f32 %v7279, %v7529
  %v7666 = vadd.f32 %v7284, %v7534
  %v7667 = vadd.f32 %v7287, %v7537
  %v7668 = vadd.f32 %v7292, %v7542
  %v7669 = vadd.f32 %v7295, %v7545
  %v7670 = vadd.f32 %v7300, %v7550
  %v7671 = vadd.f32 %v7303, %v7553
  %v7672 = vadd.f32 %v7326, %v7576
  %v7673 = vadd.f32 %v7329, %v7579
  %v7674 = vadd.f32 %v7334, %v7584
  %v7675 = vadd.f32 %v7337, %v7587
  %v7676 = vadd.f32 %v7342, %v7592
  %v7677 = vadd.f32 %v7345, %v7595
  %v7678 = vadd.f32 %v7350, %v7600
  %v7679 = vadd.f32 %v7353, %v7603
  %v7680 = vadd.f32 %v7376, %v7626
  %v7681 = vadd.f32 %v7379, %v7629
  %v7682 = vadd.f32 %v7384, %v7634
  %v7683 = vadd.f32 %v7387, %v7637
  %v7684 = vadd.f32 %v7392, %v7642
  %v7685 = vadd.f32 %v7395, %v7645
  %v7686 = vadd.f32 %v7400, %v7650
  %v7687 = vadd.f32 %v7403, %v7653
  %v7688 = vld [vmem:[%s5 + $0x60] sm:$0xf]
  %v7689 = vld [vmem:[%s5 + $0x64] sm:$0xf]
  %v7690 = vld [vmem:[%s5 + $0x68] sm:$0xf]
  %v7691 = vld [vmem:[%s5 + $0x6c] sm:$0xf]
  %v7692 = vld [vmem:[%s5 + $0x70] sm:$0xf]
  %v7693 = vld [vmem:[%s5 + $0x74] sm:$0xf]
  %v7694 = vld [vmem:[%s5 + $0x78] sm:$0xf]
  %v7695 = vld [vmem:[%s5 + $0x7c] sm:$0xf]
  %v7704 = vunpack.c.l.b16 %v7688
  %v7705 = vunpack.c.l.b16 %v7689
  %v7706 = vunpack.c.l.b16 %v7690
  %v7707 = vunpack.c.l.b16 %v7691
  %v7708 = vunpack.c.l.b16 %v7692
  %v7709 = vunpack.c.l.b16 %v7693
  %v7710 = vunpack.c.l.b16 %v7694
  %v7711 = vunpack.c.l.b16 %v7695
  %v7712 = vpack.c.b16 %v7705, %v7704
  %v7713 = vpack.c.b16 %v7707, %v7706
  %v7714 = vpack.c.b16 %v7709, %v7708
  %v7715 = vpack.c.b16 %v7711, %v7710
  %v7721 = vsel %vm6873, %v6819, 0
  %v7724 = vsel %vm6873, %v6820, 0
  %v7727 = vsel %vm6873, %v6821, 0
  %v7730 = vsel %vm6873, %v6822, 0
  %v7733 = vsel %vm6873, %v6823, 0
  %7735 = vmatprep.subr.bf16.mxu0 0
  %7736 = vmatpush1.bf16.msra.mxu0 0
  %7737 = vmatprep.subr.bf16.mxu0 0
  %7738 = vmatpush1.bf16.msra.mxu0 0
  %7739 = vmatprep.subr.bf16.mxu0 0
  %7740 = vmatpush1.bf16.msra.mxu0 0
  %7741 = vmatprep.subr.bf16.mxu0 0
  %7742 = vmatpush1.bf16.msra.mxu0 0
  %7743 = vmatprep.subr.bf16.mxu0 0
  %7744 = vmatpush1.bf16.msra.mxu0 %v7715
  %7745 = vmatprep.subr.bf16.mxu0 0
  %7746 = vmatpush1.bf16.msra.mxu0 %v7714
  %7747 = vmatprep.subr.bf16.mxu0 0
  %7748 = vmatpush1.bf16.msra.mxu0 %v7713
  %7749 = vmatprep.subr.bf16.mxu0 0
  %7750 = vmatpush1.bf16.msra.mxu0 %v7712
  %7751 = vmatprep.subr.bf16.mxu0 0
  %7752 = vmatpush2.bf16.msra.mxu0 0
  %7753 = vmatprep.subr.bf16.mxu0 0
  %7754 = vmatpush2.bf16.msra.mxu0 0
  %7755 = vmatprep.subr.bf16.mxu0 0
  %7756 = vmatpush2.bf16.msra.mxu0 0
  %7757 = vmatprep.subr.bf16.mxu0 0
  %7758 = vmatpush2.bf16.msra.mxu0 0
  %7759 = vmatprep.subr.bf16.mxu0 0
  %7760 = vmatpush2.bf16.msra.mxu0 0
  %7761 = vmatprep.subr.bf16.mxu0 0
  %7762 = vmatpush2.bf16.msra.mxu0 0
  %7763 = vmatprep.subr.bf16.mxu0 0
  %7764 = vmatpush2.bf16.msra.mxu0 0
  %7765 = vmatprep.subr.bf16.mxu0 0
  %7766 = vmatpush2.bf16.msra.mxu0 0
  %7767 = vmatprep.mubr.bf16.mxu0 0
  %7768 = vmatmul.mubr.bf16.gmra.mxu0 %v6893
  %v7769 = vpop.f32.mrf.mxu0
  %v7770 = vadd.f32 0.0, %v7769
  %v7771 = vpop.f32.mrf.mxu0
  %v7772 = vpop.f32.mrf.mxu0
  %v7773 = vadd.f32 0.0, %v7772
  %v7774 = vpop.f32.mrf.mxu0
  %7775 = vmatprep.mubr.bf16.mxu0 0
  %7776 = vmatmul.mubr.bf16.gmra.mxu0 %v6896
  %v7777 = vpop.f32.mrf.mxu0
  %v7778 = vadd.f32 0.0, %v7777
  %v7779 = vpop.f32.mrf.mxu0
  %v7780 = vpop.f32.mrf.mxu0
  %v7781 = vadd.f32 0.0, %v7780
  %v7782 = vpop.f32.mrf.mxu0
  %7783 = vmatprep.mubr.bf16.mxu0 0
  %7784 = vmatmul.mubr.bf16.gmra.mxu0 %v6899
  %v7785 = vpop.f32.mrf.mxu0
  %v7786 = vadd.f32 0.0, %v7785
  %v7787 = vpop.f32.mrf.mxu0
  %v7788 = vpop.f32.mrf.mxu0
  %v7789 = vadd.f32 0.0, %v7788
  %v7790 = vpop.f32.mrf.mxu0
  %7791 = vmatprep.mubr.bf16.mxu0 0
  %7792 = vmatmul.mubr.bf16.gmra.mxu0 %v6902
  %v7793 = vpop.f32.mrf.mxu0
  %v7794 = vadd.f32 0.0, %v7793
  %v7795 = vpop.f32.mrf.mxu0
  %v7796 = vpop.f32.mrf.mxu0
  %v7797 = vadd.f32 0.0, %v7796
  %v7798 = vpop.f32.mrf.mxu0
  %7799 = vmatprep.mubr.bf16.mxu0 0
  %7800 = vmatmul.mubr.bf16.gmra.mxu0 %v6905
  %v7801 = vpop.f32.mrf.mxu0
  %v7802 = vpop.f32.mrf.mxu0
  %v7803 = vpop.f32.mrf.mxu0
  %v7804 = vpop.f32.mrf.mxu0
  %7805 = vmatprep.mubr.bf16.mxu0 0
  %7806 = vmatmul.mubr.bf16.gmra.mxu0 %v6908
  %v7807 = vpop.f32.mrf.mxu0
  %v7808 = vpop.f32.mrf.mxu0
  %v7809 = vpop.f32.mrf.mxu0
  %v7810 = vpop.f32.mrf.mxu0
  %7811 = vmatprep.mubr.bf16.mxu0 0
  %7812 = vmatmul.mubr.bf16.gmra.mxu0 %v6911
  %v7813 = vpop.f32.mrf.mxu0
  %v7814 = vpop.f32.mrf.mxu0
  %v7815 = vpop.f32.mrf.mxu0
  %v7816 = vpop.f32.mrf.mxu0
  %7817 = vmatprep.mubr.bf16.mxu0 0
  %7818 = vmatmul.mubr.bf16.gmra.mxu0 %v6914
  %v7819 = vpop.f32.mrf.mxu0
  %v7820 = vadd.f32 0.0, %v7819
  %v7821 = vpop.f32.mrf.mxu0
  %v7822 = vpop.f32.mrf.mxu0
  %v7823 = vadd.f32 0.0, %v7822
  %v7824 = vpop.f32.mrf.mxu0
  %7825 = vmatprep.mubr.bf16.mxu0 0
  %7826 = vmatmul.mubr.bf16.gmra.mxu0 %v6917
  %v7827 = vpop.f32.mrf.mxu0
  %v7828 = vadd.f32 0.0, %v7827
  %v7829 = vpop.f32.mrf.mxu0
  %v7830 = vpop.f32.mrf.mxu0
  %v7831 = vadd.f32 0.0, %v7830
  %v7832 = vpop.f32.mrf.mxu0
  %7833 = vmatprep.mubr.bf16.mxu0 0
  %7834 = vmatmul.mubr.bf16.gmra.mxu0 %v6920
  %v7835 = vpop.f32.mrf.mxu0
  %v7836 = vadd.f32 0.0, %v7835
  %v7837 = vpop.f32.mrf.mxu0
  %v7838 = vpop.f32.mrf.mxu0
  %v7839 = vadd.f32 0.0, %v7838
  %v7840 = vpop.f32.mrf.mxu0
  %7841 = vmatprep.mubr.bf16.mxu0 0
  %7842 = vmatmul.mubr.bf16.gmra.mxu0 %v6923
  %v7843 = vpop.f32.mrf.mxu0
  %v7844 = vadd.f32 0.0, %v7843
  %v7845 = vpop.f32.mrf.mxu0
  %v7846 = vpop.f32.mrf.mxu0
  %v7847 = vadd.f32 0.0, %v7846
  %v7848 = vpop.f32.mrf.mxu0
  %7849 = vmatprep.mubr.bf16.mxu0 0
  %7850 = vmatmul.mubr.bf16.gmra.mxu0 %v6926
  %v7851 = vpop.f32.mrf.mxu0
  %v7852 = vpop.f32.mrf.mxu0
  %v7853 = vpop.f32.mrf.mxu0
  %v7854 = vpop.f32.mrf.mxu0
  %7855 = vmatprep.mubr.bf16.mxu0 0
  %7856 = vmatmul.mubr.bf16.gmra.mxu0 %v6929
  %v7857 = vpop.f32.mrf.mxu0
  %v7858 = vpop.f32.mrf.mxu0
  %v7859 = vpop.f32.mrf.mxu0
  %v7860 = vpop.f32.mrf.mxu0
  %7861 = vmatprep.mubr.bf16.mxu0 0
  %7862 = vmatmul.mubr.bf16.gmra.mxu0 %v6932
  %v7863 = vpop.f32.mrf.mxu0
  %v7864 = vpop.f32.mrf.mxu0
  %v7865 = vpop.f32.mrf.mxu0
  %v7866 = vpop.f32.mrf.mxu0
  %7867 = vmatprep.mubr.bf16.mxu0 0
  %7868 = vmatmul.mubr.bf16.gmra.mxu0 %v6935
  %v7869 = vpop.f32.mrf.mxu0
  %v7870 = vadd.f32 0.0, %v7869
  %v7871 = vpop.f32.mrf.mxu0
  %v7872 = vpop.f32.mrf.mxu0
  %v7873 = vadd.f32 0.0, %v7872
  %v7874 = vpop.f32.mrf.mxu0
  %7875 = vmatprep.mubr.bf16.mxu0 0
  %7876 = vmatmul.mubr.bf16.gmra.mxu0 %v6938
  %v7877 = vpop.f32.mrf.mxu0
  %v7878 = vadd.f32 0.0, %v7877
  %v7879 = vpop.f32.mrf.mxu0
  %v7880 = vpop.f32.mrf.mxu0
  %v7881 = vadd.f32 0.0, %v7880
  %v7882 = vpop.f32.mrf.mxu0
  %7883 = vmatprep.mubr.bf16.mxu0 0
  %7884 = vmatmul.mubr.bf16.gmra.mxu0 %v6941
  %v7885 = vpop.f32.mrf.mxu0
  %v7886 = vadd.f32 0.0, %v7885
  %v7887 = vpop.f32.mrf.mxu0
  %v7888 = vpop.f32.mrf.mxu0
  %v7889 = vadd.f32 0.0, %v7888
  %v7890 = vpop.f32.mrf.mxu0
  %7891 = vmatprep.mubr.bf16.mxu0 0
  %7892 = vmatmul.mubr.bf16.gmra.mxu0 %v6944
  %v7893 = vpop.f32.mrf.mxu0
  %v7894 = vadd.f32 0.0, %v7893
  %v7895 = vpop.f32.mrf.mxu0
  %v7896 = vpop.f32.mrf.mxu0
  %v7897 = vadd.f32 0.0, %v7896
  %v7898 = vpop.f32.mrf.mxu0
  %7899 = vmatprep.mubr.bf16.mxu0 0
  %7900 = vmatmul.mubr.bf16.gmra.mxu0 %v6947
  %v7901 = vpop.f32.mrf.mxu0
  %v7902 = vpop.f32.mrf.mxu0
  %v7903 = vpop.f32.mrf.mxu0
  %v7904 = vpop.f32.mrf.mxu0
  %7905 = vmatprep.mubr.bf16.mxu0 0
  %7906 = vmatmul.mubr.bf16.gmra.mxu0 %v7439
  %v7907 = vpop.f32.mrf.mxu0
  %v7908 = vpop.f32.mrf.mxu0
  %v7909 = vpop.f32.mrf.mxu0
  %v7910 = vpop.f32.mrf.mxu0
  %7911 = vmatprep.mubr.bf16.mxu0 0
  %7912 = vmatmul.mubr.bf16.gmra.mxu0 %v7721
  %v7913 = vpop.f32.mrf.mxu0
  %v7914 = vpop.f32.mrf.mxu0
  %v7915 = vpop.f32.mrf.mxu0
  %v7916 = vpop.f32.mrf.mxu0
  %7917 = vmatprep.mubr.bf16.mxu0 0
  %7918 = vmatmul.mubr.bf16.gmra.mxu0 %v7724
  %v7919 = vpop.f32.mrf.mxu0
  %v7920 = vadd.f32 0.0, %v7919
  %v7921 = vpop.f32.mrf.mxu0
  %v7922 = vpop.f32.mrf.mxu0
  %v7923 = vadd.f32 0.0, %v7922
  %v7924 = vpop.f32.mrf.mxu0
  %7925 = vmatprep.mubr.bf16.mxu0 0
  %7926 = vmatmul.mubr.bf16.gmra.mxu0 %v7727
  %v7927 = vpop.f32.mrf.mxu0
  %v7928 = vadd.f32 0.0, %v7927
  %v7929 = vpop.f32.mrf.mxu0
  %v7930 = vpop.f32.mrf.mxu0
  %v7931 = vadd.f32 0.0, %v7930
  %v7932 = vpop.f32.mrf.mxu0
  %7933 = vmatprep.mubr.bf16.mxu0 0
  %7934 = vmatmul.mubr.bf16.gmra.mxu0 %v7730
  %v7935 = vpop.f32.mrf.mxu0
  %v7936 = vadd.f32 0.0, %v7935
  %v7937 = vpop.f32.mrf.mxu0
  %v7938 = vpop.f32.mrf.mxu0
  %v7939 = vadd.f32 0.0, %v7938
  %v7940 = vpop.f32.mrf.mxu0
  %7941 = vmatprep.mubr.bf16.mxu0 0
  %7942 = vmatmul.mubr.bf16.gmra.mxu0 %v7733
  %v7943 = vpop.f32.mrf.mxu0
  %v7944 = vadd.f32 0.0, %v7943
  %v7945 = vpop.f32.mrf.mxu0
  %v7946 = vpop.f32.mrf.mxu0
  %v7947 = vadd.f32 0.0, %v7946
  %v7948 = vpop.f32.mrf.mxu0
  %7949 = vdwg.mxu0
  %v7950 = vadd.f32 %v7656, %v7770
  %v7951 = vadd.f32 %v7657, %v7773
  %v7952 = vadd.f32 %v7658, %v7778
  %v7953 = vadd.f32 %v7659, %v7781
  %v7954 = vadd.f32 %v7660, %v7786
  %v7955 = vadd.f32 %v7661, %v7789
  %v7956 = vadd.f32 %v7662, %v7794
  %v7957 = vadd.f32 %v7663, %v7797
  %v7958 = vadd.f32 %v7664, %v7820
  %v7959 = vadd.f32 %v7665, %v7823
  %v7960 = vadd.f32 %v7666, %v7828
  %v7961 = vadd.f32 %v7667, %v7831
  %v7962 = vadd.f32 %v7668, %v7836
  %v7963 = vadd.f32 %v7669, %v7839
  %v7964 = vadd.f32 %v7670, %v7844
  %v7965 = vadd.f32 %v7671, %v7847
  %v7966 = vadd.f32 %v7672, %v7870
  %v7967 = vadd.f32 %v7673, %v7873
  %v7968 = vadd.f32 %v7674, %v7878
  %v7969 = vadd.f32 %v7675, %v7881
  %v7970 = vadd.f32 %v7676, %v7886
  %v7971 = vadd.f32 %v7677, %v7889
  %v7972 = vadd.f32 %v7678, %v7894
  %v7973 = vadd.f32 %v7679, %v7897
  %v7974 = vadd.f32 %v7680, %v7920
  %v7975 = vadd.f32 %v7681, %v7923
  %v7976 = vadd.f32 %v7682, %v7928
  %v7977 = vadd.f32 %v7683, %v7931
  %v7978 = vadd.f32 %v7684, %v7936
  %v7979 = vadd.f32 %v7685, %v7939
  %v7980 = vadd.f32 %v7686, %v7944
  %v7981 = vadd.f32 %v7687, %v7947
  %v7982 = vld [vmem:[%s5 + $0x80] sm:$0xf]
  %v7983 = vld [vmem:[%s5 + $0x84] sm:$0xf]
  %v7984 = vld [vmem:[%s5 + $0x88] sm:$0xf]
  %v7985 = vld [vmem:[%s5 + $0x8c] sm:$0xf]
  %v7986 = vld [vmem:[%s5 + $0x90] sm:$0xf]
  %v7987 = vld [vmem:[%s5 + $0x94] sm:$0xf]
  %v7988 = vld [vmem:[%s5 + $0x98] sm:$0xf]
  %v7989 = vld [vmem:[%s5 + $0x9c] sm:$0xf]
  %v7998 = vunpack.c.l.b16 %v7982
  %v7999 = vunpack.c.l.b16 %v7983
  %v8000 = vunpack.c.l.b16 %v7984
  %v8001 = vunpack.c.l.b16 %v7985
  %v8002 = vunpack.c.l.b16 %v7986
  %v8003 = vunpack.c.l.b16 %v7987
  %v8004 = vunpack.c.l.b16 %v7988
  %v8005 = vunpack.c.l.b16 %v7989
  %v8006 = vpack.c.b16 %v7999, %v7998
  %v8007 = vpack.c.b16 %v8001, %v8000
  %v8008 = vpack.c.b16 %v8003, %v8002
  %v8009 = vpack.c.b16 %v8005, %v8004
  %v8015 = vsel %vm6873, %v6824, 0
  %8017 = vmatprep.subr.bf16.mxu0 0
  %8018 = vmatpush1.bf16.msra.mxu0 0
  %8019 = vmatprep.subr.bf16.mxu0 0
  %8020 = vmatpush1.bf16.msra.mxu0 0
  %8021 = vmatprep.subr.bf16.mxu0 0
  %8022 = vmatpush1.bf16.msra.mxu0 0
  %8023 = vmatprep.subr.bf16.mxu0 0
  %8024 = vmatpush1.bf16.msra.mxu0 0
  %8025 = vmatprep.subr.bf16.mxu0 0
  %8026 = vmatpush1.bf16.msra.mxu0 %v8009
  %8027 = vmatprep.subr.bf16.mxu0 0
  %8028 = vmatpush1.bf16.msra.mxu0 %v8008
  %8029 = vmatprep.subr.bf16.mxu0 0
  %8030 = vmatpush1.bf16.msra.mxu0 %v8007
  %8031 = vmatprep.subr.bf16.mxu0 0
  %8032 = vmatpush1.bf16.msra.mxu0 %v8006
  %8033 = vmatprep.subr.bf16.mxu0 0
  %8034 = vmatpush2.bf16.msra.mxu0 0
  %8035 = vmatprep.subr.bf16.mxu0 0
  %8036 = vmatpush2.bf16.msra.mxu0 0
  %8037 = vmatprep.subr.bf16.mxu0 0
  %8038 = vmatpush2.bf16.msra.mxu0 0
  %8039 = vmatprep.subr.bf16.mxu0 0
  %8040 = vmatpush2.bf16.msra.mxu0 0
  %8041 = vmatprep.subr.bf16.mxu0 0
  %8042 = vmatpush2.bf16.msra.mxu0 0
  %8043 = vmatprep.subr.bf16.mxu0 0
  %8044 = vmatpush2.bf16.msra.mxu0 0
  %8045 = vmatprep.subr.bf16.mxu0 0
  %8046 = vmatpush2.bf16.msra.mxu0 0
  %8047 = vmatprep.subr.bf16.mxu0 0
  %8048 = vmatpush2.bf16.msra.mxu0 0
  %8049 = vmatprep.mubr.bf16.mxu0 0
  %8050 = vmatmul.mubr.bf16.gmra.mxu0 %v6896
  %v8051 = vpop.f32.mrf.mxu0
  %v8052 = vadd.f32 0.0, %v8051
  %v8053 = vpop.f32.mrf.mxu0
  %v8054 = vpop.f32.mrf.mxu0
  %v8055 = vadd.f32 0.0, %v8054
  %v8056 = vpop.f32.mrf.mxu0
  %8057 = vmatprep.mubr.bf16.mxu0 0
  %8058 = vmatmul.mubr.bf16.gmra.mxu0 %v6899
  %v8059 = vpop.f32.mrf.mxu0
  %v8060 = vadd.f32 0.0, %v8059
  %v8061 = vpop.f32.mrf.mxu0
  %v8062 = vpop.f32.mrf.mxu0
  %v8063 = vadd.f32 0.0, %v8062
  %v8064 = vpop.f32.mrf.mxu0
  %8065 = vmatprep.mubr.bf16.mxu0 0
  %8066 = vmatmul.mubr.bf16.gmra.mxu0 %v6902
  %v8067 = vpop.f32.mrf.mxu0
  %v8068 = vadd.f32 0.0, %v8067
  %v8069 = vpop.f32.mrf.mxu0
  %v8070 = vpop.f32.mrf.mxu0
  %v8071 = vadd.f32 0.0, %v8070
  %v8072 = vpop.f32.mrf.mxu0
  %8073 = vmatprep.mubr.bf16.mxu0 0
  %8074 = vmatmul.mubr.bf16.gmra.mxu0 %v6905
  %v8075 = vpop.f32.mrf.mxu0
  %v8076 = vadd.f32 0.0, %v8075
  %v8077 = vpop.f32.mrf.mxu0
  %v8078 = vpop.f32.mrf.mxu0
  %v8079 = vadd.f32 0.0, %v8078
  %v8080 = vpop.f32.mrf.mxu0
  %8081 = vmatprep.mubr.bf16.mxu0 0
  %8082 = vmatmul.mubr.bf16.gmra.mxu0 %v6908
  %v8083 = vpop.f32.mrf.mxu0
  %v8084 = vpop.f32.mrf.mxu0
  %v8085 = vpop.f32.mrf.mxu0
  %v8086 = vpop.f32.mrf.mxu0
  %8087 = vmatprep.mubr.bf16.mxu0 0
  %8088 = vmatmul.mubr.bf16.gmra.mxu0 %v6911
  %v8089 = vpop.f32.mrf.mxu0
  %v8090 = vpop.f32.mrf.mxu0
  %v8091 = vpop.f32.mrf.mxu0
  %v8092 = vpop.f32.mrf.mxu0
  %8093 = vmatprep.mubr.bf16.mxu0 0
  %8094 = vmatmul.mubr.bf16.gmra.mxu0 %v6914
  %v8095 = vpop.f32.mrf.mxu0
  %v8096 = vpop.f32.mrf.mxu0
  %v8097 = vpop.f32.mrf.mxu0
  %v8098 = vpop.f32.mrf.mxu0
  %8099 = vmatprep.mubr.bf16.mxu0 0
  %8100 = vmatmul.mubr.bf16.gmra.mxu0 %v6917
  %v8101 = vpop.f32.mrf.mxu0
  %v8102 = vadd.f32 0.0, %v8101
  %v8103 = vpop.f32.mrf.mxu0
  %v8104 = vpop.f32.mrf.mxu0
  %v8105 = vadd.f32 0.0, %v8104
  %v8106 = vpop.f32.mrf.mxu0
  %8107 = vmatprep.mubr.bf16.mxu0 0
  %8108 = vmatmul.mubr.bf16.gmra.mxu0 %v6920
  %v8109 = vpop.f32.mrf.mxu0
  %v8110 = vadd.f32 0.0, %v8109
  %v8111 = vpop.f32.mrf.mxu0
  %v8112 = vpop.f32.mrf.mxu0
  %v8113 = vadd.f32 0.0, %v8112
  %v8114 = vpop.f32.mrf.mxu0
  %8115 = vmatprep.mubr.bf16.mxu0 0
  %8116 = vmatmul.mubr.bf16.gmra.mxu0 %v6923
  %v8117 = vpop.f32.mrf.mxu0
  %v8118 = vadd.f32 0.0, %v8117
  %v8119 = vpop.f32.mrf.mxu0
  %v8120 = vpop.f32.mrf.mxu0
  %v8121 = vadd.f32 0.0, %v8120
  %v8122 = vpop.f32.mrf.mxu0
  %8123 = vmatprep.mubr.bf16.mxu0 0
  %8124 = vmatmul.mubr.bf16.gmra.mxu0 %v6926
  %v8125 = vpop.f32.mrf.mxu0
  %v8126 = vadd.f32 0.0, %v8125
  %v8127 = vpop.f32.mrf.mxu0
  %v8128 = vpop.f32.mrf.mxu0
  %v8129 = vadd.f32 0.0, %v8128
  %v8130 = vpop.f32.mrf.mxu0
  %8131 = vmatprep.mubr.bf16.mxu0 0
  %8132 = vmatmul.mubr.bf16.gmra.mxu0 %v6929
  %v8133 = vpop.f32.mrf.mxu0
  %v8134 = vpop.f32.mrf.mxu0
  %v8135 = vpop.f32.mrf.mxu0
  %v8136 = vpop.f32.mrf.mxu0
  %8137 = vmatprep.mubr.bf16.mxu0 0
  %8138 = vmatmul.mubr.bf16.gmra.mxu0 %v6932
  %v8139 = vpop.f32.mrf.mxu0
  %v8140 = vpop.f32.mrf.mxu0
  %v8141 = vpop.f32.mrf.mxu0
  %v8142 = vpop.f32.mrf.mxu0
  %8143 = vmatprep.mubr.bf16.mxu0 0
  %8144 = vmatmul.mubr.bf16.gmra.mxu0 %v6935
  %v8145 = vpop.f32.mrf.mxu0
  %v8146 = vpop.f32.mrf.mxu0
  %v8147 = vpop.f32.mrf.mxu0
  %v8148 = vpop.f32.mrf.mxu0
  %8149 = vmatprep.mubr.bf16.mxu0 0
  %8150 = vmatmul.mubr.bf16.gmra.mxu0 %v6938
  %v8151 = vpop.f32.mrf.mxu0
  %v8152 = vadd.f32 0.0, %v8151
  %v8153 = vpop.f32.mrf.mxu0
  %v8154 = vpop.f32.mrf.mxu0
  %v8155 = vadd.f32 0.0, %v8154
  %v8156 = vpop.f32.mrf.mxu0
  %8157 = vmatprep.mubr.bf16.mxu0 0
  %8158 = vmatmul.mubr.bf16.gmra.mxu0 %v6941
  %v8159 = vpop.f32.mrf.mxu0
  %v8160 = vadd.f32 0.0, %v8159
  %v8161 = vpop.f32.mrf.mxu0
  %v8162 = vpop.f32.mrf.mxu0
  %v8163 = vadd.f32 0.0, %v8162
  %v8164 = vpop.f32.mrf.mxu0
  %8165 = vmatprep.mubr.bf16.mxu0 0
  %8166 = vmatmul.mubr.bf16.gmra.mxu0 %v6944
  %v8167 = vpop.f32.mrf.mxu0
  %v8168 = vadd.f32 0.0, %v8167
  %v8169 = vpop.f32.mrf.mxu0
  %v8170 = vpop.f32.mrf.mxu0
  %v8171 = vadd.f32 0.0, %v8170
  %v8172 = vpop.f32.mrf.mxu0
  %8173 = vmatprep.mubr.bf16.mxu0 0
  %8174 = vmatmul.mubr.bf16.gmra.mxu0 %v6947
  %v8175 = vpop.f32.mrf.mxu0
  %v8176 = vadd.f32 0.0, %v8175
  %v8177 = vpop.f32.mrf.mxu0
  %v8178 = vpop.f32.mrf.mxu0
  %v8179 = vadd.f32 0.0, %v8178
  %v8180 = vpop.f32.mrf.mxu0
  %8181 = vmatprep.mubr.bf16.mxu0 0
  %8182 = vmatmul.mubr.bf16.gmra.mxu0 %v7439
  %v8183 = vpop.f32.mrf.mxu0
  %v8184 = vpop.f32.mrf.mxu0
  %v8185 = vpop.f32.mrf.mxu0
  %v8186 = vpop.f32.mrf.mxu0
  %8187 = vmatprep.mubr.bf16.mxu0 0
  %8188 = vmatmul.mubr.bf16.gmra.mxu0 %v7721
  %v8189 = vpop.f32.mrf.mxu0
  %v8190 = vpop.f32.mrf.mxu0
  %v8191 = vpop.f32.mrf.mxu0
  %v8192 = vpop.f32.mrf.mxu0
  %8193 = vmatprep.mubr.bf16.mxu0 0
  %8194 = vmatmul.mubr.bf16.gmra.mxu0 %v7724
  %v8195 = vpop.f32.mrf.mxu0
  %v8196 = vpop.f32.mrf.mxu0
  %v8197 = vpop.f32.mrf.mxu0
  %v8198 = vpop.f32.mrf.mxu0
  %8199 = vmatprep.mubr.bf16.mxu0 0
  %8200 = vmatmul.mubr.bf16.gmra.mxu0 %v7727
  %v8201 = vpop.f32.mrf.mxu0
  %v8202 = vadd.f32 0.0, %v8201
  %v8203 = vpop.f32.mrf.mxu0
  %v8204 = vpop.f32.mrf.mxu0
  %v8205 = vadd.f32 0.0, %v8204
  %v8206 = vpop.f32.mrf.mxu0
  %8207 = vmatprep.mubr.bf16.mxu0 0
  %8208 = vmatmul.mubr.bf16.gmra.mxu0 %v7730
  %v8209 = vpop.f32.mrf.mxu0
  %v8210 = vadd.f32 0.0, %v8209
  %v8211 = vpop.f32.mrf.mxu0
  %v8212 = vpop.f32.mrf.mxu0
  %v8213 = vadd.f32 0.0, %v8212
  %v8214 = vpop.f32.mrf.mxu0
  %8215 = vmatprep.mubr.bf16.mxu0 0
  %8216 = vmatmul.mubr.bf16.gmra.mxu0 %v7733
  %v8217 = vpop.f32.mrf.mxu0
  %v8218 = vadd.f32 0.0, %v8217
  %v8219 = vpop.f32.mrf.mxu0
  %v8220 = vpop.f32.mrf.mxu0
  %v8221 = vadd.f32 0.0, %v8220
  %v8222 = vpop.f32.mrf.mxu0
  %8223 = vmatprep.mubr.bf16.mxu0 0
  %8224 = vmatmul.mubr.bf16.gmra.mxu0 %v8015
  %v8225 = vpop.f32.mrf.mxu0
  %v8226 = vadd.f32 0.0, %v8225
  %v8227 = vpop.f32.mrf.mxu0
  %v8228 = vpop.f32.mrf.mxu0
  %v8229 = vadd.f32 0.0, %v8228
  %v8230 = vpop.f32.mrf.mxu0
  %8231 = vdwg.mxu0
  %v8232 = vadd.f32 %v7950, %v8052
  %v8233 = vadd.f32 %v7951, %v8055
  %v8234 = vadd.f32 %v7952, %v8060
  %v8235 = vadd.f32 %v7953, %v8063
  %v8236 = vadd.f32 %v7954, %v8068
  %v8237 = vadd.f32 %v7955, %v8071
  %v8238 = vadd.f32 %v7956, %v8076
  %v8239 = vadd.f32 %v7957, %v8079
  %v8240 = vadd.f32 %v7958, %v8102
  %v8241 = vadd.f32 %v7959, %v8105
  %v8242 = vadd.f32 %v7960, %v8110
  %v8243 = vadd.f32 %v7961, %v8113
  %v8244 = vadd.f32 %v7962, %v8118
  %v8245 = vadd.f32 %v7963, %v8121
  %v8246 = vadd.f32 %v7964, %v8126
  %v8247 = vadd.f32 %v7965, %v8129
  %v8248 = vadd.f32 %v7966, %v8152
  %v8249 = vadd.f32 %v7967, %v8155
  %v8250 = vadd.f32 %v7968, %v8160
  %v8251 = vadd.f32 %v7969, %v8163
  %v8252 = vadd.f32 %v7970, %v8168
  %v8253 = vadd.f32 %v7971, %v8171
  %v8254 = vadd.f32 %v7972, %v8176
  %v8255 = vadd.f32 %v7973, %v8179
  %v8256 = vadd.f32 %v7974, %v8202
  %v8257 = vadd.f32 %v7975, %v8205
  %v8258 = vadd.f32 %v7976, %v8210
  %v8259 = vadd.f32 %v7977, %v8213
  %v8260 = vadd.f32 %v7978, %v8218
  %v8261 = vadd.f32 %v7979, %v8221
  %v8262 = vadd.f32 %v7980, %v8226
  %v8263 = vadd.f32 %v7981, %v8229
  %v8264 = vld [vmem:[%s5 + $0xa0] sm:$0xf]
  %v8265 = vld [vmem:[%s5 + $0xa4] sm:$0xf]
  %v8266 = vld [vmem:[%s5 + $0xa8] sm:$0xf]
  %v8267 = vld [vmem:[%s5 + $0xac] sm:$0xf]
  %v8268 = vld [vmem:[%s5 + $0xb0] sm:$0xf]
  %v8269 = vld [vmem:[%s5 + $0xb4] sm:$0xf]
  %v8270 = vld [vmem:[%s5 + $0xb8] sm:$0xf]
  %v8271 = vld [vmem:[%s5 + $0xbc] sm:$0xf]
  %v8280 = vunpack.c.l.b16 %v8264
  %v8281 = vunpack.c.l.b16 %v8265
  %v8282 = vunpack.c.l.b16 %v8266
  %v8283 = vunpack.c.l.b16 %v8267
  %v8284 = vunpack.c.l.b16 %v8268
  %v8285 = vunpack.c.l.b16 %v8269
  %v8286 = vunpack.c.l.b16 %v8270
  %v8287 = vunpack.c.l.b16 %v8271
  %v8288 = vpack.c.b16 %v8281, %v8280
  %v8289 = vpack.c.b16 %v8283, %v8282
  %v8290 = vpack.c.b16 %v8285, %v8284
  %v8291 = vpack.c.b16 %v8287, %v8286
  %v8297 = vsel %vm6873, %v6825, 0
  %8299 = vmatprep.subr.bf16.mxu0 0
  %8300 = vmatpush1.bf16.msra.mxu0 0
  %8301 = vmatprep.subr.bf16.mxu0 0
  %8302 = vmatpush1.bf16.msra.mxu0 0
  %8303 = vmatprep.subr.bf16.mxu0 0
  %8304 = vmatpush1.bf16.msra.mxu0 0
  %8305 = vmatprep.subr.bf16.mxu0 0
  %8306 = vmatpush1.bf16.msra.mxu0 0
  %8307 = vmatprep.subr.bf16.mxu0 0
  %8308 = vmatpush1.bf16.msra.mxu0 %v8291
  %8309 = vmatprep.subr.bf16.mxu0 0
  %8310 = vmatpush1.bf16.msra.mxu0 %v8290
  %8311 = vmatprep.subr.bf16.mxu0 0
  %8312 = vmatpush1.bf16.msra.mxu0 %v8289
  %8313 = vmatprep.subr.bf16.mxu0 0
  %8314 = vmatpush1.bf16.msra.mxu0 %v8288
  %8315 = vmatprep.subr.bf16.mxu0 0
  %8316 = vmatpush2.bf16.msra.mxu0 0
  %8317 = vmatprep.subr.bf16.mxu0 0
  %8318 = vmatpush2.bf16.msra.mxu0 0
  %8319 = vmatprep.subr.bf16.mxu0 0
  %8320 = vmatpush2.bf16.msra.mxu0 0
  %8321 = vmatprep.subr.bf16.mxu0 0
  %8322 = vmatpush2.bf16.msra.mxu0 0
  %8323 = vmatprep.subr.bf16.mxu0 0
  %8324 = vmatpush2.bf16.msra.mxu0 0
  %8325 = vmatprep.subr.bf16.mxu0 0
  %8326 = vmatpush2.bf16.msra.mxu0 0
  %8327 = vmatprep.subr.bf16.mxu0 0
  %8328 = vmatpush2.bf16.msra.mxu0 0
  %8329 = vmatprep.subr.bf16.mxu0 0
  %8330 = vmatpush2.bf16.msra.mxu0 0
  %8331 = vmatprep.mubr.bf16.mxu0 0
  %8332 = vmatmul.mubr.bf16.gmra.mxu0 %v6899
  %v8333 = vpop.f32.mrf.mxu0
  %v8334 = vadd.f32 0.0, %v8333
  %v8335 = vpop.f32.mrf.mxu0
  %v8336 = vpop.f32.mrf.mxu0
  %v8337 = vadd.f32 0.0, %v8336
  %v8338 = vpop.f32.mrf.mxu0
  %8339 = vmatprep.mubr.bf16.mxu0 0
  %8340 = vmatmul.mubr.bf16.gmra.mxu0 %v6902
  %v8341 = vpop.f32.mrf.mxu0
  %v8342 = vadd.f32 0.0, %v8341
  %v8343 = vpop.f32.mrf.mxu0
  %v8344 = vpop.f32.mrf.mxu0
  %v8345 = vadd.f32 0.0, %v8344
  %v8346 = vpop.f32.mrf.mxu0
  %8347 = vmatprep.mubr.bf16.mxu0 0
  %8348 = vmatmul.mubr.bf16.gmra.mxu0 %v6905
  %v8349 = vpop.f32.mrf.mxu0
  %v8350 = vadd.f32 0.0, %v8349
  %v8351 = vpop.f32.mrf.mxu0
  %v8352 = vpop.f32.mrf.mxu0
  %v8353 = vadd.f32 0.0, %v8352
  %v8354 = vpop.f32.mrf.mxu0
  %8355 = vmatprep.mubr.bf16.mxu0 0
  %8356 = vmatmul.mubr.bf16.gmra.mxu0 %v6908
  %v8357 = vpop.f32.mrf.mxu0
  %v8358 = vadd.f32 0.0, %v8357
  %v8359 = vpop.f32.mrf.mxu0
  %v8360 = vpop.f32.mrf.mxu0
  %v8361 = vadd.f32 0.0, %v8360
  %v8362 = vpop.f32.mrf.mxu0
  %8363 = vmatprep.mubr.bf16.mxu0 0
  %8364 = vmatmul.mubr.bf16.gmra.mxu0 %v6911
  %v8365 = vpop.f32.mrf.mxu0
  %v8366 = vpop.f32.mrf.mxu0
  %v8367 = vpop.f32.mrf.mxu0
  %v8368 = vpop.f32.mrf.mxu0
  %8369 = vmatprep.mubr.bf16.mxu0 0
  %8370 = vmatmul.mubr.bf16.gmra.mxu0 %v6914
  %v8371 = vpop.f32.mrf.mxu0
  %v8372 = vpop.f32.mrf.mxu0
  %v8373 = vpop.f32.mrf.mxu0
  %v8374 = vpop.f32.mrf.mxu0
  %8375 = vmatprep.mubr.bf16.mxu0 0
  %8376 = vmatmul.mubr.bf16.gmra.mxu0 %v6917
  %v8377 = vpop.f32.mrf.mxu0
  %v8378 = vpop.f32.mrf.mxu0
  %v8379 = vpop.f32.mrf.mxu0
  %v8380 = vpop.f32.mrf.mxu0
  %8381 = vmatprep.mubr.bf16.mxu0 0
  %8382 = vmatmul.mubr.bf16.gmra.mxu0 %v6920
  %v8383 = vpop.f32.mrf.mxu0
  %v8384 = vadd.f32 0.0, %v8383
  %v8385 = vpop.f32.mrf.mxu0
  %v8386 = vpop.f32.mrf.mxu0
  %v8387 = vadd.f32 0.0, %v8386
  %v8388 = vpop.f32.mrf.mxu0
  %8389 = vmatprep.mubr.bf16.mxu0 0
  %8390 = vmatmul.mubr.bf16.gmra.mxu0 %v6923
  %v8391 = vpop.f32.mrf.mxu0
  %v8392 = vadd.f32 0.0, %v8391
  %v8393 = vpop.f32.mrf.mxu0
  %v8394 = vpop.f32.mrf.mxu0
  %v8395 = vadd.f32 0.0, %v8394
  %v8396 = vpop.f32.mrf.mxu0
  %8397 = vmatprep.mubr.bf16.mxu0 0
  %8398 = vmatmul.mubr.bf16.gmra.mxu0 %v6926
  %v8399 = vpop.f32.mrf.mxu0
  %v8400 = vadd.f32 0.0, %v8399
  %v8401 = vpop.f32.mrf.mxu0
  %v8402 = vpop.f32.mrf.mxu0
  %v8403 = vadd.f32 0.0, %v8402
  %v8404 = vpop.f32.mrf.mxu0
  %8405 = vmatprep.mubr.bf16.mxu0 0
  %8406 = vmatmul.mubr.bf16.gmra.mxu0 %v6929
  %v8407 = vpop.f32.mrf.mxu0
  %v8408 = vadd.f32 0.0, %v8407
  %v8409 = vpop.f32.mrf.mxu0
  %v8410 = vpop.f32.mrf.mxu0
  %v8411 = vadd.f32 0.0, %v8410
  %v8412 = vpop.f32.mrf.mxu0
  %8413 = vmatprep.mubr.bf16.mxu0 0
  %8414 = vmatmul.mubr.bf16.gmra.mxu0 %v6932
  %v8415 = vpop.f32.mrf.mxu0
  %v8416 = vpop.f32.mrf.mxu0
  %v8417 = vpop.f32.mrf.mxu0
  %v8418 = vpop.f32.mrf.mxu0
  %8419 = vmatprep.mubr.bf16.mxu0 0
  %8420 = vmatmul.mubr.bf16.gmra.mxu0 %v6935
  %v8421 = vpop.f32.mrf.mxu0
  %v8422 = vpop.f32.mrf.mxu0
  %v8423 = vpop.f32.mrf.mxu0
  %v8424 = vpop.f32.mrf.mxu0
  %8425 = vmatprep.mubr.bf16.mxu0 0
  %8426 = vmatmul.mubr.bf16.gmra.mxu0 %v6938
  %v8427 = vpop.f32.mrf.mxu0
  %v8428 = vpop.f32.mrf.mxu0
  %v8429 = vpop.f32.mrf.mxu0
  %v8430 = vpop.f32.mrf.mxu0
  %8431 = vmatprep.mubr.bf16.mxu0 0
  %8432 = vmatmul.mubr.bf16.gmra.mxu0 %v6941
  %v8433 = vpop.f32.mrf.mxu0
  %v8434 = vadd.f32 0.0, %v8433
  %v8435 = vpop.f32.mrf.mxu0
  %v8436 = vpop.f32.mrf.mxu0
  %v8437 = vadd.f32 0.0, %v8436
  %v8438 = vpop.f32.mrf.mxu0
  %8439 = vmatprep.mubr.bf16.mxu0 0
  %8440 = vmatmul.mubr.bf16.gmra.mxu0 %v6944
  %v8441 = vpop.f32.mrf.mxu0
  %v8442 = vadd.f32 0.0, %v8441
  %v8443 = vpop.f32.mrf.mxu0
  %v8444 = vpop.f32.mrf.mxu0
  %v8445 = vadd.f32 0.0, %v8444
  %v8446 = vpop.f32.mrf.mxu0
  %8447 = vmatprep.mubr.bf16.mxu0 0
  %8448 = vmatmul.mubr.bf16.gmra.mxu0 %v6947
  %v8449 = vpop.f32.mrf.mxu0
  %v8450 = vadd.f32 0.0, %v8449
  %v8451 = vpop.f32.mrf.mxu0
  %v8452 = vpop.f32.mrf.mxu0
  %v8453 = vadd.f32 0.0, %v8452
  %v8454 = vpop.f32.mrf.mxu0
  %8455 = vmatprep.mubr.bf16.mxu0 0
  %8456 = vmatmul.mubr.bf16.gmra.mxu0 %v7439
  %v8457 = vpop.f32.mrf.mxu0
  %v8458 = vadd.f32 0.0, %v8457
  %v8459 = vpop.f32.mrf.mxu0
  %v8460 = vpop.f32.mrf.mxu0
  %v8461 = vadd.f32 0.0, %v8460
  %v8462 = vpop.f32.mrf.mxu0
  %8463 = vmatprep.mubr.bf16.mxu0 0
  %8464 = vmatmul.mubr.bf16.gmra.mxu0 %v7721
  %v8465 = vpop.f32.mrf.mxu0
  %v8466 = vpop.f32.mrf.mxu0
  %v8467 = vpop.f32.mrf.mxu0
  %v8468 = vpop.f32.mrf.mxu0
  %8469 = vmatprep.mubr.bf16.mxu0 0
  %8470 = vmatmul.mubr.bf16.gmra.mxu0 %v7724
  %v8471 = vpop.f32.mrf.mxu0
  %v8472 = vpop.f32.mrf.mxu0
  %v8473 = vpop.f32.mrf.mxu0
  %v8474 = vpop.f32.mrf.mxu0
  %8475 = vmatprep.mubr.bf16.mxu0 0
  %8476 = vmatmul.mubr.bf16.gmra.mxu0 %v7727
  %v8477 = vpop.f32.mrf.mxu0
  %v8478 = vpop.f32.mrf.mxu0
  %v8479 = vpop.f32.mrf.mxu0
  %v8480 = vpop.f32.mrf.mxu0
  %8481 = vmatprep.mubr.bf16.mxu0 0
  %8482 = vmatmul.mubr.bf16.gmra.mxu0 %v7730
  %v8483 = vpop.f32.mrf.mxu0
  %v8484 = vadd.f32 0.0, %v8483
  %v8485 = vpop.f32.mrf.mxu0
  %v8486 = vpop.f32.mrf.mxu0
  %v8487 = vadd.f32 0.0, %v8486
  %v8488 = vpop.f32.mrf.mxu0
  %8489 = vmatprep.mubr.bf16.mxu0 0
  %8490 = vmatmul.mubr.bf16.gmra.mxu0 %v7733
  %v8491 = vpop.f32.mrf.mxu0
  %v8492 = vadd.f32 0.0, %v8491
  %v8493 = vpop.f32.mrf.mxu0
  %v8494 = vpop.f32.mrf.mxu0
  %v8495 = vadd.f32 0.0, %v8494
  %v8496 = vpop.f32.mrf.mxu0
  %8497 = vmatprep.mubr.bf16.mxu0 0
  %8498 = vmatmul.mubr.bf16.gmra.mxu0 %v8015
  %v8499 = vpop.f32.mrf.mxu0
  %v8500 = vadd.f32 0.0, %v8499
  %v8501 = vpop.f32.mrf.mxu0
  %v8502 = vpop.f32.mrf.mxu0
  %v8503 = vadd.f32 0.0, %v8502
  %v8504 = vpop.f32.mrf.mxu0
  %8505 = vmatprep.mubr.bf16.mxu0 0
  %8506 = vmatmul.mubr.bf16.gmra.mxu0 %v8297
  %v8507 = vpop.f32.mrf.mxu0
  %v8508 = vadd.f32 0.0, %v8507
  %v8509 = vpop.f32.mrf.mxu0
  %v8510 = vpop.f32.mrf.mxu0
  %v8511 = vadd.f32 0.0, %v8510
  %v8512 = vpop.f32.mrf.mxu0
  %8513 = vdwg.mxu0
  %v8514 = vadd.f32 %v8232, %v8334
  %v8515 = vadd.f32 %v8233, %v8337
  %v8516 = vadd.f32 %v8234, %v8342
  %v8517 = vadd.f32 %v8235, %v8345
  %v8518 = vadd.f32 %v8236, %v8350
  %v8519 = vadd.f32 %v8237, %v8353
  %v8520 = vadd.f32 %v8238, %v8358
  %v8521 = vadd.f32 %v8239, %v8361
  %v8522 = vadd.f32 %v8240, %v8384
  %v8523 = vadd.f32 %v8241, %v8387
  %v8524 = vadd.f32 %v8242, %v8392
  %v8525 = vadd.f32 %v8243, %v8395
  %v8526 = vadd.f32 %v8244, %v8400
  %v8527 = vadd.f32 %v8245, %v8403
  %v8528 = vadd.f32 %v8246, %v8408
  %v8529 = vadd.f32 %v8247, %v8411
  %v8530 = vadd.f32 %v8248, %v8434
  %v8531 = vadd.f32 %v8249, %v8437
  %v8532 = vadd.f32 %v8250, %v8442
  %v8533 = vadd.f32 %v8251, %v8445
  %v8534 = vadd.f32 %v8252, %v8450
  %v8535 = vadd.f32 %v8253, %v8453
  %v8536 = vadd.f32 %v8254, %v8458
  %v8537 = vadd.f32 %v8255, %v8461
  %v8538 = vadd.f32 %v8256, %v8484
  %v8539 = vadd.f32 %v8257, %v8487
  %v8540 = vadd.f32 %v8258, %v8492
  %v8541 = vadd.f32 %v8259, %v8495
  %v8542 = vadd.f32 %v8260, %v8500
  %v8543 = vadd.f32 %v8261, %v8503
  %v8544 = vadd.f32 %v8262, %v8508
  %v8545 = vadd.f32 %v8263, %v8511
  %v8546 = vld [vmem:[%s5 + $0xc0] sm:$0xf]
  %v8547 = vld [vmem:[%s5 + $0xc4] sm:$0xf]
  %v8548 = vld [vmem:[%s5 + $0xc8] sm:$0xf]
  %v8549 = vld [vmem:[%s5 + $0xcc] sm:$0xf]
  %v8550 = vld [vmem:[%s5 + $0xd0] sm:$0xf]
  %v8551 = vld [vmem:[%s5 + $0xd4] sm:$0xf]
  %v8552 = vld [vmem:[%s5 + $0xd8] sm:$0xf]
  %v8553 = vld [vmem:[%s5 + $0xdc] sm:$0xf]
  %v8562 = vunpack.c.l.b16 %v8546
  %v8563 = vunpack.c.l.b16 %v8547
  %v8564 = vunpack.c.l.b16 %v8548
  %v8565 = vunpack.c.l.b16 %v8549
  %v8566 = vunpack.c.l.b16 %v8550
  %v8567 = vunpack.c.l.b16 %v8551
  %v8568 = vunpack.c.l.b16 %v8552
  %v8569 = vunpack.c.l.b16 %v8553
  %v8570 = vpack.c.b16 %v8563, %v8562
  %v8571 = vpack.c.b16 %v8565, %v8564
  %v8572 = vpack.c.b16 %v8567, %v8566
  %v8573 = vpack.c.b16 %v8569, %v8568
  %v8579 = vsel %vm6873, %v6826, 0
  %v8582 = vsel %vm6873, %v6827, 0
  %v8585 = vsel %vm6873, %v6828, 0
  %v8588 = vsel %vm6873, %v6829, 0
  %v8591 = vsel %vm6873, %v6830, 0
  %8593 = vmatprep.subr.bf16.mxu0 0
  %8594 = vmatpush1.bf16.msra.mxu0 0
  %8595 = vmatprep.subr.bf16.mxu0 0
  %8596 = vmatpush1.bf16.msra.mxu0 0
  %8597 = vmatprep.subr.bf16.mxu0 0
  %8598 = vmatpush1.bf16.msra.mxu0 0
  %8599 = vmatprep.subr.bf16.mxu0 0
  %8600 = vmatpush1.bf16.msra.mxu0 0
  %8601 = vmatprep.subr.bf16.mxu0 0
  %8602 = vmatpush1.bf16.msra.mxu0 %v8573
  %8603 = vmatprep.subr.bf16.mxu0 0
  %8604 = vmatpush1.bf16.msra.mxu0 %v8572
  %8605 = vmatprep.subr.bf16.mxu0 0
  %8606 = vmatpush1.bf16.msra.mxu0 %v8571
  %8607 = vmatprep.subr.bf16.mxu0 0
  %8608 = vmatpush1.bf16.msra.mxu0 %v8570
  %8609 = vmatprep.subr.bf16.mxu0 0
  %8610 = vmatpush2.bf16.msra.mxu0 0
  %8611 = vmatprep.subr.bf16.mxu0 0
  %8612 = vmatpush2.bf16.msra.mxu0 0
  %8613 = vmatprep.subr.bf16.mxu0 0
  %8614 = vmatpush2.bf16.msra.mxu0 0
  %8615 = vmatprep.subr.bf16.mxu0 0
  %8616 = vmatpush2.bf16.msra.mxu0 0
  %8617 = vmatprep.subr.bf16.mxu0 0
  %8618 = vmatpush2.bf16.msra.mxu0 0
  %8619 = vmatprep.subr.bf16.mxu0 0
  %8620 = vmatpush2.bf16.msra.mxu0 0
  %8621 = vmatprep.subr.bf16.mxu0 0
  %8622 = vmatpush2.bf16.msra.mxu0 0
  %8623 = vmatprep.subr.bf16.mxu0 0
  %8624 = vmatpush2.bf16.msra.mxu0 0
  %8625 = vmatprep.mubr.bf16.mxu0 0
  %8626 = vmatmul.mubr.bf16.gmra.mxu0 %v6914
  %v8627 = vpop.f32.mrf.mxu0
  %v8628 = vadd.f32 0.0, %v8627
  %v8629 = vpop.f32.mrf.mxu0
  %v8630 = vpop.f32.mrf.mxu0
  %v8631 = vadd.f32 0.0, %v8630
  %v8632 = vpop.f32.mrf.mxu0
  %8633 = vmatprep.mubr.bf16.mxu0 0
  %8634 = vmatmul.mubr.bf16.gmra.mxu0 %v6917
  %v8635 = vpop.f32.mrf.mxu0
  %v8636 = vadd.f32 0.0, %v8635
  %v8637 = vpop.f32.mrf.mxu0
  %v8638 = vpop.f32.mrf.mxu0
  %v8639 = vadd.f32 0.0, %v8638
  %v8640 = vpop.f32.mrf.mxu0
  %8641 = vmatprep.mubr.bf16.mxu0 0
  %8642 = vmatmul.mubr.bf16.gmra.mxu0 %v6920
  %v8643 = vpop.f32.mrf.mxu0
  %v8644 = vadd.f32 0.0, %v8643
  %v8645 = vpop.f32.mrf.mxu0
  %v8646 = vpop.f32.mrf.mxu0
  %v8647 = vadd.f32 0.0, %v8646
  %v8648 = vpop.f32.mrf.mxu0
  %8649 = vmatprep.mubr.bf16.mxu0 0
  %8650 = vmatmul.mubr.bf16.gmra.mxu0 %v6923
  %v8651 = vpop.f32.mrf.mxu0
  %v8652 = vadd.f32 0.0, %v8651
  %v8653 = vpop.f32.mrf.mxu0
  %v8654 = vpop.f32.mrf.mxu0
  %v8655 = vadd.f32 0.0, %v8654
  %v8656 = vpop.f32.mrf.mxu0
  %8657 = vmatprep.mubr.bf16.mxu0 0
  %8658 = vmatmul.mubr.bf16.gmra.mxu0 %v6926
  %v8659 = vpop.f32.mrf.mxu0
  %v8660 = vpop.f32.mrf.mxu0
  %v8661 = vpop.f32.mrf.mxu0
  %v8662 = vpop.f32.mrf.mxu0
  %8663 = vmatprep.mubr.bf16.mxu0 0
  %8664 = vmatmul.mubr.bf16.gmra.mxu0 %v6929
  %v8665 = vpop.f32.mrf.mxu0
  %v8666 = vpop.f32.mrf.mxu0
  %v8667 = vpop.f32.mrf.mxu0
  %v8668 = vpop.f32.mrf.mxu0
  %8669 = vmatprep.mubr.bf16.mxu0 0
  %8670 = vmatmul.mubr.bf16.gmra.mxu0 %v6932
  %v8671 = vpop.f32.mrf.mxu0
  %v8672 = vpop.f32.mrf.mxu0
  %v8673 = vpop.f32.mrf.mxu0
  %v8674 = vpop.f32.mrf.mxu0
  %8675 = vmatprep.mubr.bf16.mxu0 0
  %8676 = vmatmul.mubr.bf16.gmra.mxu0 %v6935
  %v8677 = vpop.f32.mrf.mxu0
  %v8678 = vadd.f32 0.0, %v8677
  %v8679 = vpop.f32.mrf.mxu0
  %v8680 = vpop.f32.mrf.mxu0
  %v8681 = vadd.f32 0.0, %v8680
  %v8682 = vpop.f32.mrf.mxu0
  %8683 = vmatprep.mubr.bf16.mxu0 0
  %8684 = vmatmul.mubr.bf16.gmra.mxu0 %v6938
  %v8685 = vpop.f32.mrf.mxu0
  %v8686 = vadd.f32 0.0, %v8685
  %v8687 = vpop.f32.mrf.mxu0
  %v8688 = vpop.f32.mrf.mxu0
  %v8689 = vadd.f32 0.0, %v8688
  %v8690 = vpop.f32.mrf.mxu0
  %8691 = vmatprep.mubr.bf16.mxu0 0
  %8692 = vmatmul.mubr.bf16.gmra.mxu0 %v6941
  %v8693 = vpop.f32.mrf.mxu0
  %v8694 = vadd.f32 0.0, %v8693
  %v8695 = vpop.f32.mrf.mxu0
  %v8696 = vpop.f32.mrf.mxu0
  %v8697 = vadd.f32 0.0, %v8696
  %v8698 = vpop.f32.mrf.mxu0
  %8699 = vmatprep.mubr.bf16.mxu0 0
  %8700 = vmatmul.mubr.bf16.gmra.mxu0 %v6944
  %v8701 = vpop.f32.mrf.mxu0
  %v8702 = vadd.f32 0.0, %v8701
  %v8703 = vpop.f32.mrf.mxu0
  %v8704 = vpop.f32.mrf.mxu0
  %v8705 = vadd.f32 0.0, %v8704
  %v8706 = vpop.f32.mrf.mxu0
  %8707 = vmatprep.mubr.bf16.mxu0 0
  %8708 = vmatmul.mubr.bf16.gmra.mxu0 %v6947
  %v8709 = vpop.f32.mrf.mxu0
  %v8710 = vpop.f32.mrf.mxu0
  %v8711 = vpop.f32.mrf.mxu0
  %v8712 = vpop.f32.mrf.mxu0
  %8713 = vmatprep.mubr.bf16.mxu0 0
  %8714 = vmatmul.mubr.bf16.gmra.mxu0 %v7439
  %v8715 = vpop.f32.mrf.mxu0
  %v8716 = vpop.f32.mrf.mxu0
  %v8717 = vpop.f32.mrf.mxu0
  %v8718 = vpop.f32.mrf.mxu0
  %8719 = vmatprep.mubr.bf16.mxu0 0
  %8720 = vmatmul.mubr.bf16.gmra.mxu0 %v7721
  %v8721 = vpop.f32.mrf.mxu0
  %v8722 = vpop.f32.mrf.mxu0
  %v8723 = vpop.f32.mrf.mxu0
  %v8724 = vpop.f32.mrf.mxu0
  %8725 = vmatprep.mubr.bf16.mxu0 0
  %8726 = vmatmul.mubr.bf16.gmra.mxu0 %v7724
  %v8727 = vpop.f32.mrf.mxu0
  %v8728 = vadd.f32 0.0, %v8727
  %v8729 = vpop.f32.mrf.mxu0
  %v8730 = vpop.f32.mrf.mxu0
  %v8731 = vadd.f32 0.0, %v8730
  %v8732 = vpop.f32.mrf.mxu0
  %8733 = vmatprep.mubr.bf16.mxu0 0
  %8734 = vmatmul.mubr.bf16.gmra.mxu0 %v7727
  %v8735 = vpop.f32.mrf.mxu0
  %v8736 = vadd.f32 0.0, %v8735
  %v8737 = vpop.f32.mrf.mxu0
  %v8738 = vpop.f32.mrf.mxu0
  %v8739 = vadd.f32 0.0, %v8738
  %v8740 = vpop.f32.mrf.mxu0
  %8741 = vmatprep.mubr.bf16.mxu0 0
  %8742 = vmatmul.mubr.bf16.gmra.mxu0 %v7730
  %v8743 = vpop.f32.mrf.mxu0
  %v8744 = vadd.f32 0.0, %v8743
  %v8745 = vpop.f32.mrf.mxu0
  %v8746 = vpop.f32.mrf.mxu0
  %v8747 = vadd.f32 0.0, %v8746
  %v8748 = vpop.f32.mrf.mxu0
  %8749 = vmatprep.mubr.bf16.mxu0 0
  %8750 = vmatmul.mubr.bf16.gmra.mxu0 %v7733
  %v8751 = vpop.f32.mrf.mxu0
  %v8752 = vadd.f32 0.0, %v8751
  %v8753 = vpop.f32.mrf.mxu0
  %v8754 = vpop.f32.mrf.mxu0
  %v8755 = vadd.f32 0.0, %v8754
  %v8756 = vpop.f32.mrf.mxu0
  %8757 = vmatprep.mubr.bf16.mxu0 0
  %8758 = vmatmul.mubr.bf16.gmra.mxu0 %v8015
  %v8759 = vpop.f32.mrf.mxu0
  %v8760 = vpop.f32.mrf.mxu0
  %v8761 = vpop.f32.mrf.mxu0
  %v8762 = vpop.f32.mrf.mxu0
  %8763 = vmatprep.mubr.bf16.mxu0 0
  %8764 = vmatmul.mubr.bf16.gmra.mxu0 %v8297
  %v8765 = vpop.f32.mrf.mxu0
  %v8766 = vpop.f32.mrf.mxu0
  %v8767 = vpop.f32.mrf.mxu0
  %v8768 = vpop.f32.mrf.mxu0
  %8769 = vmatprep.mubr.bf16.mxu0 0
  %8770 = vmatmul.mubr.bf16.gmra.mxu0 %v8579
  %v8771 = vpop.f32.mrf.mxu0
  %v8772 = vpop.f32.mrf.mxu0
  %v8773 = vpop.f32.mrf.mxu0
  %v8774 = vpop.f32.mrf.mxu0
  %8775 = vmatprep.mubr.bf16.mxu0 0
  %8776 = vmatmul.mubr.bf16.gmra.mxu0 %v8582
  %v8777 = vpop.f32.mrf.mxu0
  %v8778 = vadd.f32 0.0, %v8777
  %v8779 = vpop.f32.mrf.mxu0
  %v8780 = vpop.f32.mrf.mxu0
  %v8781 = vadd.f32 0.0, %v8780
  %v8782 = vpop.f32.mrf.mxu0
  %8783 = vmatprep.mubr.bf16.mxu0 0
  %8784 = vmatmul.mubr.bf16.gmra.mxu0 %v8585
  %v8785 = vpop.f32.mrf.mxu0
  %v8786 = vadd.f32 0.0, %v8785
  %v8787 = vpop.f32.mrf.mxu0
  %v8788 = vpop.f32.mrf.mxu0
  %v8789 = vadd.f32 0.0, %v8788
  %v8790 = vpop.f32.mrf.mxu0
  %8791 = vmatprep.mubr.bf16.mxu0 0
  %8792 = vmatmul.mubr.bf16.gmra.mxu0 %v8588
  %v8793 = vpop.f32.mrf.mxu0
  %v8794 = vadd.f32 0.0, %v8793
  %v8795 = vpop.f32.mrf.mxu0
  %v8796 = vpop.f32.mrf.mxu0
  %v8797 = vadd.f32 0.0, %v8796
  %v8798 = vpop.f32.mrf.mxu0
  %8799 = vmatprep.mubr.bf16.mxu0 0
  %8800 = vmatmul.mubr.bf16.gmra.mxu0 %v8591
  %v8801 = vpop.f32.mrf.mxu0
  %v8802 = vadd.f32 0.0, %v8801
  %v8803 = vpop.f32.mrf.mxu0
  %v8804 = vpop.f32.mrf.mxu0
  %v8805 = vadd.f32 0.0, %v8804
  %v8806 = vpop.f32.mrf.mxu0
  %8807 = vdwg.mxu0
  %v8808 = vadd.f32 %v8514, %v8628
  %v8809 = vadd.f32 %v8515, %v8631
  %v8810 = vadd.f32 %v8516, %v8636
  %v8811 = vadd.f32 %v8517, %v8639
  %v8812 = vadd.f32 %v8518, %v8644
  %v8813 = vadd.f32 %v8519, %v8647
  %v8814 = vadd.f32 %v8520, %v8652
  %v8815 = vadd.f32 %v8521, %v8655
  %v8816 = vadd.f32 %v8522, %v8678
  %v8817 = vadd.f32 %v8523, %v8681
  %v8818 = vadd.f32 %v8524, %v8686
  %v8819 = vadd.f32 %v8525, %v8689
  %v8820 = vadd.f32 %v8526, %v8694
  %v8821 = vadd.f32 %v8527, %v8697
  %v8822 = vadd.f32 %v8528, %v8702
  %v8823 = vadd.f32 %v8529, %v8705
  %v8824 = vadd.f32 %v8530, %v8728
  %v8825 = vadd.f32 %v8531, %v8731
  %v8826 = vadd.f32 %v8532, %v8736
  %v8827 = vadd.f32 %v8533, %v8739
  %v8828 = vadd.f32 %v8534, %v8744
  %v8829 = vadd.f32 %v8535, %v8747
  %v8830 = vadd.f32 %v8536, %v8752
  %v8831 = vadd.f32 %v8537, %v8755
  %v8832 = vadd.f32 %v8538, %v8778
  %v8833 = vadd.f32 %v8539, %v8781
  %v8834 = vadd.f32 %v8540, %v8786
  %v8835 = vadd.f32 %v8541, %v8789
  %v8836 = vadd.f32 %v8542, %v8794
  %v8837 = vadd.f32 %v8543, %v8797
  %v8838 = vadd.f32 %v8544, %v8802
  %v8839 = vadd.f32 %v8545, %v8805
  %v8840 = vld [vmem:[%s5 + $0xe0] sm:$0xf]
  %v8841 = vld [vmem:[%s5 + $0xe4] sm:$0xf]
  %v8842 = vld [vmem:[%s5 + $0xe8] sm:$0xf]
  %v8843 = vld [vmem:[%s5 + $0xec] sm:$0xf]
  %v8844 = vld [vmem:[%s5 + $0xf0] sm:$0xf]
  %v8845 = vld [vmem:[%s5 + $0xf4] sm:$0xf]
  %v8846 = vld [vmem:[%s5 + $0xf8] sm:$0xf]
  %v8847 = vld [vmem:[%s5 + $0xfc] sm:$0xf]
  %v8856 = vunpack.c.l.b16 %v8840
  %v8857 = vunpack.c.l.b16 %v8841
  %v8858 = vunpack.c.l.b16 %v8842
  %v8859 = vunpack.c.l.b16 %v8843
  %v8860 = vunpack.c.l.b16 %v8844
  %v8861 = vunpack.c.l.b16 %v8845
  %v8862 = vunpack.c.l.b16 %v8846
  %v8863 = vunpack.c.l.b16 %v8847
  %v8864 = vpack.c.b16 %v8857, %v8856
  %v8865 = vpack.c.b16 %v8859, %v8858
  %v8866 = vpack.c.b16 %v8861, %v8860
  %v8867 = vpack.c.b16 %v8863, %v8862
  %v8873 = vsel %vm6873, %v6831, 0
  %8875 = vmatprep.subr.bf16.mxu0 0
  %8876 = vmatpush1.bf16.msra.mxu0 0
  %8877 = vmatprep.subr.bf16.mxu0 0
  %8878 = vmatpush1.bf16.msra.mxu0 0
  %8879 = vmatprep.subr.bf16.mxu0 0
  %8880 = vmatpush1.bf16.msra.mxu0 0
  %8881 = vmatprep.subr.bf16.mxu0 0
  %8882 = vmatpush1.bf16.msra.mxu0 0
  %8883 = vmatprep.subr.bf16.mxu0 0
  %8884 = vmatpush1.bf16.msra.mxu0 %v8867
  %8885 = vmatprep.subr.bf16.mxu0 0
  %8886 = vmatpush1.bf16.msra.mxu0 %v8866
  %8887 = vmatprep.subr.bf16.mxu0 0
  %8888 = vmatpush1.bf16.msra.mxu0 %v8865
  %8889 = vmatprep.subr.bf16.mxu0 0
  %8890 = vmatpush1.bf16.msra.mxu0 %v8864
  %8891 = vmatprep.subr.bf16.mxu0 0
  %8892 = vmatpush2.bf16.msra.mxu0 0
  %8893 = vmatprep.subr.bf16.mxu0 0
  %8894 = vmatpush2.bf16.msra.mxu0 0
  %8895 = vmatprep.subr.bf16.mxu0 0
  %8896 = vmatpush2.bf16.msra.mxu0 0
  %8897 = vmatprep.subr.bf16.mxu0 0
  %8898 = vmatpush2.bf16.msra.mxu0 0
  %8899 = vmatprep.subr.bf16.mxu0 0
  %8900 = vmatpush2.bf16.msra.mxu0 0
  %8901 = vmatprep.subr.bf16.mxu0 0
  %8902 = vmatpush2.bf16.msra.mxu0 0
  %8903 = vmatprep.subr.bf16.mxu0 0
  %8904 = vmatpush2.bf16.msra.mxu0 0
  %8905 = vmatprep.subr.bf16.mxu0 0
  %8906 = vmatpush2.bf16.msra.mxu0 0
  %8907 = vmatprep.mubr.bf16.mxu0 0
  %8908 = vmatmul.mubr.bf16.gmra.mxu0 %v6917
  %v8909 = vpop.f32.mrf.mxu0
  %v8910 = vadd.f32 0.0, %v8909
  %v8911 = vpop.f32.mrf.mxu0
  %v8912 = vpop.f32.mrf.mxu0
  %v8913 = vadd.f32 0.0, %v8912
  %v8914 = vpop.f32.mrf.mxu0
  %8915 = vmatprep.mubr.bf16.mxu0 0
  %8916 = vmatmul.mubr.bf16.gmra.mxu0 %v6920
  %v8917 = vpop.f32.mrf.mxu0
  %v8918 = vadd.f32 0.0, %v8917
  %v8919 = vpop.f32.mrf.mxu0
  %v8920 = vpop.f32.mrf.mxu0
  %v8921 = vadd.f32 0.0, %v8920
  %v8922 = vpop.f32.mrf.mxu0
  %8923 = vmatprep.mubr.bf16.mxu0 0
  %8924 = vmatmul.mubr.bf16.gmra.mxu0 %v6923
  %v8925 = vpop.f32.mrf.mxu0
  %v8926 = vadd.f32 0.0, %v8925
  %v8927 = vpop.f32.mrf.mxu0
  %v8928 = vpop.f32.mrf.mxu0
  %v8929 = vadd.f32 0.0, %v8928
  %v8930 = vpop.f32.mrf.mxu0
  %8931 = vmatprep.mubr.bf16.mxu0 0
  %8932 = vmatmul.mubr.bf16.gmra.mxu0 %v6926
  %v8933 = vpop.f32.mrf.mxu0
  %v8934 = vadd.f32 0.0, %v8933
  %v8935 = vpop.f32.mrf.mxu0
  %v8936 = vpop.f32.mrf.mxu0
  %v8937 = vadd.f32 0.0, %v8936
  %v8938 = vpop.f32.mrf.mxu0
  %8939 = vmatprep.mubr.bf16.mxu0 0
  %8940 = vmatmul.mubr.bf16.gmra.mxu0 %v6929
  %v8941 = vpop.f32.mrf.mxu0
  %v8942 = vpop.f32.mrf.mxu0
  %v8943 = vpop.f32.mrf.mxu0
  %v8944 = vpop.f32.mrf.mxu0
  %8945 = vmatprep.mubr.bf16.mxu0 0
  %8946 = vmatmul.mubr.bf16.gmra.mxu0 %v6932
  %v8947 = vpop.f32.mrf.mxu0
  %v8948 = vpop.f32.mrf.mxu0
  %v8949 = vpop.f32.mrf.mxu0
  %v8950 = vpop.f32.mrf.mxu0
  %8951 = vmatprep.mubr.bf16.mxu0 0
  %8952 = vmatmul.mubr.bf16.gmra.mxu0 %v6935
  %v8953 = vpop.f32.mrf.mxu0
  %v8954 = vpop.f32.mrf.mxu0
  %v8955 = vpop.f32.mrf.mxu0
  %v8956 = vpop.f32.mrf.mxu0
  %8957 = vmatprep.mubr.bf16.mxu0 0
  %8958 = vmatmul.mubr.bf16.gmra.mxu0 %v6938
  %v8959 = vpop.f32.mrf.mxu0
  %v8960 = vadd.f32 0.0, %v8959
  %v8961 = vpop.f32.mrf.mxu0
  %v8962 = vpop.f32.mrf.mxu0
  %v8963 = vadd.f32 0.0, %v8962
  %v8964 = vpop.f32.mrf.mxu0
  %8965 = vmatprep.mubr.bf16.mxu0 0
  %8966 = vmatmul.mubr.bf16.gmra.mxu0 %v6941
  %v8967 = vpop.f32.mrf.mxu0
  %v8968 = vadd.f32 0.0, %v8967
  %v8969 = vpop.f32.mrf.mxu0
  %v8970 = vpop.f32.mrf.mxu0
  %v8971 = vadd.f32 0.0, %v8970
  %v8972 = vpop.f32.mrf.mxu0
  %8973 = vmatprep.mubr.bf16.mxu0 0
  %8974 = vmatmul.mubr.bf16.gmra.mxu0 %v6944
  %v8975 = vpop.f32.mrf.mxu0
  %v8976 = vadd.f32 0.0, %v8975
  %v8977 = vpop.f32.mrf.mxu0
  %v8978 = vpop.f32.mrf.mxu0
  %v8979 = vadd.f32 0.0, %v8978
  %v8980 = vpop.f32.mrf.mxu0
  %8981 = vmatprep.mubr.bf16.mxu0 0
  %8982 = vmatmul.mubr.bf16.gmra.mxu0 %v6947
  %v8983 = vpop.f32.mrf.mxu0
  %v8984 = vadd.f32 0.0, %v8983
  %v8985 = vpop.f32.mrf.mxu0
  %v8986 = vpop.f32.mrf.mxu0
  %v8987 = vadd.f32 0.0, %v8986
  %v8988 = vpop.f32.mrf.mxu0
  %8989 = vmatprep.mubr.bf16.mxu0 0
  %8990 = vmatmul.mubr.bf16.gmra.mxu0 %v7439
  %v8991 = vpop.f32.mrf.mxu0
  %v8992 = vpop.f32.mrf.mxu0
  %v8993 = vpop.f32.mrf.mxu0
  %v8994 = vpop.f32.mrf.mxu0
  %8995 = vmatprep.mubr.bf16.mxu0 0
  %8996 = vmatmul.mubr.bf16.gmra.mxu0 %v7721
  %v8997 = vpop.f32.mrf.mxu0
  %v8998 = vpop.f32.mrf.mxu0
  %v8999 = vpop.f32.mrf.mxu0
  %v9000 = vpop.f32.mrf.mxu0
  %9001 = vmatprep.mubr.bf16.mxu0 0
  %9002 = vmatmul.mubr.bf16.gmra.mxu0 %v7724
  %v9003 = vpop.f32.mrf.mxu0
  %v9004 = vpop.f32.mrf.mxu0
  %v9005 = vpop.f32.mrf.mxu0
  %v9006 = vpop.f32.mrf.mxu0
  %9007 = vmatprep.mubr.bf16.mxu0 0
  %9008 = vmatmul.mubr.bf16.gmra.mxu0 %v7727
  %v9009 = vpop.f32.mrf.mxu0
  %v9010 = vadd.f32 0.0, %v9009
  %v9011 = vpop.f32.mrf.mxu0
  %v9012 = vpop.f32.mrf.mxu0
  %v9013 = vadd.f32 0.0, %v9012
  %v9014 = vpop.f32.mrf.mxu0
  %9015 = vmatprep.mubr.bf16.mxu0 0
  %9016 = vmatmul.mubr.bf16.gmra.mxu0 %v7730
  %v9017 = vpop.f32.mrf.mxu0
  %v9018 = vadd.f32 0.0, %v9017
  %v9019 = vpop.f32.mrf.mxu0
  %v9020 = vpop.f32.mrf.mxu0
  %v9021 = vadd.f32 0.0, %v9020
  %v9022 = vpop.f32.mrf.mxu0
  %9023 = vmatprep.mubr.bf16.mxu0 0
  %9024 = vmatmul.mubr.bf16.gmra.mxu0 %v7733
  %v9025 = vpop.f32.mrf.mxu0
  %v9026 = vadd.f32 0.0, %v9025
  %v9027 = vpop.f32.mrf.mxu0
  %v9028 = vpop.f32.mrf.mxu0
  %v9029 = vadd.f32 0.0, %v9028
  %v9030 = vpop.f32.mrf.mxu0
  %9031 = vmatprep.mubr.bf16.mxu0 0
  %9032 = vmatmul.mubr.bf16.gmra.mxu0 %v8015
  %v9033 = vpop.f32.mrf.mxu0
  %v9034 = vadd.f32 0.0, %v9033
  %v9035 = vpop.f32.mrf.mxu0
  %v9036 = vpop.f32.mrf.mxu0
  %v9037 = vadd.f32 0.0, %v9036
  %v9038 = vpop.f32.mrf.mxu0
  %9039 = vmatprep.mubr.bf16.mxu0 0
  %9040 = vmatmul.mubr.bf16.gmra.mxu0 %v8297
  %v9041 = vpop.f32.mrf.mxu0
  %v9042 = vpop.f32.mrf.mxu0
  %v9043 = vpop.f32.mrf.mxu0
  %v9044 = vpop.f32.mrf.mxu0
  %9045 = vmatprep.mubr.bf16.mxu0 0
  %9046 = vmatmul.mubr.bf16.gmra.mxu0 %v8579
  %v9047 = vpop.f32.mrf.mxu0
  %v9048 = vpop.f32.mrf.mxu0
  %v9049 = vpop.f32.mrf.mxu0
  %v9050 = vpop.f32.mrf.mxu0
  %9051 = vmatprep.mubr.bf16.mxu0 0
  %9052 = vmatmul.mubr.bf16.gmra.mxu0 %v8582
  %v9053 = vpop.f32.mrf.mxu0
  %v9054 = vpop.f32.mrf.mxu0
  %v9055 = vpop.f32.mrf.mxu0
  %v9056 = vpop.f32.mrf.mxu0
  %9057 = vmatprep.mubr.bf16.mxu0 0
  %9058 = vmatmul.mubr.bf16.gmra.mxu0 %v8585
  %v9059 = vpop.f32.mrf.mxu0
  %v9060 = vadd.f32 0.0, %v9059
  %v9061 = vpop.f32.mrf.mxu0
  %v9062 = vpop.f32.mrf.mxu0
  %v9063 = vadd.f32 0.0, %v9062
  %v9064 = vpop.f32.mrf.mxu0
  %9065 = vmatprep.mubr.bf16.mxu0 0
  %9066 = vmatmul.mubr.bf16.gmra.mxu0 %v8588
  %v9067 = vpop.f32.mrf.mxu0
  %v9068 = vadd.f32 0.0, %v9067
  %v9069 = vpop.f32.mrf.mxu0
  %v9070 = vpop.f32.mrf.mxu0
  %v9071 = vadd.f32 0.0, %v9070
  %v9072 = vpop.f32.mrf.mxu0
  %9073 = vmatprep.mubr.bf16.mxu0 0
  %9074 = vmatmul.mubr.bf16.gmra.mxu0 %v8591
  %v9075 = vpop.f32.mrf.mxu0
  %v9076 = vadd.f32 0.0, %v9075
  %v9077 = vpop.f32.mrf.mxu0
  %v9078 = vpop.f32.mrf.mxu0
  %v9079 = vadd.f32 0.0, %v9078
  %v9080 = vpop.f32.mrf.mxu0
  %9081 = vmatprep.mubr.bf16.mxu0 0
  %9082 = vmatmul.mubr.bf16.gmra.mxu0 %v8873
  %v9083 = vpop.f32.mrf.mxu0
  %v9084 = vadd.f32 0.0, %v9083
  %v9085 = vpop.f32.mrf.mxu0
  %v9086 = vpop.f32.mrf.mxu0
  %v9087 = vadd.f32 0.0, %v9086
  %v9088 = vpop.f32.mrf.mxu0
  %9089 = vdwg.mxu0
  %v9090 = vadd.f32 %v8808, %v8910
  %v9091 = vadd.f32 %v8809, %v8913
  %v9092 = vadd.f32 %v8810, %v8918
  %v9093 = vadd.f32 %v8811, %v8921
  %v9094 = vadd.f32 %v8812, %v8926
  %v9095 = vadd.f32 %v8813, %v8929
  %v9096 = vadd.f32 %v8814, %v8934
  %v9097 = vadd.f32 %v8815, %v8937
  %v9098 = vadd.f32 %v8816, %v8960
  %v9099 = vadd.f32 %v8817, %v8963
  %v9100 = vadd.f32 %v8818, %v8968
  %v9101 = vadd.f32 %v8819, %v8971
  %v9102 = vadd.f32 %v8820, %v8976
  %v9103 = vadd.f32 %v8821, %v8979
  %v9104 = vadd.f32 %v8822, %v8984
  %v9105 = vadd.f32 %v8823, %v8987
  %v9106 = vadd.f32 %v8824, %v9010
  %v9107 = vadd.f32 %v8825, %v9013
  %v9108 = vadd.f32 %v8826, %v9018
  %v9109 = vadd.f32 %v8827, %v9021
  %v9110 = vadd.f32 %v8828, %v9026
  %v9111 = vadd.f32 %v8829, %v9029
  %v9112 = vadd.f32 %v8830, %v9034
  %v9113 = vadd.f32 %v8831, %v9037
  %v9114 = vadd.f32 %v8832, %v9060
  %v9115 = vadd.f32 %v8833, %v9063
  %v9116 = vadd.f32 %v8834, %v9068
  %v9117 = vadd.f32 %v8835, %v9071
  %v9118 = vadd.f32 %v8836, %v9076
  %v9119 = vadd.f32 %v8837, %v9079
  %v9120 = vadd.f32 %v8838, %v9084
  %v9121 = vadd.f32 %v8839, %v9087
  %v9122 = vld [vmem:[%s5 + $0x100] sm:$0xf]
  %v9123 = vld [vmem:[%s5 + $0x104] sm:$0xf]
  %v9124 = vld [vmem:[%s5 + $0x108] sm:$0xf]
  %v9125 = vld [vmem:[%s5 + $0x10c] sm:$0xf]
  %v9126 = vld [vmem:[%s5 + $0x110] sm:$0xf]
  %v9127 = vld [vmem:[%s5 + $0x114] sm:$0xf]
  %v9128 = vld [vmem:[%s5 + $0x118] sm:$0xf]
  %v9129 = vld [vmem:[%s5 + $0x11c] sm:$0xf]
  %v9138 = vunpack.c.l.b16 %v9122
  %v9139 = vunpack.c.l.b16 %v9123
  %v9140 = vunpack.c.l.b16 %v9124
  %v9141 = vunpack.c.l.b16 %v9125
  %v9142 = vunpack.c.l.b16 %v9126
  %v9143 = vunpack.c.l.b16 %v9127
  %v9144 = vunpack.c.l.b16 %v9128
  %v9145 = vunpack.c.l.b16 %v9129
  %v9146 = vpack.c.b16 %v9139, %v9138
  %v9147 = vpack.c.b16 %v9141, %v9140
  %v9148 = vpack.c.b16 %v9143, %v9142
  %v9149 = vpack.c.b16 %v9145, %v9144
  %v9155 = vsel %vm6873, %v6832, 0
  %9157 = vmatprep.subr.bf16.mxu0 0
  %9158 = vmatpush1.bf16.msra.mxu0 0
  %9159 = vmatprep.subr.bf16.mxu0 0
  %9160 = vmatpush1.bf16.msra.mxu0 0
  %9161 = vmatprep.subr.bf16.mxu0 0
  %9162 = vmatpush1.bf16.msra.mxu0 0
  %9163 = vmatprep.subr.bf16.mxu0 0
  %9164 = vmatpush1.bf16.msra.mxu0 0
  %9165 = vmatprep.subr.bf16.mxu0 0
  %9166 = vmatpush1.bf16.msra.mxu0 %v9149
  %9167 = vmatprep.subr.bf16.mxu0 0
  %9168 = vmatpush1.bf16.msra.mxu0 %v9148
  %9169 = vmatprep.subr.bf16.mxu0 0
  %9170 = vmatpush1.bf16.msra.mxu0 %v9147
  %9171 = vmatprep.subr.bf16.mxu0 0
  %9172 = vmatpush1.bf16.msra.mxu0 %v9146
  %9173 = vmatprep.subr.bf16.mxu0 0
  %9174 = vmatpush2.bf16.msra.mxu0 0
  %9175 = vmatprep.subr.bf16.mxu0 0
  %9176 = vmatpush2.bf16.msra.mxu0 0
  %9177 = vmatprep.subr.bf16.mxu0 0
  %9178 = vmatpush2.bf16.msra.mxu0 0
  %9179 = vmatprep.subr.bf16.mxu0 0
  %9180 = vmatpush2.bf16.msra.mxu0 0
  %9181 = vmatprep.subr.bf16.mxu0 0
  %9182 = vmatpush2.bf16.msra.mxu0 0
  %9183 = vmatprep.subr.bf16.mxu0 0
  %9184 = vmatpush2.bf16.msra.mxu0 0
  %9185 = vmatprep.subr.bf16.mxu0 0
  %9186 = vmatpush2.bf16.msra.mxu0 0
  %9187 = vmatprep.subr.bf16.mxu0 0
  %9188 = vmatpush2.bf16.msra.mxu0 0
  %9189 = vmatprep.mubr.bf16.mxu0 0
  %9190 = vmatmul.mubr.bf16.gmra.mxu0 %v6920
  %v9191 = vpop.f32.mrf.mxu0
  %v9192 = vadd.f32 0.0, %v9191
  %v9193 = vpop.f32.mrf.mxu0
  %v9194 = vpop.f32.mrf.mxu0
  %v9195 = vadd.f32 0.0, %v9194
  %v9196 = vpop.f32.mrf.mxu0
  %9197 = vmatprep.mubr.bf16.mxu0 0
  %9198 = vmatmul.mubr.bf16.gmra.mxu0 %v6923
  %v9199 = vpop.f32.mrf.mxu0
  %v9200 = vadd.f32 0.0, %v9199
  %v9201 = vpop.f32.mrf.mxu0
  %v9202 = vpop.f32.mrf.mxu0
  %v9203 = vadd.f32 0.0, %v9202
  %v9204 = vpop.f32.mrf.mxu0
  %9205 = vmatprep.mubr.bf16.mxu0 0
  %9206 = vmatmul.mubr.bf16.gmra.mxu0 %v6926
  %v9207 = vpop.f32.mrf.mxu0
  %v9208 = vadd.f32 0.0, %v9207
  %v9209 = vpop.f32.mrf.mxu0
  %v9210 = vpop.f32.mrf.mxu0
  %v9211 = vadd.f32 0.0, %v9210
  %v9212 = vpop.f32.mrf.mxu0
  %9213 = vmatprep.mubr.bf16.mxu0 0
  %9214 = vmatmul.mubr.bf16.gmra.mxu0 %v6929
  %v9215 = vpop.f32.mrf.mxu0
  %v9216 = vadd.f32 0.0, %v9215
  %v9217 = vpop.f32.mrf.mxu0
  %v9218 = vpop.f32.mrf.mxu0
  %v9219 = vadd.f32 0.0, %v9218
  %v9220 = vpop.f32.mrf.mxu0
  %9221 = vmatprep.mubr.bf16.mxu0 0
  %9222 = vmatmul.mubr.bf16.gmra.mxu0 %v6932
  %v9223 = vpop.f32.mrf.mxu0
  %v9224 = vpop.f32.mrf.mxu0
  %v9225 = vpop.f32.mrf.mxu0
  %v9226 = vpop.f32.mrf.mxu0
  %9227 = vmatprep.mubr.bf16.mxu0 0
  %9228 = vmatmul.mubr.bf16.gmra.mxu0 %v6935
  %v9229 = vpop.f32.mrf.mxu0
  %v9230 = vpop.f32.mrf.mxu0
  %v9231 = vpop.f32.mrf.mxu0
  %v9232 = vpop.f32.mrf.mxu0
  %9233 = vmatprep.mubr.bf16.mxu0 0
  %9234 = vmatmul.mubr.bf16.gmra.mxu0 %v6938
  %v9235 = vpop.f32.mrf.mxu0
  %v9236 = vpop.f32.mrf.mxu0
  %v9237 = vpop.f32.mrf.mxu0
  %v9238 = vpop.f32.mrf.mxu0
  %9239 = vmatprep.mubr.bf16.mxu0 0
  %9240 = vmatmul.mubr.bf16.gmra.mxu0 %v6941
  %v9241 = vpop.f32.mrf.mxu0
  %v9242 = vadd.f32 0.0, %v9241
  %v9243 = vpop.f32.mrf.mxu0
  %v9244 = vpop.f32.mrf.mxu0
  %v9245 = vadd.f32 0.0, %v9244
  %v9246 = vpop.f32.mrf.mxu0
  %9247 = vmatprep.mubr.bf16.mxu0 0
  %9248 = vmatmul.mubr.bf16.gmra.mxu0 %v6944
  %v9249 = vpop.f32.mrf.mxu0
  %v9250 = vadd.f32 0.0, %v9249
  %v9251 = vpop.f32.mrf.mxu0
  %v9252 = vpop.f32.mrf.mxu0
  %v9253 = vadd.f32 0.0, %v9252
  %v9254 = vpop.f32.mrf.mxu0
  %9255 = vmatprep.mubr.bf16.mxu0 0
  %9256 = vmatmul.mubr.bf16.gmra.mxu0 %v6947
  %v9257 = vpop.f32.mrf.mxu0
  %v9258 = vadd.f32 0.0, %v9257
  %v9259 = vpop.f32.mrf.mxu0
  %v9260 = vpop.f32.mrf.mxu0
  %v9261 = vadd.f32 0.0, %v9260
  %v9262 = vpop.f32.mrf.mxu0
  %9263 = vmatprep.mubr.bf16.mxu0 0
  %9264 = vmatmul.mubr.bf16.gmra.mxu0 %v7439
  %v9265 = vpop.f32.mrf.mxu0
  %v9266 = vadd.f32 0.0, %v9265
  %v9267 = vpop.f32.mrf.mxu0
  %v9268 = vpop.f32.mrf.mxu0
  %v9269 = vadd.f32 0.0, %v9268
  %v9270 = vpop.f32.mrf.mxu0
  %9271 = vmatprep.mubr.bf16.mxu0 0
  %9272 = vmatmul.mubr.bf16.gmra.mxu0 %v7721
  %v9273 = vpop.f32.mrf.mxu0
  %v9274 = vpop.f32.mrf.mxu0
  %v9275 = vpop.f32.mrf.mxu0
  %v9276 = vpop.f32.mrf.mxu0
  %9277 = vmatprep.mubr.bf16.mxu0 0
  %9278 = vmatmul.mubr.bf16.gmra.mxu0 %v7724
  %v9279 = vpop.f32.mrf.mxu0
  %v9280 = vpop.f32.mrf.mxu0
  %v9281 = vpop.f32.mrf.mxu0
  %v9282 = vpop.f32.mrf.mxu0
  %9283 = vmatprep.mubr.bf16.mxu0 0
  %9284 = vmatmul.mubr.bf16.gmra.mxu0 %v7727
  %v9285 = vpop.f32.mrf.mxu0
  %v9286 = vpop.f32.mrf.mxu0
  %v9287 = vpop.f32.mrf.mxu0
  %v9288 = vpop.f32.mrf.mxu0
  %9289 = vmatprep.mubr.bf16.mxu0 0
  %9290 = vmatmul.mubr.bf16.gmra.mxu0 %v7730
  %v9291 = vpop.f32.mrf.mxu0
  %v9292 = vadd.f32 0.0, %v9291
  %v9293 = vpop.f32.mrf.mxu0
  %v9294 = vpop.f32.mrf.mxu0
  %v9295 = vadd.f32 0.0, %v9294
  %v9296 = vpop.f32.mrf.mxu0
  %9297 = vmatprep.mubr.bf16.mxu0 0
  %9298 = vmatmul.mubr.bf16.gmra.mxu0 %v7733
  %v9299 = vpop.f32.mrf.mxu0
  %v9300 = vadd.f32 0.0, %v9299
  %v9301 = vpop.f32.mrf.mxu0
  %v9302 = vpop.f32.mrf.mxu0
  %v9303 = vadd.f32 0.0, %v9302
  %v9304 = vpop.f32.mrf.mxu0
  %9305 = vmatprep.mubr.bf16.mxu0 0
  %9306 = vmatmul.mubr.bf16.gmra.mxu0 %v8015
  %v9307 = vpop.f32.mrf.mxu0
  %v9308 = vadd.f32 0.0, %v9307
  %v9309 = vpop.f32.mrf.mxu0
  %v9310 = vpop.f32.mrf.mxu0
  %v9311 = vadd.f32 0.0, %v9310
  %v9312 = vpop.f32.mrf.mxu0
  %9313 = vmatprep.mubr.bf16.mxu0 0
  %9314 = vmatmul.mubr.bf16.gmra.mxu0 %v8297
  %v9315 = vpop.f32.mrf.mxu0
  %v9316 = vadd.f32 0.0, %v9315
  %v9317 = vpop.f32.mrf.mxu0
  %v9318 = vpop.f32.mrf.mxu0
  %v9319 = vadd.f32 0.0, %v9318
  %v9320 = vpop.f32.mrf.mxu0
  %9321 = vmatprep.mubr.bf16.mxu0 0
  %9322 = vmatmul.mubr.bf16.gmra.mxu0 %v8579
  %v9323 = vpop.f32.mrf.mxu0
  %v9324 = vpop.f32.mrf.mxu0
  %v9325 = vpop.f32.mrf.mxu0
  %v9326 = vpop.f32.mrf.mxu0
  %9327 = vmatprep.mubr.bf16.mxu0 0
  %9328 = vmatmul.mubr.bf16.gmra.mxu0 %v8582
  %v9329 = vpop.f32.mrf.mxu0
  %v9330 = vpop.f32.mrf.mxu0
  %v9331 = vpop.f32.mrf.mxu0
  %v9332 = vpop.f32.mrf.mxu0
  %9333 = vmatprep.mubr.bf16.mxu0 0
  %9334 = vmatmul.mubr.bf16.gmra.mxu0 %v8585
  %v9335 = vpop.f32.mrf.mxu0
  %v9336 = vpop.f32.mrf.mxu0
  %v9337 = vpop.f32.mrf.mxu0
  %v9338 = vpop.f32.mrf.mxu0
  %9339 = vmatprep.mubr.bf16.mxu0 0
  %9340 = vmatmul.mubr.bf16.gmra.mxu0 %v8588
  %v9341 = vpop.f32.mrf.mxu0
  %v9342 = vadd.f32 0.0, %v9341
  %v9343 = vpop.f32.mrf.mxu0
  %v9344 = vpop.f32.mrf.mxu0
  %v9345 = vadd.f32 0.0, %v9344
  %v9346 = vpop.f32.mrf.mxu0
  %9347 = vmatprep.mubr.bf16.mxu0 0
  %9348 = vmatmul.mubr.bf16.gmra.mxu0 %v8591
  %v9349 = vpop.f32.mrf.mxu0
  %v9350 = vadd.f32 0.0, %v9349
  %v9351 = vpop.f32.mrf.mxu0
  %v9352 = vpop.f32.mrf.mxu0
  %v9353 = vadd.f32 0.0, %v9352
  %v9354 = vpop.f32.mrf.mxu0
  %9355 = vmatprep.mubr.bf16.mxu0 0
  %9356 = vmatmul.mubr.bf16.gmra.mxu0 %v8873
  %v9357 = vpop.f32.mrf.mxu0
  %v9358 = vadd.f32 0.0, %v9357
  %v9359 = vpop.f32.mrf.mxu0
  %v9360 = vpop.f32.mrf.mxu0
  %v9361 = vadd.f32 0.0, %v9360
  %v9362 = vpop.f32.mrf.mxu0
  %9363 = vmatprep.mubr.bf16.mxu0 0
  %9364 = vmatmul.mubr.bf16.gmra.mxu0 %v9155
  %v9365 = vpop.f32.mrf.mxu0
  %v9366 = vadd.f32 0.0, %v9365
  %v9367 = vpop.f32.mrf.mxu0
  %v9368 = vpop.f32.mrf.mxu0
  %v9369 = vadd.f32 0.0, %v9368
  %v9370 = vpop.f32.mrf.mxu0
  %9371 = vdwg.mxu0
  %v9372 = vadd.f32 %v9090, %v9192
  %v9373 = vadd.f32 %v9091, %v9195
  %v9374 = vadd.f32 %v9092, %v9200
  %v9375 = vadd.f32 %v9093, %v9203
  %v9376 = vadd.f32 %v9094, %v9208
  %v9377 = vadd.f32 %v9095, %v9211
  %v9378 = vadd.f32 %v9096, %v9216
  %v9379 = vadd.f32 %v9097, %v9219
  %v9380 = vadd.f32 %v9098, %v9242
  %v9381 = vadd.f32 %v9099, %v9245
  %v9382 = vadd.f32 %v9100, %v9250
  %v9383 = vadd.f32 %v9101, %v9253
  %v9384 = vadd.f32 %v9102, %v9258
  %v9385 = vadd.f32 %v9103, %v9261
  %v9386 = vadd.f32 %v9104, %v9266
  %v9387 = vadd.f32 %v9105, %v9269
  %v9388 = vadd.f32 %v9106, %v9292
  %v9389 = vadd.f32 %v9107, %v9295
  %v9390 = vadd.f32 %v9108, %v9300
  %v9391 = vadd.f32 %v9109, %v9303
  %v9392 = vadd.f32 %v9110, %v9308
  %v9393 = vadd.f32 %v9111, %v9311
  %v9394 = vadd.f32 %v9112, %v9316
  %v9395 = vadd.f32 %v9113, %v9319
  %v9396 = vadd.f32 %v9114, %v9342
  %v9397 = vadd.f32 %v9115, %v9345
  %v9398 = vadd.f32 %v9116, %v9350
  %v9399 = vadd.f32 %v9117, %v9353
  %v9400 = vadd.f32 %v9118, %v9358
  %v9401 = vadd.f32 %v9119, %v9361
  %v9402 = vadd.f32 %v9120, %v9366
  %v9403 = vadd.f32 %v9121, %v9369
  %v9404 = vld [vmem:[%s6] sm:$0x1]
  %v9406 = vlaneseq
  %v9407 = vshrl.u32 %v9406, 7
  %v9408 = vsub.s32 0, %v9407
  %v9409 = vrot.slane %v9404, %v9408
  %v9411 = vadd.f32 %v9372, %v9409
  %v9412 = vadd.f32 %v9373, %v9409
  %v9413 = vadd.f32 %v9374, %v9409
  %v9414 = vadd.f32 %v9375, %v9409
  %v9415 = vadd.f32 %v9376, %v9409
  %v9416 = vadd.f32 %v9377, %v9409
  %v9417 = vadd.f32 %v9378, %v9409
  %v9418 = vadd.f32 %v9379, %v9409
  %v9419 = vadd.f32 %v9380, %v9409
  %v9420 = vadd.f32 %v9381, %v9409
  %v9421 = vadd.f32 %v9382, %v9409
  %v9422 = vadd.f32 %v9383, %v9409
  %v9423 = vadd.f32 %v9384, %v9409
  %v9424 = vadd.f32 %v9385, %v9409
  %v9425 = vadd.f32 %v9386, %v9409
  %v9426 = vadd.f32 %v9387, %v9409
  %v9427 = vadd.f32 %v9388, %v9409
  %v9428 = vadd.f32 %v9389, %v9409
  %v9429 = vadd.f32 %v9390, %v9409
  %v9430 = vadd.f32 %v9391, %v9409
  %v9431 = vadd.f32 %v9392, %v9409
  %v9432 = vadd.f32 %v9393, %v9409
  %v9433 = vadd.f32 %v9394, %v9409
  %v9434 = vadd.f32 %v9395, %v9409
  %v9435 = vadd.f32 %v9396, %v9409
  %v9436 = vadd.f32 %v9397, %v9409
  %v9437 = vadd.f32 %v9398, %v9409
  %v9438 = vadd.f32 %v9399, %v9409
  %v9439 = vadd.f32 %v9400, %v9409
  %v9440 = vadd.f32 %v9401, %v9409
  %v9441 = vadd.f32 %v9402, %v9409
  %v9442 = vadd.f32 %v9403, %v9409
  %v9443 = vmax.f32 %v9411, 0.0
  %v9444 = vmax.f32 %v9412, 0.0
  %v9445 = vmax.f32 %v9413, 0.0
  %v9446 = vmax.f32 %v9414, 0.0
  %v9447 = vmax.f32 %v9415, 0.0
  %v9448 = vmax.f32 %v9416, 0.0
  %v9449 = vmax.f32 %v9417, 0.0
  %v9450 = vmax.f32 %v9418, 0.0
  %v9451 = vmax.f32 %v9419, 0.0
  %v9452 = vmax.f32 %v9420, 0.0
  %v9453 = vmax.f32 %v9421, 0.0
  %v9454 = vmax.f32 %v9422, 0.0
  %v9455 = vmax.f32 %v9423, 0.0
  %v9456 = vmax.f32 %v9424, 0.0
  %v9457 = vmax.f32 %v9425, 0.0
  %v9458 = vmax.f32 %v9426, 0.0
  %v9459 = vmax.f32 %v9427, 0.0
  %v9460 = vmax.f32 %v9428, 0.0
  %v9461 = vmax.f32 %v9429, 0.0
  %v9462 = vmax.f32 %v9430, 0.0
  %v9463 = vmax.f32 %v9431, 0.0
  %v9464 = vmax.f32 %v9432, 0.0
  %v9465 = vmax.f32 %v9433, 0.0
  %v9466 = vmax.f32 %v9434, 0.0
  %v9467 = vmax.f32 %v9435, 0.0
  %v9468 = vmax.f32 %v9436, 0.0
  %v9469 = vmax.f32 %v9437, 0.0
  %v9470 = vmax.f32 %v9438, 0.0
  %v9471 = vmax.f32 %v9439, 0.0
  %v9472 = vmax.f32 %v9440, 0.0
  %v9473 = vmax.f32 %v9441, 0.0
  %v9474 = vmax.f32 %v9442, 0.0
  %v9475 = vpack.c.bf16 %v9444, %v9443
  %v9476 = vpack.c.bf16 %v9446, %v9445
  %v9477 = vpack.c.bf16 %v9448, %v9447
  %v9478 = vpack.c.bf16 %v9450, %v9449
  %v9479 = vpack.c.bf16 %v9452, %v9451
  %v9480 = vpack.c.bf16 %v9454, %v9453
  %v9481 = vpack.c.bf16 %v9456, %v9455
  %v9482 = vpack.c.bf16 %v9458, %v9457
  %v9483 = vpack.c.bf16 %v9460, %v9459
  %v9484 = vpack.c.bf16 %v9462, %v9461
  %v9485 = vpack.c.bf16 %v9464, %v9463
  %v9486 = vpack.c.bf16 %v9466, %v9465
  %v9487 = vpack.c.bf16 %v9468, %v9467
  %v9488 = vpack.c.bf16 %v9470, %v9469
  %v9489 = vpack.c.bf16 %v9472, %v9471
  %v9490 = vpack.c.bf16 %v9474, %v9473
  %v9491 = vld [vmem:[%s7] sm:$0xff]
  %v9492 = vld [vmem:[%s7 + $0x8] sm:$0xff]
  %v9493 = vld [vmem:[%s7 + $0x10] sm:$0xff]
  %v9494 = vld [vmem:[%s7 + $0x18] sm:$0xff]
  %v9495 = vld [vmem:[%s7 + $0x20] sm:$0xff]
  %v9496 = vld [vmem:[%s7 + $0x28] sm:$0xff]
  %v9497 = vld [vmem:[%s7 + $0x30] sm:$0xff]
  %v9498 = vld [vmem:[%s7 + $0x38] sm:$0xff]
  %v9499 = vld [vmem:[%s7 + $0x40] sm:$0xff]
  %v9500 = vld [vmem:[%s7 + $0x48] sm:$0xff]
  %v9501 = vld [vmem:[%s7 + $0x50] sm:$0xff]
  %v9502 = vld [vmem:[%s7 + $0x58] sm:$0xff]
  %v9503 = vld [vmem:[%s7 + $0x60] sm:$0xff]
  %v9504 = vld [vmem:[%s7 + $0x68] sm:$0xff]
  %v9505 = vld [vmem:[%s7 + $0x70] sm:$0xff]
  %v9506 = vld [vmem:[%s7 + $0x78] sm:$0xff]
  %v9507 = vld [vmem:[%s7 + $0x80] sm:$0xff]
  %v9508 = vld [vmem:[%s7 + $0x88] sm:$0xff]
  %v9509 = vld [vmem:[%s7 + $0x90] sm:$0xff]
  %v9510 = vld [vmem:[%s7 + $0x98] sm:$0xff]
  %v9511 = vld [vmem:[%s7 + $0xa0] sm:$0xff]
  %v9512 = vld [vmem:[%s7 + $0xa8] sm:$0xff]
  %v9513 = vld [vmem:[%s7 + $0xb0] sm:$0xff]
  %v9514 = vld [vmem:[%s7 + $0xb8] sm:$0xff]
  %v9515 = vld [vmem:[%s7 + $0xc0] sm:$0xff]
  %v9516 = vld [vmem:[%s7 + $0xc8] sm:$0xff]
  %v9517 = vld [vmem:[%s7 + $0xd0] sm:$0xff]
  %v9518 = vld [vmem:[%s7 + $0xd8] sm:$0xff]
  %v9519 = vld [vmem:[%s7 + $0xe0] sm:$0xff]
  %v9520 = vld [vmem:[%s7 + $0xe8] sm:$0xff]
  %v9521 = vld [vmem:[%s7 + $0xf0] sm:$0xff]
  %v9522 = vld [vmem:[%s7 + $0xf8] sm:$0xff]
  %v9539 = vunpack.c.l.b16 %v9507
  %v9540 = vunpack.c.h.b16 %v9507
  %v9541 = vunpack.c.l.b16 %v9508
  %v9542 = vunpack.c.h.b16 %v9508
  %v9543 = vunpack.c.l.b16 %v9509
  %v9544 = vunpack.c.h.b16 %v9509
  %v9545 = vunpack.c.l.b16 %v9510
  %v9546 = vunpack.c.h.b16 %v9510
  %v9547 = vunpack.c.l.b16 %v9511
  %v9548 = vunpack.c.h.b16 %v9511
  %v9549 = vunpack.c.l.b16 %v9512
  %v9550 = vunpack.c.h.b16 %v9512
  %v9551 = vunpack.c.l.b16 %v9513
  %v9552 = vunpack.c.h.b16 %v9513
  %v9553 = vunpack.c.l.b16 %v9514
  %v9554 = vunpack.c.h.b16 %v9514
  %v9555 = vunpack.c.l.b16 %v9515
  %v9556 = vunpack.c.h.b16 %v9515
  %v9557 = vunpack.c.l.b16 %v9516
  %v9558 = vunpack.c.h.b16 %v9516
  %v9559 = vunpack.c.l.b16 %v9517
  %v9560 = vunpack.c.h.b16 %v9517
  %v9561 = vunpack.c.l.b16 %v9518
  %v9562 = vunpack.c.h.b16 %v9518
  %v9563 = vunpack.c.l.b16 %v9519
  %v9564 = vunpack.c.h.b16 %v9519
  %v9565 = vunpack.c.l.b16 %v9520
  %v9566 = vunpack.c.h.b16 %v9520
  %v9567 = vunpack.c.l.b16 %v9521
  %v9568 = vunpack.c.h.b16 %v9521
  %v9569 = vunpack.c.l.b16 %v9522
  %v9570 = vunpack.c.h.b16 %v9522
  %v9571 = vpack.c.b16 %v9543, %v9539
  %v9572 = vpack.c.b16 %v9544, %v9540
  %v9573 = vpack.c.b16 %v9545, %v9541
  %v9574 = vpack.c.b16 %v9546, %v9542
  %v9575 = vpack.c.b16 %v9551, %v9547
  %v9576 = vpack.c.b16 %v9552, %v9548
  %v9577 = vpack.c.b16 %v9553, %v9549
  %v9578 = vpack.c.b16 %v9554, %v9550
  %v9579 = vpack.c.b16 %v9559, %v9555
  %v9580 = vpack.c.b16 %v9560, %v9556
  %v9581 = vpack.c.b16 %v9561, %v9557
  %v9582 = vpack.c.b16 %v9562, %v9558
  %v9583 = vpack.c.b16 %v9567, %v9563
  %v9584 = vpack.c.b16 %v9568, %v9564
  %v9585 = vpack.c.b16 %v9569, %v9565
  %v9586 = vpack.c.b16 %v9570, %v9566
  %v9604 = vsel %vm6873, %v9476, 0
  %9606 = vmatprep.subr.bf16.mxu0 0
  %9607 = vmatpush1.bf16.msra.mxu0 0
  %9608 = vmatprep.subr.bf16.mxu0 0
  %9609 = vmatpush1.bf16.msra.mxu0 0
  %9610 = vmatprep.subr.bf16.mxu0 0
  %9611 = vmatpush1.bf16.msra.mxu0 0
  %9612 = vmatprep.subr.bf16.mxu0 0
  %9613 = vmatpush1.bf16.msra.mxu0 0
  %9614 = vmatprep.subr.bf16.mxu0 %v9584
  %9615 = vmatpush1.bf16.msra.mxu0 %v9583
  %9616 = vmatprep.subr.bf16.mxu0 %v9580
  %9617 = vmatpush1.bf16.msra.mxu0 %v9579
  %9618 = vmatprep.subr.bf16.mxu0 %v9576
  %9619 = vmatpush1.bf16.msra.mxu0 %v9575
  %9620 = vmatprep.subr.bf16.mxu0 %v9572
  %9621 = vmatpush1.bf16.msra.mxu0 %v9571
  %9622 = vmatprep.subr.bf16.mxu0 0
  %9623 = vmatpush2.bf16.msra.mxu0 0
  %9624 = vmatprep.subr.bf16.mxu0 0
  %9625 = vmatpush2.bf16.msra.mxu0 0
  %9626 = vmatprep.subr.bf16.mxu0 0
  %9627 = vmatpush2.bf16.msra.mxu0 0
  %9628 = vmatprep.subr.bf16.mxu0 0
  %9629 = vmatpush2.bf16.msra.mxu0 0
  %9630 = vmatprep.subr.bf16.mxu0 0
  %9631 = vmatpush2.bf16.msra.mxu0 0
  %9632 = vmatprep.subr.bf16.mxu0 0
  %9633 = vmatpush2.bf16.msra.mxu0 0
  %9634 = vmatprep.subr.bf16.mxu0 0
  %9635 = vmatpush2.bf16.msra.mxu0 0
  %9636 = vmatprep.subr.bf16.mxu0 0
  %9637 = vmatpush2.bf16.msra.mxu0 0
  %9638 = vmatprep.mubr.bf16.mxu0 0
  %9639 = vmatmul.mubr.bf16.gmra.mxu0 %v9604
  %v9640 = vpop.f32.mrf.mxu0
  %v9641 = vadd.f32 0.0, %v9640
  %v9642 = vpop.f32.mrf.mxu0
  %v9643 = vadd.f32 0.0, %v9642
  %v9644 = vpop.f32.mrf.mxu0
  %v9645 = vadd.f32 0.0, %v9644
  %v9646 = vpop.f32.mrf.mxu0
  %v9647 = vadd.f32 0.0, %v9646
  %9648 = vdwg.mxu0
  %9649 = vmatprep.subr.bf16.mxu0 0
  %9650 = vmatpush1.bf16.msra.mxu0 0
  %9651 = vmatprep.subr.bf16.mxu0 0
  %9652 = vmatpush1.bf16.msra.mxu0 0
  %9653 = vmatprep.subr.bf16.mxu0 0
  %9654 = vmatpush1.bf16.msra.mxu0 0
  %9655 = vmatprep.subr.bf16.mxu0 0
  %9656 = vmatpush1.bf16.msra.mxu0 0
  %9657 = vmatprep.subr.bf16.mxu0 %v9586
  %9658 = vmatpush1.bf16.msra.mxu0 %v9585
  %9659 = vmatprep.subr.bf16.mxu0 %v9582
  %9660 = vmatpush1.bf16.msra.mxu0 %v9581
  %9661 = vmatprep.subr.bf16.mxu0 %v9578
  %9662 = vmatpush1.bf16.msra.mxu0 %v9577
  %9663 = vmatprep.subr.bf16.mxu0 %v9574
  %9664 = vmatpush1.bf16.msra.mxu0 %v9573
  %9665 = vmatprep.subr.bf16.mxu0 0
  %9666 = vmatpush2.bf16.msra.mxu0 0
  %9667 = vmatprep.subr.bf16.mxu0 0
  %9668 = vmatpush2.bf16.msra.mxu0 0
  %9669 = vmatprep.subr.bf16.mxu0 0
  %9670 = vmatpush2.bf16.msra.mxu0 0
  %9671 = vmatprep.subr.bf16.mxu0 0
  %9672 = vmatpush2.bf16.msra.mxu0 0
  %9673 = vmatprep.subr.bf16.mxu0 0
  %9674 = vmatpush2.bf16.msra.mxu0 0
  %9675 = vmatprep.subr.bf16.mxu0 0
  %9676 = vmatpush2.bf16.msra.mxu0 0
  %9677 = vmatprep.subr.bf16.mxu0 0
  %9678 = vmatpush2.bf16.msra.mxu0 0
  %9679 = vmatprep.subr.bf16.mxu0 0
  %9680 = vmatpush2.bf16.msra.mxu0 0
  %9681 = vmatprep.mubr.bf16.mxu0 0
  %9682 = vmatmul.mubr.bf16.gmra.mxu0 %v9604
  %v9683 = vpop.f32.mrf.mxu0
  %v9684 = vadd.f32 0.0, %v9683
  %v9685 = vpop.f32.mrf.mxu0
  %v9686 = vadd.f32 0.0, %v9685
  %v9687 = vpop.f32.mrf.mxu0
  %v9688 = vadd.f32 0.0, %v9687
  %v9689 = vpop.f32.mrf.mxu0
  %v9690 = vadd.f32 0.0, %v9689
  %9691 = vdwg.mxu0
  %v9708 = vunpack.c.l.b16 %v9491
  %v9709 = vunpack.c.h.b16 %v9491
  %v9710 = vunpack.c.l.b16 %v9492
  %v9711 = vunpack.c.h.b16 %v9492
  %v9712 = vunpack.c.l.b16 %v9493
  %v9713 = vunpack.c.h.b16 %v9493
  %v9714 = vunpack.c.l.b16 %v9494
  %v9715 = vunpack.c.h.b16 %v9494
  %v9716 = vunpack.c.l.b16 %v9495
  %v9717 = vunpack.c.h.b16 %v9495
  %v9718 = vunpack.c.l.b16 %v9496
  %v9719 = vunpack.c.h.b16 %v9496
  %v9720 = vunpack.c.l.b16 %v9497
  %v9721 = vunpack.c.h.b16 %v9497
  %v9722 = vunpack.c.l.b16 %v9498
  %v9723 = vunpack.c.h.b16 %v9498
  %v9724 = vunpack.c.l.b16 %v9499
  %v9725 = vunpack.c.h.b16 %v9499
  %v9726 = vunpack.c.l.b16 %v9500
  %v9727 = vunpack.c.h.b16 %v9500
  %v9728 = vunpack.c.l.b16 %v9501
  %v9729 = vunpack.c.h.b16 %v9501
  %v9730 = vunpack.c.l.b16 %v9502
  %v9731 = vunpack.c.h.b16 %v9502
  %v9732 = vunpack.c.l.b16 %v9503
  %v9733 = vunpack.c.h.b16 %v9503
  %v9734 = vunpack.c.l.b16 %v9504
  %v9735 = vunpack.c.h.b16 %v9504
  %v9736 = vunpack.c.l.b16 %v9505
  %v9737 = vunpack.c.h.b16 %v9505
  %v9738 = vunpack.c.l.b16 %v9506
  %v9739 = vunpack.c.h.b16 %v9506
  %v9740 = vpack.c.b16 %v9712, %v9708
  %v9741 = vpack.c.b16 %v9713, %v9709
  %v9742 = vpack.c.b16 %v9714, %v9710
  %v9743 = vpack.c.b16 %v9715, %v9711
  %v9744 = vpack.c.b16 %v9720, %v9716
  %v9745 = vpack.c.b16 %v9721, %v9717
  %v9746 = vpack.c.b16 %v9722, %v9718
  %v9747 = vpack.c.b16 %v9723, %v9719
  %v9748 = vpack.c.b16 %v9728, %v9724
  %v9749 = vpack.c.b16 %v9729, %v9725
  %v9750 = vpack.c.b16 %v9730, %v9726
  %v9751 = vpack.c.b16 %v9731, %v9727
  %v9752 = vpack.c.b16 %v9736, %v9732
  %v9753 = vpack.c.b16 %v9737, %v9733
  %v9754 = vpack.c.b16 %v9738, %v9734
  %v9755 = vpack.c.b16 %v9739, %v9735
  %v9773 = vsel %vm6873, %v9475, 0
  %9775 = vmatprep.subr.bf16.mxu0 0
  %9776 = vmatpush1.bf16.msra.mxu0 0
  %9777 = vmatprep.subr.bf16.mxu0 0
  %9778 = vmatpush1.bf16.msra.mxu0 0
  %9779 = vmatprep.subr.bf16.mxu0 0
  %9780 = vmatpush1.bf16.msra.mxu0 0
  %9781 = vmatprep.subr.bf16.mxu0 0
  %9782 = vmatpush1.bf16.msra.mxu0 0
  %9783 = vmatprep.subr.bf16.mxu0 %v9753
  %9784 = vmatpush1.bf16.msra.mxu0 %v9752
  %9785 = vmatprep.subr.bf16.mxu0 %v9749
  %9786 = vmatpush1.bf16.msra.mxu0 %v9748
  %9787 = vmatprep.subr.bf16.mxu0 %v9745
  %9788 = vmatpush1.bf16.msra.mxu0 %v9744
  %9789 = vmatprep.subr.bf16.mxu0 %v9741
  %9790 = vmatpush1.bf16.msra.mxu0 %v9740
  %9791 = vmatprep.subr.bf16.mxu0 0
  %9792 = vmatpush2.bf16.msra.mxu0 0
  %9793 = vmatprep.subr.bf16.mxu0 0
  %9794 = vmatpush2.bf16.msra.mxu0 0
  %9795 = vmatprep.subr.bf16.mxu0 0
  %9796 = vmatpush2.bf16.msra.mxu0 0
  %9797 = vmatprep.subr.bf16.mxu0 0
  %9798 = vmatpush2.bf16.msra.mxu0 0
  %9799 = vmatprep.subr.bf16.mxu0 0
  %9800 = vmatpush2.bf16.msra.mxu0 0
  %9801 = vmatprep.subr.bf16.mxu0 0
  %9802 = vmatpush2.bf16.msra.mxu0 0
  %9803 = vmatprep.subr.bf16.mxu0 0
  %9804 = vmatpush2.bf16.msra.mxu0 0
  %9805 = vmatprep.subr.bf16.mxu0 0
  %9806 = vmatpush2.bf16.msra.mxu0 0
  %9807 = vmatprep.mubr.bf16.mxu0 0
  %9808 = vmatmul.mubr.bf16.gmra.mxu0 %v9773
  %v9809 = vpop.f32.mrf.mxu0
  %v9810 = vadd.f32 %v9641, %v9809
  %v9811 = vpop.f32.mrf.mxu0
  %v9812 = vadd.f32 %v9643, %v9811
  %v9813 = vpop.f32.mrf.mxu0
  %v9814 = vadd.f32 %v9645, %v9813
  %v9815 = vpop.f32.mrf.mxu0
  %v9816 = vadd.f32 %v9647, %v9815
  %9817 = vdwg.mxu0
  %9818 = vmatprep.subr.bf16.mxu0 0
  %9819 = vmatpush1.bf16.msra.mxu0 0
  %9820 = vmatprep.subr.bf16.mxu0 0
  %9821 = vmatpush1.bf16.msra.mxu0 0
  %9822 = vmatprep.subr.bf16.mxu0 0
  %9823 = vmatpush1.bf16.msra.mxu0 0
  %9824 = vmatprep.subr.bf16.mxu0 0
  %9825 = vmatpush1.bf16.msra.mxu0 0
  %9826 = vmatprep.subr.bf16.mxu0 %v9755
  %9827 = vmatpush1.bf16.msra.mxu0 %v9754
  %9828 = vmatprep.subr.bf16.mxu0 %v9751
  %9829 = vmatpush1.bf16.msra.mxu0 %v9750
  %9830 = vmatprep.subr.bf16.mxu0 %v9747
  %9831 = vmatpush1.bf16.msra.mxu0 %v9746
  %9832 = vmatprep.subr.bf16.mxu0 %v9743
  %9833 = vmatpush1.bf16.msra.mxu0 %v9742
  %9834 = vmatprep.subr.bf16.mxu0 0
  %9835 = vmatpush2.bf16.msra.mxu0 0
  %9836 = vmatprep.subr.bf16.mxu0 0
  %9837 = vmatpush2.bf16.msra.mxu0 0
  %9838 = vmatprep.subr.bf16.mxu0 0
  %9839 = vmatpush2.bf16.msra.mxu0 0
  %9840 = vmatprep.subr.bf16.mxu0 0
  %9841 = vmatpush2.bf16.msra.mxu0 0
  %9842 = vmatprep.subr.bf16.mxu0 0
  %9843 = vmatpush2.bf16.msra.mxu0 0
  %9844 = vmatprep.subr.bf16.mxu0 0
  %9845 = vmatpush2.bf16.msra.mxu0 0
  %9846 = vmatprep.subr.bf16.mxu0 0
  %9847 = vmatpush2.bf16.msra.mxu0 0
  %9848 = vmatprep.subr.bf16.mxu0 0
  %9849 = vmatpush2.bf16.msra.mxu0 0
  %9850 = vmatprep.mubr.bf16.mxu0 0
  %9851 = vmatmul.mubr.bf16.gmra.mxu0 %v9773
  %v9852 = vpop.f32.mrf.mxu0
  %v9853 = vadd.f32 %v9684, %v9852
  %v9854 = vpop.f32.mrf.mxu0
  %v9855 = vadd.f32 %v9686, %v9854
  %v9856 = vpop.f32.mrf.mxu0
  %v9857 = vadd.f32 %v9688, %v9856
  %v9858 = vpop.f32.mrf.mxu0
  %v9859 = vadd.f32 %v9690, %v9858
  %9860 = vdwg.mxu0
  %v9861 = vld [vmem:[%s7 + $0x100] sm:$0xff]
  %v9862 = vld [vmem:[%s7 + $0x108] sm:$0xff]
  %v9863 = vld [vmem:[%s7 + $0x110] sm:$0xff]
  %v9864 = vld [vmem:[%s7 + $0x118] sm:$0xff]
  %v9865 = vld [vmem:[%s7 + $0x120] sm:$0xff]
  %v9866 = vld [vmem:[%s7 + $0x128] sm:$0xff]
  %v9867 = vld [vmem:[%s7 + $0x130] sm:$0xff]
  %v9868 = vld [vmem:[%s7 + $0x138] sm:$0xff]
  %v9869 = vld [vmem:[%s7 + $0x140] sm:$0xff]
  %v9870 = vld [vmem:[%s7 + $0x148] sm:$0xff]
  %v9871 = vld [vmem:[%s7 + $0x150] sm:$0xff]
  %v9872 = vld [vmem:[%s7 + $0x158] sm:$0xff]
  %v9873 = vld [vmem:[%s7 + $0x160] sm:$0xff]
  %v9874 = vld [vmem:[%s7 + $0x168] sm:$0xff]
  %v9875 = vld [vmem:[%s7 + $0x170] sm:$0xff]
  %v9876 = vld [vmem:[%s7 + $0x178] sm:$0xff]
  %v9893 = vunpack.c.l.b16 %v9861
  %v9894 = vunpack.c.h.b16 %v9861
  %v9895 = vunpack.c.l.b16 %v9862
  %v9896 = vunpack.c.h.b16 %v9862
  %v9897 = vunpack.c.l.b16 %v9863
  %v9898 = vunpack.c.h.b16 %v9863
  %v9899 = vunpack.c.l.b16 %v9864
  %v9900 = vunpack.c.h.b16 %v9864
  %v9901 = vunpack.c.l.b16 %v9865
  %v9902 = vunpack.c.h.b16 %v9865
  %v9903 = vunpack.c.l.b16 %v9866
  %v9904 = vunpack.c.h.b16 %v9866
  %v9905 = vunpack.c.l.b16 %v9867
  %v9906 = vunpack.c.h.b16 %v9867
  %v9907 = vunpack.c.l.b16 %v9868
  %v9908 = vunpack.c.h.b16 %v9868
  %v9909 = vunpack.c.l.b16 %v9869
  %v9910 = vunpack.c.h.b16 %v9869
  %v9911 = vunpack.c.l.b16 %v9870
  %v9912 = vunpack.c.h.b16 %v9870
  %v9913 = vunpack.c.l.b16 %v9871
  %v9914 = vunpack.c.h.b16 %v9871
  %v9915 = vunpack.c.l.b16 %v9872
  %v9916 = vunpack.c.h.b16 %v9872
  %v9917 = vunpack.c.l.b16 %v9873
  %v9918 = vunpack.c.h.b16 %v9873
  %v9919 = vunpack.c.l.b16 %v9874
  %v9920 = vunpack.c.h.b16 %v9874
  %v9921 = vunpack.c.l.b16 %v9875
  %v9922 = vunpack.c.h.b16 %v9875
  %v9923 = vunpack.c.l.b16 %v9876
  %v9924 = vunpack.c.h.b16 %v9876
  %v9925 = vpack.c.b16 %v9897, %v9893
  %v9926 = vpack.c.b16 %v9898, %v9894
  %v9927 = vpack.c.b16 %v9899, %v9895
  %v9928 = vpack.c.b16 %v9900, %v9896
  %v9929 = vpack.c.b16 %v9905, %v9901
  %v9930 = vpack.c.b16 %v9906, %v9902
  %v9931 = vpack.c.b16 %v9907, %v9903
  %v9932 = vpack.c.b16 %v9908, %v9904
  %v9933 = vpack.c.b16 %v9913, %v9909
  %v9934 = vpack.c.b16 %v9914, %v9910
  %v9935 = vpack.c.b16 %v9915, %v9911
  %v9936 = vpack.c.b16 %v9916, %v9912
  %v9937 = vpack.c.b16 %v9921, %v9917
  %v9938 = vpack.c.b16 %v9922, %v9918
  %v9939 = vpack.c.b16 %v9923, %v9919
  %v9940 = vpack.c.b16 %v9924, %v9920
  %v9958 = vsel %vm6873, %v9477, 0
  %9960 = vmatprep.subr.bf16.mxu0 0
  %9961 = vmatpush1.bf16.msra.mxu0 0
  %9962 = vmatprep.subr.bf16.mxu0 0
  %9963 = vmatpush1.bf16.msra.mxu0 0
  %9964 = vmatprep.subr.bf16.mxu0 0
  %9965 = vmatpush1.bf16.msra.mxu0 0
  %9966 = vmatprep.subr.bf16.mxu0 0
  %9967 = vmatpush1.bf16.msra.mxu0 0
  %9968 = vmatprep.subr.bf16.mxu0 %v9938
  %9969 = vmatpush1.bf16.msra.mxu0 %v9937
  %9970 = vmatprep.subr.bf16.mxu0 %v9934
  %9971 = vmatpush1.bf16.msra.mxu0 %v9933
  %9972 = vmatprep.subr.bf16.mxu0 %v9930
  %9973 = vmatpush1.bf16.msra.mxu0 %v9929
  %9974 = vmatprep.subr.bf16.mxu0 %v9926
  %9975 = vmatpush1.bf16.msra.mxu0 %v9925
  %9976 = vmatprep.subr.bf16.mxu0 0
  %9977 = vmatpush2.bf16.msra.mxu0 0
  %9978 = vmatprep.subr.bf16.mxu0 0
  %9979 = vmatpush2.bf16.msra.mxu0 0
  %9980 = vmatprep.subr.bf16.mxu0 0
  %9981 = vmatpush2.bf16.msra.mxu0 0
  %9982 = vmatprep.subr.bf16.mxu0 0
  %9983 = vmatpush2.bf16.msra.mxu0 0
  %9984 = vmatprep.subr.bf16.mxu0 0
  %9985 = vmatpush2.bf16.msra.mxu0 0
  %9986 = vmatprep.subr.bf16.mxu0 0
  %9987 = vmatpush2.bf16.msra.mxu0 0
  %9988 = vmatprep.subr.bf16.mxu0 0
  %9989 = vmatpush2.bf16.msra.mxu0 0
  %9990 = vmatprep.subr.bf16.mxu0 0
  %9991 = vmatpush2.bf16.msra.mxu0 0
  %9992 = vmatprep.mubr.bf16.mxu0 0
  %9993 = vmatmul.mubr.bf16.gmra.mxu0 %v9958
  %v9994 = vpop.f32.mrf.mxu0
  %v9995 = vadd.f32 0.0, %v9994
  %v9996 = vpop.f32.mrf.mxu0
  %v9997 = vadd.f32 0.0, %v9996
  %v9998 = vpop.f32.mrf.mxu0
  %v9999 = vadd.f32 0.0, %v9998
  %v10000 = vpop.f32.mrf.mxu0
  %v10001 = vadd.f32 0.0, %v10000
  %10002 = vdwg.mxu0
  %10003 = vmatprep.subr.bf16.mxu0 0
  %10004 = vmatpush1.bf16.msra.mxu0 0
  %10005 = vmatprep.subr.bf16.mxu0 0
  %10006 = vmatpush1.bf16.msra.mxu0 0
  %10007 = vmatprep.subr.bf16.mxu0 0
  %10008 = vmatpush1.bf16.msra.mxu0 0
  %10009 = vmatprep.subr.bf16.mxu0 0
  %10010 = vmatpush1.bf16.msra.mxu0 0
  %10011 = vmatprep.subr.bf16.mxu0 %v9940
  %10012 = vmatpush1.bf16.msra.mxu0 %v9939
  %10013 = vmatprep.subr.bf16.mxu0 %v9936
  %10014 = vmatpush1.bf16.msra.mxu0 %v9935
  %10015 = vmatprep.subr.bf16.mxu0 %v9932
  %10016 = vmatpush1.bf16.msra.mxu0 %v9931
  %10017 = vmatprep.subr.bf16.mxu0 %v9928
  %10018 = vmatpush1.bf16.msra.mxu0 %v9927
  %10019 = vmatprep.subr.bf16.mxu0 0
  %10020 = vmatpush2.bf16.msra.mxu0 0
  %10021 = vmatprep.subr.bf16.mxu0 0
  %10022 = vmatpush2.bf16.msra.mxu0 0
  %10023 = vmatprep.subr.bf16.mxu0 0
  %10024 = vmatpush2.bf16.msra.mxu0 0
  %10025 = vmatprep.subr.bf16.mxu0 0
  %10026 = vmatpush2.bf16.msra.mxu0 0
  %10027 = vmatprep.subr.bf16.mxu0 0
  %10028 = vmatpush2.bf16.msra.mxu0 0
  %10029 = vmatprep.subr.bf16.mxu0 0
  %10030 = vmatpush2.bf16.msra.mxu0 0
  %10031 = vmatprep.subr.bf16.mxu0 0
  %10032 = vmatpush2.bf16.msra.mxu0 0
  %10033 = vmatprep.subr.bf16.mxu0 0
  %10034 = vmatpush2.bf16.msra.mxu0 0
  %10035 = vmatprep.mubr.bf16.mxu0 0
  %10036 = vmatmul.mubr.bf16.gmra.mxu0 %v9958
  %v10037 = vpop.f32.mrf.mxu0
  %v10038 = vadd.f32 0.0, %v10037
  %v10039 = vpop.f32.mrf.mxu0
  %v10040 = vadd.f32 0.0, %v10039
  %v10041 = vpop.f32.mrf.mxu0
  %v10042 = vadd.f32 0.0, %v10041
  %v10043 = vpop.f32.mrf.mxu0
  %v10044 = vadd.f32 0.0, %v10043
  %10045 = vdwg.mxu0
  %v10046 = vadd.f32 %v9810, %v9995
  %v10047 = vadd.f32 %v9812, %v9997
  %v10048 = vadd.f32 %v9853, %v10038
  %v10049 = vadd.f32 %v9855, %v10040
  %v10050 = vadd.f32 %v9814, %v9999
  %v10051 = vadd.f32 %v9816, %v10001
  %v10052 = vadd.f32 %v9857, %v10042
  %v10053 = vadd.f32 %v9859, %v10044
  %v10054 = vld [vmem:[%s7 + $0x180] sm:$0xff]
  %v10055 = vld [vmem:[%s7 + $0x188] sm:$0xff]
  %v10056 = vld [vmem:[%s7 + $0x190] sm:$0xff]
  %v10057 = vld [vmem:[%s7 + $0x198] sm:$0xff]
  %v10058 = vld [vmem:[%s7 + $0x1a0] sm:$0xff]
  %v10059 = vld [vmem:[%s7 + $0x1a8] sm:$0xff]
  %v10060 = vld [vmem:[%s7 + $0x1b0] sm:$0xff]
  %v10061 = vld [vmem:[%s7 + $0x1b8] sm:$0xff]
  %v10062 = vld [vmem:[%s7 + $0x1c0] sm:$0xff]
  %v10063 = vld [vmem:[%s7 + $0x1c8] sm:$0xff]
  %v10064 = vld [vmem:[%s7 + $0x1d0] sm:$0xff]
  %v10065 = vld [vmem:[%s7 + $0x1d8] sm:$0xff]
  %v10066 = vld [vmem:[%s7 + $0x1e0] sm:$0xff]
  %v10067 = vld [vmem:[%s7 + $0x1e8] sm:$0xff]
  %v10068 = vld [vmem:[%s7 + $0x1f0] sm:$0xff]
  %v10069 = vld [vmem:[%s7 + $0x1f8] sm:$0xff]
  %v10086 = vunpack.c.l.b16 %v10054
  %v10087 = vunpack.c.h.b16 %v10054
  %v10088 = vunpack.c.l.b16 %v10055
  %v10089 = vunpack.c.h.b16 %v10055
  %v10090 = vunpack.c.l.b16 %v10056
  %v10091 = vunpack.c.h.b16 %v10056
  %v10092 = vunpack.c.l.b16 %v10057
  %v10093 = vunpack.c.h.b16 %v10057
  %v10094 = vunpack.c.l.b16 %v10058
  %v10095 = vunpack.c.h.b16 %v10058
  %v10096 = vunpack.c.l.b16 %v10059
  %v10097 = vunpack.c.h.b16 %v10059
  %v10098 = vunpack.c.l.b16 %v10060
  %v10099 = vunpack.c.h.b16 %v10060
  %v10100 = vunpack.c.l.b16 %v10061
  %v10101 = vunpack.c.h.b16 %v10061
  %v10102 = vunpack.c.l.b16 %v10062
  %v10103 = vunpack.c.h.b16 %v10062
  %v10104 = vunpack.c.l.b16 %v10063
  %v10105 = vunpack.c.h.b16 %v10063
  %v10106 = vunpack.c.l.b16 %v10064
  %v10107 = vunpack.c.h.b16 %v10064
  %v10108 = vunpack.c.l.b16 %v10065
  %v10109 = vunpack.c.h.b16 %v10065
  %v10110 = vunpack.c.l.b16 %v10066
  %v10111 = vunpack.c.h.b16 %v10066
  %v10112 = vunpack.c.l.b16 %v10067
  %v10113 = vunpack.c.h.b16 %v10067
  %v10114 = vunpack.c.l.b16 %v10068
  %v10115 = vunpack.c.h.b16 %v10068
  %v10116 = vunpack.c.l.b16 %v10069
  %v10117 = vunpack.c.h.b16 %v10069
  %v10118 = vpack.c.b16 %v10090, %v10086
  %v10119 = vpack.c.b16 %v10091, %v10087
  %v10120 = vpack.c.b16 %v10092, %v10088
  %v10121 = vpack.c.b16 %v10093, %v10089
  %v10122 = vpack.c.b16 %v10098, %v10094
  %v10123 = vpack.c.b16 %v10099, %v10095
  %v10124 = vpack.c.b16 %v10100, %v10096
  %v10125 = vpack.c.b16 %v10101, %v10097
  %v10126 = vpack.c.b16 %v10106, %v10102
  %v10127 = vpack.c.b16 %v10107, %v10103
  %v10128 = vpack.c.b16 %v10108, %v10104
  %v10129 = vpack.c.b16 %v10109, %v10105
  %v10130 = vpack.c.b16 %v10114, %v10110
  %v10131 = vpack.c.b16 %v10115, %v10111
  %v10132 = vpack.c.b16 %v10116, %v10112
  %v10133 = vpack.c.b16 %v10117, %v10113
  %v10151 = vsel %vm6873, %v9478, 0
  %10153 = vmatprep.subr.bf16.mxu0 0
  %10154 = vmatpush1.bf16.msra.mxu0 0
  %10155 = vmatprep.subr.bf16.mxu0 0
  %10156 = vmatpush1.bf16.msra.mxu0 0
  %10157 = vmatprep.subr.bf16.mxu0 0
  %10158 = vmatpush1.bf16.msra.mxu0 0
  %10159 = vmatprep.subr.bf16.mxu0 0
  %10160 = vmatpush1.bf16.msra.mxu0 0
  %10161 = vmatprep.subr.bf16.mxu0 %v10131
  %10162 = vmatpush1.bf16.msra.mxu0 %v10130
  %10163 = vmatprep.subr.bf16.mxu0 %v10127
  %10164 = vmatpush1.bf16.msra.mxu0 %v10126
  %10165 = vmatprep.subr.bf16.mxu0 %v10123
  %10166 = vmatpush1.bf16.msra.mxu0 %v10122
  %10167 = vmatprep.subr.bf16.mxu0 %v10119
  %10168 = vmatpush1.bf16.msra.mxu0 %v10118
  %10169 = vmatprep.subr.bf16.mxu0 0
  %10170 = vmatpush2.bf16.msra.mxu0 0
  %10171 = vmatprep.subr.bf16.mxu0 0
  %10172 = vmatpush2.bf16.msra.mxu0 0
  %10173 = vmatprep.subr.bf16.mxu0 0
  %10174 = vmatpush2.bf16.msra.mxu0 0
  %10175 = vmatprep.subr.bf16.mxu0 0
  %10176 = vmatpush2.bf16.msra.mxu0 0
  %10177 = vmatprep.subr.bf16.mxu0 0
  %10178 = vmatpush2.bf16.msra.mxu0 0
  %10179 = vmatprep.subr.bf16.mxu0 0
  %10180 = vmatpush2.bf16.msra.mxu0 0
  %10181 = vmatprep.subr.bf16.mxu0 0
  %10182 = vmatpush2.bf16.msra.mxu0 0
  %10183 = vmatprep.subr.bf16.mxu0 0
  %10184 = vmatpush2.bf16.msra.mxu0 0
  %10185 = vmatprep.mubr.bf16.mxu0 0
  %10186 = vmatmul.mubr.bf16.gmra.mxu0 %v10151
  %v10187 = vpop.f32.mrf.mxu0
  %v10188 = vadd.f32 0.0, %v10187
  %v10189 = vpop.f32.mrf.mxu0
  %v10190 = vadd.f32 0.0, %v10189
  %v10191 = vpop.f32.mrf.mxu0
  %v10192 = vadd.f32 0.0, %v10191
  %v10193 = vpop.f32.mrf.mxu0
  %v10194 = vadd.f32 0.0, %v10193
  %10195 = vdwg.mxu0
  %10196 = vmatprep.subr.bf16.mxu0 0
  %10197 = vmatpush1.bf16.msra.mxu0 0
  %10198 = vmatprep.subr.bf16.mxu0 0
  %10199 = vmatpush1.bf16.msra.mxu0 0
  %10200 = vmatprep.subr.bf16.mxu0 0
  %10201 = vmatpush1.bf16.msra.mxu0 0
  %10202 = vmatprep.subr.bf16.mxu0 0
  %10203 = vmatpush1.bf16.msra.mxu0 0
  %10204 = vmatprep.subr.bf16.mxu0 %v10133
  %10205 = vmatpush1.bf16.msra.mxu0 %v10132
  %10206 = vmatprep.subr.bf16.mxu0 %v10129
  %10207 = vmatpush1.bf16.msra.mxu0 %v10128
  %10208 = vmatprep.subr.bf16.mxu0 %v10125
  %10209 = vmatpush1.bf16.msra.mxu0 %v10124
  %10210 = vmatprep.subr.bf16.mxu0 %v10121
  %10211 = vmatpush1.bf16.msra.mxu0 %v10120
  %10212 = vmatprep.subr.bf16.mxu0 0
  %10213 = vmatpush2.bf16.msra.mxu0 0
  %10214 = vmatprep.subr.bf16.mxu0 0
  %10215 = vmatpush2.bf16.msra.mxu0 0
  %10216 = vmatprep.subr.bf16.mxu0 0
  %10217 = vmatpush2.bf16.msra.mxu0 0
  %10218 = vmatprep.subr.bf16.mxu0 0
  %10219 = vmatpush2.bf16.msra.mxu0 0
  %10220 = vmatprep.subr.bf16.mxu0 0
  %10221 = vmatpush2.bf16.msra.mxu0 0
  %10222 = vmatprep.subr.bf16.mxu0 0
  %10223 = vmatpush2.bf16.msra.mxu0 0
  %10224 = vmatprep.subr.bf16.mxu0 0
  %10225 = vmatpush2.bf16.msra.mxu0 0
  %10226 = vmatprep.subr.bf16.mxu0 0
  %10227 = vmatpush2.bf16.msra.mxu0 0
  %10228 = vmatprep.mubr.bf16.mxu0 0
  %10229 = vmatmul.mubr.bf16.gmra.mxu0 %v10151
  %v10230 = vpop.f32.mrf.mxu0
  %v10231 = vadd.f32 0.0, %v10230
  %v10232 = vpop.f32.mrf.mxu0
  %v10233 = vadd.f32 0.0, %v10232
  %v10234 = vpop.f32.mrf.mxu0
  %v10235 = vadd.f32 0.0, %v10234
  %v10236 = vpop.f32.mrf.mxu0
  %v10237 = vadd.f32 0.0, %v10236
  %10238 = vdwg.mxu0
  %v10239 = vadd.f32 %v10046, %v10188
  %v10240 = vadd.f32 %v10047, %v10190
  %v10241 = vadd.f32 %v10048, %v10231
  %v10242 = vadd.f32 %v10049, %v10233
  %v10243 = vadd.f32 %v10050, %v10192
  %v10244 = vadd.f32 %v10051, %v10194
  %v10245 = vadd.f32 %v10052, %v10235
  %v10246 = vadd.f32 %v10053, %v10237
  %v10247 = vld [vmem:[%s7 + $0x200] sm:$0xff]
  %v10248 = vld [vmem:[%s7 + $0x208] sm:$0xff]
  %v10249 = vld [vmem:[%s7 + $0x210] sm:$0xff]
  %v10250 = vld [vmem:[%s7 + $0x218] sm:$0xff]
  %v10251 = vld [vmem:[%s7 + $0x220] sm:$0xff]
  %v10252 = vld [vmem:[%s7 + $0x228] sm:$0xff]
  %v10253 = vld [vmem:[%s7 + $0x230] sm:$0xff]
  %v10254 = vld [vmem:[%s7 + $0x238] sm:$0xff]
  %v10255 = vld [vmem:[%s7 + $0x240] sm:$0xff]
  %v10256 = vld [vmem:[%s7 + $0x248] sm:$0xff]
  %v10257 = vld [vmem:[%s7 + $0x250] sm:$0xff]
  %v10258 = vld [vmem:[%s7 + $0x258] sm:$0xff]
  %v10259 = vld [vmem:[%s7 + $0x260] sm:$0xff]
  %v10260 = vld [vmem:[%s7 + $0x268] sm:$0xff]
  %v10261 = vld [vmem:[%s7 + $0x270] sm:$0xff]
  %v10262 = vld [vmem:[%s7 + $0x278] sm:$0xff]
  %v10279 = vunpack.c.l.b16 %v10247
  %v10280 = vunpack.c.h.b16 %v10247
  %v10281 = vunpack.c.l.b16 %v10248
  %v10282 = vunpack.c.h.b16 %v10248
  %v10283 = vunpack.c.l.b16 %v10249
  %v10284 = vunpack.c.h.b16 %v10249
  %v10285 = vunpack.c.l.b16 %v10250
  %v10286 = vunpack.c.h.b16 %v10250
  %v10287 = vunpack.c.l.b16 %v10251
  %v10288 = vunpack.c.h.b16 %v10251
  %v10289 = vunpack.c.l.b16 %v10252
  %v10290 = vunpack.c.h.b16 %v10252
  %v10291 = vunpack.c.l.b16 %v10253
  %v10292 = vunpack.c.h.b16 %v10253
  %v10293 = vunpack.c.l.b16 %v10254
  %v10294 = vunpack.c.h.b16 %v10254
  %v10295 = vunpack.c.l.b16 %v10255
  %v10296 = vunpack.c.h.b16 %v10255
  %v10297 = vunpack.c.l.b16 %v10256
  %v10298 = vunpack.c.h.b16 %v10256
  %v10299 = vunpack.c.l.b16 %v10257
  %v10300 = vunpack.c.h.b16 %v10257
  %v10301 = vunpack.c.l.b16 %v10258
  %v10302 = vunpack.c.h.b16 %v10258
  %v10303 = vunpack.c.l.b16 %v10259
  %v10304 = vunpack.c.h.b16 %v10259
  %v10305 = vunpack.c.l.b16 %v10260
  %v10306 = vunpack.c.h.b16 %v10260
  %v10307 = vunpack.c.l.b16 %v10261
  %v10308 = vunpack.c.h.b16 %v10261
  %v10309 = vunpack.c.l.b16 %v10262
  %v10310 = vunpack.c.h.b16 %v10262
  %v10311 = vpack.c.b16 %v10283, %v10279
  %v10312 = vpack.c.b16 %v10284, %v10280
  %v10313 = vpack.c.b16 %v10285, %v10281
  %v10314 = vpack.c.b16 %v10286, %v10282
  %v10315 = vpack.c.b16 %v10291, %v10287
  %v10316 = vpack.c.b16 %v10292, %v10288
  %v10317 = vpack.c.b16 %v10293, %v10289
  %v10318 = vpack.c.b16 %v10294, %v10290
  %v10319 = vpack.c.b16 %v10299, %v10295
  %v10320 = vpack.c.b16 %v10300, %v10296
  %v10321 = vpack.c.b16 %v10301, %v10297
  %v10322 = vpack.c.b16 %v10302, %v10298
  %v10323 = vpack.c.b16 %v10307, %v10303
  %v10324 = vpack.c.b16 %v10308, %v10304
  %v10325 = vpack.c.b16 %v10309, %v10305
  %v10326 = vpack.c.b16 %v10310, %v10306
  %v10344 = vsel %vm6873, %v9479, 0
  %10346 = vmatprep.subr.bf16.mxu0 0
  %10347 = vmatpush1.bf16.msra.mxu0 0
  %10348 = vmatprep.subr.bf16.mxu0 0
  %10349 = vmatpush1.bf16.msra.mxu0 0
  %10350 = vmatprep.subr.bf16.mxu0 0
  %10351 = vmatpush1.bf16.msra.mxu0 0
  %10352 = vmatprep.subr.bf16.mxu0 0
  %10353 = vmatpush1.bf16.msra.mxu0 0
  %10354 = vmatprep.subr.bf16.mxu0 %v10324
  %10355 = vmatpush1.bf16.msra.mxu0 %v10323
  %10356 = vmatprep.subr.bf16.mxu0 %v10320
  %10357 = vmatpush1.bf16.msra.mxu0 %v10319
  %10358 = vmatprep.subr.bf16.mxu0 %v10316
  %10359 = vmatpush1.bf16.msra.mxu0 %v10315
  %10360 = vmatprep.subr.bf16.mxu0 %v10312
  %10361 = vmatpush1.bf16.msra.mxu0 %v10311
  %10362 = vmatprep.subr.bf16.mxu0 0
  %10363 = vmatpush2.bf16.msra.mxu0 0
  %10364 = vmatprep.subr.bf16.mxu0 0
  %10365 = vmatpush2.bf16.msra.mxu0 0
  %10366 = vmatprep.subr.bf16.mxu0 0
  %10367 = vmatpush2.bf16.msra.mxu0 0
  %10368 = vmatprep.subr.bf16.mxu0 0
  %10369 = vmatpush2.bf16.msra.mxu0 0
  %10370 = vmatprep.subr.bf16.mxu0 0
  %10371 = vmatpush2.bf16.msra.mxu0 0
  %10372 = vmatprep.subr.bf16.mxu0 0
  %10373 = vmatpush2.bf16.msra.mxu0 0
  %10374 = vmatprep.subr.bf16.mxu0 0
  %10375 = vmatpush2.bf16.msra.mxu0 0
  %10376 = vmatprep.subr.bf16.mxu0 0
  %10377 = vmatpush2.bf16.msra.mxu0 0
  %10378 = vmatprep.mubr.bf16.mxu0 0
  %10379 = vmatmul.mubr.bf16.gmra.mxu0 %v10344
  %v10380 = vpop.f32.mrf.mxu0
  %v10381 = vadd.f32 0.0, %v10380
  %v10382 = vpop.f32.mrf.mxu0
  %v10383 = vadd.f32 0.0, %v10382
  %v10384 = vpop.f32.mrf.mxu0
  %v10385 = vadd.f32 0.0, %v10384
  %v10386 = vpop.f32.mrf.mxu0
  %v10387 = vadd.f32 0.0, %v10386
  %10388 = vdwg.mxu0
  %10389 = vmatprep.subr.bf16.mxu0 0
  %10390 = vmatpush1.bf16.msra.mxu0 0
  %10391 = vmatprep.subr.bf16.mxu0 0
  %10392 = vmatpush1.bf16.msra.mxu0 0
  %10393 = vmatprep.subr.bf16.mxu0 0
  %10394 = vmatpush1.bf16.msra.mxu0 0
  %10395 = vmatprep.subr.bf16.mxu0 0
  %10396 = vmatpush1.bf16.msra.mxu0 0
  %10397 = vmatprep.subr.bf16.mxu0 %v10326
  %10398 = vmatpush1.bf16.msra.mxu0 %v10325
  %10399 = vmatprep.subr.bf16.mxu0 %v10322
  %10400 = vmatpush1.bf16.msra.mxu0 %v10321
  %10401 = vmatprep.subr.bf16.mxu0 %v10318
  %10402 = vmatpush1.bf16.msra.mxu0 %v10317
  %10403 = vmatprep.subr.bf16.mxu0 %v10314
  %10404 = vmatpush1.bf16.msra.mxu0 %v10313
  %10405 = vmatprep.subr.bf16.mxu0 0
  %10406 = vmatpush2.bf16.msra.mxu0 0
  %10407 = vmatprep.subr.bf16.mxu0 0
  %10408 = vmatpush2.bf16.msra.mxu0 0
  %10409 = vmatprep.subr.bf16.mxu0 0
  %10410 = vmatpush2.bf16.msra.mxu0 0
  %10411 = vmatprep.subr.bf16.mxu0 0
  %10412 = vmatpush2.bf16.msra.mxu0 0
  %10413 = vmatprep.subr.bf16.mxu0 0
  %10414 = vmatpush2.bf16.msra.mxu0 0
  %10415 = vmatprep.subr.bf16.mxu0 0
  %10416 = vmatpush2.bf16.msra.mxu0 0
  %10417 = vmatprep.subr.bf16.mxu0 0
  %10418 = vmatpush2.bf16.msra.mxu0 0
  %10419 = vmatprep.subr.bf16.mxu0 0
  %10420 = vmatpush2.bf16.msra.mxu0 0
  %10421 = vmatprep.mubr.bf16.mxu0 0
  %10422 = vmatmul.mubr.bf16.gmra.mxu0 %v10344
  %v10423 = vpop.f32.mrf.mxu0
  %v10424 = vadd.f32 0.0, %v10423
  %v10425 = vpop.f32.mrf.mxu0
  %v10426 = vadd.f32 0.0, %v10425
  %v10427 = vpop.f32.mrf.mxu0
  %v10428 = vadd.f32 0.0, %v10427
  %v10429 = vpop.f32.mrf.mxu0
  %v10430 = vadd.f32 0.0, %v10429
  %10431 = vdwg.mxu0
  %v10432 = vadd.f32 %v10239, %v10381
  %v10433 = vadd.f32 %v10240, %v10383
  %v10434 = vadd.f32 %v10241, %v10424
  %v10435 = vadd.f32 %v10242, %v10426
  %v10436 = vadd.f32 %v10243, %v10385
  %v10437 = vadd.f32 %v10244, %v10387
  %v10438 = vadd.f32 %v10245, %v10428
  %v10439 = vadd.f32 %v10246, %v10430
  %v10440 = vld [vmem:[%s7 + $0x280] sm:$0xff]
  %v10441 = vld [vmem:[%s7 + $0x288] sm:$0xff]
  %v10442 = vld [vmem:[%s7 + $0x290] sm:$0xff]
  %v10443 = vld [vmem:[%s7 + $0x298] sm:$0xff]
  %v10444 = vld [vmem:[%s7 + $0x2a0] sm:$0xff]
  %v10445 = vld [vmem:[%s7 + $0x2a8] sm:$0xff]
  %v10446 = vld [vmem:[%s7 + $0x2b0] sm:$0xff]
  %v10447 = vld [vmem:[%s7 + $0x2b8] sm:$0xff]
  %v10448 = vld [vmem:[%s7 + $0x2c0] sm:$0xff]
  %v10449 = vld [vmem:[%s7 + $0x2c8] sm:$0xff]
  %v10450 = vld [vmem:[%s7 + $0x2d0] sm:$0xff]
  %v10451 = vld [vmem:[%s7 + $0x2d8] sm:$0xff]
  %v10452 = vld [vmem:[%s7 + $0x2e0] sm:$0xff]
  %v10453 = vld [vmem:[%s7 + $0x2e8] sm:$0xff]
  %v10454 = vld [vmem:[%s7 + $0x2f0] sm:$0xff]
  %v10455 = vld [vmem:[%s7 + $0x2f8] sm:$0xff]
  %v10472 = vunpack.c.l.b16 %v10440
  %v10473 = vunpack.c.h.b16 %v10440
  %v10474 = vunpack.c.l.b16 %v10441
  %v10475 = vunpack.c.h.b16 %v10441
  %v10476 = vunpack.c.l.b16 %v10442
  %v10477 = vunpack.c.h.b16 %v10442
  %v10478 = vunpack.c.l.b16 %v10443
  %v10479 = vunpack.c.h.b16 %v10443
  %v10480 = vunpack.c.l.b16 %v10444
  %v10481 = vunpack.c.h.b16 %v10444
  %v10482 = vunpack.c.l.b16 %v10445
  %v10483 = vunpack.c.h.b16 %v10445
  %v10484 = vunpack.c.l.b16 %v10446
  %v10485 = vunpack.c.h.b16 %v10446
  %v10486 = vunpack.c.l.b16 %v10447
  %v10487 = vunpack.c.h.b16 %v10447
  %v10488 = vunpack.c.l.b16 %v10448
  %v10489 = vunpack.c.h.b16 %v10448
  %v10490 = vunpack.c.l.b16 %v10449
  %v10491 = vunpack.c.h.b16 %v10449
  %v10492 = vunpack.c.l.b16 %v10450
  %v10493 = vunpack.c.h.b16 %v10450
  %v10494 = vunpack.c.l.b16 %v10451
  %v10495 = vunpack.c.h.b16 %v10451
  %v10496 = vunpack.c.l.b16 %v10452
  %v10497 = vunpack.c.h.b16 %v10452
  %v10498 = vunpack.c.l.b16 %v10453
  %v10499 = vunpack.c.h.b16 %v10453
  %v10500 = vunpack.c.l.b16 %v10454
  %v10501 = vunpack.c.h.b16 %v10454
  %v10502 = vunpack.c.l.b16 %v10455
  %v10503 = vunpack.c.h.b16 %v10455
  %v10504 = vpack.c.b16 %v10476, %v10472
  %v10505 = vpack.c.b16 %v10477, %v10473
  %v10506 = vpack.c.b16 %v10478, %v10474
  %v10507 = vpack.c.b16 %v10479, %v10475
  %v10508 = vpack.c.b16 %v10484, %v10480
  %v10509 = vpack.c.b16 %v10485, %v10481
  %v10510 = vpack.c.b16 %v10486, %v10482
  %v10511 = vpack.c.b16 %v10487, %v10483
  %v10512 = vpack.c.b16 %v10492, %v10488
  %v10513 = vpack.c.b16 %v10493, %v10489
  %v10514 = vpack.c.b16 %v10494, %v10490
  %v10515 = vpack.c.b16 %v10495, %v10491
  %v10516 = vpack.c.b16 %v10500, %v10496
  %v10517 = vpack.c.b16 %v10501, %v10497
  %v10518 = vpack.c.b16 %v10502, %v10498
  %v10519 = vpack.c.b16 %v10503, %v10499
  %v10537 = vsel %vm6873, %v9480, 0
  %10539 = vmatprep.subr.bf16.mxu0 0
  %10540 = vmatpush1.bf16.msra.mxu0 0
  %10541 = vmatprep.subr.bf16.mxu0 0
  %10542 = vmatpush1.bf16.msra.mxu0 0
  %10543 = vmatprep.subr.bf16.mxu0 0
  %10544 = vmatpush1.bf16.msra.mxu0 0
  %10545 = vmatprep.subr.bf16.mxu0 0
  %10546 = vmatpush1.bf16.msra.mxu0 0
  %10547 = vmatprep.subr.bf16.mxu0 %v10517
  %10548 = vmatpush1.bf16.msra.mxu0 %v10516
  %10549 = vmatprep.subr.bf16.mxu0 %v10513
  %10550 = vmatpush1.bf16.msra.mxu0 %v10512
  %10551 = vmatprep.subr.bf16.mxu0 %v10509
  %10552 = vmatpush1.bf16.msra.mxu0 %v10508
  %10553 = vmatprep.subr.bf16.mxu0 %v10505
  %10554 = vmatpush1.bf16.msra.mxu0 %v10504
  %10555 = vmatprep.subr.bf16.mxu0 0
  %10556 = vmatpush2.bf16.msra.mxu0 0
  %10557 = vmatprep.subr.bf16.mxu0 0
  %10558 = vmatpush2.bf16.msra.mxu0 0
  %10559 = vmatprep.subr.bf16.mxu0 0
  %10560 = vmatpush2.bf16.msra.mxu0 0
  %10561 = vmatprep.subr.bf16.mxu0 0
  %10562 = vmatpush2.bf16.msra.mxu0 0
  %10563 = vmatprep.subr.bf16.mxu0 0
  %10564 = vmatpush2.bf16.msra.mxu0 0
  %10565 = vmatprep.subr.bf16.mxu0 0
  %10566 = vmatpush2.bf16.msra.mxu0 0
  %10567 = vmatprep.subr.bf16.mxu0 0
  %10568 = vmatpush2.bf16.msra.mxu0 0
  %10569 = vmatprep.subr.bf16.mxu0 0
  %10570 = vmatpush2.bf16.msra.mxu0 0
  %10571 = vmatprep.mubr.bf16.mxu0 0
  %10572 = vmatmul.mubr.bf16.gmra.mxu0 %v10537
  %v10573 = vpop.f32.mrf.mxu0
  %v10574 = vadd.f32 0.0, %v10573
  %v10575 = vpop.f32.mrf.mxu0
  %v10576 = vadd.f32 0.0, %v10575
  %v10577 = vpop.f32.mrf.mxu0
  %v10578 = vadd.f32 0.0, %v10577
  %v10579 = vpop.f32.mrf.mxu0
  %v10580 = vadd.f32 0.0, %v10579
  %10581 = vdwg.mxu0
  %10582 = vmatprep.subr.bf16.mxu0 0
  %10583 = vmatpush1.bf16.msra.mxu0 0
  %10584 = vmatprep.subr.bf16.mxu0 0
  %10585 = vmatpush1.bf16.msra.mxu0 0
  %10586 = vmatprep.subr.bf16.mxu0 0
  %10587 = vmatpush1.bf16.msra.mxu0 0
  %10588 = vmatprep.subr.bf16.mxu0 0
  %10589 = vmatpush1.bf16.msra.mxu0 0
  %10590 = vmatprep.subr.bf16.mxu0 %v10519
  %10591 = vmatpush1.bf16.msra.mxu0 %v10518
  %10592 = vmatprep.subr.bf16.mxu0 %v10515
  %10593 = vmatpush1.bf16.msra.mxu0 %v10514
  %10594 = vmatprep.subr.bf16.mxu0 %v10511
  %10595 = vmatpush1.bf16.msra.mxu0 %v10510
  %10596 = vmatprep.subr.bf16.mxu0 %v10507
  %10597 = vmatpush1.bf16.msra.mxu0 %v10506
  %10598 = vmatprep.subr.bf16.mxu0 0
  %10599 = vmatpush2.bf16.msra.mxu0 0
  %10600 = vmatprep.subr.bf16.mxu0 0
  %10601 = vmatpush2.bf16.msra.mxu0 0
  %10602 = vmatprep.subr.bf16.mxu0 0
  %10603 = vmatpush2.bf16.msra.mxu0 0
  %10604 = vmatprep.subr.bf16.mxu0 0
  %10605 = vmatpush2.bf16.msra.mxu0 0
  %10606 = vmatprep.subr.bf16.mxu0 0
  %10607 = vmatpush2.bf16.msra.mxu0 0
  %10608 = vmatprep.subr.bf16.mxu0 0
  %10609 = vmatpush2.bf16.msra.mxu0 0
  %10610 = vmatprep.subr.bf16.mxu0 0
  %10611 = vmatpush2.bf16.msra.mxu0 0
  %10612 = vmatprep.subr.bf16.mxu0 0
  %10613 = vmatpush2.bf16.msra.mxu0 0
  %10614 = vmatprep.mubr.bf16.mxu0 0
  %10615 = vmatmul.mubr.bf16.gmra.mxu0 %v10537
  %v10616 = vpop.f32.mrf.mxu0
  %v10617 = vadd.f32 0.0, %v10616
  %v10618 = vpop.f32.mrf.mxu0
  %v10619 = vadd.f32 0.0, %v10618
  %v10620 = vpop.f32.mrf.mxu0
  %v10621 = vadd.f32 0.0, %v10620
  %v10622 = vpop.f32.mrf.mxu0
  %v10623 = vadd.f32 0.0, %v10622
  %10624 = vdwg.mxu0
  %v10625 = vadd.f32 %v10432, %v10574
  %v10626 = vadd.f32 %v10433, %v10576
  %v10627 = vadd.f32 %v10434, %v10617
  %v10628 = vadd.f32 %v10435, %v10619
  %v10629 = vadd.f32 %v10436, %v10578
  %v10630 = vadd.f32 %v10437, %v10580
  %v10631 = vadd.f32 %v10438, %v10621
  %v10632 = vadd.f32 %v10439, %v10623
  %v10633 = vld [vmem:[%s7 + $0x300] sm:$0xff]
  %v10634 = vld [vmem:[%s7 + $0x308] sm:$0xff]
  %v10635 = vld [vmem:[%s7 + $0x310] sm:$0xff]
  %v10636 = vld [vmem:[%s7 + $0x318] sm:$0xff]
  %v10637 = vld [vmem:[%s7 + $0x320] sm:$0xff]
  %v10638 = vld [vmem:[%s7 + $0x328] sm:$0xff]
  %v10639 = vld [vmem:[%s7 + $0x330] sm:$0xff]
  %v10640 = vld [vmem:[%s7 + $0x338] sm:$0xff]
  %v10641 = vld [vmem:[%s7 + $0x340] sm:$0xff]
  %v10642 = vld [vmem:[%s7 + $0x348] sm:$0xff]
  %v10643 = vld [vmem:[%s7 + $0x350] sm:$0xff]
  %v10644 = vld [vmem:[%s7 + $0x358] sm:$0xff]
  %v10645 = vld [vmem:[%s7 + $0x360] sm:$0xff]
  %v10646 = vld [vmem:[%s7 + $0x368] sm:$0xff]
  %v10647 = vld [vmem:[%s7 + $0x370] sm:$0xff]
  %v10648 = vld [vmem:[%s7 + $0x378] sm:$0xff]
  %v10665 = vunpack.c.l.b16 %v10633
  %v10666 = vunpack.c.h.b16 %v10633
  %v10667 = vunpack.c.l.b16 %v10634
  %v10668 = vunpack.c.h.b16 %v10634
  %v10669 = vunpack.c.l.b16 %v10635
  %v10670 = vunpack.c.h.b16 %v10635
  %v10671 = vunpack.c.l.b16 %v10636
  %v10672 = vunpack.c.h.b16 %v10636
  %v10673 = vunpack.c.l.b16 %v10637
  %v10674 = vunpack.c.h.b16 %v10637
  %v10675 = vunpack.c.l.b16 %v10638
  %v10676 = vunpack.c.h.b16 %v10638
  %v10677 = vunpack.c.l.b16 %v10639
  %v10678 = vunpack.c.h.b16 %v10639
  %v10679 = vunpack.c.l.b16 %v10640
  %v10680 = vunpack.c.h.b16 %v10640
  %v10681 = vunpack.c.l.b16 %v10641
  %v10682 = vunpack.c.h.b16 %v10641
  %v10683 = vunpack.c.l.b16 %v10642
  %v10684 = vunpack.c.h.b16 %v10642
  %v10685 = vunpack.c.l.b16 %v10643
  %v10686 = vunpack.c.h.b16 %v10643
  %v10687 = vunpack.c.l.b16 %v10644
  %v10688 = vunpack.c.h.b16 %v10644
  %v10689 = vunpack.c.l.b16 %v10645
  %v10690 = vunpack.c.h.b16 %v10645
  %v10691 = vunpack.c.l.b16 %v10646
  %v10692 = vunpack.c.h.b16 %v10646
  %v10693 = vunpack.c.l.b16 %v10647
  %v10694 = vunpack.c.h.b16 %v10647
  %v10695 = vunpack.c.l.b16 %v10648
  %v10696 = vunpack.c.h.b16 %v10648
  %v10697 = vpack.c.b16 %v10669, %v10665
  %v10698 = vpack.c.b16 %v10670, %v10666
  %v10699 = vpack.c.b16 %v10671, %v10667
  %v10700 = vpack.c.b16 %v10672, %v10668
  %v10701 = vpack.c.b16 %v10677, %v10673
  %v10702 = vpack.c.b16 %v10678, %v10674
  %v10703 = vpack.c.b16 %v10679, %v10675
  %v10704 = vpack.c.b16 %v10680, %v10676
  %v10705 = vpack.c.b16 %v10685, %v10681
  %v10706 = vpack.c.b16 %v10686, %v10682
  %v10707 = vpack.c.b16 %v10687, %v10683
  %v10708 = vpack.c.b16 %v10688, %v10684
  %v10709 = vpack.c.b16 %v10693, %v10689
  %v10710 = vpack.c.b16 %v10694, %v10690
  %v10711 = vpack.c.b16 %v10695, %v10691
  %v10712 = vpack.c.b16 %v10696, %v10692
  %v10730 = vsel %vm6873, %v9481, 0
  %10732 = vmatprep.subr.bf16.mxu0 0
  %10733 = vmatpush1.bf16.msra.mxu0 0
  %10734 = vmatprep.subr.bf16.mxu0 0
  %10735 = vmatpush1.bf16.msra.mxu0 0
  %10736 = vmatprep.subr.bf16.mxu0 0
  %10737 = vmatpush1.bf16.msra.mxu0 0
  %10738 = vmatprep.subr.bf16.mxu0 0
  %10739 = vmatpush1.bf16.msra.mxu0 0
  %10740 = vmatprep.subr.bf16.mxu0 %v10710
  %10741 = vmatpush1.bf16.msra.mxu0 %v10709
  %10742 = vmatprep.subr.bf16.mxu0 %v10706
  %10743 = vmatpush1.bf16.msra.mxu0 %v10705
  %10744 = vmatprep.subr.bf16.mxu0 %v10702
  %10745 = vmatpush1.bf16.msra.mxu0 %v10701
  %10746 = vmatprep.subr.bf16.mxu0 %v10698
  %10747 = vmatpush1.bf16.msra.mxu0 %v10697
  %10748 = vmatprep.subr.bf16.mxu0 0
  %10749 = vmatpush2.bf16.msra.mxu0 0
  %10750 = vmatprep.subr.bf16.mxu0 0
  %10751 = vmatpush2.bf16.msra.mxu0 0
  %10752 = vmatprep.subr.bf16.mxu0 0
  %10753 = vmatpush2.bf16.msra.mxu0 0
  %10754 = vmatprep.subr.bf16.mxu0 0
  %10755 = vmatpush2.bf16.msra.mxu0 0
  %10756 = vmatprep.subr.bf16.mxu0 0
  %10757 = vmatpush2.bf16.msra.mxu0 0
  %10758 = vmatprep.subr.bf16.mxu0 0
  %10759 = vmatpush2.bf16.msra.mxu0 0
  %10760 = vmatprep.subr.bf16.mxu0 0
  %10761 = vmatpush2.bf16.msra.mxu0 0
  %10762 = vmatprep.subr.bf16.mxu0 0
  %10763 = vmatpush2.bf16.msra.mxu0 0
  %10764 = vmatprep.mubr.bf16.mxu0 0
  %10765 = vmatmul.mubr.bf16.gmra.mxu0 %v10730
  %v10766 = vpop.f32.mrf.mxu0
  %v10767 = vadd.f32 0.0, %v10766
  %v10768 = vpop.f32.mrf.mxu0
  %v10769 = vadd.f32 0.0, %v10768
  %v10770 = vpop.f32.mrf.mxu0
  %v10771 = vadd.f32 0.0, %v10770
  %v10772 = vpop.f32.mrf.mxu0
  %v10773 = vadd.f32 0.0, %v10772
  %10774 = vdwg.mxu0
  %10775 = vmatprep.subr.bf16.mxu0 0
  %10776 = vmatpush1.bf16.msra.mxu0 0
  %10777 = vmatprep.subr.bf16.mxu0 0
  %10778 = vmatpush1.bf16.msra.mxu0 0
  %10779 = vmatprep.subr.bf16.mxu0 0
  %10780 = vmatpush1.bf16.msra.mxu0 0
  %10781 = vmatprep.subr.bf16.mxu0 0
  %10782 = vmatpush1.bf16.msra.mxu0 0
  %10783 = vmatprep.subr.bf16.mxu0 %v10712
  %10784 = vmatpush1.bf16.msra.mxu0 %v10711
  %10785 = vmatprep.subr.bf16.mxu0 %v10708
  %10786 = vmatpush1.bf16.msra.mxu0 %v10707
  %10787 = vmatprep.subr.bf16.mxu0 %v10704
  %10788 = vmatpush1.bf16.msra.mxu0 %v10703
  %10789 = vmatprep.subr.bf16.mxu0 %v10700
  %10790 = vmatpush1.bf16.msra.mxu0 %v10699
  %10791 = vmatprep.subr.bf16.mxu0 0
  %10792 = vmatpush2.bf16.msra.mxu0 0
  %10793 = vmatprep.subr.bf16.mxu0 0
  %10794 = vmatpush2.bf16.msra.mxu0 0
  %10795 = vmatprep.subr.bf16.mxu0 0
  %10796 = vmatpush2.bf16.msra.mxu0 0
  %10797 = vmatprep.subr.bf16.mxu0 0
  %10798 = vmatpush2.bf16.msra.mxu0 0
  %10799 = vmatprep.subr.bf16.mxu0 0
  %10800 = vmatpush2.bf16.msra.mxu0 0
  %10801 = vmatprep.subr.bf16.mxu0 0
  %10802 = vmatpush2.bf16.msra.mxu0 0
  %10803 = vmatprep.subr.bf16.mxu0 0
  %10804 = vmatpush2.bf16.msra.mxu0 0
  %10805 = vmatprep.subr.bf16.mxu0 0
  %10806 = vmatpush2.bf16.msra.mxu0 0
  %10807 = vmatprep.mubr.bf16.mxu0 0
  %10808 = vmatmul.mubr.bf16.gmra.mxu0 %v10730
  %v10809 = vpop.f32.mrf.mxu0
  %v10810 = vadd.f32 0.0, %v10809
  %v10811 = vpop.f32.mrf.mxu0
  %v10812 = vadd.f32 0.0, %v10811
  %v10813 = vpop.f32.mrf.mxu0
  %v10814 = vadd.f32 0.0, %v10813
  %v10815 = vpop.f32.mrf.mxu0
  %v10816 = vadd.f32 0.0, %v10815
  %10817 = vdwg.mxu0
  %v10818 = vadd.f32 %v10625, %v10767
  %v10819 = vadd.f32 %v10626, %v10769
  %v10820 = vadd.f32 %v10627, %v10810
  %v10821 = vadd.f32 %v10628, %v10812
  %v10822 = vadd.f32 %v10629, %v10771
  %v10823 = vadd.f32 %v10630, %v10773
  %v10824 = vadd.f32 %v10631, %v10814
  %v10825 = vadd.f32 %v10632, %v10816
  %v10826 = vld [vmem:[%s7 + $0x380] sm:$0xff]
  %v10827 = vld [vmem:[%s7 + $0x388] sm:$0xff]
  %v10828 = vld [vmem:[%s7 + $0x390] sm:$0xff]
  %v10829 = vld [vmem:[%s7 + $0x398] sm:$0xff]
  %v10830 = vld [vmem:[%s7 + $0x3a0] sm:$0xff]
  %v10831 = vld [vmem:[%s7 + $0x3a8] sm:$0xff]
  %v10832 = vld [vmem:[%s7 + $0x3b0] sm:$0xff]
  %v10833 = vld [vmem:[%s7 + $0x3b8] sm:$0xff]
  %v10834 = vld [vmem:[%s7 + $0x3c0] sm:$0xff]
  %v10835 = vld [vmem:[%s7 + $0x3c8] sm:$0xff]
  %v10836 = vld [vmem:[%s7 + $0x3d0] sm:$0xff]
  %v10837 = vld [vmem:[%s7 + $0x3d8] sm:$0xff]
  %v10838 = vld [vmem:[%s7 + $0x3e0] sm:$0xff]
  %v10839 = vld [vmem:[%s7 + $0x3e8] sm:$0xff]
  %v10840 = vld [vmem:[%s7 + $0x3f0] sm:$0xff]
  %v10841 = vld [vmem:[%s7 + $0x3f8] sm:$0xff]
  %v10858 = vunpack.c.l.b16 %v10826
  %v10859 = vunpack.c.h.b16 %v10826
  %v10860 = vunpack.c.l.b16 %v10827
  %v10861 = vunpack.c.h.b16 %v10827
  %v10862 = vunpack.c.l.b16 %v10828
  %v10863 = vunpack.c.h.b16 %v10828
  %v10864 = vunpack.c.l.b16 %v10829
  %v10865 = vunpack.c.h.b16 %v10829
  %v10866 = vunpack.c.l.b16 %v10830
  %v10867 = vunpack.c.h.b16 %v10830
  %v10868 = vunpack.c.l.b16 %v10831
  %v10869 = vunpack.c.h.b16 %v10831
  %v10870 = vunpack.c.l.b16 %v10832
  %v10871 = vunpack.c.h.b16 %v10832
  %v10872 = vunpack.c.l.b16 %v10833
  %v10873 = vunpack.c.h.b16 %v10833
  %v10874 = vunpack.c.l.b16 %v10834
  %v10875 = vunpack.c.h.b16 %v10834
  %v10876 = vunpack.c.l.b16 %v10835
  %v10877 = vunpack.c.h.b16 %v10835
  %v10878 = vunpack.c.l.b16 %v10836
  %v10879 = vunpack.c.h.b16 %v10836
  %v10880 = vunpack.c.l.b16 %v10837
  %v10881 = vunpack.c.h.b16 %v10837
  %v10882 = vunpack.c.l.b16 %v10838
  %v10883 = vunpack.c.h.b16 %v10838
  %v10884 = vunpack.c.l.b16 %v10839
  %v10885 = vunpack.c.h.b16 %v10839
  %v10886 = vunpack.c.l.b16 %v10840
  %v10887 = vunpack.c.h.b16 %v10840
  %v10888 = vunpack.c.l.b16 %v10841
  %v10889 = vunpack.c.h.b16 %v10841
  %v10890 = vpack.c.b16 %v10862, %v10858
  %v10891 = vpack.c.b16 %v10863, %v10859
  %v10892 = vpack.c.b16 %v10864, %v10860
  %v10893 = vpack.c.b16 %v10865, %v10861
  %v10894 = vpack.c.b16 %v10870, %v10866
  %v10895 = vpack.c.b16 %v10871, %v10867
  %v10896 = vpack.c.b16 %v10872, %v10868
  %v10897 = vpack.c.b16 %v10873, %v10869
  %v10898 = vpack.c.b16 %v10878, %v10874
  %v10899 = vpack.c.b16 %v10879, %v10875
  %v10900 = vpack.c.b16 %v10880, %v10876
  %v10901 = vpack.c.b16 %v10881, %v10877
  %v10902 = vpack.c.b16 %v10886, %v10882
  %v10903 = vpack.c.b16 %v10887, %v10883
  %v10904 = vpack.c.b16 %v10888, %v10884
  %v10905 = vpack.c.b16 %v10889, %v10885
  %v10923 = vsel %vm6873, %v9482, 0
  %10925 = vmatprep.subr.bf16.mxu0 0
  %10926 = vmatpush1.bf16.msra.mxu0 0
  %10927 = vmatprep.subr.bf16.mxu0 0
  %10928 = vmatpush1.bf16.msra.mxu0 0
  %10929 = vmatprep.subr.bf16.mxu0 0
  %10930 = vmatpush1.bf16.msra.mxu0 0
  %10931 = vmatprep.subr.bf16.mxu0 0
  %10932 = vmatpush1.bf16.msra.mxu0 0
  %10933 = vmatprep.subr.bf16.mxu0 %v10903
  %10934 = vmatpush1.bf16.msra.mxu0 %v10902
  %10935 = vmatprep.subr.bf16.mxu0 %v10899
  %10936 = vmatpush1.bf16.msra.mxu0 %v10898
  %10937 = vmatprep.subr.bf16.mxu0 %v10895
  %10938 = vmatpush1.bf16.msra.mxu0 %v10894
  %10939 = vmatprep.subr.bf16.mxu0 %v10891
  %10940 = vmatpush1.bf16.msra.mxu0 %v10890
  %10941 = vmatprep.subr.bf16.mxu0 0
  %10942 = vmatpush2.bf16.msra.mxu0 0
  %10943 = vmatprep.subr.bf16.mxu0 0
  %10944 = vmatpush2.bf16.msra.mxu0 0
  %10945 = vmatprep.subr.bf16.mxu0 0
  %10946 = vmatpush2.bf16.msra.mxu0 0
  %10947 = vmatprep.subr.bf16.mxu0 0
  %10948 = vmatpush2.bf16.msra.mxu0 0
  %10949 = vmatprep.subr.bf16.mxu0 0
  %10950 = vmatpush2.bf16.msra.mxu0 0
  %10951 = vmatprep.subr.bf16.mxu0 0
  %10952 = vmatpush2.bf16.msra.mxu0 0
  %10953 = vmatprep.subr.bf16.mxu0 0
  %10954 = vmatpush2.bf16.msra.mxu0 0
  %10955 = vmatprep.subr.bf16.mxu0 0
  %10956 = vmatpush2.bf16.msra.mxu0 0
  %10957 = vmatprep.mubr.bf16.mxu0 0
  %10958 = vmatmul.mubr.bf16.gmra.mxu0 %v10923
  %v10959 = vpop.f32.mrf.mxu0
  %v10960 = vadd.f32 0.0, %v10959
  %v10961 = vpop.f32.mrf.mxu0
  %v10962 = vadd.f32 0.0, %v10961
  %v10963 = vpop.f32.mrf.mxu0
  %v10964 = vadd.f32 0.0, %v10963
  %v10965 = vpop.f32.mrf.mxu0
  %v10966 = vadd.f32 0.0, %v10965
  %10967 = vdwg.mxu0
  %10968 = vmatprep.subr.bf16.mxu0 0
  %10969 = vmatpush1.bf16.msra.mxu0 0
  %10970 = vmatprep.subr.bf16.mxu0 0
  %10971 = vmatpush1.bf16.msra.mxu0 0
  %10972 = vmatprep.subr.bf16.mxu0 0
  %10973 = vmatpush1.bf16.msra.mxu0 0
  %10974 = vmatprep.subr.bf16.mxu0 0
  %10975 = vmatpush1.bf16.msra.mxu0 0
  %10976 = vmatprep.subr.bf16.mxu0 %v10905
  %10977 = vmatpush1.bf16.msra.mxu0 %v10904
  %10978 = vmatprep.subr.bf16.mxu0 %v10901
  %10979 = vmatpush1.bf16.msra.mxu0 %v10900
  %10980 = vmatprep.subr.bf16.mxu0 %v10897
  %10981 = vmatpush1.bf16.msra.mxu0 %v10896
  %10982 = vmatprep.subr.bf16.mxu0 %v10893
  %10983 = vmatpush1.bf16.msra.mxu0 %v10892
  %10984 = vmatprep.subr.bf16.mxu0 0
  %10985 = vmatpush2.bf16.msra.mxu0 0
  %10986 = vmatprep.subr.bf16.mxu0 0
  %10987 = vmatpush2.bf16.msra.mxu0 0
  %10988 = vmatprep.subr.bf16.mxu0 0
  %10989 = vmatpush2.bf16.msra.mxu0 0
  %10990 = vmatprep.subr.bf16.mxu0 0
  %10991 = vmatpush2.bf16.msra.mxu0 0
  %10992 = vmatprep.subr.bf16.mxu0 0
  %10993 = vmatpush2.bf16.msra.mxu0 0
  %10994 = vmatprep.subr.bf16.mxu0 0
  %10995 = vmatpush2.bf16.msra.mxu0 0
  %10996 = vmatprep.subr.bf16.mxu0 0
  %10997 = vmatpush2.bf16.msra.mxu0 0
  %10998 = vmatprep.subr.bf16.mxu0 0
  %10999 = vmatpush2.bf16.msra.mxu0 0
  %11000 = vmatprep.mubr.bf16.mxu0 0
  %11001 = vmatmul.mubr.bf16.gmra.mxu0 %v10923
  %v11002 = vpop.f32.mrf.mxu0
  %v11003 = vadd.f32 0.0, %v11002
  %v11004 = vpop.f32.mrf.mxu0
  %v11005 = vadd.f32 0.0, %v11004
  %v11006 = vpop.f32.mrf.mxu0
  %v11007 = vadd.f32 0.0, %v11006
  %v11008 = vpop.f32.mrf.mxu0
  %v11009 = vadd.f32 0.0, %v11008
  %11010 = vdwg.mxu0
  %v11011 = vadd.f32 %v10818, %v10960
  %v11012 = vadd.f32 %v10819, %v10962
  %v11013 = vadd.f32 %v10820, %v11003
  %v11014 = vadd.f32 %v10821, %v11005
  %v11015 = vadd.f32 %v10822, %v10964
  %v11016 = vadd.f32 %v10823, %v10966
  %v11017 = vadd.f32 %v10824, %v11007
  %v11018 = vadd.f32 %v10825, %v11009
  %v11019 = vld [vmem:[%s7 + $0x400] sm:$0xff]
  %v11020 = vld [vmem:[%s7 + $0x408] sm:$0xff]
  %v11021 = vld [vmem:[%s7 + $0x410] sm:$0xff]
  %v11022 = vld [vmem:[%s7 + $0x418] sm:$0xff]
  %v11023 = vld [vmem:[%s7 + $0x420] sm:$0xff]
  %v11024 = vld [vmem:[%s7 + $0x428] sm:$0xff]
  %v11025 = vld [vmem:[%s7 + $0x430] sm:$0xff]
  %v11026 = vld [vmem:[%s7 + $0x438] sm:$0xff]
  %v11027 = vld [vmem:[%s7 + $0x440] sm:$0xff]
  %v11028 = vld [vmem:[%s7 + $0x448] sm:$0xff]
  %v11029 = vld [vmem:[%s7 + $0x450] sm:$0xff]
  %v11030 = vld [vmem:[%s7 + $0x458] sm:$0xff]
  %v11031 = vld [vmem:[%s7 + $0x460] sm:$0xff]
  %v11032 = vld [vmem:[%s7 + $0x468] sm:$0xff]
  %v11033 = vld [vmem:[%s7 + $0x470] sm:$0xff]
  %v11034 = vld [vmem:[%s7 + $0x478] sm:$0xff]
  %v11051 = vunpack.c.l.b16 %v11019
  %v11052 = vunpack.c.h.b16 %v11019
  %v11053 = vunpack.c.l.b16 %v11020
  %v11054 = vunpack.c.h.b16 %v11020
  %v11055 = vunpack.c.l.b16 %v11021
  %v11056 = vunpack.c.h.b16 %v11021
  %v11057 = vunpack.c.l.b16 %v11022
  %v11058 = vunpack.c.h.b16 %v11022
  %v11059 = vunpack.c.l.b16 %v11023
  %v11060 = vunpack.c.h.b16 %v11023
  %v11061 = vunpack.c.l.b16 %v11024
  %v11062 = vunpack.c.h.b16 %v11024
  %v11063 = vunpack.c.l.b16 %v11025
  %v11064 = vunpack.c.h.b16 %v11025
  %v11065 = vunpack.c.l.b16 %v11026
  %v11066 = vunpack.c.h.b16 %v11026
  %v11067 = vunpack.c.l.b16 %v11027
  %v11068 = vunpack.c.h.b16 %v11027
  %v11069 = vunpack.c.l.b16 %v11028
  %v11070 = vunpack.c.h.b16 %v11028
  %v11071 = vunpack.c.l.b16 %v11029
  %v11072 = vunpack.c.h.b16 %v11029
  %v11073 = vunpack.c.l.b16 %v11030
  %v11074 = vunpack.c.h.b16 %v11030
  %v11075 = vunpack.c.l.b16 %v11031
  %v11076 = vunpack.c.h.b16 %v11031
  %v11077 = vunpack.c.l.b16 %v11032
  %v11078 = vunpack.c.h.b16 %v11032
  %v11079 = vunpack.c.l.b16 %v11033
  %v11080 = vunpack.c.h.b16 %v11033
  %v11081 = vunpack.c.l.b16 %v11034
  %v11082 = vunpack.c.h.b16 %v11034
  %v11083 = vpack.c.b16 %v11055, %v11051
  %v11084 = vpack.c.b16 %v11056, %v11052
  %v11085 = vpack.c.b16 %v11057, %v11053
  %v11086 = vpack.c.b16 %v11058, %v11054
  %v11087 = vpack.c.b16 %v11063, %v11059
  %v11088 = vpack.c.b16 %v11064, %v11060
  %v11089 = vpack.c.b16 %v11065, %v11061
  %v11090 = vpack.c.b16 %v11066, %v11062
  %v11091 = vpack.c.b16 %v11071, %v11067
  %v11092 = vpack.c.b16 %v11072, %v11068
  %v11093 = vpack.c.b16 %v11073, %v11069
  %v11094 = vpack.c.b16 %v11074, %v11070
  %v11095 = vpack.c.b16 %v11079, %v11075
  %v11096 = vpack.c.b16 %v11080, %v11076
  %v11097 = vpack.c.b16 %v11081, %v11077
  %v11098 = vpack.c.b16 %v11082, %v11078
  %v11116 = vsel %vm6873, %v9483, 0
  %11118 = vmatprep.subr.bf16.mxu0 0
  %11119 = vmatpush1.bf16.msra.mxu0 0
  %11120 = vmatprep.subr.bf16.mxu0 0
  %11121 = vmatpush1.bf16.msra.mxu0 0
  %11122 = vmatprep.subr.bf16.mxu0 0
  %11123 = vmatpush1.bf16.msra.mxu0 0
  %11124 = vmatprep.subr.bf16.mxu0 0
  %11125 = vmatpush1.bf16.msra.mxu0 0
  %11126 = vmatprep.subr.bf16.mxu0 %v11096
  %11127 = vmatpush1.bf16.msra.mxu0 %v11095
  %11128 = vmatprep.subr.bf16.mxu0 %v11092
  %11129 = vmatpush1.bf16.msra.mxu0 %v11091
  %11130 = vmatprep.subr.bf16.mxu0 %v11088
  %11131 = vmatpush1.bf16.msra.mxu0 %v11087
  %11132 = vmatprep.subr.bf16.mxu0 %v11084
  %11133 = vmatpush1.bf16.msra.mxu0 %v11083
  %11134 = vmatprep.subr.bf16.mxu0 0
  %11135 = vmatpush2.bf16.msra.mxu0 0
  %11136 = vmatprep.subr.bf16.mxu0 0
  %11137 = vmatpush2.bf16.msra.mxu0 0
  %11138 = vmatprep.subr.bf16.mxu0 0
  %11139 = vmatpush2.bf16.msra.mxu0 0
  %11140 = vmatprep.subr.bf16.mxu0 0
  %11141 = vmatpush2.bf16.msra.mxu0 0
  %11142 = vmatprep.subr.bf16.mxu0 0
  %11143 = vmatpush2.bf16.msra.mxu0 0
  %11144 = vmatprep.subr.bf16.mxu0 0
  %11145 = vmatpush2.bf16.msra.mxu0 0
  %11146 = vmatprep.subr.bf16.mxu0 0
  %11147 = vmatpush2.bf16.msra.mxu0 0
  %11148 = vmatprep.subr.bf16.mxu0 0
  %11149 = vmatpush2.bf16.msra.mxu0 0
  %11150 = vmatprep.mubr.bf16.mxu0 0
  %11151 = vmatmul.mubr.bf16.gmra.mxu0 %v11116
  %v11152 = vpop.f32.mrf.mxu0
  %v11153 = vadd.f32 0.0, %v11152
  %v11154 = vpop.f32.mrf.mxu0
  %v11155 = vadd.f32 0.0, %v11154
  %v11156 = vpop.f32.mrf.mxu0
  %v11157 = vadd.f32 0.0, %v11156
  %v11158 = vpop.f32.mrf.mxu0
  %v11159 = vadd.f32 0.0, %v11158
  %11160 = vdwg.mxu0
  %11161 = vmatprep.subr.bf16.mxu0 0
  %11162 = vmatpush1.bf16.msra.mxu0 0
  %11163 = vmatprep.subr.bf16.mxu0 0
  %11164 = vmatpush1.bf16.msra.mxu0 0
  %11165 = vmatprep.subr.bf16.mxu0 0
  %11166 = vmatpush1.bf16.msra.mxu0 0
  %11167 = vmatprep.subr.bf16.mxu0 0
  %11168 = vmatpush1.bf16.msra.mxu0 0
  %11169 = vmatprep.subr.bf16.mxu0 %v11098
  %11170 = vmatpush1.bf16.msra.mxu0 %v11097
  %11171 = vmatprep.subr.bf16.mxu0 %v11094
  %11172 = vmatpush1.bf16.msra.mxu0 %v11093
  %11173 = vmatprep.subr.bf16.mxu0 %v11090
  %11174 = vmatpush1.bf16.msra.mxu0 %v11089
  %11175 = vmatprep.subr.bf16.mxu0 %v11086
  %11176 = vmatpush1.bf16.msra.mxu0 %v11085
  %11177 = vmatprep.subr.bf16.mxu0 0
  %11178 = vmatpush2.bf16.msra.mxu0 0
  %11179 = vmatprep.subr.bf16.mxu0 0
  %11180 = vmatpush2.bf16.msra.mxu0 0
  %11181 = vmatprep.subr.bf16.mxu0 0
  %11182 = vmatpush2.bf16.msra.mxu0 0
  %11183 = vmatprep.subr.bf16.mxu0 0
  %11184 = vmatpush2.bf16.msra.mxu0 0
  %11185 = vmatprep.subr.bf16.mxu0 0
  %11186 = vmatpush2.bf16.msra.mxu0 0
  %11187 = vmatprep.subr.bf16.mxu0 0
  %11188 = vmatpush2.bf16.msra.mxu0 0
  %11189 = vmatprep.subr.bf16.mxu0 0
  %11190 = vmatpush2.bf16.msra.mxu0 0
  %11191 = vmatprep.subr.bf16.mxu0 0
  %11192 = vmatpush2.bf16.msra.mxu0 0
  %11193 = vmatprep.mubr.bf16.mxu0 0
  %11194 = vmatmul.mubr.bf16.gmra.mxu0 %v11116
  %v11195 = vpop.f32.mrf.mxu0
  %v11196 = vadd.f32 0.0, %v11195
  %v11197 = vpop.f32.mrf.mxu0
  %v11198 = vadd.f32 0.0, %v11197
  %v11199 = vpop.f32.mrf.mxu0
  %v11200 = vadd.f32 0.0, %v11199
  %v11201 = vpop.f32.mrf.mxu0
  %v11202 = vadd.f32 0.0, %v11201
  %11203 = vdwg.mxu0
  %v11204 = vadd.f32 %v11011, %v11153
  %v11205 = vadd.f32 %v11012, %v11155
  %v11206 = vadd.f32 %v11013, %v11196
  %v11207 = vadd.f32 %v11014, %v11198
  %v11208 = vadd.f32 %v11015, %v11157
  %v11209 = vadd.f32 %v11016, %v11159
  %v11210 = vadd.f32 %v11017, %v11200
  %v11211 = vadd.f32 %v11018, %v11202
  %v11212 = vld [vmem:[%s7 + $0x480] sm:$0xff]
  %v11213 = vld [vmem:[%s7 + $0x488] sm:$0xff]
  %v11214 = vld [vmem:[%s7 + $0x490] sm:$0xff]
  %v11215 = vld [vmem:[%s7 + $0x498] sm:$0xff]
  %v11216 = vld [vmem:[%s7 + $0x4a0] sm:$0xff]
  %v11217 = vld [vmem:[%s7 + $0x4a8] sm:$0xff]
  %v11218 = vld [vmem:[%s7 + $0x4b0] sm:$0xff]
  %v11219 = vld [vmem:[%s7 + $0x4b8] sm:$0xff]
  %v11220 = vld [vmem:[%s7 + $0x4c0] sm:$0xff]
  %v11221 = vld [vmem:[%s7 + $0x4c8] sm:$0xff]
  %v11222 = vld [vmem:[%s7 + $0x4d0] sm:$0xff]
  %v11223 = vld [vmem:[%s7 + $0x4d8] sm:$0xff]
  %v11224 = vld [vmem:[%s7 + $0x4e0] sm:$0xff]
  %v11225 = vld [vmem:[%s7 + $0x4e8] sm:$0xff]
  %v11226 = vld [vmem:[%s7 + $0x4f0] sm:$0xff]
  %v11227 = vld [vmem:[%s7 + $0x4f8] sm:$0xff]
  %v11244 = vunpack.c.l.b16 %v11212
  %v11245 = vunpack.c.h.b16 %v11212
  %v11246 = vunpack.c.l.b16 %v11213
  %v11247 = vunpack.c.h.b16 %v11213
  %v11248 = vunpack.c.l.b16 %v11214
  %v11249 = vunpack.c.h.b16 %v11214
  %v11250 = vunpack.c.l.b16 %v11215
  %v11251 = vunpack.c.h.b16 %v11215
  %v11252 = vunpack.c.l.b16 %v11216
  %v11253 = vunpack.c.h.b16 %v11216
  %v11254 = vunpack.c.l.b16 %v11217
  %v11255 = vunpack.c.h.b16 %v11217
  %v11256 = vunpack.c.l.b16 %v11218
  %v11257 = vunpack.c.h.b16 %v11218
  %v11258 = vunpack.c.l.b16 %v11219
  %v11259 = vunpack.c.h.b16 %v11219
  %v11260 = vunpack.c.l.b16 %v11220
  %v11261 = vunpack.c.h.b16 %v11220
  %v11262 = vunpack.c.l.b16 %v11221
  %v11263 = vunpack.c.h.b16 %v11221
  %v11264 = vunpack.c.l.b16 %v11222
  %v11265 = vunpack.c.h.b16 %v11222
  %v11266 = vunpack.c.l.b16 %v11223
  %v11267 = vunpack.c.h.b16 %v11223
  %v11268 = vunpack.c.l.b16 %v11224
  %v11269 = vunpack.c.h.b16 %v11224
  %v11270 = vunpack.c.l.b16 %v11225
  %v11271 = vunpack.c.h.b16 %v11225
  %v11272 = vunpack.c.l.b16 %v11226
  %v11273 = vunpack.c.h.b16 %v11226
  %v11274 = vunpack.c.l.b16 %v11227
  %v11275 = vunpack.c.h.b16 %v11227
  %v11276 = vpack.c.b16 %v11248, %v11244
  %v11277 = vpack.c.b16 %v11249, %v11245
  %v11278 = vpack.c.b16 %v11250, %v11246
  %v11279 = vpack.c.b16 %v11251, %v11247
  %v11280 = vpack.c.b16 %v11256, %v11252
  %v11281 = vpack.c.b16 %v11257, %v11253
  %v11282 = vpack.c.b16 %v11258, %v11254
  %v11283 = vpack.c.b16 %v11259, %v11255
  %v11284 = vpack.c.b16 %v11264, %v11260
  %v11285 = vpack.c.b16 %v11265, %v11261
  %v11286 = vpack.c.b16 %v11266, %v11262
  %v11287 = vpack.c.b16 %v11267, %v11263
  %v11288 = vpack.c.b16 %v11272, %v11268
  %v11289 = vpack.c.b16 %v11273, %v11269
  %v11290 = vpack.c.b16 %v11274, %v11270
  %v11291 = vpack.c.b16 %v11275, %v11271
  %v11309 = vsel %vm6873, %v9484, 0
  %11311 = vmatprep.subr.bf16.mxu0 0
  %11312 = vmatpush1.bf16.msra.mxu0 0
  %11313 = vmatprep.subr.bf16.mxu0 0
  %11314 = vmatpush1.bf16.msra.mxu0 0
  %11315 = vmatprep.subr.bf16.mxu0 0
  %11316 = vmatpush1.bf16.msra.mxu0 0
  %11317 = vmatprep.subr.bf16.mxu0 0
  %11318 = vmatpush1.bf16.msra.mxu0 0
  %11319 = vmatprep.subr.bf16.mxu0 %v11289
  %11320 = vmatpush1.bf16.msra.mxu0 %v11288
  %11321 = vmatprep.subr.bf16.mxu0 %v11285
  %11322 = vmatpush1.bf16.msra.mxu0 %v11284
  %11323 = vmatprep.subr.bf16.mxu0 %v11281
  %11324 = vmatpush1.bf16.msra.mxu0 %v11280
  %11325 = vmatprep.subr.bf16.mxu0 %v11277
  %11326 = vmatpush1.bf16.msra.mxu0 %v11276
  %11327 = vmatprep.subr.bf16.mxu0 0
  %11328 = vmatpush2.bf16.msra.mxu0 0
  %11329 = vmatprep.subr.bf16.mxu0 0
  %11330 = vmatpush2.bf16.msra.mxu0 0
  %11331 = vmatprep.subr.bf16.mxu0 0
  %11332 = vmatpush2.bf16.msra.mxu0 0
  %11333 = vmatprep.subr.bf16.mxu0 0
  %11334 = vmatpush2.bf16.msra.mxu0 0
  %11335 = vmatprep.subr.bf16.mxu0 0
  %11336 = vmatpush2.bf16.msra.mxu0 0
  %11337 = vmatprep.subr.bf16.mxu0 0
  %11338 = vmatpush2.bf16.msra.mxu0 0
  %11339 = vmatprep.subr.bf16.mxu0 0
  %11340 = vmatpush2.bf16.msra.mxu0 0
  %11341 = vmatprep.subr.bf16.mxu0 0
  %11342 = vmatpush2.bf16.msra.mxu0 0
  %11343 = vmatprep.mubr.bf16.mxu0 0
  %11344 = vmatmul.mubr.bf16.gmra.mxu0 %v11309
  %v11345 = vpop.f32.mrf.mxu0
  %v11346 = vadd.f32 0.0, %v11345
  %v11347 = vpop.f32.mrf.mxu0
  %v11348 = vadd.f32 0.0, %v11347
  %v11349 = vpop.f32.mrf.mxu0
  %v11350 = vadd.f32 0.0, %v11349
  %v11351 = vpop.f32.mrf.mxu0
  %v11352 = vadd.f32 0.0, %v11351
  %11353 = vdwg.mxu0
  %11354 = vmatprep.subr.bf16.mxu0 0
  %11355 = vmatpush1.bf16.msra.mxu0 0
  %11356 = vmatprep.subr.bf16.mxu0 0
  %11357 = vmatpush1.bf16.msra.mxu0 0
  %11358 = vmatprep.subr.bf16.mxu0 0
  %11359 = vmatpush1.bf16.msra.mxu0 0
  %11360 = vmatprep.subr.bf16.mxu0 0
  %11361 = vmatpush1.bf16.msra.mxu0 0
  %11362 = vmatprep.subr.bf16.mxu0 %v11291
  %11363 = vmatpush1.bf16.msra.mxu0 %v11290
  %11364 = vmatprep.subr.bf16.mxu0 %v11287
  %11365 = vmatpush1.bf16.msra.mxu0 %v11286
  %11366 = vmatprep.subr.bf16.mxu0 %v11283
  %11367 = vmatpush1.bf16.msra.mxu0 %v11282
  %11368 = vmatprep.subr.bf16.mxu0 %v11279
  %11369 = vmatpush1.bf16.msra.mxu0 %v11278
  %11370 = vmatprep.subr.bf16.mxu0 0
  %11371 = vmatpush2.bf16.msra.mxu0 0
  %11372 = vmatprep.subr.bf16.mxu0 0
  %11373 = vmatpush2.bf16.msra.mxu0 0
  %11374 = vmatprep.subr.bf16.mxu0 0
  %11375 = vmatpush2.bf16.msra.mxu0 0
  %11376 = vmatprep.subr.bf16.mxu0 0
  %11377 = vmatpush2.bf16.msra.mxu0 0
  %11378 = vmatprep.subr.bf16.mxu0 0
  %11379 = vmatpush2.bf16.msra.mxu0 0
  %11380 = vmatprep.subr.bf16.mxu0 0
  %11381 = vmatpush2.bf16.msra.mxu0 0
  %11382 = vmatprep.subr.bf16.mxu0 0
  %11383 = vmatpush2.bf16.msra.mxu0 0
  %11384 = vmatprep.subr.bf16.mxu0 0
  %11385 = vmatpush2.bf16.msra.mxu0 0
  %11386 = vmatprep.mubr.bf16.mxu0 0
  %11387 = vmatmul.mubr.bf16.gmra.mxu0 %v11309
  %v11388 = vpop.f32.mrf.mxu0
  %v11389 = vadd.f32 0.0, %v11388
  %v11390 = vpop.f32.mrf.mxu0
  %v11391 = vadd.f32 0.0, %v11390
  %v11392 = vpop.f32.mrf.mxu0
  %v11393 = vadd.f32 0.0, %v11392
  %v11394 = vpop.f32.mrf.mxu0
  %v11395 = vadd.f32 0.0, %v11394
  %11396 = vdwg.mxu0
  %v11397 = vadd.f32 %v11204, %v11346
  %v11398 = vadd.f32 %v11205, %v11348
  %v11399 = vadd.f32 %v11206, %v11389
  %v11400 = vadd.f32 %v11207, %v11391
  %v11401 = vadd.f32 %v11208, %v11350
  %v11402 = vadd.f32 %v11209, %v11352
  %v11403 = vadd.f32 %v11210, %v11393
  %v11404 = vadd.f32 %v11211, %v11395
  %v11405 = vld [vmem:[%s7 + $0x500] sm:$0xff]
  %v11406 = vld [vmem:[%s7 + $0x508] sm:$0xff]
  %v11407 = vld [vmem:[%s7 + $0x510] sm:$0xff]
  %v11408 = vld [vmem:[%s7 + $0x518] sm:$0xff]
  %v11409 = vld [vmem:[%s7 + $0x520] sm:$0xff]
  %v11410 = vld [vmem:[%s7 + $0x528] sm:$0xff]
  %v11411 = vld [vmem:[%s7 + $0x530] sm:$0xff]
  %v11412 = vld [vmem:[%s7 + $0x538] sm:$0xff]
  %v11413 = vld [vmem:[%s7 + $0x540] sm:$0xff]
  %v11414 = vld [vmem:[%s7 + $0x548] sm:$0xff]
  %v11415 = vld [vmem:[%s7 + $0x550] sm:$0xff]
  %v11416 = vld [vmem:[%s7 + $0x558] sm:$0xff]
  %v11417 = vld [vmem:[%s7 + $0x560] sm:$0xff]
  %v11418 = vld [vmem:[%s7 + $0x568] sm:$0xff]
  %v11419 = vld [vmem:[%s7 + $0x570] sm:$0xff]
  %v11420 = vld [vmem:[%s7 + $0x578] sm:$0xff]
  %v11437 = vunpack.c.l.b16 %v11405
  %v11438 = vunpack.c.h.b16 %v11405
  %v11439 = vunpack.c.l.b16 %v11406
  %v11440 = vunpack.c.h.b16 %v11406
  %v11441 = vunpack.c.l.b16 %v11407
  %v11442 = vunpack.c.h.b16 %v11407
  %v11443 = vunpack.c.l.b16 %v11408
  %v11444 = vunpack.c.h.b16 %v11408
  %v11445 = vunpack.c.l.b16 %v11409
  %v11446 = vunpack.c.h.b16 %v11409
  %v11447 = vunpack.c.l.b16 %v11410
  %v11448 = vunpack.c.h.b16 %v11410
  %v11449 = vunpack.c.l.b16 %v11411
  %v11450 = vunpack.c.h.b16 %v11411
  %v11451 = vunpack.c.l.b16 %v11412
  %v11452 = vunpack.c.h.b16 %v11412
  %v11453 = vunpack.c.l.b16 %v11413
  %v11454 = vunpack.c.h.b16 %v11413
  %v11455 = vunpack.c.l.b16 %v11414
  %v11456 = vunpack.c.h.b16 %v11414
  %v11457 = vunpack.c.l.b16 %v11415
  %v11458 = vunpack.c.h.b16 %v11415
  %v11459 = vunpack.c.l.b16 %v11416
  %v11460 = vunpack.c.h.b16 %v11416
  %v11461 = vunpack.c.l.b16 %v11417
  %v11462 = vunpack.c.h.b16 %v11417
  %v11463 = vunpack.c.l.b16 %v11418
  %v11464 = vunpack.c.h.b16 %v11418
  %v11465 = vunpack.c.l.b16 %v11419
  %v11466 = vunpack.c.h.b16 %v11419
  %v11467 = vunpack.c.l.b16 %v11420
  %v11468 = vunpack.c.h.b16 %v11420
  %v11469 = vpack.c.b16 %v11441, %v11437
  %v11470 = vpack.c.b16 %v11442, %v11438
  %v11471 = vpack.c.b16 %v11443, %v11439
  %v11472 = vpack.c.b16 %v11444, %v11440
  %v11473 = vpack.c.b16 %v11449, %v11445
  %v11474 = vpack.c.b16 %v11450, %v11446
  %v11475 = vpack.c.b16 %v11451, %v11447
  %v11476 = vpack.c.b16 %v11452, %v11448
  %v11477 = vpack.c.b16 %v11457, %v11453
  %v11478 = vpack.c.b16 %v11458, %v11454
  %v11479 = vpack.c.b16 %v11459, %v11455
  %v11480 = vpack.c.b16 %v11460, %v11456
  %v11481 = vpack.c.b16 %v11465, %v11461
  %v11482 = vpack.c.b16 %v11466, %v11462
  %v11483 = vpack.c.b16 %v11467, %v11463
  %v11484 = vpack.c.b16 %v11468, %v11464
  %v11502 = vsel %vm6873, %v9485, 0
  %11504 = vmatprep.subr.bf16.mxu0 0
  %11505 = vmatpush1.bf16.msra.mxu0 0
  %11506 = vmatprep.subr.bf16.mxu0 0
  %11507 = vmatpush1.bf16.msra.mxu0 0
  %11508 = vmatprep.subr.bf16.mxu0 0
  %11509 = vmatpush1.bf16.msra.mxu0 0
  %11510 = vmatprep.subr.bf16.mxu0 0
  %11511 = vmatpush1.bf16.msra.mxu0 0
  %11512 = vmatprep.subr.bf16.mxu0 %v11482
  %11513 = vmatpush1.bf16.msra.mxu0 %v11481
  %11514 = vmatprep.subr.bf16.mxu0 %v11478
  %11515 = vmatpush1.bf16.msra.mxu0 %v11477
  %11516 = vmatprep.subr.bf16.mxu0 %v11474
  %11517 = vmatpush1.bf16.msra.mxu0 %v11473
  %11518 = vmatprep.subr.bf16.mxu0 %v11470
  %11519 = vmatpush1.bf16.msra.mxu0 %v11469
  %11520 = vmatprep.subr.bf16.mxu0 0
  %11521 = vmatpush2.bf16.msra.mxu0 0
  %11522 = vmatprep.subr.bf16.mxu0 0
  %11523 = vmatpush2.bf16.msra.mxu0 0
  %11524 = vmatprep.subr.bf16.mxu0 0
  %11525 = vmatpush2.bf16.msra.mxu0 0
  %11526 = vmatprep.subr.bf16.mxu0 0
  %11527 = vmatpush2.bf16.msra.mxu0 0
  %11528 = vmatprep.subr.bf16.mxu0 0
  %11529 = vmatpush2.bf16.msra.mxu0 0
  %11530 = vmatprep.subr.bf16.mxu0 0
  %11531 = vmatpush2.bf16.msra.mxu0 0
  %11532 = vmatprep.subr.bf16.mxu0 0
  %11533 = vmatpush2.bf16.msra.mxu0 0
  %11534 = vmatprep.subr.bf16.mxu0 0
  %11535 = vmatpush2.bf16.msra.mxu0 0
  %11536 = vmatprep.mubr.bf16.mxu0 0
  %11537 = vmatmul.mubr.bf16.gmra.mxu0 %v11502
  %v11538 = vpop.f32.mrf.mxu0
  %v11539 = vadd.f32 0.0, %v11538
  %v11540 = vpop.f32.mrf.mxu0
  %v11541 = vadd.f32 0.0, %v11540
  %v11542 = vpop.f32.mrf.mxu0
  %v11543 = vadd.f32 0.0, %v11542
  %v11544 = vpop.f32.mrf.mxu0
  %v11545 = vadd.f32 0.0, %v11544
  %11546 = vdwg.mxu0
  %11547 = vmatprep.subr.bf16.mxu0 0
  %11548 = vmatpush1.bf16.msra.mxu0 0
  %11549 = vmatprep.subr.bf16.mxu0 0
  %11550 = vmatpush1.bf16.msra.mxu0 0
  %11551 = vmatprep.subr.bf16.mxu0 0
  %11552 = vmatpush1.bf16.msra.mxu0 0
  %11553 = vmatprep.subr.bf16.mxu0 0
  %11554 = vmatpush1.bf16.msra.mxu0 0
  %11555 = vmatprep.subr.bf16.mxu0 %v11484
  %11556 = vmatpush1.bf16.msra.mxu0 %v11483
  %11557 = vmatprep.subr.bf16.mxu0 %v11480
  %11558 = vmatpush1.bf16.msra.mxu0 %v11479
  %11559 = vmatprep.subr.bf16.mxu0 %v11476
  %11560 = vmatpush1.bf16.msra.mxu0 %v11475
  %11561 = vmatprep.subr.bf16.mxu0 %v11472
  %11562 = vmatpush1.bf16.msra.mxu0 %v11471
  %11563 = vmatprep.subr.bf16.mxu0 0
  %11564 = vmatpush2.bf16.msra.mxu0 0
  %11565 = vmatprep.subr.bf16.mxu0 0
  %11566 = vmatpush2.bf16.msra.mxu0 0
  %11567 = vmatprep.subr.bf16.mxu0 0
  %11568 = vmatpush2.bf16.msra.mxu0 0
  %11569 = vmatprep.subr.bf16.mxu0 0
  %11570 = vmatpush2.bf16.msra.mxu0 0
  %11571 = vmatprep.subr.bf16.mxu0 0
  %11572 = vmatpush2.bf16.msra.mxu0 0
  %11573 = vmatprep.subr.bf16.mxu0 0
  %11574 = vmatpush2.bf16.msra.mxu0 0
  %11575 = vmatprep.subr.bf16.mxu0 0
  %11576 = vmatpush2.bf16.msra.mxu0 0
  %11577 = vmatprep.subr.bf16.mxu0 0
  %11578 = vmatpush2.bf16.msra.mxu0 0
  %11579 = vmatprep.mubr.bf16.mxu0 0
  %11580 = vmatmul.mubr.bf16.gmra.mxu0 %v11502
  %v11581 = vpop.f32.mrf.mxu0
  %v11582 = vadd.f32 0.0, %v11581
  %v11583 = vpop.f32.mrf.mxu0
  %v11584 = vadd.f32 0.0, %v11583
  %v11585 = vpop.f32.mrf.mxu0
  %v11586 = vadd.f32 0.0, %v11585
  %v11587 = vpop.f32.mrf.mxu0
  %v11588 = vadd.f32 0.0, %v11587
  %11589 = vdwg.mxu0
  %v11590 = vadd.f32 %v11397, %v11539
  %v11591 = vadd.f32 %v11398, %v11541
  %v11592 = vadd.f32 %v11399, %v11582
  %v11593 = vadd.f32 %v11400, %v11584
  %v11594 = vadd.f32 %v11401, %v11543
  %v11595 = vadd.f32 %v11402, %v11545
  %v11596 = vadd.f32 %v11403, %v11586
  %v11597 = vadd.f32 %v11404, %v11588
  %v11598 = vld [vmem:[%s7 + $0x580] sm:$0xff]
  %v11599 = vld [vmem:[%s7 + $0x588] sm:$0xff]
  %v11600 = vld [vmem:[%s7 + $0x590] sm:$0xff]
  %v11601 = vld [vmem:[%s7 + $0x598] sm:$0xff]
  %v11602 = vld [vmem:[%s7 + $0x5a0] sm:$0xff]
  %v11603 = vld [vmem:[%s7 + $0x5a8] sm:$0xff]
  %v11604 = vld [vmem:[%s7 + $0x5b0] sm:$0xff]
  %v11605 = vld [vmem:[%s7 + $0x5b8] sm:$0xff]
  %v11606 = vld [vmem:[%s7 + $0x5c0] sm:$0xff]
  %v11607 = vld [vmem:[%s7 + $0x5c8] sm:$0xff]
  %v11608 = vld [vmem:[%s7 + $0x5d0] sm:$0xff]
  %v11609 = vld [vmem:[%s7 + $0x5d8] sm:$0xff]
  %v11610 = vld [vmem:[%s7 + $0x5e0] sm:$0xff]
  %v11611 = vld [vmem:[%s7 + $0x5e8] sm:$0xff]
  %v11612 = vld [vmem:[%s7 + $0x5f0] sm:$0xff]
  %v11613 = vld [vmem:[%s7 + $0x5f8] sm:$0xff]
  %v11630 = vunpack.c.l.b16 %v11598
  %v11631 = vunpack.c.h.b16 %v11598
  %v11632 = vunpack.c.l.b16 %v11599
  %v11633 = vunpack.c.h.b16 %v11599
  %v11634 = vunpack.c.l.b16 %v11600
  %v11635 = vunpack.c.h.b16 %v11600
  %v11636 = vunpack.c.l.b16 %v11601
  %v11637 = vunpack.c.h.b16 %v11601
  %v11638 = vunpack.c.l.b16 %v11602
  %v11639 = vunpack.c.h.b16 %v11602
  %v11640 = vunpack.c.l.b16 %v11603
  %v11641 = vunpack.c.h.b16 %v11603
  %v11642 = vunpack.c.l.b16 %v11604
  %v11643 = vunpack.c.h.b16 %v11604
  %v11644 = vunpack.c.l.b16 %v11605
  %v11645 = vunpack.c.h.b16 %v11605
  %v11646 = vunpack.c.l.b16 %v11606
  %v11647 = vunpack.c.h.b16 %v11606
  %v11648 = vunpack.c.l.b16 %v11607
  %v11649 = vunpack.c.h.b16 %v11607
  %v11650 = vunpack.c.l.b16 %v11608
  %v11651 = vunpack.c.h.b16 %v11608
  %v11652 = vunpack.c.l.b16 %v11609
  %v11653 = vunpack.c.h.b16 %v11609
  %v11654 = vunpack.c.l.b16 %v11610
  %v11655 = vunpack.c.h.b16 %v11610
  %v11656 = vunpack.c.l.b16 %v11611
  %v11657 = vunpack.c.h.b16 %v11611
  %v11658 = vunpack.c.l.b16 %v11612
  %v11659 = vunpack.c.h.b16 %v11612
  %v11660 = vunpack.c.l.b16 %v11613
  %v11661 = vunpack.c.h.b16 %v11613
  %v11662 = vpack.c.b16 %v11634, %v11630
  %v11663 = vpack.c.b16 %v11635, %v11631
  %v11664 = vpack.c.b16 %v11636, %v11632
  %v11665 = vpack.c.b16 %v11637, %v11633
  %v11666 = vpack.c.b16 %v11642, %v11638
  %v11667 = vpack.c.b16 %v11643, %v11639
  %v11668 = vpack.c.b16 %v11644, %v11640
  %v11669 = vpack.c.b16 %v11645, %v11641
  %v11670 = vpack.c.b16 %v11650, %v11646
  %v11671 = vpack.c.b16 %v11651, %v11647
  %v11672 = vpack.c.b16 %v11652, %v11648
  %v11673 = vpack.c.b16 %v11653, %v11649
  %v11674 = vpack.c.b16 %v11658, %v11654
  %v11675 = vpack.c.b16 %v11659, %v11655
  %v11676 = vpack.c.b16 %v11660, %v11656
  %v11677 = vpack.c.b16 %v11661, %v11657
  %v11695 = vsel %vm6873, %v9486, 0
  %11697 = vmatprep.subr.bf16.mxu0 0
  %11698 = vmatpush1.bf16.msra.mxu0 0
  %11699 = vmatprep.subr.bf16.mxu0 0
  %11700 = vmatpush1.bf16.msra.mxu0 0
  %11701 = vmatprep.subr.bf16.mxu0 0
  %11702 = vmatpush1.bf16.msra.mxu0 0
  %11703 = vmatprep.subr.bf16.mxu0 0
  %11704 = vmatpush1.bf16.msra.mxu0 0
  %11705 = vmatprep.subr.bf16.mxu0 %v11675
  %11706 = vmatpush1.bf16.msra.mxu0 %v11674
  %11707 = vmatprep.subr.bf16.mxu0 %v11671
  %11708 = vmatpush1.bf16.msra.mxu0 %v11670
  %11709 = vmatprep.subr.bf16.mxu0 %v11667
  %11710 = vmatpush1.bf16.msra.mxu0 %v11666
  %11711 = vmatprep.subr.bf16.mxu0 %v11663
  %11712 = vmatpush1.bf16.msra.mxu0 %v11662
  %11713 = vmatprep.subr.bf16.mxu0 0
  %11714 = vmatpush2.bf16.msra.mxu0 0
  %11715 = vmatprep.subr.bf16.mxu0 0
  %11716 = vmatpush2.bf16.msra.mxu0 0
  %11717 = vmatprep.subr.bf16.mxu0 0
  %11718 = vmatpush2.bf16.msra.mxu0 0
  %11719 = vmatprep.subr.bf16.mxu0 0
  %11720 = vmatpush2.bf16.msra.mxu0 0
  %11721 = vmatprep.subr.bf16.mxu0 0
  %11722 = vmatpush2.bf16.msra.mxu0 0
  %11723 = vmatprep.subr.bf16.mxu0 0
  %11724 = vmatpush2.bf16.msra.mxu0 0
  %11725 = vmatprep.subr.bf16.mxu0 0
  %11726 = vmatpush2.bf16.msra.mxu0 0
  %11727 = vmatprep.subr.bf16.mxu0 0
  %11728 = vmatpush2.bf16.msra.mxu0 0
  %11729 = vmatprep.mubr.bf16.mxu0 0
  %11730 = vmatmul.mubr.bf16.gmra.mxu0 %v11695
  %v11731 = vpop.f32.mrf.mxu0
  %v11732 = vadd.f32 0.0, %v11731
  %v11733 = vpop.f32.mrf.mxu0
  %v11734 = vadd.f32 0.0, %v11733
  %v11735 = vpop.f32.mrf.mxu0
  %v11736 = vadd.f32 0.0, %v11735
  %v11737 = vpop.f32.mrf.mxu0
  %v11738 = vadd.f32 0.0, %v11737
  %11739 = vdwg.mxu0
  %11740 = vmatprep.subr.bf16.mxu0 0
  %11741 = vmatpush1.bf16.msra.mxu0 0
  %11742 = vmatprep.subr.bf16.mxu0 0
  %11743 = vmatpush1.bf16.msra.mxu0 0
  %11744 = vmatprep.subr.bf16.mxu0 0
  %11745 = vmatpush1.bf16.msra.mxu0 0
  %11746 = vmatprep.subr.bf16.mxu0 0
  %11747 = vmatpush1.bf16.msra.mxu0 0
  %11748 = vmatprep.subr.bf16.mxu0 %v11677
  %11749 = vmatpush1.bf16.msra.mxu0 %v11676
  %11750 = vmatprep.subr.bf16.mxu0 %v11673
  %11751 = vmatpush1.bf16.msra.mxu0 %v11672
  %11752 = vmatprep.subr.bf16.mxu0 %v11669
  %11753 = vmatpush1.bf16.msra.mxu0 %v11668
  %11754 = vmatprep.subr.bf16.mxu0 %v11665
  %11755 = vmatpush1.bf16.msra.mxu0 %v11664
  %11756 = vmatprep.subr.bf16.mxu0 0
  %11757 = vmatpush2.bf16.msra.mxu0 0
  %11758 = vmatprep.subr.bf16.mxu0 0
  %11759 = vmatpush2.bf16.msra.mxu0 0
  %11760 = vmatprep.subr.bf16.mxu0 0
  %11761 = vmatpush2.bf16.msra.mxu0 0
  %11762 = vmatprep.subr.bf16.mxu0 0
  %11763 = vmatpush2.bf16.msra.mxu0 0
  %11764 = vmatprep.subr.bf16.mxu0 0
  %11765 = vmatpush2.bf16.msra.mxu0 0
  %11766 = vmatprep.subr.bf16.mxu0 0
  %11767 = vmatpush2.bf16.msra.mxu0 0
  %11768 = vmatprep.subr.bf16.mxu0 0
  %11769 = vmatpush2.bf16.msra.mxu0 0
  %11770 = vmatprep.subr.bf16.mxu0 0
  %11771 = vmatpush2.bf16.msra.mxu0 0
  %11772 = vmatprep.mubr.bf16.mxu0 0
  %11773 = vmatmul.mubr.bf16.gmra.mxu0 %v11695
  %v11774 = vpop.f32.mrf.mxu0
  %v11775 = vadd.f32 0.0, %v11774
  %v11776 = vpop.f32.mrf.mxu0
  %v11777 = vadd.f32 0.0, %v11776
  %v11778 = vpop.f32.mrf.mxu0
  %v11779 = vadd.f32 0.0, %v11778
  %v11780 = vpop.f32.mrf.mxu0
  %v11781 = vadd.f32 0.0, %v11780
  %11782 = vdwg.mxu0
  %v11783 = vadd.f32 %v11590, %v11732
  %v11784 = vadd.f32 %v11591, %v11734
  %v11785 = vadd.f32 %v11592, %v11775
  %v11786 = vadd.f32 %v11593, %v11777
  %v11787 = vadd.f32 %v11594, %v11736
  %v11788 = vadd.f32 %v11595, %v11738
  %v11789 = vadd.f32 %v11596, %v11779
  %v11790 = vadd.f32 %v11597, %v11781
  %v11791 = vld [vmem:[%s7 + $0x600] sm:$0xff]
  %v11792 = vld [vmem:[%s7 + $0x608] sm:$0xff]
  %v11793 = vld [vmem:[%s7 + $0x610] sm:$0xff]
  %v11794 = vld [vmem:[%s7 + $0x618] sm:$0xff]
  %v11795 = vld [vmem:[%s7 + $0x620] sm:$0xff]
  %v11796 = vld [vmem:[%s7 + $0x628] sm:$0xff]
  %v11797 = vld [vmem:[%s7 + $0x630] sm:$0xff]
  %v11798 = vld [vmem:[%s7 + $0x638] sm:$0xff]
  %v11799 = vld [vmem:[%s7 + $0x640] sm:$0xff]
  %v11800 = vld [vmem:[%s7 + $0x648] sm:$0xff]
  %v11801 = vld [vmem:[%s7 + $0x650] sm:$0xff]
  %v11802 = vld [vmem:[%s7 + $0x658] sm:$0xff]
  %v11803 = vld [vmem:[%s7 + $0x660] sm:$0xff]
  %v11804 = vld [vmem:[%s7 + $0x668] sm:$0xff]
  %v11805 = vld [vmem:[%s7 + $0x670] sm:$0xff]
  %v11806 = vld [vmem:[%s7 + $0x678] sm:$0xff]
  %v11823 = vunpack.c.l.b16 %v11791
  %v11824 = vunpack.c.h.b16 %v11791
  %v11825 = vunpack.c.l.b16 %v11792
  %v11826 = vunpack.c.h.b16 %v11792
  %v11827 = vunpack.c.l.b16 %v11793
  %v11828 = vunpack.c.h.b16 %v11793
  %v11829 = vunpack.c.l.b16 %v11794
  %v11830 = vunpack.c.h.b16 %v11794
  %v11831 = vunpack.c.l.b16 %v11795
  %v11832 = vunpack.c.h.b16 %v11795
  %v11833 = vunpack.c.l.b16 %v11796
  %v11834 = vunpack.c.h.b16 %v11796
  %v11835 = vunpack.c.l.b16 %v11797
  %v11836 = vunpack.c.h.b16 %v11797
  %v11837 = vunpack.c.l.b16 %v11798
  %v11838 = vunpack.c.h.b16 %v11798
  %v11839 = vunpack.c.l.b16 %v11799
  %v11840 = vunpack.c.h.b16 %v11799
  %v11841 = vunpack.c.l.b16 %v11800
  %v11842 = vunpack.c.h.b16 %v11800
  %v11843 = vunpack.c.l.b16 %v11801
  %v11844 = vunpack.c.h.b16 %v11801
  %v11845 = vunpack.c.l.b16 %v11802
  %v11846 = vunpack.c.h.b16 %v11802
  %v11847 = vunpack.c.l.b16 %v11803
  %v11848 = vunpack.c.h.b16 %v11803
  %v11849 = vunpack.c.l.b16 %v11804
  %v11850 = vunpack.c.h.b16 %v11804
  %v11851 = vunpack.c.l.b16 %v11805
  %v11852 = vunpack.c.h.b16 %v11805
  %v11853 = vunpack.c.l.b16 %v11806
  %v11854 = vunpack.c.h.b16 %v11806
  %v11855 = vpack.c.b16 %v11827, %v11823
  %v11856 = vpack.c.b16 %v11828, %v11824
  %v11857 = vpack.c.b16 %v11829, %v11825
  %v11858 = vpack.c.b16 %v11830, %v11826
  %v11859 = vpack.c.b16 %v11835, %v11831
  %v11860 = vpack.c.b16 %v11836, %v11832
  %v11861 = vpack.c.b16 %v11837, %v11833
  %v11862 = vpack.c.b16 %v11838, %v11834
  %v11863 = vpack.c.b16 %v11843, %v11839
  %v11864 = vpack.c.b16 %v11844, %v11840
  %v11865 = vpack.c.b16 %v11845, %v11841
  %v11866 = vpack.c.b16 %v11846, %v11842
  %v11867 = vpack.c.b16 %v11851, %v11847
  %v11868 = vpack.c.b16 %v11852, %v11848
  %v11869 = vpack.c.b16 %v11853, %v11849
  %v11870 = vpack.c.b16 %v11854, %v11850
  %v11888 = vsel %vm6873, %v9487, 0
  %11890 = vmatprep.subr.bf16.mxu0 0
  %11891 = vmatpush1.bf16.msra.mxu0 0
  %11892 = vmatprep.subr.bf16.mxu0 0
  %11893 = vmatpush1.bf16.msra.mxu0 0
  %11894 = vmatprep.subr.bf16.mxu0 0
  %11895 = vmatpush1.bf16.msra.mxu0 0
  %11896 = vmatprep.subr.bf16.mxu0 0
  %11897 = vmatpush1.bf16.msra.mxu0 0
  %11898 = vmatprep.subr.bf16.mxu0 %v11868
  %11899 = vmatpush1.bf16.msra.mxu0 %v11867
  %11900 = vmatprep.subr.bf16.mxu0 %v11864
  %11901 = vmatpush1.bf16.msra.mxu0 %v11863
  %11902 = vmatprep.subr.bf16.mxu0 %v11860
  %11903 = vmatpush1.bf16.msra.mxu0 %v11859
  %11904 = vmatprep.subr.bf16.mxu0 %v11856
  %11905 = vmatpush1.bf16.msra.mxu0 %v11855
  %11906 = vmatprep.subr.bf16.mxu0 0
  %11907 = vmatpush2.bf16.msra.mxu0 0
  %11908 = vmatprep.subr.bf16.mxu0 0
  %11909 = vmatpush2.bf16.msra.mxu0 0
  %11910 = vmatprep.subr.bf16.mxu0 0
  %11911 = vmatpush2.bf16.msra.mxu0 0
  %11912 = vmatprep.subr.bf16.mxu0 0
  %11913 = vmatpush2.bf16.msra.mxu0 0
  %11914 = vmatprep.subr.bf16.mxu0 0
  %11915 = vmatpush2.bf16.msra.mxu0 0
  %11916 = vmatprep.subr.bf16.mxu0 0
  %11917 = vmatpush2.bf16.msra.mxu0 0
  %11918 = vmatprep.subr.bf16.mxu0 0
  %11919 = vmatpush2.bf16.msra.mxu0 0
  %11920 = vmatprep.subr.bf16.mxu0 0
  %11921 = vmatpush2.bf16.msra.mxu0 0
  %11922 = vmatprep.mubr.bf16.mxu0 0
  %11923 = vmatmul.mubr.bf16.gmra.mxu0 %v11888
  %v11924 = vpop.f32.mrf.mxu0
  %v11925 = vadd.f32 0.0, %v11924
  %v11926 = vpop.f32.mrf.mxu0
  %v11927 = vadd.f32 0.0, %v11926
  %v11928 = vpop.f32.mrf.mxu0
  %v11929 = vadd.f32 0.0, %v11928
  %v11930 = vpop.f32.mrf.mxu0
  %v11931 = vadd.f32 0.0, %v11930
  %11932 = vdwg.mxu0
  %11933 = vmatprep.subr.bf16.mxu0 0
  %11934 = vmatpush1.bf16.msra.mxu0 0
  %11935 = vmatprep.subr.bf16.mxu0 0
  %11936 = vmatpush1.bf16.msra.mxu0 0
  %11937 = vmatprep.subr.bf16.mxu0 0
  %11938 = vmatpush1.bf16.msra.mxu0 0
  %11939 = vmatprep.subr.bf16.mxu0 0
  %11940 = vmatpush1.bf16.msra.mxu0 0
  %11941 = vmatprep.subr.bf16.mxu0 %v11870
  %11942 = vmatpush1.bf16.msra.mxu0 %v11869
  %11943 = vmatprep.subr.bf16.mxu0 %v11866
  %11944 = vmatpush1.bf16.msra.mxu0 %v11865
  %11945 = vmatprep.subr.bf16.mxu0 %v11862
  %11946 = vmatpush1.bf16.msra.mxu0 %v11861
  %11947 = vmatprep.subr.bf16.mxu0 %v11858
  %11948 = vmatpush1.bf16.msra.mxu0 %v11857
  %11949 = vmatprep.subr.bf16.mxu0 0
  %11950 = vmatpush2.bf16.msra.mxu0 0
  %11951 = vmatprep.subr.bf16.mxu0 0
  %11952 = vmatpush2.bf16.msra.mxu0 0
  %11953 = vmatprep.subr.bf16.mxu0 0
  %11954 = vmatpush2.bf16.msra.mxu0 0
  %11955 = vmatprep.subr.bf16.mxu0 0
  %11956 = vmatpush2.bf16.msra.mxu0 0
  %11957 = vmatprep.subr.bf16.mxu0 0
  %11958 = vmatpush2.bf16.msra.mxu0 0
  %11959 = vmatprep.subr.bf16.mxu0 0
  %11960 = vmatpush2.bf16.msra.mxu0 0
  %11961 = vmatprep.subr.bf16.mxu0 0
  %11962 = vmatpush2.bf16.msra.mxu0 0
  %11963 = vmatprep.subr.bf16.mxu0 0
  %11964 = vmatpush2.bf16.msra.mxu0 0
  %11965 = vmatprep.mubr.bf16.mxu0 0
  %11966 = vmatmul.mubr.bf16.gmra.mxu0 %v11888
  %v11967 = vpop.f32.mrf.mxu0
  %v11968 = vadd.f32 0.0, %v11967
  %v11969 = vpop.f32.mrf.mxu0
  %v11970 = vadd.f32 0.0, %v11969
  %v11971 = vpop.f32.mrf.mxu0
  %v11972 = vadd.f32 0.0, %v11971
  %v11973 = vpop.f32.mrf.mxu0
  %v11974 = vadd.f32 0.0, %v11973
  %11975 = vdwg.mxu0
  %v11976 = vadd.f32 %v11783, %v11925
  %v11977 = vadd.f32 %v11784, %v11927
  %v11978 = vadd.f32 %v11785, %v11968
  %v11979 = vadd.f32 %v11786, %v11970
  %v11980 = vadd.f32 %v11787, %v11929
  %v11981 = vadd.f32 %v11788, %v11931
  %v11982 = vadd.f32 %v11789, %v11972
  %v11983 = vadd.f32 %v11790, %v11974
  %v11984 = vld [vmem:[%s7 + $0x680] sm:$0xff]
  %v11985 = vld [vmem:[%s7 + $0x688] sm:$0xff]
  %v11986 = vld [vmem:[%s7 + $0x690] sm:$0xff]
  %v11987 = vld [vmem:[%s7 + $0x698] sm:$0xff]
  %v11988 = vld [vmem:[%s7 + $0x6a0] sm:$0xff]
  %v11989 = vld [vmem:[%s7 + $0x6a8] sm:$0xff]
  %v11990 = vld [vmem:[%s7 + $0x6b0] sm:$0xff]
  %v11991 = vld [vmem:[%s7 + $0x6b8] sm:$0xff]
  %v11992 = vld [vmem:[%s7 + $0x6c0] sm:$0xff]
  %v11993 = vld [vmem:[%s7 + $0x6c8] sm:$0xff]
  %v11994 = vld [vmem:[%s7 + $0x6d0] sm:$0xff]
  %v11995 = vld [vmem:[%s7 + $0x6d8] sm:$0xff]
  %v11996 = vld [vmem:[%s7 + $0x6e0] sm:$0xff]
  %v11997 = vld [vmem:[%s7 + $0x6e8] sm:$0xff]
  %v11998 = vld [vmem:[%s7 + $0x6f0] sm:$0xff]
  %v11999 = vld [vmem:[%s7 + $0x6f8] sm:$0xff]
  %v12016 = vunpack.c.l.b16 %v11984
  %v12017 = vunpack.c.h.b16 %v11984
  %v12018 = vunpack.c.l.b16 %v11985
  %v12019 = vunpack.c.h.b16 %v11985
  %v12020 = vunpack.c.l.b16 %v11986
  %v12021 = vunpack.c.h.b16 %v11986
  %v12022 = vunpack.c.l.b16 %v11987
  %v12023 = vunpack.c.h.b16 %v11987
  %v12024 = vunpack.c.l.b16 %v11988
  %v12025 = vunpack.c.h.b16 %v11988
  %v12026 = vunpack.c.l.b16 %v11989
  %v12027 = vunpack.c.h.b16 %v11989
  %v12028 = vunpack.c.l.b16 %v11990
  %v12029 = vunpack.c.h.b16 %v11990
  %v12030 = vunpack.c.l.b16 %v11991
  %v12031 = vunpack.c.h.b16 %v11991
  %v12032 = vunpack.c.l.b16 %v11992
  %v12033 = vunpack.c.h.b16 %v11992
  %v12034 = vunpack.c.l.b16 %v11993
  %v12035 = vunpack.c.h.b16 %v11993
  %v12036 = vunpack.c.l.b16 %v11994
  %v12037 = vunpack.c.h.b16 %v11994
  %v12038 = vunpack.c.l.b16 %v11995
  %v12039 = vunpack.c.h.b16 %v11995
  %v12040 = vunpack.c.l.b16 %v11996
  %v12041 = vunpack.c.h.b16 %v11996
  %v12042 = vunpack.c.l.b16 %v11997
  %v12043 = vunpack.c.h.b16 %v11997
  %v12044 = vunpack.c.l.b16 %v11998
  %v12045 = vunpack.c.h.b16 %v11998
  %v12046 = vunpack.c.l.b16 %v11999
  %v12047 = vunpack.c.h.b16 %v11999
  %v12048 = vpack.c.b16 %v12020, %v12016
  %v12049 = vpack.c.b16 %v12021, %v12017
  %v12050 = vpack.c.b16 %v12022, %v12018
  %v12051 = vpack.c.b16 %v12023, %v12019
  %v12052 = vpack.c.b16 %v12028, %v12024
  %v12053 = vpack.c.b16 %v12029, %v12025
  %v12054 = vpack.c.b16 %v12030, %v12026
  %v12055 = vpack.c.b16 %v12031, %v12027
  %v12056 = vpack.c.b16 %v12036, %v12032
  %v12057 = vpack.c.b16 %v12037, %v12033
  %v12058 = vpack.c.b16 %v12038, %v12034
  %v12059 = vpack.c.b16 %v12039, %v12035
  %v12060 = vpack.c.b16 %v12044, %v12040
  %v12061 = vpack.c.b16 %v12045, %v12041
  %v12062 = vpack.c.b16 %v12046, %v12042
  %v12063 = vpack.c.b16 %v12047, %v12043
  %v12081 = vsel %vm6873, %v9488, 0
  %12083 = vmatprep.subr.bf16.mxu0 0
  %12084 = vmatpush1.bf16.msra.mxu0 0
  %12085 = vmatprep.subr.bf16.mxu0 0
  %12086 = vmatpush1.bf16.msra.mxu0 0
  %12087 = vmatprep.subr.bf16.mxu0 0
  %12088 = vmatpush1.bf16.msra.mxu0 0
  %12089 = vmatprep.subr.bf16.mxu0 0
  %12090 = vmatpush1.bf16.msra.mxu0 0
  %12091 = vmatprep.subr.bf16.mxu0 %v12061
  %12092 = vmatpush1.bf16.msra.mxu0 %v12060
  %12093 = vmatprep.subr.bf16.mxu0 %v12057
  %12094 = vmatpush1.bf16.msra.mxu0 %v12056
  %12095 = vmatprep.subr.bf16.mxu0 %v12053
  %12096 = vmatpush1.bf16.msra.mxu0 %v12052
  %12097 = vmatprep.subr.bf16.mxu0 %v12049
  %12098 = vmatpush1.bf16.msra.mxu0 %v12048
  %12099 = vmatprep.subr.bf16.mxu0 0
  %12100 = vmatpush2.bf16.msra.mxu0 0
  %12101 = vmatprep.subr.bf16.mxu0 0
  %12102 = vmatpush2.bf16.msra.mxu0 0
  %12103 = vmatprep.subr.bf16.mxu0 0
  %12104 = vmatpush2.bf16.msra.mxu0 0
  %12105 = vmatprep.subr.bf16.mxu0 0
  %12106 = vmatpush2.bf16.msra.mxu0 0
  %12107 = vmatprep.subr.bf16.mxu0 0
  %12108 = vmatpush2.bf16.msra.mxu0 0
  %12109 = vmatprep.subr.bf16.mxu0 0
  %12110 = vmatpush2.bf16.msra.mxu0 0
  %12111 = vmatprep.subr.bf16.mxu0 0
  %12112 = vmatpush2.bf16.msra.mxu0 0
  %12113 = vmatprep.subr.bf16.mxu0 0
  %12114 = vmatpush2.bf16.msra.mxu0 0
  %12115 = vmatprep.mubr.bf16.mxu0 0
  %12116 = vmatmul.mubr.bf16.gmra.mxu0 %v12081
  %v12117 = vpop.f32.mrf.mxu0
  %v12118 = vadd.f32 0.0, %v12117
  %v12119 = vpop.f32.mrf.mxu0
  %v12120 = vadd.f32 0.0, %v12119
  %v12121 = vpop.f32.mrf.mxu0
  %v12122 = vadd.f32 0.0, %v12121
  %v12123 = vpop.f32.mrf.mxu0
  %v12124 = vadd.f32 0.0, %v12123
  %12125 = vdwg.mxu0
  %12126 = vmatprep.subr.bf16.mxu0 0
  %12127 = vmatpush1.bf16.msra.mxu0 0
  %12128 = vmatprep.subr.bf16.mxu0 0
  %12129 = vmatpush1.bf16.msra.mxu0 0
  %12130 = vmatprep.subr.bf16.mxu0 0
  %12131 = vmatpush1.bf16.msra.mxu0 0
  %12132 = vmatprep.subr.bf16.mxu0 0
  %12133 = vmatpush1.bf16.msra.mxu0 0
  %12134 = vmatprep.subr.bf16.mxu0 %v12063
  %12135 = vmatpush1.bf16.msra.mxu0 %v12062
  %12136 = vmatprep.subr.bf16.mxu0 %v12059
  %12137 = vmatpush1.bf16.msra.mxu0 %v12058
  %12138 = vmatprep.subr.bf16.mxu0 %v12055
  %12139 = vmatpush1.bf16.msra.mxu0 %v12054
  %12140 = vmatprep.subr.bf16.mxu0 %v12051
  %12141 = vmatpush1.bf16.msra.mxu0 %v12050
  %12142 = vmatprep.subr.bf16.mxu0 0
  %12143 = vmatpush2.bf16.msra.mxu0 0
  %12144 = vmatprep.subr.bf16.mxu0 0
  %12145 = vmatpush2.bf16.msra.mxu0 0
  %12146 = vmatprep.subr.bf16.mxu0 0
  %12147 = vmatpush2.bf16.msra.mxu0 0
  %12148 = vmatprep.subr.bf16.mxu0 0
  %12149 = vmatpush2.bf16.msra.mxu0 0
  %12150 = vmatprep.subr.bf16.mxu0 0
  %12151 = vmatpush2.bf16.msra.mxu0 0
  %12152 = vmatprep.subr.bf16.mxu0 0
  %12153 = vmatpush2.bf16.msra.mxu0 0
  %12154 = vmatprep.subr.bf16.mxu0 0
  %12155 = vmatpush2.bf16.msra.mxu0 0
  %12156 = vmatprep.subr.bf16.mxu0 0
  %12157 = vmatpush2.bf16.msra.mxu0 0
  %12158 = vmatprep.mubr.bf16.mxu0 0
  %12159 = vmatmul.mubr.bf16.gmra.mxu0 %v12081
  %v12160 = vpop.f32.mrf.mxu0
  %v12161 = vadd.f32 0.0, %v12160
  %v12162 = vpop.f32.mrf.mxu0
  %v12163 = vadd.f32 0.0, %v12162
  %v12164 = vpop.f32.mrf.mxu0
  %v12165 = vadd.f32 0.0, %v12164
  %v12166 = vpop.f32.mrf.mxu0
  %v12167 = vadd.f32 0.0, %v12166
  %12168 = vdwg.mxu0
  %v12169 = vadd.f32 %v11976, %v12118
  %v12170 = vadd.f32 %v11977, %v12120
  %v12171 = vadd.f32 %v11978, %v12161
  %v12172 = vadd.f32 %v11979, %v12163
  %v12173 = vadd.f32 %v11980, %v12122
  %v12174 = vadd.f32 %v11981, %v12124
  %v12175 = vadd.f32 %v11982, %v12165
  %v12176 = vadd.f32 %v11983, %v12167
  %v12177 = vld [vmem:[%s7 + $0x700] sm:$0xff]
  %v12178 = vld [vmem:[%s7 + $0x708] sm:$0xff]
  %v12179 = vld [vmem:[%s7 + $0x710] sm:$0xff]
  %v12180 = vld [vmem:[%s7 + $0x718] sm:$0xff]
  %v12181 = vld [vmem:[%s7 + $0x720] sm:$0xff]
  %v12182 = vld [vmem:[%s7 + $0x728] sm:$0xff]
  %v12183 = vld [vmem:[%s7 + $0x730] sm:$0xff]
  %v12184 = vld [vmem:[%s7 + $0x738] sm:$0xff]
  %v12185 = vld [vmem:[%s7 + $0x740] sm:$0xff]
  %v12186 = vld [vmem:[%s7 + $0x748] sm:$0xff]
  %v12187 = vld [vmem:[%s7 + $0x750] sm:$0xff]
  %v12188 = vld [vmem:[%s7 + $0x758] sm:$0xff]
  %v12189 = vld [vmem:[%s7 + $0x760] sm:$0xff]
  %v12190 = vld [vmem:[%s7 + $0x768] sm:$0xff]
  %v12191 = vld [vmem:[%s7 + $0x770] sm:$0xff]
  %v12192 = vld [vmem:[%s7 + $0x778] sm:$0xff]
  %v12209 = vunpack.c.l.b16 %v12177
  %v12210 = vunpack.c.h.b16 %v12177
  %v12211 = vunpack.c.l.b16 %v12178
  %v12212 = vunpack.c.h.b16 %v12178
  %v12213 = vunpack.c.l.b16 %v12179
  %v12214 = vunpack.c.h.b16 %v12179
  %v12215 = vunpack.c.l.b16 %v12180
  %v12216 = vunpack.c.h.b16 %v12180
  %v12217 = vunpack.c.l.b16 %v12181
  %v12218 = vunpack.c.h.b16 %v12181
  %v12219 = vunpack.c.l.b16 %v12182
  %v12220 = vunpack.c.h.b16 %v12182
  %v12221 = vunpack.c.l.b16 %v12183
  %v12222 = vunpack.c.h.b16 %v12183
  %v12223 = vunpack.c.l.b16 %v12184
  %v12224 = vunpack.c.h.b16 %v12184
  %v12225 = vunpack.c.l.b16 %v12185
  %v12226 = vunpack.c.h.b16 %v12185
  %v12227 = vunpack.c.l.b16 %v12186
  %v12228 = vunpack.c.h.b16 %v12186
  %v12229 = vunpack.c.l.b16 %v12187
  %v12230 = vunpack.c.h.b16 %v12187
  %v12231 = vunpack.c.l.b16 %v12188
  %v12232 = vunpack.c.h.b16 %v12188
  %v12233 = vunpack.c.l.b16 %v12189
  %v12234 = vunpack.c.h.b16 %v12189
  %v12235 = vunpack.c.l.b16 %v12190
  %v12236 = vunpack.c.h.b16 %v12190
  %v12237 = vunpack.c.l.b16 %v12191
  %v12238 = vunpack.c.h.b16 %v12191
  %v12239 = vunpack.c.l.b16 %v12192
  %v12240 = vunpack.c.h.b16 %v12192
  %v12241 = vpack.c.b16 %v12213, %v12209
  %v12242 = vpack.c.b16 %v12214, %v12210
  %v12243 = vpack.c.b16 %v12215, %v12211
  %v12244 = vpack.c.b16 %v12216, %v12212
  %v12245 = vpack.c.b16 %v12221, %v12217
  %v12246 = vpack.c.b16 %v12222, %v12218
  %v12247 = vpack.c.b16 %v12223, %v12219
  %v12248 = vpack.c.b16 %v12224, %v12220
  %v12249 = vpack.c.b16 %v12229, %v12225
  %v12250 = vpack.c.b16 %v12230, %v12226
  %v12251 = vpack.c.b16 %v12231, %v12227
  %v12252 = vpack.c.b16 %v12232, %v12228
  %v12253 = vpack.c.b16 %v12237, %v12233
  %v12254 = vpack.c.b16 %v12238, %v12234
  %v12255 = vpack.c.b16 %v12239, %v12235
  %v12256 = vpack.c.b16 %v12240, %v12236
  %v12274 = vsel %vm6873, %v9489, 0
  %12276 = vmatprep.subr.bf16.mxu0 0
  %12277 = vmatpush1.bf16.msra.mxu0 0
  %12278 = vmatprep.subr.bf16.mxu0 0
  %12279 = vmatpush1.bf16.msra.mxu0 0
  %12280 = vmatprep.subr.bf16.mxu0 0
  %12281 = vmatpush1.bf16.msra.mxu0 0
  %12282 = vmatprep.subr.bf16.mxu0 0
  %12283 = vmatpush1.bf16.msra.mxu0 0
  %12284 = vmatprep.subr.bf16.mxu0 %v12254
  %12285 = vmatpush1.bf16.msra.mxu0 %v12253
  %12286 = vmatprep.subr.bf16.mxu0 %v12250
  %12287 = vmatpush1.bf16.msra.mxu0 %v12249
  %12288 = vmatprep.subr.bf16.mxu0 %v12246
  %12289 = vmatpush1.bf16.msra.mxu0 %v12245
  %12290 = vmatprep.subr.bf16.mxu0 %v12242
  %12291 = vmatpush1.bf16.msra.mxu0 %v12241
  %12292 = vmatprep.subr.bf16.mxu0 0
  %12293 = vmatpush2.bf16.msra.mxu0 0
  %12294 = vmatprep.subr.bf16.mxu0 0
  %12295 = vmatpush2.bf16.msra.mxu0 0
  %12296 = vmatprep.subr.bf16.mxu0 0
  %12297 = vmatpush2.bf16.msra.mxu0 0
  %12298 = vmatprep.subr.bf16.mxu0 0
  %12299 = vmatpush2.bf16.msra.mxu0 0
  %12300 = vmatprep.subr.bf16.mxu0 0
  %12301 = vmatpush2.bf16.msra.mxu0 0
  %12302 = vmatprep.subr.bf16.mxu0 0
  %12303 = vmatpush2.bf16.msra.mxu0 0
  %12304 = vmatprep.subr.bf16.mxu0 0
  %12305 = vmatpush2.bf16.msra.mxu0 0
  %12306 = vmatprep.subr.bf16.mxu0 0
  %12307 = vmatpush2.bf16.msra.mxu0 0
  %12308 = vmatprep.mubr.bf16.mxu0 0
  %12309 = vmatmul.mubr.bf16.gmra.mxu0 %v12274
  %v12310 = vpop.f32.mrf.mxu0
  %v12311 = vadd.f32 0.0, %v12310
  %v12312 = vpop.f32.mrf.mxu0
  %v12313 = vadd.f32 0.0, %v12312
  %v12314 = vpop.f32.mrf.mxu0
  %v12315 = vadd.f32 0.0, %v12314
  %v12316 = vpop.f32.mrf.mxu0
  %v12317 = vadd.f32 0.0, %v12316
  %12318 = vdwg.mxu0
  %12319 = vmatprep.subr.bf16.mxu0 0
  %12320 = vmatpush1.bf16.msra.mxu0 0
  %12321 = vmatprep.subr.bf16.mxu0 0
  %12322 = vmatpush1.bf16.msra.mxu0 0
  %12323 = vmatprep.subr.bf16.mxu0 0
  %12324 = vmatpush1.bf16.msra.mxu0 0
  %12325 = vmatprep.subr.bf16.mxu0 0
  %12326 = vmatpush1.bf16.msra.mxu0 0
  %12327 = vmatprep.subr.bf16.mxu0 %v12256
  %12328 = vmatpush1.bf16.msra.mxu0 %v12255
  %12329 = vmatprep.subr.bf16.mxu0 %v12252
  %12330 = vmatpush1.bf16.msra.mxu0 %v12251
  %12331 = vmatprep.subr.bf16.mxu0 %v12248
  %12332 = vmatpush1.bf16.msra.mxu0 %v12247
  %12333 = vmatprep.subr.bf16.mxu0 %v12244
  %12334 = vmatpush1.bf16.msra.mxu0 %v12243
  %12335 = vmatprep.subr.bf16.mxu0 0
  %12336 = vmatpush2.bf16.msra.mxu0 0
  %12337 = vmatprep.subr.bf16.mxu0 0
  %12338 = vmatpush2.bf16.msra.mxu0 0
  %12339 = vmatprep.subr.bf16.mxu0 0
  %12340 = vmatpush2.bf16.msra.mxu0 0
  %12341 = vmatprep.subr.bf16.mxu0 0
  %12342 = vmatpush2.bf16.msra.mxu0 0
  %12343 = vmatprep.subr.bf16.mxu0 0
  %12344 = vmatpush2.bf16.msra.mxu0 0
  %12345 = vmatprep.subr.bf16.mxu0 0
  %12346 = vmatpush2.bf16.msra.mxu0 0
  %12347 = vmatprep.subr.bf16.mxu0 0
  %12348 = vmatpush2.bf16.msra.mxu0 0
  %12349 = vmatprep.subr.bf16.mxu0 0
  %12350 = vmatpush2.bf16.msra.mxu0 0
  %12351 = vmatprep.mubr.bf16.mxu0 0
  %12352 = vmatmul.mubr.bf16.gmra.mxu0 %v12274
  %v12353 = vpop.f32.mrf.mxu0
  %v12354 = vadd.f32 0.0, %v12353
  %v12355 = vpop.f32.mrf.mxu0
  %v12356 = vadd.f32 0.0, %v12355
  %v12357 = vpop.f32.mrf.mxu0
  %v12358 = vadd.f32 0.0, %v12357
  %v12359 = vpop.f32.mrf.mxu0
  %v12360 = vadd.f32 0.0, %v12359
  %12361 = vdwg.mxu0
  %v12362 = vadd.f32 %v12169, %v12311
  %v12363 = vadd.f32 %v12170, %v12313
  %v12364 = vadd.f32 %v12171, %v12354
  %v12365 = vadd.f32 %v12172, %v12356
  %v12366 = vadd.f32 %v12173, %v12315
  %v12367 = vadd.f32 %v12174, %v12317
  %v12368 = vadd.f32 %v12175, %v12358
  %v12369 = vadd.f32 %v12176, %v12360
  %v12370 = vld [vmem:[%s7 + $0x780] sm:$0xff]
  %v12371 = vld [vmem:[%s7 + $0x788] sm:$0xff]
  %v12372 = vld [vmem:[%s7 + $0x790] sm:$0xff]
  %v12373 = vld [vmem:[%s7 + $0x798] sm:$0xff]
  %v12374 = vld [vmem:[%s7 + $0x7a0] sm:$0xff]
  %v12375 = vld [vmem:[%s7 + $0x7a8] sm:$0xff]
  %v12376 = vld [vmem:[%s7 + $0x7b0] sm:$0xff]
  %v12377 = vld [vmem:[%s7 + $0x7b8] sm:$0xff]
  %v12378 = vld [vmem:[%s7 + $0x7c0] sm:$0xff]
  %v12379 = vld [vmem:[%s7 + $0x7c8] sm:$0xff]
  %v12380 = vld [vmem:[%s7 + $0x7d0] sm:$0xff]
  %v12381 = vld [vmem:[%s7 + $0x7d8] sm:$0xff]
  %v12382 = vld [vmem:[%s7 + $0x7e0] sm:$0xff]
  %v12383 = vld [vmem:[%s7 + $0x7e8] sm:$0xff]
  %v12384 = vld [vmem:[%s7 + $0x7f0] sm:$0xff]
  %v12385 = vld [vmem:[%s7 + $0x7f8] sm:$0xff]
  %v12402 = vunpack.c.l.b16 %v12370
  %v12403 = vunpack.c.h.b16 %v12370
  %v12404 = vunpack.c.l.b16 %v12371
  %v12405 = vunpack.c.h.b16 %v12371
  %v12406 = vunpack.c.l.b16 %v12372
  %v12407 = vunpack.c.h.b16 %v12372
  %v12408 = vunpack.c.l.b16 %v12373
  %v12409 = vunpack.c.h.b16 %v12373
  %v12410 = vunpack.c.l.b16 %v12374
  %v12411 = vunpack.c.h.b16 %v12374
  %v12412 = vunpack.c.l.b16 %v12375
  %v12413 = vunpack.c.h.b16 %v12375
  %v12414 = vunpack.c.l.b16 %v12376
  %v12415 = vunpack.c.h.b16 %v12376
  %v12416 = vunpack.c.l.b16 %v12377
  %v12417 = vunpack.c.h.b16 %v12377
  %v12418 = vunpack.c.l.b16 %v12378
  %v12419 = vunpack.c.h.b16 %v12378
  %v12420 = vunpack.c.l.b16 %v12379
  %v12421 = vunpack.c.h.b16 %v12379
  %v12422 = vunpack.c.l.b16 %v12380
  %v12423 = vunpack.c.h.b16 %v12380
  %v12424 = vunpack.c.l.b16 %v12381
  %v12425 = vunpack.c.h.b16 %v12381
  %v12426 = vunpack.c.l.b16 %v12382
  %v12427 = vunpack.c.h.b16 %v12382
  %v12428 = vunpack.c.l.b16 %v12383
  %v12429 = vunpack.c.h.b16 %v12383
  %v12430 = vunpack.c.l.b16 %v12384
  %v12431 = vunpack.c.h.b16 %v12384
  %v12432 = vunpack.c.l.b16 %v12385
  %v12433 = vunpack.c.h.b16 %v12385
  %v12434 = vpack.c.b16 %v12406, %v12402
  %v12435 = vpack.c.b16 %v12407, %v12403
  %v12436 = vpack.c.b16 %v12408, %v12404
  %v12437 = vpack.c.b16 %v12409, %v12405
  %v12438 = vpack.c.b16 %v12414, %v12410
  %v12439 = vpack.c.b16 %v12415, %v12411
  %v12440 = vpack.c.b16 %v12416, %v12412
  %v12441 = vpack.c.b16 %v12417, %v12413
  %v12442 = vpack.c.b16 %v12422, %v12418
  %v12443 = vpack.c.b16 %v12423, %v12419
  %v12444 = vpack.c.b16 %v12424, %v12420
  %v12445 = vpack.c.b16 %v12425, %v12421
  %v12446 = vpack.c.b16 %v12430, %v12426
  %v12447 = vpack.c.b16 %v12431, %v12427
  %v12448 = vpack.c.b16 %v12432, %v12428
  %v12449 = vpack.c.b16 %v12433, %v12429
  %v12467 = vsel %vm6873, %v9490, 0
  %12469 = vmatprep.subr.bf16.mxu0 0
  %12470 = vmatpush1.bf16.msra.mxu0 0
  %12471 = vmatprep.subr.bf16.mxu0 0
  %12472 = vmatpush1.bf16.msra.mxu0 0
  %12473 = vmatprep.subr.bf16.mxu0 0
  %12474 = vmatpush1.bf16.msra.mxu0 0
  %12475 = vmatprep.subr.bf16.mxu0 0
  %12476 = vmatpush1.bf16.msra.mxu0 0
  %12477 = vmatprep.subr.bf16.mxu0 %v12447
  %12478 = vmatpush1.bf16.msra.mxu0 %v12446
  %12479 = vmatprep.subr.bf16.mxu0 %v12443
  %12480 = vmatpush1.bf16.msra.mxu0 %v12442
  %12481 = vmatprep.subr.bf16.mxu0 %v12439
  %12482 = vmatpush1.bf16.msra.mxu0 %v12438
  %12483 = vmatprep.subr.bf16.mxu0 %v12435
  %12484 = vmatpush1.bf16.msra.mxu0 %v12434
  %12485 = vmatprep.subr.bf16.mxu0 0
  %12486 = vmatpush2.bf16.msra.mxu0 0
  %12487 = vmatprep.subr.bf16.mxu0 0
  %12488 = vmatpush2.bf16.msra.mxu0 0
  %12489 = vmatprep.subr.bf16.mxu0 0
  %12490 = vmatpush2.bf16.msra.mxu0 0
  %12491 = vmatprep.subr.bf16.mxu0 0
  %12492 = vmatpush2.bf16.msra.mxu0 0
  %12493 = vmatprep.subr.bf16.mxu0 0
  %12494 = vmatpush2.bf16.msra.mxu0 0
  %12495 = vmatprep.subr.bf16.mxu0 0
  %12496 = vmatpush2.bf16.msra.mxu0 0
  %12497 = vmatprep.subr.bf16.mxu0 0
  %12498 = vmatpush2.bf16.msra.mxu0 0
  %12499 = vmatprep.subr.bf16.mxu0 0
  %12500 = vmatpush2.bf16.msra.mxu0 0
  %12501 = vmatprep.mubr.bf16.mxu0 0
  %12502 = vmatmul.mubr.bf16.gmra.mxu0 %v12467
  %v12503 = vpop.f32.mrf.mxu0
  %v12504 = vadd.f32 0.0, %v12503
  %v12505 = vpop.f32.mrf.mxu0
  %v12506 = vadd.f32 0.0, %v12505
  %v12507 = vpop.f32.mrf.mxu0
  %v12508 = vadd.f32 0.0, %v12507
  %v12509 = vpop.f32.mrf.mxu0
  %v12510 = vadd.f32 0.0, %v12509
  %12511 = vdwg.mxu0
  %12512 = vmatprep.subr.bf16.mxu0 0
  %12513 = vmatpush1.bf16.msra.mxu0 0
  %12514 = vmatprep.subr.bf16.mxu0 0
  %12515 = vmatpush1.bf16.msra.mxu0 0
  %12516 = vmatprep.subr.bf16.mxu0 0
  %12517 = vmatpush1.bf16.msra.mxu0 0
  %12518 = vmatprep.subr.bf16.mxu0 0
  %12519 = vmatpush1.bf16.msra.mxu0 0
  %12520 = vmatprep.subr.bf16.mxu0 %v12449
  %12521 = vmatpush1.bf16.msra.mxu0 %v12448
  %12522 = vmatprep.subr.bf16.mxu0 %v12445
  %12523 = vmatpush1.bf16.msra.mxu0 %v12444
  %12524 = vmatprep.subr.bf16.mxu0 %v12441
  %12525 = vmatpush1.bf16.msra.mxu0 %v12440
  %12526 = vmatprep.subr.bf16.mxu0 %v12437
  %12527 = vmatpush1.bf16.msra.mxu0 %v12436
  %12528 = vmatprep.subr.bf16.mxu0 0
  %12529 = vmatpush2.bf16.msra.mxu0 0
  %12530 = vmatprep.subr.bf16.mxu0 0
  %12531 = vmatpush2.bf16.msra.mxu0 0
  %12532 = vmatprep.subr.bf16.mxu0 0
  %12533 = vmatpush2.bf16.msra.mxu0 0
  %12534 = vmatprep.subr.bf16.mxu0 0
  %12535 = vmatpush2.bf16.msra.mxu0 0
  %12536 = vmatprep.subr.bf16.mxu0 0
  %12537 = vmatpush2.bf16.msra.mxu0 0
  %12538 = vmatprep.subr.bf16.mxu0 0
  %12539 = vmatpush2.bf16.msra.mxu0 0
  %12540 = vmatprep.subr.bf16.mxu0 0
  %12541 = vmatpush2.bf16.msra.mxu0 0
  %12542 = vmatprep.subr.bf16.mxu0 0
  %12543 = vmatpush2.bf16.msra.mxu0 0
  %12544 = vmatprep.mubr.bf16.mxu0 0
  %12545 = vmatmul.mubr.bf16.gmra.mxu0 %v12467
  %v12546 = vpop.f32.mrf.mxu0
  %v12547 = vadd.f32 0.0, %v12546
  %v12548 = vpop.f32.mrf.mxu0
  %v12549 = vadd.f32 0.0, %v12548
  %v12550 = vpop.f32.mrf.mxu0
  %v12551 = vadd.f32 0.0, %v12550
  %v12552 = vpop.f32.mrf.mxu0
  %v12553 = vadd.f32 0.0, %v12552
  %12554 = vdwg.mxu0
  %v12555 = vadd.f32 %v12362, %v12504
  %v12556 = vadd.f32 %v12363, %v12506
  %v12557 = vadd.f32 %v12364, %v12547
  %v12558 = vadd.f32 %v12365, %v12549
  %v12559 = vadd.f32 %v12366, %v12508
  %v12560 = vadd.f32 %v12367, %v12510
  %v12561 = vadd.f32 %v12368, %v12551
  %v12562 = vadd.f32 %v12369, %v12553
  %v12563 = vld [vmem:[%s8] sm:$0xf]
  %v12565 = vlaneseq
  %v12566 = vshrl.u32 %v12565, 7
  %v12567 = vsub.s32 0, %v12566
  %v12568 = vrot.slane %v12563, %v12567
  %v12569 = vlaneseq
  %v12570 = vshrl.u32 %v12569, 7
  %v12571 = vsub.s32 1, %v12570
  %v12572 = vrot.slane %v12563, %v12571
  %v12573 = vlaneseq
  %v12574 = vshrl.u32 %v12573, 7
  %v12575 = vsub.s32 2, %v12574
  %v12576 = vrot.slane %v12563, %v12575
  %v12577 = vlaneseq
  %v12578 = vshrl.u32 %v12577, 7
  %v12579 = vsub.s32 3, %v12578
  %v12580 = vrot.slane %v12563, %v12579
  %v12585 = vadd.f32 %v12555, %v12568
  %v12586 = vadd.f32 %v12556, %v12572
  %v12587 = vadd.f32 %v12557, %v12576
  %v12588 = vadd.f32 %v12558, %v12580
  %v12589 = vadd.f32 %v12559, %v12568
  %v12590 = vadd.f32 %v12560, %v12572
  %v12591 = vadd.f32 %v12561, %v12576
  %v12592 = vadd.f32 %v12562, %v12580
  %v12593 = vmax.f32 %v12585, 0.0
  %v12594 = vmax.f32 %v12586, 0.0
  %v12595 = vmax.f32 %v12587, 0.0
  %v12596 = vmax.f32 %v12588, 0.0
  %v12597 = vmax.f32 %v12589, 0.0
  %v12598 = vmax.f32 %v12590, 0.0
  %v12599 = vmax.f32 %v12591, 0.0
  %v12600 = vmax.f32 %v12592, 0.0
  %v12601 = vpack.c.bf16 %v12597, %v12593
  %v12602 = vpack.c.bf16 %v12598, %v12594
  %v12603 = vpack.c.bf16 %v12599, %v12595
  %v12604 = vpack.c.bf16 %v12600, %v12596
  %v12605 = vld [vmem:[%s9] sm:$0xf]
  %v12606 = vld [vmem:[%s9 + $0x4] sm:$0xf]
  %v12607 = vld [vmem:[%s9 + $0x8] sm:$0xf]
  %v12608 = vld [vmem:[%s9 + $0xc] sm:$0xf]
  %v12609 = vld [vmem:[%s9 + $0x10] sm:$0xf]
  %v12610 = vld [vmem:[%s9 + $0x14] sm:$0xf]
  %v12611 = vld [vmem:[%s9 + $0x18] sm:$0xf]
  %v12612 = vld [vmem:[%s9 + $0x1c] sm:$0xf]
  %v12613 = vld [vmem:[%s9 + $0x20] sm:$0xf]
  %v12614 = vld [vmem:[%s9 + $0x24] sm:$0xf]
  %v12615 = vld [vmem:[%s9 + $0x28] sm:$0xf]
  %v12616 = vld [vmem:[%s9 + $0x2c] sm:$0xf]
  %v12617 = vld [vmem:[%s9 + $0x30] sm:$0xf]
  %v12618 = vld [vmem:[%s9 + $0x34] sm:$0xf]
  %v12619 = vld [vmem:[%s9 + $0x38] sm:$0xf]
  %v12620 = vld [vmem:[%s9 + $0x3c] sm:$0xf]
  %v12621 = vld [vmem:[%s9 + $0x40] sm:$0xf]
  %v12622 = vld [vmem:[%s9 + $0x44] sm:$0xf]
  %v12623 = vld [vmem:[%s9 + $0x48] sm:$0xf]
  %v12624 = vld [vmem:[%s9 + $0x4c] sm:$0xf]
  %v12625 = vld [vmem:[%s9 + $0x50] sm:$0xf]
  %v12626 = vld [vmem:[%s9 + $0x54] sm:$0xf]
  %v12627 = vld [vmem:[%s9 + $0x58] sm:$0xf]
  %v12628 = vld [vmem:[%s9 + $0x5c] sm:$0xf]
  %v12629 = vld [vmem:[%s9 + $0x60] sm:$0xf]
  %v12630 = vld [vmem:[%s9 + $0x64] sm:$0xf]
  %v12631 = vld [vmem:[%s9 + $0x68] sm:$0xf]
  %v12632 = vld [vmem:[%s9 + $0x6c] sm:$0xf]
  %v12633 = vld [vmem:[%s9 + $0x70] sm:$0xf]
  %v12634 = vld [vmem:[%s9 + $0x74] sm:$0xf]
  %v12635 = vld [vmem:[%s9 + $0x78] sm:$0xf]
  %v12636 = vld [vmem:[%s9 + $0x7c] sm:$0xf]
  %v12637 = vld [vmem:[%s9 + $0x80] sm:$0xf]
  %v12638 = vld [vmem:[%s9 + $0x84] sm:$0xf]
  %v12639 = vld [vmem:[%s9 + $0x88] sm:$0xf]
  %v12640 = vld [vmem:[%s9 + $0x8c] sm:$0xf]
  %v12641 = vld [vmem:[%s9 + $0x90] sm:$0xf]
  %v12642 = vld [vmem:[%s9 + $0x94] sm:$0xf]
  %v12643 = vld [vmem:[%s9 + $0x98] sm:$0xf]
  %v12644 = vld [vmem:[%s9 + $0x9c] sm:$0xf]
  %v12645 = vld [vmem:[%s9 + $0xa0] sm:$0xf]
  %v12646 = vld [vmem:[%s9 + $0xa4] sm:$0xf]
  %v12647 = vld [vmem:[%s9 + $0xa8] sm:$0xf]
  %v12648 = vld [vmem:[%s9 + $0xac] sm:$0xf]
  %v12649 = vld [vmem:[%s9 + $0xb0] sm:$0xf]
  %v12650 = vld [vmem:[%s9 + $0xb4] sm:$0xf]
  %v12651 = vld [vmem:[%s9 + $0xb8] sm:$0xf]
  %v12652 = vld [vmem:[%s9 + $0xbc] sm:$0xf]
  %v12653 = vld [vmem:[%s9 + $0xc0] sm:$0xf]
  %v12654 = vld [vmem:[%s9 + $0xc4] sm:$0xf]
  %v12655 = vld [vmem:[%s9 + $0xc8] sm:$0xf]
  %v12656 = vld [vmem:[%s9 + $0xcc] sm:$0xf]
  %v12657 = vld [vmem:[%s9 + $0xd0] sm:$0xf]
  %v12658 = vld [vmem:[%s9 + $0xd4] sm:$0xf]
  %v12659 = vld [vmem:[%s9 + $0xd8] sm:$0xf]
  %v12660 = vld [vmem:[%s9 + $0xdc] sm:$0xf]
  %v12661 = vld [vmem:[%s9 + $0xe0] sm:$0xf]
  %v12662 = vld [vmem:[%s9 + $0xe4] sm:$0xf]
  %v12663 = vld [vmem:[%s9 + $0xe8] sm:$0xf]
  %v12664 = vld [vmem:[%s9 + $0xec] sm:$0xf]
  %v12665 = vld [vmem:[%s9 + $0xf0] sm:$0xf]
  %v12666 = vld [vmem:[%s9 + $0xf4] sm:$0xf]
  %v12667 = vld [vmem:[%s9 + $0xf8] sm:$0xf]
  %v12668 = vld [vmem:[%s9 + $0xfc] sm:$0xf]
  %v12669 = vld [vmem:[%s10] sm:$0x1]
  %v12671 = vlaneseq
  %v12672 = vshrl.u32 %v12671, 7
  %v12673 = vsub.s32 0, %v12672
  %v12674 = vrot.slane %v12669, %v12673
  %v12740 = vunpack.c.l.b16 %v12605
  %v12741 = vunpack.c.l.b16 %v12606
  %v12742 = vunpack.c.l.b16 %v12607
  %v12743 = vunpack.c.l.b16 %v12608
  %v12744 = vunpack.c.l.b16 %v12609
  %v12745 = vunpack.c.l.b16 %v12610
  %v12746 = vunpack.c.l.b16 %v12611
  %v12747 = vunpack.c.l.b16 %v12612
  %v12748 = vunpack.c.l.b16 %v12613
  %v12749 = vunpack.c.l.b16 %v12614
  %v12750 = vunpack.c.l.b16 %v12615
  %v12751 = vunpack.c.l.b16 %v12616
  %v12752 = vunpack.c.l.b16 %v12617
  %v12753 = vunpack.c.l.b16 %v12618
  %v12754 = vunpack.c.l.b16 %v12619
  %v12755 = vunpack.c.l.b16 %v12620
  %v12756 = vunpack.c.l.b16 %v12621
  %v12757 = vunpack.c.l.b16 %v12622
  %v12758 = vunpack.c.l.b16 %v12623
  %v12759 = vunpack.c.l.b16 %v12624
  %v12760 = vunpack.c.l.b16 %v12625
  %v12761 = vunpack.c.l.b16 %v12626
  %v12762 = vunpack.c.l.b16 %v12627
  %v12763 = vunpack.c.l.b16 %v12628
  %v12764 = vunpack.c.l.b16 %v12629
  %v12765 = vunpack.c.l.b16 %v12630
  %v12766 = vunpack.c.l.b16 %v12631
  %v12767 = vunpack.c.l.b16 %v12632
  %v12768 = vunpack.c.l.b16 %v12633
  %v12769 = vunpack.c.l.b16 %v12634
  %v12770 = vunpack.c.l.b16 %v12635
  %v12771 = vunpack.c.l.b16 %v12636
  %v12772 = vunpack.c.l.b16 %v12637
  %v12773 = vunpack.c.l.b16 %v12638
  %v12774 = vunpack.c.l.b16 %v12639
  %v12775 = vunpack.c.l.b16 %v12640
  %v12776 = vunpack.c.l.b16 %v12641
  %v12777 = vunpack.c.l.b16 %v12642
  %v12778 = vunpack.c.l.b16 %v12643
  %v12779 = vunpack.c.l.b16 %v12644
  %v12780 = vunpack.c.l.b16 %v12645
  %v12781 = vunpack.c.l.b16 %v12646
  %v12782 = vunpack.c.l.b16 %v12647
  %v12783 = vunpack.c.l.b16 %v12648
  %v12784 = vunpack.c.l.b16 %v12649
  %v12785 = vunpack.c.l.b16 %v12650
  %v12786 = vunpack.c.l.b16 %v12651
  %v12787 = vunpack.c.l.b16 %v12652
  %v12788 = vunpack.c.l.b16 %v12653
  %v12789 = vunpack.c.l.b16 %v12654
  %v12790 = vunpack.c.l.b16 %v12655
  %v12791 = vunpack.c.l.b16 %v12656
  %v12792 = vunpack.c.l.b16 %v12657
  %v12793 = vunpack.c.l.b16 %v12658
  %v12794 = vunpack.c.l.b16 %v12659
  %v12795 = vunpack.c.l.b16 %v12660
  %v12796 = vunpack.c.l.b16 %v12661
  %v12797 = vunpack.c.l.b16 %v12662
  %v12798 = vunpack.c.l.b16 %v12663
  %v12799 = vunpack.c.l.b16 %v12664
  %v12800 = vunpack.c.l.b16 %v12665
  %v12801 = vunpack.c.l.b16 %v12666
  %v12802 = vunpack.c.l.b16 %v12667
  %v12803 = vunpack.c.l.b16 %v12668
  %v12804 = vpack.c.b16 %v12741, %v12740
  %v12805 = vpack.c.b16 %v12743, %v12742
  %v12806 = vpack.c.b16 %v12745, %v12744
  %v12807 = vpack.c.b16 %v12747, %v12746
  %v12808 = vpack.c.b16 %v12749, %v12748
  %v12809 = vpack.c.b16 %v12751, %v12750
  %v12810 = vpack.c.b16 %v12753, %v12752
  %v12811 = vpack.c.b16 %v12755, %v12754
  %v12812 = vpack.c.b16 %v12757, %v12756
  %v12813 = vpack.c.b16 %v12759, %v12758
  %v12814 = vpack.c.b16 %v12761, %v12760
  %v12815 = vpack.c.b16 %v12763, %v12762
  %v12816 = vpack.c.b16 %v12765, %v12764
  %v12817 = vpack.c.b16 %v12767, %v12766
  %v12818 = vpack.c.b16 %v12769, %v12768
  %v12819 = vpack.c.b16 %v12771, %v12770
  %v12820 = vpack.c.b16 %v12773, %v12772
  %v12821 = vpack.c.b16 %v12775, %v12774
  %v12822 = vpack.c.b16 %v12777, %v12776
  %v12823 = vpack.c.b16 %v12779, %v12778
  %v12824 = vpack.c.b16 %v12781, %v12780
  %v12825 = vpack.c.b16 %v12783, %v12782
  %v12826 = vpack.c.b16 %v12785, %v12784
  %v12827 = vpack.c.b16 %v12787, %v12786
  %v12828 = vpack.c.b16 %v12789, %v12788
  %v12829 = vpack.c.b16 %v12791, %v12790
  %v12830 = vpack.c.b16 %v12793, %v12792
  %v12831 = vpack.c.b16 %v12795, %v12794
  %v12832 = vpack.c.b16 %v12797, %v12796
  %v12833 = vpack.c.b16 %v12799, %v12798
  %v12834 = vpack.c.b16 %v12801, %v12800
  %v12835 = vpack.c.b16 %v12803, %v12802
  %12868 = vmatprep.subr.bf16.mxu0 0
  %12869 = vmatpush1.bf16.msra.mxu0 %v12811
  %12870 = vmatprep.subr.bf16.mxu0 0
  %12871 = vmatpush1.bf16.msra.mxu0 %v12810
  %12872 = vmatprep.subr.bf16.mxu0 0
  %12873 = vmatpush1.bf16.msra.mxu0 %v12809
  %12874 = vmatprep.subr.bf16.mxu0 0
  %12875 = vmatpush1.bf16.msra.mxu0 %v12808
  %12876 = vmatprep.subr.bf16.mxu0 0
  %12877 = vmatpush1.bf16.msra.mxu0 %v12807
  %12878 = vmatprep.subr.bf16.mxu0 0
  %12879 = vmatpush1.bf16.msra.mxu0 %v12806
  %12880 = vmatprep.subr.bf16.mxu0 0
  %12881 = vmatpush1.bf16.msra.mxu0 %v12805
  %12882 = vmatprep.subr.bf16.mxu0 0
  %12883 = vmatpush1.bf16.msra.mxu0 %v12804
  %12884 = vmatprep.subr.bf16.mxu0 0
  %12885 = vmatpush2.bf16.msra.mxu0 %v12819
  %12886 = vmatprep.subr.bf16.mxu0 0
  %12887 = vmatpush2.bf16.msra.mxu0 %v12818
  %12888 = vmatprep.subr.bf16.mxu0 0
  %12889 = vmatpush2.bf16.msra.mxu0 %v12817
  %12890 = vmatprep.subr.bf16.mxu0 0
  %12891 = vmatpush2.bf16.msra.mxu0 %v12816
  %12892 = vmatprep.subr.bf16.mxu0 0
  %12893 = vmatpush2.bf16.msra.mxu0 %v12815
  %12894 = vmatprep.subr.bf16.mxu0 0
  %12895 = vmatpush2.bf16.msra.mxu0 %v12814
  %12896 = vmatprep.subr.bf16.mxu0 0
  %12897 = vmatpush2.bf16.msra.mxu0 %v12813
  %12898 = vmatprep.subr.bf16.mxu0 0
  %12899 = vmatpush2.bf16.msra.mxu0 %v12812
  %12900 = vmatprep.mubr.bf16.mxu0 %v12602
  %12901 = vmatmul.mubr.bf16.gmra.mxu0 %v12601
  %v12902 = vpop.f32.mrf.mxu0
  %v12903 = vadd.f32 %v12674, %v12902
  %v12904 = vpop.f32.mrf.mxu0
  %v12905 = vpop.f32.mrf.mxu0
  %v12906 = vadd.f32 %v12674, %v12905
  %v12907 = vpop.f32.mrf.mxu0
  %12908 = vdwg.mxu0
  %12909 = vmatprep.subr.bf16.mxu0 0
  %12910 = vmatpush1.bf16.msra.mxu0 %v12827
  %12911 = vmatprep.subr.bf16.mxu0 0
  %12912 = vmatpush1.bf16.msra.mxu0 %v12826
  %12913 = vmatprep.subr.bf16.mxu0 0
  %12914 = vmatpush1.bf16.msra.mxu0 %v12825
  %12915 = vmatprep.subr.bf16.mxu0 0
  %12916 = vmatpush1.bf16.msra.mxu0 %v12824
  %12917 = vmatprep.subr.bf16.mxu0 0
  %12918 = vmatpush1.bf16.msra.mxu0 %v12823
  %12919 = vmatprep.subr.bf16.mxu0 0
  %12920 = vmatpush1.bf16.msra.mxu0 %v12822
  %12921 = vmatprep.subr.bf16.mxu0 0
  %12922 = vmatpush1.bf16.msra.mxu0 %v12821
  %12923 = vmatprep.subr.bf16.mxu0 0
  %12924 = vmatpush1.bf16.msra.mxu0 %v12820
  %12925 = vmatprep.subr.bf16.mxu0 0
  %12926 = vmatpush2.bf16.msra.mxu0 %v12835
  %12927 = vmatprep.subr.bf16.mxu0 0
  %12928 = vmatpush2.bf16.msra.mxu0 %v12834
  %12929 = vmatprep.subr.bf16.mxu0 0
  %12930 = vmatpush2.bf16.msra.mxu0 %v12833
  %12931 = vmatprep.subr.bf16.mxu0 0
  %12932 = vmatpush2.bf16.msra.mxu0 %v12832
  %12933 = vmatprep.subr.bf16.mxu0 0
  %12934 = vmatpush2.bf16.msra.mxu0 %v12831
  %12935 = vmatprep.subr.bf16.mxu0 0
  %12936 = vmatpush2.bf16.msra.mxu0 %v12830
  %12937 = vmatprep.subr.bf16.mxu0 0
  %12938 = vmatpush2.bf16.msra.mxu0 %v12829
  %12939 = vmatprep.subr.bf16.mxu0 0
  %12940 = vmatpush2.bf16.msra.mxu0 %v12828
  %12941 = vmatprep.mubr.bf16.mxu0 %v12604
  %12942 = vmatmul.mubr.bf16.gmra.mxu0 %v12603
  %v12943 = vpop.f32.mrf.mxu0
  %v12944 = vadd.f32 %v12903, %v12943
  %v12945 = vpop.f32.mrf.mxu0
  %v12946 = vpop.f32.mrf.mxu0
  %v12947 = vadd.f32 %v12906, %v12946
  %v12948 = vpop.f32.mrf.mxu0
  %12949 = vdwg.mxu0
  %12950 = vst [vmem:[%s11] sm:$0xff] %v12944
  %12951 = vst [vmem:[%s11 + $0x8] sm:$0xff] %v12947
  // Predicated region
  $region46: #{policy_forward.1} parent=0 // pred_check
    _
  $region47: #{policy_forward.1} parent=0 // pred_check_branch
    %12953 = sbr.rel (0) target = $region49
  $region48: #{policy_forward.1} parent=0 // pred_region
    _
  $region49: #{policy_forward.1} parent=0 // pred_fallthru
    _
  // Predicated region
  $region50: #{policy_forward.1} parent=0 // pred_check
    _
  $region51: #{policy_forward.1} parent=0 // pred_check_branch
    %12955 = sbr.rel (0) target = $region53
  $region52: #{policy_forward.1} parent=0 // pred_region
    _
  $region53: #{policy_forward.1} parent=0 // pred_fallthru
    _

</llo_original>
